<compile_context>
chip_gen: v7x
topology: tpu7x:2x2x1
jax: 0.10.0
libtpu: 0.0.40
codegen_flags: <defaults>
</compile_context>

<pallas_src>
import jax
import jax.numpy as jnp
from jax.experimental import pallas as pl
from jax.experimental.pallas import tpu as pltpu

_VMEM = pl.BlockSpec(memory_space=pltpu.MemorySpace.VMEM)
_SMEM = pl.BlockSpec(memory_space=pltpu.MemorySpace.SMEM)

# module constants (NASNoiseDecoder: hidden_dim=64, initial_size=2)
_HIDDEN = 64
_INIT = 2
# (input height=width, in channels, out channels) of the three MixedUpsampling stages
_STAGES = ((2, 64, 32), (4, 32, 16), (8, 16, 8))
_FINAL_HW = 16
_FINAL_CI = 8


# ----------------------------------------------------------------------------
# single fused Pallas kernel
# ----------------------------------------------------------------------------
def _decoder_kernel(aw_ref, z_ref, w1_ref, b1_ref, w2_ref, b2_ref,
                    wu1_ref, bu1_ref, wu2_ref, bu2_ref, wu3_ref, bu3_ref,
                    wf_ref, bf_ref, o_ref, xs1, xs2, xs3, xs4):
    batch = z_ref.shape[0]
    oc = o_ref.shape[1]

    # read the 5 softmaxed MixedActivation alpha rows from SMEM once (hoisted)
    aw = [tuple(aw_ref[s, k] for k in range(4)) for s in range(5)]

    def act_mix(y, a):
        # assumed candidates: [ReLU, Tanh, LeakyReLU(0.2), ELU]
        return (a[0] * jnp.maximum(y, 0.0)
                + a[1] * jnp.tanh(y)
                + a[2] * jnp.where(y > 0.0, y, 0.2 * y)
                + a[3] * jnp.where(y > 0.0, y, jnp.exp(jnp.minimum(y, 0.0)) - 1.0))

    def mm(x, w):
        return jnp.dot(x, w, preferred_element_type=jnp.float32)

    # ---- fc1 -> act1 -> fc2 -> act2  (fc2 columns pre-permuted to (h, w, c)) ----
    h1 = act_mix(mm(z_ref[...], w1_ref[...]) + b1_ref[...], aw[0])          # (B, 128)
    h2 = act_mix(mm(h1, w2_ref[...]) + b2_ref[...], aw[1])                  # (B, 256)

    # zero the padded scratches once: their borders ARE the conv zero padding
    xs1[...] = jnp.zeros_like(xs1)
    xs2[...] = jnp.zeros_like(xs2)
    xs3[...] = jnp.zeros_like(xs3)
    xs4[...] = jnp.zeros_like(xs4)

    # scatter the (B, 2, 2, 64) fc map into xs1's padded (row, width*chan) layout
    row_w = _INIT * _HIDDEN                                                 # 128 lanes/row
    for b in range(batch):
        for h in range(_INIT):
            xs1[b, 1 + h:2 + h, _HIDDEN:_HIDDEN + row_w] = \
                h2[b:b + 1, h * row_w:(h + 1) * row_w]

    # ---- three MixedUpsampling(+MixedActivation) stages, all resident in VMEM ----
    plan = ((xs1, wu1_ref, bu1_ref, aw[2], xs2),
            (xs2, wu2_ref, bu2_ref, aw[3], xs3),
            (xs3, wu3_ref, bu3_ref, aw[4], xs4))
    for (hi, _ci, co), (x_in, w_ref, b_ref, a, x_out) in zip(_STAGES, plan):
        k = 2 * hi * co                         # lanes of one high-res output row (=128)
        for b in range(batch):
            y = (mm(x_in[b, 0:hi, :], w_ref[0])         # row tap dy = -1
                 + mm(x_in[b, 1:hi + 1, :], w_ref[1])   # row tap dy =  0
                 + mm(x_in[b, 2:hi + 2, :], w_ref[2])   # row tap dy = +1
                 + b_ref[...])                  # (hi, 2k); cols = (phase_y, w', cout)
            y = act_mix(y, a)
            for i in range(hi):                 # phase -> row interleave (VMEM stores only)
                x_out[b, 1 + 2 * i:2 + 2 * i, co:co + k] = y[i:i + 1, 0:k]       # py = 0
                x_out[b, 2 + 2 * i:3 + 2 * i, co:co + k] = y[i:i + 1, k:2 * k]   # py = 1

    # ---- fused final conv3x3 (tanh)  *  conv1x1 attention (sigmoid), NCHW out ----
    n = _FINAL_HW
    for b in range(batch):
        y = (mm(xs4[b, 0:n, :], wf_ref[0])
             + mm(xs4[b, 1:n + 1, :], wf_ref[1])
             + mm(xs4[b, 2:n + 2, :], wf_ref[2])
             + bf_ref[...])                     # (16, (oc+1)*16): [conv cols | attn cols]
        gate = jax.nn.sigmoid(y[:, oc * n:(oc + 1) * n])
        for c in range(oc):
            o_ref[b, c, :, :] = jnp.tanh(y[:, c * n:(c + 1) * n]) * gate


@jax.jit
def nas_noise_decoder(plan, z):
    """Whole NASNoiseDecoder forward in ONE pallas_call (all intermediates in VMEM)."""
    batch = z.shape[0]
    oc = plan['bf'].shape[1] // _FINAL_HW - 1
    return pl.pallas_call(
        _decoder_kernel,
        out_shape=jax.ShapeDtypeStruct((batch, oc, _FINAL_HW, _FINAL_HW), jnp.float32),
        in_specs=[_SMEM] + [_VMEM] * 13,
        out_specs=_VMEM,
        scratch_shapes=[  # zero-padded (rows, (width+2)*chan) feature maps
            pltpu.VMEM((batch, 4, 4 * 64), jnp.float32),    # 2x2x64   (fc output)
            pltpu.VMEM((batch, 6, 6 * 32), jnp.float32),    # 4x4x32   (up1 output)
            pltpu.VMEM((batch, 10, 10 * 16), jnp.float32),  # 8x8x16   (up2 output)
            pltpu.VMEM((batch, 18, 18 * 8), jnp.float32),   # 16x16x8  (up3 output)
        ],
    )(plan['aw'], z, plan['w1'], plan['b1'], plan['w2'], plan['b2'],
      plan['wu1'], plan['bu1'], plan['wu2'], plan['bu2'],
      plan['wu3'], plan['bu3'], plan['wf'], plan['bf'])


# ----------------------------------------------------------------------------
# one-time weight folding (outside the per-call hot path)
# ----------------------------------------------------------------------------
# Assumed MixedUpsampling candidates:
#   branch A: nn.ConvTranspose2d(cin, cout, kernel_size=4, stride=2, padding=1)
#   branch B: nn.Upsample(scale=2, nearest) + nn.Conv2d(cin, cout, 3, padding=1)
# For output phase p (0/1) and low-res 3x3 tap d (0/1/2 <-> offset -1/0/+1):
_K_DECONV = ({0: 3, 1: 1}, {1: 2, 2: 0})                    # phase -> {tap: kernel index}
_K_NEAREST = ({0: (0,), 1: (1, 2)}, {1: (0, 1), 2: (2,)})   # phase -> {tap: kernel indices}


def _phase_tap_weight(up, py, px, dy, dx):
    """(Cin, Cout) contribution of low-res tap (dy, dx) to output phase (py, px)."""
    betas = jax.nn.softmax(up['beta'].astype(jnp.float32))
    ci, co = up['wt'].shape[0], up['wt'].shape[1]
    w = jnp.zeros((ci, co), jnp.float32)
    if dy in _K_DECONV[py] and dx in _K_DECONV[px]:
        w = w + betas[0] * up['wt'][:, :, _K_DECONV[py][dy], _K_DECONV[px][dx]]
    for ky in _K_NEAREST[py].get(dy, ()):
        for kx in _K_NEAREST[px].get(dx, ()):
            w = w + betas[1] * up['wc'][:, :, ky, kx].T
    return w


def _fold_mixed_up(up, wi):
    """MixedUpsampling -> per-dy block-Toeplitz row weights.

    Returns w: (3, (wi+2)*Cin, 2*wi*2*Cout), rows = (padded input col, cin),
    cols = (phase_y, out col, phase_x, cout), and the matching (1, N) bias.
    """
    ci, co = up['wt'].shape[0], up['wt'].shape[1]
    w = jnp.zeros((3, wi + 2, ci, 2, wi, 2, co), jnp.float32)
    for dy in range(3):
        for dx in range(3):
            shift = jnp.eye(wi + 2, wi, k=-dx, dtype=jnp.float32)   # 1 at (j+dx, j)
            for py in range(2):
                for px in range(2):
                    w = w.at[dy, :, :, py, :, px, :].add(
                        jnp.einsum('rj,ck->rcjk', shift,
                                   _phase_tap_weight(up, py, px, dy, dx)))
    w = w.reshape(3, (wi + 2) * ci, 2 * wi * 2 * co)
    betas = jax.nn.softmax(up['beta'].astype(jnp.float32))
    bias = betas[0] * up['bt'] + betas[1] * up['bc']
    bias = jnp.tile(bias, 2 * wi * 2).reshape(1, -1).astype(jnp.float32)
    return w, bias


def _fold_final(final_w, final_b, attn_w, attn_b, wi):
    """3x3 final conv + 1x1 attention conv -> (3, (wi+2)*ci, (oc+1)*wi) row weights."""
    oc, ci = final_w.shape[0], final_w.shape[1]
    w3 = jnp.zeros((3, wi + 2, ci, oc, wi), jnp.float32)
    for dy in range(3):
        for dx in range(3):
            shift = jnp.eye(wi + 2, wi, k=-dx, dtype=jnp.float32)
            w3 = w3.at[dy].add(jnp.einsum('rj,ck->rkcj', shift, final_w[:, :, dy, dx]))
    w3 = w3.reshape(3, (wi + 2) * ci, oc * wi)
    # the 1x1 attention conv is the centre tap (dy = 1, dx = 1)
    wat = jnp.zeros((3, wi + 2, ci, wi), jnp.float32).at[1].set(
        jnp.einsum('rj,k->rkj', jnp.eye(wi + 2, wi, k=-1, dtype=jnp.float32),
                   attn_w[0, :, 0, 0]))
    wat = wat.reshape(3, (wi + 2) * ci, wi)
    w = jnp.concatenate([w3, wat], axis=-1)
    b = jnp.concatenate([jnp.repeat(final_b.astype(jnp.float32), wi),
                         jnp.full((wi,), attn_b[0], jnp.float32)]).reshape(1, -1)
    return w, b


def prepare(params):
    """One-time folding of PyTorch-convention params into matmul-ready tensors."""
    aw = jnp.stack([jax.nn.softmax(params[k].astype(jnp.float32))
                    for k in ('alpha1', 'alpha2', 'alpha_up1', 'alpha_up2', 'alpha_up3')])
    hw = _INIT * _INIT * _HIDDEN
    # fc2 output columns permuted from PyTorch's (c, h, w) flattening to (h, w, c)
    w2 = (params['fc2_w'].T.reshape(-1, _HIDDEN, _INIT, _INIT)
          .transpose(0, 2, 3, 1).reshape(-1, hw))
    b2 = (params['fc2_b'].reshape(_HIDDEN, _INIT, _INIT)
          .transpose(1, 2, 0).reshape(1, hw))
    plan = dict(
        aw=aw.astype(jnp.float32),
        w1=params['fc1_w'].T.astype(jnp.float32),
        b1=params['fc1_b'].reshape(1, -1).astype(jnp.float32),
        w2=w2.astype(jnp.float32), b2=b2.astype(jnp.float32))
    for idx, (name, (wi, _ci, _co)) in enumerate(zip(('up1', 'up2', 'up3'), _STAGES), 1):
        w, b = _fold_mixed_up(params[name], wi)
        plan[f'wu{idx}'] = w
        plan[f'bu{idx}'] = b
    wf, bf = _fold_final(params['final_w'], params['final_b'],
                         params['attn_w'], params['attn_b'], _FINAL_HW)
    plan['wf'] = wf
    plan['bf'] = bf
    return plan


# ----------------------------------------------------------------------------
# pure-JAX f32 reference of the (assumed) NASNoiseDecoder forward
# ----------------------------------------------------------------------------
def _mixed_act_ref(x, alpha):
    w = jax.nn.softmax(alpha.astype(jnp.float32))
    return (w[0] * jax.nn.relu(x) + w[1] * jnp.tanh(x)
            + w[2] * jnp.where(x > 0, x, 0.2 * x) + w[3] * jax.nn.elu(x))


def _mixed_up_ref(x, up):
    betas = jax.nn.softmax(up['beta'].astype(jnp.float32))
    dn = ('NCHW', 'OIHW', 'NCHW')
    hp = jax.lax.Precision.HIGHEST
    # ConvTranspose2d(4, 2, 1) == lhs-dilated conv with the flipped kernel
    wt = jnp.flip(up['wt'].transpose(1, 0, 2, 3), axis=(2, 3))
    a = jax.lax.conv_general_dilated(x, wt, (1, 1), [(2, 2), (2, 2)],
                                     lhs_dilation=(2, 2), dimension_numbers=dn,
                                     precision=hp) + up['bt'][None, :, None, None]
    u = jnp.repeat(jnp.repeat(x, 2, axis=2), 2, axis=3)            # nearest x2
    b = jax.lax.conv_general_dilated(u, up['wc'], (1, 1), [(1, 1), (1, 1)],
                                     dimension_numbers=dn,
                                     precision=hp) + up['bc'][None, :, None, None]
    return betas[0] * a + betas[1] * b


def reference_forward(params, z):
    dn = ('NCHW', 'OIHW', 'NCHW')
    hp = jax.lax.Precision.HIGHEST
    x = _mixed_act_ref(jnp.dot(z, params['fc1_w'].T, precision=hp) + params['fc1_b'],
                       params['alpha1'])
    x = _mixed_act_ref(jnp.dot(x, params['fc2_w'].T, precision=hp) + params['fc2_b'],
                       params['alpha2'])
    x = x.reshape(-1, _HIDDEN, _INIT, _INIT)
    x = _mixed_act_ref(_mixed_up_ref(x, params['up1']), params['alpha_up1'])
    x = _mixed_act_ref(_mixed_up_ref(x, params['up2']), params['alpha_up2'])
    x = _mixed_act_ref(_mixed_up_ref(x, params['up3']), params['alpha_up3'])
    out = jnp.tanh(jax.lax.conv_general_dilated(
        x, params['final_w'], (1, 1), [(1, 1), (1, 1)], dimension_numbers=dn,
        precision=hp) + params['final_b'][None, :, None, None])
    attn = jax.nn.sigmoid(jax.lax.conv_general_dilated(
        x, params['attn_w'], (1, 1), [(0, 0), (0, 0)], dimension_numbers=dn,
        precision=hp) + params['attn_b'][None, :, None, None])
    return out * attn


# ----------------------------------------------------------------------------
# parameter init (deterministic, synthetic; PyTorch layout conventions)
# ----------------------------------------------------------------------------
def _mixed_up_params(key, cin, cout):
    k = jax.random.split(key, 5)
    return dict(
        wt=0.1 * jax.random.normal(k[0], (cin, cout, 4, 4), jnp.float32),   # ConvTranspose2d
        bt=0.01 * jax.random.normal(k[1], (cout,), jnp.float32),
        wc=0.1 * jax.random.normal(k[2], (cout, cin, 3, 3), jnp.float32),   # Conv2d
        bc=0.01 * jax.random.normal(k[3], (cout,), jnp.float32),
        beta=jax.random.normal(k[4], (2,), jnp.float32),                    # architecture params
    )


def init_params(key, latent_dim=10, output_channels=1):
    k = jax.random.split(key, 16)
    h = _HIDDEN
    return dict(
        fc1_w=0.1 * jax.random.normal(k[0], (128, latent_dim), jnp.float32),
        fc1_b=0.01 * jax.random.normal(k[1], (128,), jnp.float32),
        alpha1=jax.random.normal(k[2], (4,), jnp.float32),
        fc2_w=0.1 * jax.random.normal(k[3], (h * _INIT * _INIT, 128), jnp.float32),
        fc2_b=0.01 * jax.random.normal(k[4], (h * _INIT * _INIT,), jnp.float32),
        alpha2=jax.random.normal(k[5], (4,), jnp.float32),
        up1=_mixed_up_params(k[6], h, h // 2),
        alpha_up1=jax.random.normal(k[7], (4,), jnp.float32),
        up2=_mixed_up_params(k[8], h // 2, h // 4),
        alpha_up2=jax.random.normal(k[9], (4,), jnp.float32),
        up3=_mixed_up_params(k[10], h // 4, h // 8),
        alpha_up3=jax.random.normal(k[11], (4,), jnp.float32),
        final_w=0.1 * jax.random.normal(k[12], (output_channels, h // 8, 3, 3), jnp.float32),
        final_b=0.01 * jax.random.normal(k[13], (output_channels,), jnp.float32),
        attn_w=0.1 * jax.random.normal(k[14], (1, h // 8, 1, 1), jnp.float32),
        attn_b=0.01 * jax.random.normal(k[15], (1,), jnp.float32),
    )


# ----------------------------------------------------------------------------
if __name__ == "__main__":
    latent_dim = 10
    batch = 2

    key = jax.random.PRNGKey(0)
    pkey, zkey = jax.random.split(key)
    params = init_params(pkey, latent_dim=latent_dim, output_channels=1)
    plan = prepare(params)                                   # one-time weight folding
    z = jax.random.normal(zkey, (batch, latent_dim), jnp.float32)

    cleaned = jax.block_until_ready(nas_noise_decoder(plan, z))

    assert cleaned.shape == (batch, 1, 16, 16), cleaned.shape
    assert cleaned.dtype == jnp.float32
    assert bool(jnp.all(jnp.isfinite(cleaned)))

    # tolerance check against the pure-JAX f32 reference (validates the folding)
    ref = reference_forward(params, z)
    err = float(jnp.max(jnp.abs(cleaned - ref)))
    assert err < 5e-2, f"kernel/reference mismatch: max abs err = {err}"

    print("KERNEL_OK")
</pallas_src>

<mosaic_0001>
module attributes {stable_mosaic.version = 11 : i64} {
  func.func @_decoder_kernel(%arg0: memref<5x4xf32, #tpu.memory_space<smem>>, %arg1: memref<2x10xf32, #tpu.memory_space<vmem>>, %arg2: memref<10x128xf32, #tpu.memory_space<vmem>>, %arg3: memref<1x128xf32, #tpu.memory_space<vmem>>, %arg4: memref<128x256xf32, #tpu.memory_space<vmem>>, %arg5: memref<1x256xf32, #tpu.memory_space<vmem>>, %arg6: memref<3x256x256xf32, #tpu.memory_space<vmem>>, %arg7: memref<1x256xf32, #tpu.memory_space<vmem>>, %arg8: memref<3x192x256xf32, #tpu.memory_space<vmem>>, %arg9: memref<1x256xf32, #tpu.memory_space<vmem>>, %arg10: memref<3x160x256xf32, #tpu.memory_space<vmem>>, %arg11: memref<1x256xf32, #tpu.memory_space<vmem>>, %arg12: memref<3x144x32xf32, #tpu.memory_space<vmem>>, %arg13: memref<1x32xf32, #tpu.memory_space<vmem>>, %arg14: memref<2x1x16x16xf32, #tpu.memory_space<vmem>>, %arg15: memref<2x4x256xf32, #tpu.memory_space<vmem>>, %arg16: memref<2x6x192xf32, #tpu.memory_space<vmem>>, %arg17: memref<2x10x160xf32, #tpu.memory_space<vmem>>, %arg18: memref<2x18x144xf32, #tpu.memory_space<vmem>>) attributes {dimension_semantics = [], scalar_prefetch = 0 : i64, scratch_operands = 4 : i64, tpu.core_type = #tpu.core_type<tc>} {
    %c0 = arith.constant 0 : index
    %c0_0 = arith.constant 0 : index
    %0 = memref.load %arg0[%c0, %c0_0] : memref<5x4xf32, #tpu.memory_space<smem>>
    %c0_1 = arith.constant 0 : index
    %c1 = arith.constant 1 : index
    %1 = memref.load %arg0[%c0_1, %c1] : memref<5x4xf32, #tpu.memory_space<smem>>
    %c0_2 = arith.constant 0 : index
    %c2 = arith.constant 2 : index
    %2 = memref.load %arg0[%c0_2, %c2] : memref<5x4xf32, #tpu.memory_space<smem>>
    %c0_3 = arith.constant 0 : index
    %c3 = arith.constant 3 : index
    %3 = memref.load %arg0[%c0_3, %c3] : memref<5x4xf32, #tpu.memory_space<smem>>
    %c1_4 = arith.constant 1 : index
    %c0_5 = arith.constant 0 : index
    %4 = memref.load %arg0[%c1_4, %c0_5] : memref<5x4xf32, #tpu.memory_space<smem>>
    %c1_6 = arith.constant 1 : index
    %c1_7 = arith.constant 1 : index
    %5 = memref.load %arg0[%c1_6, %c1_7] : memref<5x4xf32, #tpu.memory_space<smem>>
    %c1_8 = arith.constant 1 : index
    %c2_9 = arith.constant 2 : index
    %6 = memref.load %arg0[%c1_8, %c2_9] : memref<5x4xf32, #tpu.memory_space<smem>>
    %c1_10 = arith.constant 1 : index
    %c3_11 = arith.constant 3 : index
    %7 = memref.load %arg0[%c1_10, %c3_11] : memref<5x4xf32, #tpu.memory_space<smem>>
    %c2_12 = arith.constant 2 : index
    %c0_13 = arith.constant 0 : index
    %8 = memref.load %arg0[%c2_12, %c0_13] : memref<5x4xf32, #tpu.memory_space<smem>>
    %c2_14 = arith.constant 2 : index
    %c1_15 = arith.constant 1 : index
    %9 = memref.load %arg0[%c2_14, %c1_15] : memref<5x4xf32, #tpu.memory_space<smem>>
    %c2_16 = arith.constant 2 : index
    %c2_17 = arith.constant 2 : index
    %10 = memref.load %arg0[%c2_16, %c2_17] : memref<5x4xf32, #tpu.memory_space<smem>>
    %c2_18 = arith.constant 2 : index
    %c3_19 = arith.constant 3 : index
    %11 = memref.load %arg0[%c2_18, %c3_19] : memref<5x4xf32, #tpu.memory_space<smem>>
    %c3_20 = arith.constant 3 : index
    %c0_21 = arith.constant 0 : index
    %12 = memref.load %arg0[%c3_20, %c0_21] : memref<5x4xf32, #tpu.memory_space<smem>>
    %c3_22 = arith.constant 3 : index
    %c1_23 = arith.constant 1 : index
    %13 = memref.load %arg0[%c3_22, %c1_23] : memref<5x4xf32, #tpu.memory_space<smem>>
    %c3_24 = arith.constant 3 : index
    %c2_25 = arith.constant 2 : index
    %14 = memref.load %arg0[%c3_24, %c2_25] : memref<5x4xf32, #tpu.memory_space<smem>>
    %c3_26 = arith.constant 3 : index
    %c3_27 = arith.constant 3 : index
    %15 = memref.load %arg0[%c3_26, %c3_27] : memref<5x4xf32, #tpu.memory_space<smem>>
    %c4 = arith.constant 4 : index
    %c0_28 = arith.constant 0 : index
    %16 = memref.load %arg0[%c4, %c0_28] : memref<5x4xf32, #tpu.memory_space<smem>>
    %c4_29 = arith.constant 4 : index
    %c1_30 = arith.constant 1 : index
    %17 = memref.load %arg0[%c4_29, %c1_30] : memref<5x4xf32, #tpu.memory_space<smem>>
    %c4_31 = arith.constant 4 : index
    %c2_32 = arith.constant 2 : index
    %18 = memref.load %arg0[%c4_31, %c2_32] : memref<5x4xf32, #tpu.memory_space<smem>>
    %c4_33 = arith.constant 4 : index
    %c3_34 = arith.constant 3 : index
    %19 = memref.load %arg0[%c4_33, %c3_34] : memref<5x4xf32, #tpu.memory_space<smem>>
    %c0_35 = arith.constant 0 : index
    %c0_36 = arith.constant 0 : index
    %20 = vector.load %arg1[%c0_35, %c0_36] : memref<2x10xf32, #tpu.memory_space<vmem>>, vector<2x10xf32>
    %c0_37 = arith.constant 0 : index
    %c0_38 = arith.constant 0 : index
    %21 = vector.load %arg2[%c0_37, %c0_38] : memref<10x128xf32, #tpu.memory_space<vmem>>, vector<10x128xf32>
    %cst = arith.constant dense<0.000000e+00> : vector<2x128xf32>
    %22 = tpu.matmul %20, %21, %cst {dimension_numbers = #tpu.dot_dimension_numbers<[1], [0], [0], [1], [0, 0, 1, 1], [], []>} : vector<2x10xf32>, vector<10x128xf32>, vector<2x128xf32> -> vector<2x128xf32>
    %c0_39 = arith.constant 0 : index
    %c0_40 = arith.constant 0 : index
    %23 = vector.load %arg3[%c0_39, %c0_40] : memref<1x128xf32, #tpu.memory_space<vmem>>, vector<1x128xf32>
    %24 = vector.broadcast %23 : vector<1x128xf32> to vector<2x128xf32>
    %25 = arith.addf %22, %24 : vector<2x128xf32>
    %cst_41 = arith.constant 0.000000e+00 : f32
    %26 = vector.broadcast %cst_41 : f32 to vector<2x128xf32>
    %27 = arith.maximumf %25, %26 : vector<2x128xf32>
    %28 = vector.broadcast %0 : f32 to vector<2x128xf32>
    %29 = arith.mulf %28, %27 : vector<2x128xf32>
    %30 = math.tanh %25 : vector<2x128xf32>
    %31 = vector.broadcast %1 : f32 to vector<2x128xf32>
    %32 = arith.mulf %31, %30 : vector<2x128xf32>
    %33 = arith.addf %29, %32 : vector<2x128xf32>
    %cst_42 = arith.constant 0.000000e+00 : f32
    %34 = vector.broadcast %cst_42 : f32 to vector<2x128xf32>
    %35 = arith.cmpf ogt, %25, %34 : vector<2x128xf32>
    %cst_43 = arith.constant 2.000000e-01 : f32
    %36 = vector.broadcast %cst_43 : f32 to vector<2x128xf32>
    %37 = arith.mulf %36, %25 : vector<2x128xf32>
    %38 = arith.select %35, %25, %37 : vector<2x128xi1>, vector<2x128xf32>
    %39 = vector.broadcast %2 : f32 to vector<2x128xf32>
    %40 = arith.mulf %39, %38 : vector<2x128xf32>
    %41 = arith.addf %33, %40 : vector<2x128xf32>
    %cst_44 = arith.constant 0.000000e+00 : f32
    %42 = vector.broadcast %cst_44 : f32 to vector<2x128xf32>
    %43 = arith.cmpf ogt, %25, %42 : vector<2x128xf32>
    %cst_45 = arith.constant 0.000000e+00 : f32
    %44 = vector.broadcast %cst_45 : f32 to vector<2x128xf32>
    %45 = arith.minimumf %25, %44 : vector<2x128xf32>
    %46 = math.exp %45 : vector<2x128xf32>
    %cst_46 = arith.constant 1.000000e+00 : f32
    %47 = vector.broadcast %cst_46 : f32 to vector<2x128xf32>
    %48 = arith.subf %46, %47 : vector<2x128xf32>
    %49 = arith.select %43, %25, %48 : vector<2x128xi1>, vector<2x128xf32>
    %50 = vector.broadcast %3 : f32 to vector<2x128xf32>
    %51 = arith.mulf %50, %49 : vector<2x128xf32>
    %52 = arith.addf %41, %51 : vector<2x128xf32>
    %c0_47 = arith.constant 0 : index
    %c0_48 = arith.constant 0 : index
    %53 = vector.load %arg4[%c0_47, %c0_48] : memref<128x256xf32, #tpu.memory_space<vmem>>, vector<128x256xf32>
    %cst_49 = arith.constant dense<0.000000e+00> : vector<2x256xf32>
    %54 = tpu.matmul %52, %53, %cst_49 {dimension_numbers = #tpu.dot_dimension_numbers<[1], [0], [0], [1], [0, 0, 1, 1], [], []>} : vector<2x128xf32>, vector<128x256xf32>, vector<2x256xf32> -> vector<2x256xf32>
    %c0_50 = arith.constant 0 : index
    %c0_51 = arith.constant 0 : index
    %55 = vector.load %arg5[%c0_50, %c0_51] : memref<1x256xf32, #tpu.memory_space<vmem>>, vector<1x256xf32>
    %56 = vector.broadcast %55 : vector<1x256xf32> to vector<2x256xf32>
    %57 = arith.addf %54, %56 : vector<2x256xf32>
    %cst_52 = arith.constant 0.000000e+00 : f32
    %58 = vector.broadcast %cst_52 : f32 to vector<2x256xf32>
    %59 = arith.maximumf %57, %58 : vector<2x256xf32>
    %60 = vector.broadcast %4 : f32 to vector<2x256xf32>
    %61 = arith.mulf %60, %59 : vector<2x256xf32>
    %62 = math.tanh %57 : vector<2x256xf32>
    %63 = vector.broadcast %5 : f32 to vector<2x256xf32>
    %64 = arith.mulf %63, %62 : vector<2x256xf32>
    %65 = arith.addf %61, %64 : vector<2x256xf32>
    %cst_53 = arith.constant 0.000000e+00 : f32
    %66 = vector.broadcast %cst_53 : f32 to vector<2x256xf32>
    %67 = arith.cmpf ogt, %57, %66 : vector<2x256xf32>
    %cst_54 = arith.constant 2.000000e-01 : f32
    %68 = vector.broadcast %cst_54 : f32 to vector<2x256xf32>
    %69 = arith.mulf %68, %57 : vector<2x256xf32>
    %70 = arith.select %67, %57, %69 : vector<2x256xi1>, vector<2x256xf32>
    %71 = vector.broadcast %6 : f32 to vector<2x256xf32>
    %72 = arith.mulf %71, %70 : vector<2x256xf32>
    %73 = arith.addf %65, %72 : vector<2x256xf32>
    %cst_55 = arith.constant 0.000000e+00 : f32
    %74 = vector.broadcast %cst_55 : f32 to vector<2x256xf32>
    %75 = arith.cmpf ogt, %57, %74 : vector<2x256xf32>
    %cst_56 = arith.constant 0.000000e+00 : f32
    %76 = vector.broadcast %cst_56 : f32 to vector<2x256xf32>
    %77 = arith.minimumf %57, %76 : vector<2x256xf32>
    %78 = math.exp %77 : vector<2x256xf32>
    %cst_57 = arith.constant 1.000000e+00 : f32
    %79 = vector.broadcast %cst_57 : f32 to vector<2x256xf32>
    %80 = arith.subf %78, %79 : vector<2x256xf32>
    %81 = arith.select %75, %57, %80 : vector<2x256xi1>, vector<2x256xf32>
    %82 = vector.broadcast %7 : f32 to vector<2x256xf32>
    %83 = arith.mulf %82, %81 : vector<2x256xf32>
    %84 = arith.addf %73, %83 : vector<2x256xf32>
    %cst_58 = arith.constant 0.000000e+00 : f32
    %85 = vector.broadcast %cst_58 : f32 to vector<2x4x256xf32>
    %c0_59 = arith.constant 0 : index
    %c0_60 = arith.constant 0 : index
    %c0_61 = arith.constant 0 : index
    %86 = vector.load %arg15[%c0_59, %c0_60, %c0_61] : memref<2x4x256xf32, #tpu.memory_space<vmem>>, vector<2x4x256xf32>
    tpu.vector_store %arg15[%c0_59, %c0_60, %c0_61], %85 {strides = array<i32>} : memref<2x4x256xf32, #tpu.memory_space<vmem>>, vector<2x4x256xf32>,
    %cst_62 = arith.constant 0.000000e+00 : f32
    %87 = vector.broadcast %cst_62 : f32 to vector<2x6x192xf32>
    %c0_63 = arith.constant 0 : index
    %c0_64 = arith.constant 0 : index
    %c0_65 = arith.constant 0 : index
    %88 = vector.load %arg16[%c0_63, %c0_64, %c0_65] : memref<2x6x192xf32, #tpu.memory_space<vmem>>, vector<2x6x192xf32>
    tpu.vector_store %arg16[%c0_63, %c0_64, %c0_65], %87 {strides = array<i32>} : memref<2x6x192xf32, #tpu.memory_space<vmem>>, vector<2x6x192xf32>,
    %cst_66 = arith.constant 0.000000e+00 : f32
    %89 = vector.broadcast %cst_66 : f32 to vector<2x10x160xf32>
    %c0_67 = arith.constant 0 : index
    %c0_68 = arith.constant 0 : index
    %c0_69 = arith.constant 0 : index
    %90 = vector.load %arg17[%c0_67, %c0_68, %c0_69] : memref<2x10x160xf32, #tpu.memory_space<vmem>>, vector<2x10x160xf32>
    tpu.vector_store %arg17[%c0_67, %c0_68, %c0_69], %89 {strides = array<i32>} : memref<2x10x160xf32, #tpu.memory_space<vmem>>, vector<2x10x160xf32>,
    %cst_70 = arith.constant 0.000000e+00 : f32
    %91 = vector.broadcast %cst_70 : f32 to vector<2x18x144xf32>
    %c0_71 = arith.constant 0 : index
    %c0_72 = arith.constant 0 : index
    %c0_73 = arith.constant 0 : index
    %92 = vector.load %arg18[%c0_71, %c0_72, %c0_73] : memref<2x18x144xf32, #tpu.memory_space<vmem>>, vector<2x18x144xf32>
    tpu.vector_store %arg18[%c0_71, %c0_72, %c0_73], %91 {strides = array<i32>} : memref<2x18x144xf32, #tpu.memory_space<vmem>>, vector<2x18x144xf32>,
    %93 = vector.extract_strided_slice %84 {offsets = [0, 0], sizes = [1, 128], strides = [1, 1]} : vector<2x256xf32> to vector<1x128xf32>
    %c0_74 = arith.constant 0 : index
    %c1_75 = arith.constant 1 : index
    %c64 = arith.constant 64 : index
    %94 = vector.load %arg15[%c0_74, %c1_75, %c64] : memref<2x4x256xf32, #tpu.memory_space<vmem>>, vector<1x1x128xf32>
    %95 = vector.shape_cast %94 : vector<1x1x128xf32> to vector<1x128xf32>
    %96 = vector.shape_cast %93 : vector<1x128xf32> to vector<1x1x128xf32>
    tpu.vector_store %arg15[%c0_74, %c1_75, %c64], %96 {strides = array<i32>} : memref<2x4x256xf32, #tpu.memory_space<vmem>>, vector<1x1x128xf32>,
    %97 = vector.extract_strided_slice %84 {offsets = [0, 128], sizes = [1, 128], strides = [1, 1]} : vector<2x256xf32> to vector<1x128xf32>
    %c0_76 = arith.constant 0 : index
    %c2_77 = arith.constant 2 : index
    %c64_78 = arith.constant 64 : index
    %98 = vector.load %arg15[%c0_76, %c2_77, %c64_78] : memref<2x4x256xf32, #tpu.memory_space<vmem>>, vector<1x1x128xf32>
    %99 = vector.shape_cast %98 : vector<1x1x128xf32> to vector<1x128xf32>
    %100 = vector.shape_cast %97 : vector<1x128xf32> to vector<1x1x128xf32>
    tpu.vector_store %arg15[%c0_76, %c2_77, %c64_78], %100 {strides = array<i32>} : memref<2x4x256xf32, #tpu.memory_space<vmem>>, vector<1x1x128xf32>,
    %101 = vector.extract_strided_slice %84 {offsets = [1, 0], sizes = [1, 128], strides = [1, 1]} : vector<2x256xf32> to vector<1x128xf32>
    %c1_79 = arith.constant 1 : index
    %c1_80 = arith.constant 1 : index
    %c64_81 = arith.constant 64 : index
    %102 = vector.load %arg15[%c1_79, %c1_80, %c64_81] : memref<2x4x256xf32, #tpu.memory_space<vmem>>, vector<1x1x128xf32>
    %103 = vector.shape_cast %102 : vector<1x1x128xf32> to vector<1x128xf32>
    %104 = vector.shape_cast %101 : vector<1x128xf32> to vector<1x1x128xf32>
    tpu.vector_store %arg15[%c1_79, %c1_80, %c64_81], %104 {strides = array<i32>} : memref<2x4x256xf32, #tpu.memory_space<vmem>>, vector<1x1x128xf32>,
    %105 = vector.extract_strided_slice %84 {offsets = [1, 128], sizes = [1, 128], strides = [1, 1]} : vector<2x256xf32> to vector<1x128xf32>
    %c1_82 = arith.constant 1 : index
    %c2_83 = arith.constant 2 : index
    %c64_84 = arith.constant 64 : index
    %106 = vector.load %arg15[%c1_82, %c2_83, %c64_84] : memref<2x4x256xf32, #tpu.memory_space<vmem>>, vector<1x1x128xf32>
    %107 = vector.shape_cast %106 : vector<1x1x128xf32> to vector<1x128xf32>
    %108 = vector.shape_cast %105 : vector<1x128xf32> to vector<1x1x128xf32>
    tpu.vector_store %arg15[%c1_82, %c2_83, %c64_84], %108 {strides = array<i32>} : memref<2x4x256xf32, #tpu.memory_space<vmem>>, vector<1x1x128xf32>,
    %c0_85 = arith.constant 0 : index
    %c0_86 = arith.constant 0 : index
    %c0_87 = arith.constant 0 : index
    %109 = vector.load %arg15[%c0_85, %c0_86, %c0_87] : memref<2x4x256xf32, #tpu.memory_space<vmem>>, vector<1x2x256xf32>
    %110 = vector.shape_cast %109 : vector<1x2x256xf32> to vector<2x256xf32>
    %c0_88 = arith.constant 0 : index
    %c0_89 = arith.constant 0 : index
    %c0_90 = arith.constant 0 : index
    %111 = vector.load %arg6[%c0_88, %c0_89, %c0_90] : memref<3x256x256xf32, #tpu.memory_space<vmem>>, vector<1x256x256xf32>
    %112 = vector.shape_cast %111 : vector<1x256x256xf32> to vector<256x256xf32>
    %cst_91 = arith.constant dense<0.000000e+00> : vector<2x256xf32>
    %113 = tpu.matmul %110, %112, %cst_91 {dimension_numbers = #tpu.dot_dimension_numbers<[1], [0], [0], [1], [0, 0, 1, 1], [], []>} : vector<2x256xf32>, vector<256x256xf32>, vector<2x256xf32> -> vector<2x256xf32>
    %c0_92 = arith.constant 0 : index
    %c1_93 = arith.constant 1 : index
    %c0_94 = arith.constant 0 : index
    %114 = vector.load %arg15[%c0_92, %c1_93, %c0_94] : memref<2x4x256xf32, #tpu.memory_space<vmem>>, vector<1x2x256xf32>
    %115 = vector.shape_cast %114 : vector<1x2x256xf32> to vector<2x256xf32>
    %c1_95 = arith.constant 1 : index
    %c0_96 = arith.constant 0 : index
    %c0_97 = arith.constant 0 : index
    %116 = vector.load %arg6[%c1_95, %c0_96, %c0_97] : memref<3x256x256xf32, #tpu.memory_space<vmem>>, vector<1x256x256xf32>
    %117 = vector.shape_cast %116 : vector<1x256x256xf32> to vector<256x256xf32>
    %cst_98 = arith.constant dense<0.000000e+00> : vector<2x256xf32>
    %118 = tpu.matmul %115, %117, %cst_98 {dimension_numbers = #tpu.dot_dimension_numbers<[1], [0], [0], [1], [0, 0, 1, 1], [], []>} : vector<2x256xf32>, vector<256x256xf32>, vector<2x256xf32> -> vector<2x256xf32>
    %119 = arith.addf %113, %118 : vector<2x256xf32>
    %c0_99 = arith.constant 0 : index
    %c2_100 = arith.constant 2 : index
    %c0_101 = arith.constant 0 : index
    %120 = vector.load %arg15[%c0_99, %c2_100, %c0_101] : memref<2x4x256xf32, #tpu.memory_space<vmem>>, vector<1x2x256xf32>
    %121 = vector.shape_cast %120 : vector<1x2x256xf32> to vector<2x256xf32>
    %c2_102 = arith.constant 2 : index
    %c0_103 = arith.constant 0 : index
    %c0_104 = arith.constant 0 : index
    %122 = vector.load %arg6[%c2_102, %c0_103, %c0_104] : memref<3x256x256xf32, #tpu.memory_space<vmem>>, vector<1x256x256xf32>
    %123 = vector.shape_cast %122 : vector<1x256x256xf32> to vector<256x256xf32>
    %cst_105 = arith.constant dense<0.000000e+00> : vector<2x256xf32>
    %124 = tpu.matmul %121, %123, %cst_105 {dimension_numbers = #tpu.dot_dimension_numbers<[1], [0], [0], [1], [0, 0, 1, 1], [], []>} : vector<2x256xf32>, vector<256x256xf32>, vector<2x256xf32> -> vector<2x256xf32>
    %125 = arith.addf %119, %124 : vector<2x256xf32>
    %c0_106 = arith.constant 0 : index
    %c0_107 = arith.constant 0 : index
    %126 = vector.load %arg7[%c0_106, %c0_107] : memref<1x256xf32, #tpu.memory_space<vmem>>, vector<1x256xf32>
    %127 = vector.broadcast %126 : vector<1x256xf32> to vector<2x256xf32>
    %128 = arith.addf %125, %127 : vector<2x256xf32>
    %cst_108 = arith.constant 0.000000e+00 : f32
    %129 = vector.broadcast %cst_108 : f32 to vector<2x256xf32>
    %130 = arith.maximumf %128, %129 : vector<2x256xf32>
    %131 = vector.broadcast %8 : f32 to vector<2x256xf32>
    %132 = arith.mulf %131, %130 : vector<2x256xf32>
    %133 = math.tanh %128 : vector<2x256xf32>
    %134 = vector.broadcast %9 : f32 to vector<2x256xf32>
    %135 = arith.mulf %134, %133 : vector<2x256xf32>
    %136 = arith.addf %132, %135 : vector<2x256xf32>
    %cst_109 = arith.constant 0.000000e+00 : f32
    %137 = vector.broadcast %cst_109 : f32 to vector<2x256xf32>
    %138 = arith.cmpf ogt, %128, %137 : vector<2x256xf32>
    %cst_110 = arith.constant 2.000000e-01 : f32
    %139 = vector.broadcast %cst_110 : f32 to vector<2x256xf32>
    %140 = arith.mulf %139, %128 : vector<2x256xf32>
    %141 = arith.select %138, %128, %140 : vector<2x256xi1>, vector<2x256xf32>
    %142 = vector.broadcast %10 : f32 to vector<2x256xf32>
    %143 = arith.mulf %142, %141 : vector<2x256xf32>
    %144 = arith.addf %136, %143 : vector<2x256xf32>
    %cst_111 = arith.constant 0.000000e+00 : f32
    %145 = vector.broadcast %cst_111 : f32 to vector<2x256xf32>
    %146 = arith.cmpf ogt, %128, %145 : vector<2x256xf32>
    %cst_112 = arith.constant 0.000000e+00 : f32
    %147 = vector.broadcast %cst_112 : f32 to vector<2x256xf32>
    %148 = arith.minimumf %128, %147 : vector<2x256xf32>
    %149 = math.exp %148 : vector<2x256xf32>
    %cst_113 = arith.constant 1.000000e+00 : f32
    %150 = vector.broadcast %cst_113 : f32 to vector<2x256xf32>
    %151 = arith.subf %149, %150 : vector<2x256xf32>
    %152 = arith.select %146, %128, %151 : vector<2x256xi1>, vector<2x256xf32>
    %153 = vector.broadcast %11 : f32 to vector<2x256xf32>
    %154 = arith.mulf %153, %152 : vector<2x256xf32>
    %155 = arith.addf %144, %154 : vector<2x256xf32>
    %156 = vector.extract_strided_slice %155 {offsets = [0, 0], sizes = [1, 128], strides = [1, 1]} : vector<2x256xf32> to vector<1x128xf32>
    %c0_114 = arith.constant 0 : index
    %c1_115 = arith.constant 1 : index
    %c32 = arith.constant 32 : index
    %157 = vector.load %arg16[%c0_114, %c1_115, %c32] : memref<2x6x192xf32, #tpu.memory_space<vmem>>, vector<1x1x128xf32>
    %158 = vector.shape_cast %157 : vector<1x1x128xf32> to vector<1x128xf32>
    %159 = vector.shape_cast %156 : vector<1x128xf32> to vector<1x1x128xf32>
    tpu.vector_store %arg16[%c0_114, %c1_115, %c32], %159 {strides = array<i32>} : memref<2x6x192xf32, #tpu.memory_space<vmem>>, vector<1x1x128xf32>,
    %160 = vector.extract_strided_slice %155 {offsets = [0, 128], sizes = [1, 128], strides = [1, 1]} : vector<2x256xf32> to vector<1x128xf32>
    %c0_116 = arith.constant 0 : index
    %c2_117 = arith.constant 2 : index
    %c32_118 = arith.constant 32 : index
    %161 = vector.load %arg16[%c0_116, %c2_117, %c32_118] : memref<2x6x192xf32, #tpu.memory_space<vmem>>, vector<1x1x128xf32>
    %162 = vector.shape_cast %161 : vector<1x1x128xf32> to vector<1x128xf32>
    %163 = vector.shape_cast %160 : vector<1x128xf32> to vector<1x1x128xf32>
    tpu.vector_store %arg16[%c0_116, %c2_117, %c32_118], %163 {strides = array<i32>} : memref<2x6x192xf32, #tpu.memory_space<vmem>>, vector<1x1x128xf32>,
    %164 = vector.extract_strided_slice %155 {offsets = [1, 0], sizes = [1, 128], strides = [1, 1]} : vector<2x256xf32> to vector<1x128xf32>
    %c0_119 = arith.constant 0 : index
    %c3_120 = arith.constant 3 : index
    %c32_121 = arith.constant 32 : index
    %165 = vector.load %arg16[%c0_119, %c3_120, %c32_121] : memref<2x6x192xf32, #tpu.memory_space<vmem>>, vector<1x1x128xf32>
    %166 = vector.shape_cast %165 : vector<1x1x128xf32> to vector<1x128xf32>
    %167 = vector.shape_cast %164 : vector<1x128xf32> to vector<1x1x128xf32>
    tpu.vector_store %arg16[%c0_119, %c3_120, %c32_121], %167 {strides = array<i32>} : memref<2x6x192xf32, #tpu.memory_space<vmem>>, vector<1x1x128xf32>,
    %168 = vector.extract_strided_slice %155 {offsets = [1, 128], sizes = [1, 128], strides = [1, 1]} : vector<2x256xf32> to vector<1x128xf32>
    %c0_122 = arith.constant 0 : index
    %c4_123 = arith.constant 4 : index
    %c32_124 = arith.constant 32 : index
    %169 = vector.load %arg16[%c0_122, %c4_123, %c32_124] : memref<2x6x192xf32, #tpu.memory_space<vmem>>, vector<1x1x128xf32>
    %170 = vector.shape_cast %169 : vector<1x1x128xf32> to vector<1x128xf32>
    %171 = vector.shape_cast %168 : vector<1x128xf32> to vector<1x1x128xf32>
    tpu.vector_store %arg16[%c0_122, %c4_123, %c32_124], %171 {strides = array<i32>} : memref<2x6x192xf32, #tpu.memory_space<vmem>>, vector<1x1x128xf32>,
    %c1_125 = arith.constant 1 : index
    %c0_126 = arith.constant 0 : index
    %c0_127 = arith.constant 0 : index
    %172 = vector.load %arg15[%c1_125, %c0_126, %c0_127] : memref<2x4x256xf32, #tpu.memory_space<vmem>>, vector<1x2x256xf32>
    %173 = vector.shape_cast %172 : vector<1x2x256xf32> to vector<2x256xf32>
    %c0_128 = arith.constant 0 : index
    %c0_129 = arith.constant 0 : index
    %c0_130 = arith.constant 0 : index
    %174 = vector.load %arg6[%c0_128, %c0_129, %c0_130] : memref<3x256x256xf32, #tpu.memory_space<vmem>>, vector<1x256x256xf32>
    %175 = vector.shape_cast %174 : vector<1x256x256xf32> to vector<256x256xf32>
    %cst_131 = arith.constant dense<0.000000e+00> : vector<2x256xf32>
    %176 = tpu.matmul %173, %175, %cst_131 {dimension_numbers = #tpu.dot_dimension_numbers<[1], [0], [0], [1], [0, 0, 1, 1], [], []>} : vector<2x256xf32>, vector<256x256xf32>, vector<2x256xf32> -> vector<2x256xf32>
    %c1_132 = arith.constant 1 : index
    %c1_133 = arith.constant 1 : index
    %c0_134 = arith.constant 0 : index
    %177 = vector.load %arg15[%c1_132, %c1_133, %c0_134] : memref<2x4x256xf32, #tpu.memory_space<vmem>>, vector<1x2x256xf32>
    %178 = vector.shape_cast %177 : vector<1x2x256xf32> to vector<2x256xf32>
    %c1_135 = arith.constant 1 : index
    %c0_136 = arith.constant 0 : index
    %c0_137 = arith.constant 0 : index
    %179 = vector.load %arg6[%c1_135, %c0_136, %c0_137] : memref<3x256x256xf32, #tpu.memory_space<vmem>>, vector<1x256x256xf32>
    %180 = vector.shape_cast %179 : vector<1x256x256xf32> to vector<256x256xf32>
    %cst_138 = arith.constant dense<0.000000e+00> : vector<2x256xf32>
    %181 = tpu.matmul %178, %180, %cst_138 {dimension_numbers = #tpu.dot_dimension_numbers<[1], [0], [0], [1], [0, 0, 1, 1], [], []>} : vector<2x256xf32>, vector<256x256xf32>, vector<2x256xf32> -> vector<2x256xf32>
    %182 = arith.addf %176, %181 : vector<2x256xf32>
    %c1_139 = arith.constant 1 : index
    %c2_140 = arith.constant 2 : index
    %c0_141 = arith.constant 0 : index
    %183 = vector.load %arg15[%c1_139, %c2_140, %c0_141] : memref<2x4x256xf32, #tpu.memory_space<vmem>>, vector<1x2x256xf32>
    %184 = vector.shape_cast %183 : vector<1x2x256xf32> to vector<2x256xf32>
    %c2_142 = arith.constant 2 : index
    %c0_143 = arith.constant 0 : index
    %c0_144 = arith.constant 0 : index
    %185 = vector.load %arg6[%c2_142, %c0_143, %c0_144] : memref<3x256x256xf32, #tpu.memory_space<vmem>>, vector<1x256x256xf32>
    %186 = vector.shape_cast %185 : vector<1x256x256xf32> to vector<256x256xf32>
    %cst_145 = arith.constant dense<0.000000e+00> : vector<2x256xf32>
    %187 = tpu.matmul %184, %186, %cst_145 {dimension_numbers = #tpu.dot_dimension_numbers<[1], [0], [0], [1], [0, 0, 1, 1], [], []>} : vector<2x256xf32>, vector<256x256xf32>, vector<2x256xf32> -> vector<2x256xf32>
    %188 = arith.addf %182, %187 : vector<2x256xf32>
    %c0_146 = arith.constant 0 : index
    %c0_147 = arith.constant 0 : index
    %189 = vector.load %arg7[%c0_146, %c0_147] : memref<1x256xf32, #tpu.memory_space<vmem>>, vector<1x256xf32>
    %190 = vector.broadcast %189 : vector<1x256xf32> to vector<2x256xf32>
    %191 = arith.addf %188, %190 : vector<2x256xf32>
    %cst_148 = arith.constant 0.000000e+00 : f32
    %192 = vector.broadcast %cst_148 : f32 to vector<2x256xf32>
    %193 = arith.maximumf %191, %192 : vector<2x256xf32>
    %194 = vector.broadcast %8 : f32 to vector<2x256xf32>
    %195 = arith.mulf %194, %193 : vector<2x256xf32>
    %196 = math.tanh %191 : vector<2x256xf32>
    %197 = vector.broadcast %9 : f32 to vector<2x256xf32>
    %198 = arith.mulf %197, %196 : vector<2x256xf32>
    %199 = arith.addf %195, %198 : vector<2x256xf32>
    %cst_149 = arith.constant 0.000000e+00 : f32
    %200 = vector.broadcast %cst_149 : f32 to vector<2x256xf32>
    %201 = arith.cmpf ogt, %191, %200 : vector<2x256xf32>
    %cst_150 = arith.constant 2.000000e-01 : f32
    %202 = vector.broadcast %cst_150 : f32 to vector<2x256xf32>
    %203 = arith.mulf %202, %191 : vector<2x256xf32>
    %204 = arith.select %201, %191, %203 : vector<2x256xi1>, vector<2x256xf32>
    %205 = vector.broadcast %10 : f32 to vector<2x256xf32>
    %206 = arith.mulf %205, %204 : vector<2x256xf32>
    %207 = arith.addf %199, %206 : vector<2x256xf32>
    %cst_151 = arith.constant 0.000000e+00 : f32
    %208 = vector.broadcast %cst_151 : f32 to vector<2x256xf32>
    %209 = arith.cmpf ogt, %191, %208 : vector<2x256xf32>
    %cst_152 = arith.constant 0.000000e+00 : f32
    %210 = vector.broadcast %cst_152 : f32 to vector<2x256xf32>
    %211 = arith.minimumf %191, %210 : vector<2x256xf32>
    %212 = math.exp %211 : vector<2x256xf32>
    %cst_153 = arith.constant 1.000000e+00 : f32
    %213 = vector.broadcast %cst_153 : f32 to vector<2x256xf32>
    %214 = arith.subf %212, %213 : vector<2x256xf32>
    %215 = arith.select %209, %191, %214 : vector<2x256xi1>, vector<2x256xf32>
    %216 = vector.broadcast %11 : f32 to vector<2x256xf32>
    %217 = arith.mulf %216, %215 : vector<2x256xf32>
    %218 = arith.addf %207, %217 : vector<2x256xf32>
    %219 = vector.extract_strided_slice %218 {offsets = [0, 0], sizes = [1, 128], strides = [1, 1]} : vector<2x256xf32> to vector<1x128xf32>
    %c1_154 = arith.constant 1 : index
    %c1_155 = arith.constant 1 : index
    %c32_156 = arith.constant 32 : index
    %220 = vector.load %arg16[%c1_154, %c1_155, %c32_156] : memref<2x6x192xf32, #tpu.memory_space<vmem>>, vector<1x1x128xf32>
    %221 = vector.shape_cast %220 : vector<1x1x128xf32> to vector<1x128xf32>
    %222 = vector.shape_cast %219 : vector<1x128xf32> to vector<1x1x128xf32>
    tpu.vector_store %arg16[%c1_154, %c1_155, %c32_156], %222 {strides = array<i32>} : memref<2x6x192xf32, #tpu.memory_space<vmem>>, vector<1x1x128xf32>,
    %223 = vector.extract_strided_slice %218 {offsets = [0, 128], sizes = [1, 128], strides = [1, 1]} : vector<2x256xf32> to vector<1x128xf32>
    %c1_157 = arith.constant 1 : index
    %c2_158 = arith.constant 2 : index
    %c32_159 = arith.constant 32 : index
    %224 = vector.load %arg16[%c1_157, %c2_158, %c32_159] : memref<2x6x192xf32, #tpu.memory_space<vmem>>, vector<1x1x128xf32>
    %225 = vector.shape_cast %224 : vector<1x1x128xf32> to vector<1x128xf32>
    %226 = vector.shape_cast %223 : vector<1x128xf32> to vector<1x1x128xf32>
    tpu.vector_store %arg16[%c1_157, %c2_158, %c32_159], %226 {strides = array<i32>} : memref<2x6x192xf32, #tpu.memory_space<vmem>>, vector<1x1x128xf32>,
    %227 = vector.extract_strided_slice %218 {offsets = [1, 0], sizes = [1, 128], strides = [1, 1]} : vector<2x256xf32> to vector<1x128xf32>
    %c1_160 = arith.constant 1 : index
    %c3_161 = arith.constant 3 : index
    %c32_162 = arith.constant 32 : index
    %228 = vector.load %arg16[%c1_160, %c3_161, %c32_162] : memref<2x6x192xf32, #tpu.memory_space<vmem>>, vector<1x1x128xf32>
    %229 = vector.shape_cast %228 : vector<1x1x128xf32> to vector<1x128xf32>
    %230 = vector.shape_cast %227 : vector<1x128xf32> to vector<1x1x128xf32>
    tpu.vector_store %arg16[%c1_160, %c3_161, %c32_162], %230 {strides = array<i32>} : memref<2x6x192xf32, #tpu.memory_space<vmem>>, vector<1x1x128xf32>,
    %231 = vector.extract_strided_slice %218 {offsets = [1, 128], sizes = [1, 128], strides = [1, 1]} : vector<2x256xf32> to vector<1x128xf32>
    %c1_163 = arith.constant 1 : index
    %c4_164 = arith.constant 4 : index
    %c32_165 = arith.constant 32 : index
    %232 = vector.load %arg16[%c1_163, %c4_164, %c32_165] : memref<2x6x192xf32, #tpu.memory_space<vmem>>, vector<1x1x128xf32>
    %233 = vector.shape_cast %232 : vector<1x1x128xf32> to vector<1x128xf32>
    %234 = vector.shape_cast %231 : vector<1x128xf32> to vector<1x1x128xf32>
    tpu.vector_store %arg16[%c1_163, %c4_164, %c32_165], %234 {strides = array<i32>} : memref<2x6x192xf32, #tpu.memory_space<vmem>>, vector<1x1x128xf32>,
    %c0_166 = arith.constant 0 : index
    %c0_167 = arith.constant 0 : index
    %c0_168 = arith.constant 0 : index
    %235 = vector.load %arg16[%c0_166, %c0_167, %c0_168] : memref<2x6x192xf32, #tpu.memory_space<vmem>>, vector<1x4x192xf32>
    %236 = vector.shape_cast %235 : vector<1x4x192xf32> to vector<4x192xf32>
    %c0_169 = arith.constant 0 : index
    %c0_170 = arith.constant 0 : index
    %c0_171 = arith.constant 0 : index
    %237 = vector.load %arg8[%c0_169, %c0_170, %c0_171] : memref<3x192x256xf32, #tpu.memory_space<vmem>>, vector<1x192x256xf32>
    %238 = vector.shape_cast %237 : vector<1x192x256xf32> to vector<192x256xf32>
    %cst_172 = arith.constant dense<0.000000e+00> : vector<4x256xf32>
    %239 = tpu.matmul %236, %238, %cst_172 {dimension_numbers = #tpu.dot_dimension_numbers<[1], [0], [0], [1], [0, 0, 1, 1], [], []>} : vector<4x192xf32>, vector<192x256xf32>, vector<4x256xf32> -> vector<4x256xf32>
    %c0_173 = arith.constant 0 : index
    %c1_174 = arith.constant 1 : index
    %c0_175 = arith.constant 0 : index
    %240 = vector.load %arg16[%c0_173, %c1_174, %c0_175] : memref<2x6x192xf32, #tpu.memory_space<vmem>>, vector<1x4x192xf32>
    %241 = vector.shape_cast %240 : vector<1x4x192xf32> to vector<4x192xf32>
    %c1_176 = arith.constant 1 : index
    %c0_177 = arith.constant 0 : index
    %c0_178 = arith.constant 0 : index
    %242 = vector.load %arg8[%c1_176, %c0_177, %c0_178] : memref<3x192x256xf32, #tpu.memory_space<vmem>>, vector<1x192x256xf32>
    %243 = vector.shape_cast %242 : vector<1x192x256xf32> to vector<192x256xf32>
    %cst_179 = arith.constant dense<0.000000e+00> : vector<4x256xf32>
    %244 = tpu.matmul %241, %243, %cst_179 {dimension_numbers = #tpu.dot_dimension_numbers<[1], [0], [0], [1], [0, 0, 1, 1], [], []>} : vector<4x192xf32>, vector<192x256xf32>, vector<4x256xf32> -> vector<4x256xf32>
    %245 = arith.addf %239, %244 : vector<4x256xf32>
    %c0_180 = arith.constant 0 : index
    %c2_181 = arith.constant 2 : index
    %c0_182 = arith.constant 0 : index
    %246 = vector.load %arg16[%c0_180, %c2_181, %c0_182] : memref<2x6x192xf32, #tpu.memory_space<vmem>>, vector<1x4x192xf32>
    %247 = vector.shape_cast %246 : vector<1x4x192xf32> to vector<4x192xf32>
    %c2_183 = arith.constant 2 : index
    %c0_184 = arith.constant 0 : index
    %c0_185 = arith.constant 0 : index
    %248 = vector.load %arg8[%c2_183, %c0_184, %c0_185] : memref<3x192x256xf32, #tpu.memory_space<vmem>>, vector<1x192x256xf32>
    %249 = vector.shape_cast %248 : vector<1x192x256xf32> to vector<192x256xf32>
    %cst_186 = arith.constant dense<0.000000e+00> : vector<4x256xf32>
    %250 = tpu.matmul %247, %249, %cst_186 {dimension_numbers = #tpu.dot_dimension_numbers<[1], [0], [0], [1], [0, 0, 1, 1], [], []>} : vector<4x192xf32>, vector<192x256xf32>, vector<4x256xf32> -> vector<4x256xf32>
    %251 = arith.addf %245, %250 : vector<4x256xf32>
    %c0_187 = arith.constant 0 : index
    %c0_188 = arith.constant 0 : index
    %252 = vector.load %arg9[%c0_187, %c0_188] : memref<1x256xf32, #tpu.memory_space<vmem>>, vector<1x256xf32>
    %253 = vector.broadcast %252 : vector<1x256xf32> to vector<4x256xf32>
    %254 = arith.addf %251, %253 : vector<4x256xf32>
    %cst_189 = arith.constant 0.000000e+00 : f32
    %255 = vector.broadcast %cst_189 : f32 to vector<4x256xf32>
    %256 = arith.maximumf %254, %255 : vector<4x256xf32>
    %257 = vector.broadcast %12 : f32 to vector<4x256xf32>
    %258 = arith.mulf %257, %256 : vector<4x256xf32>
    %259 = math.tanh %254 : vector<4x256xf32>
    %260 = vector.broadcast %13 : f32 to vector<4x256xf32>
    %261 = arith.mulf %260, %259 : vector<4x256xf32>
    %262 = arith.addf %258, %261 : vector<4x256xf32>
    %cst_190 = arith.constant 0.000000e+00 : f32
    %263 = vector.broadcast %cst_190 : f32 to vector<4x256xf32>
    %264 = arith.cmpf ogt, %254, %263 : vector<4x256xf32>
    %cst_191 = arith.constant 2.000000e-01 : f32
    %265 = vector.broadcast %cst_191 : f32 to vector<4x256xf32>
    %266 = arith.mulf %265, %254 : vector<4x256xf32>
    %267 = arith.select %264, %254, %266 : vector<4x256xi1>, vector<4x256xf32>
    %268 = vector.broadcast %14 : f32 to vector<4x256xf32>
    %269 = arith.mulf %268, %267 : vector<4x256xf32>
    %270 = arith.addf %262, %269 : vector<4x256xf32>
    %cst_192 = arith.constant 0.000000e+00 : f32
    %271 = vector.broadcast %cst_192 : f32 to vector<4x256xf32>
    %272 = arith.cmpf ogt, %254, %271 : vector<4x256xf32>
    %cst_193 = arith.constant 0.000000e+00 : f32
    %273 = vector.broadcast %cst_193 : f32 to vector<4x256xf32>
    %274 = arith.minimumf %254, %273 : vector<4x256xf32>
    %275 = math.exp %274 : vector<4x256xf32>
    %cst_194 = arith.constant 1.000000e+00 : f32
    %276 = vector.broadcast %cst_194 : f32 to vector<4x256xf32>
    %277 = arith.subf %275, %276 : vector<4x256xf32>
    %278 = arith.select %272, %254, %277 : vector<4x256xi1>, vector<4x256xf32>
    %279 = vector.broadcast %15 : f32 to vector<4x256xf32>
    %280 = arith.mulf %279, %278 : vector<4x256xf32>
    %281 = arith.addf %270, %280 : vector<4x256xf32>
    %282 = vector.extract_strided_slice %281 {offsets = [0, 0], sizes = [1, 128], strides = [1, 1]} : vector<4x256xf32> to vector<1x128xf32>
    %c0_195 = arith.constant 0 : index
    %c1_196 = arith.constant 1 : index
    %c16 = arith.constant 16 : index
    %283 = vector.load %arg17[%c0_195, %c1_196, %c16] : memref<2x10x160xf32, #tpu.memory_space<vmem>>, vector<1x1x128xf32>
    %284 = vector.shape_cast %283 : vector<1x1x128xf32> to vector<1x128xf32>
    %285 = vector.shape_cast %282 : vector<1x128xf32> to vector<1x1x128xf32>
    tpu.vector_store %arg17[%c0_195, %c1_196, %c16], %285 {strides = array<i32>} : memref<2x10x160xf32, #tpu.memory_space<vmem>>, vector<1x1x128xf32>,
    %286 = vector.extract_strided_slice %281 {offsets = [0, 128], sizes = [1, 128], strides = [1, 1]} : vector<4x256xf32> to vector<1x128xf32>
    %c0_197 = arith.constant 0 : index
    %c2_198 = arith.constant 2 : index
    %c16_199 = arith.constant 16 : index
    %287 = vector.load %arg17[%c0_197, %c2_198, %c16_199] : memref<2x10x160xf32, #tpu.memory_space<vmem>>, vector<1x1x128xf32>
    %288 = vector.shape_cast %287 : vector<1x1x128xf32> to vector<1x128xf32>
    %289 = vector.shape_cast %286 : vector<1x128xf32> to vector<1x1x128xf32>
    tpu.vector_store %arg17[%c0_197, %c2_198, %c16_199], %289 {strides = array<i32>} : memref<2x10x160xf32, #tpu.memory_space<vmem>>, vector<1x1x128xf32>,
    %290 = vector.extract_strided_slice %281 {offsets = [1, 0], sizes = [1, 128], strides = [1, 1]} : vector<4x256xf32> to vector<1x128xf32>
    %c0_200 = arith.constant 0 : index
    %c3_201 = arith.constant 3 : index
    %c16_202 = arith.constant 16 : index
    %291 = vector.load %arg17[%c0_200, %c3_201, %c16_202] : memref<2x10x160xf32, #tpu.memory_space<vmem>>, vector<1x1x128xf32>
    %292 = vector.shape_cast %291 : vector<1x1x128xf32> to vector<1x128xf32>
    %293 = vector.shape_cast %290 : vector<1x128xf32> to vector<1x1x128xf32>
    tpu.vector_store %arg17[%c0_200, %c3_201, %c16_202], %293 {strides = array<i32>} : memref<2x10x160xf32, #tpu.memory_space<vmem>>, vector<1x1x128xf32>,
    %294 = vector.extract_strided_slice %281 {offsets = [1, 128], sizes = [1, 128], strides = [1, 1]} : vector<4x256xf32> to vector<1x128xf32>
    %c0_203 = arith.constant 0 : index
    %c4_204 = arith.constant 4 : index
    %c16_205 = arith.constant 16 : index
    %295 = vector.load %arg17[%c0_203, %c4_204, %c16_205] : memref<2x10x160xf32, #tpu.memory_space<vmem>>, vector<1x1x128xf32>
    %296 = vector.shape_cast %295 : vector<1x1x128xf32> to vector<1x128xf32>
    %297 = vector.shape_cast %294 : vector<1x128xf32> to vector<1x1x128xf32>
    tpu.vector_store %arg17[%c0_203, %c4_204, %c16_205], %297 {strides = array<i32>} : memref<2x10x160xf32, #tpu.memory_space<vmem>>, vector<1x1x128xf32>,
    %298 = vector.extract_strided_slice %281 {offsets = [2, 0], sizes = [1, 128], strides = [1, 1]} : vector<4x256xf32> to vector<1x128xf32>
    %c0_206 = arith.constant 0 : index
    %c5 = arith.constant 5 : index
    %c16_207 = arith.constant 16 : index
    %299 = vector.load %arg17[%c0_206, %c5, %c16_207] : memref<2x10x160xf32, #tpu.memory_space<vmem>>, vector<1x1x128xf32>
    %300 = vector.shape_cast %299 : vector<1x1x128xf32> to vector<1x128xf32>
    %301 = vector.shape_cast %298 : vector<1x128xf32> to vector<1x1x128xf32>
    tpu.vector_store %arg17[%c0_206, %c5, %c16_207], %301 {strides = array<i32>} : memref<2x10x160xf32, #tpu.memory_space<vmem>>, vector<1x1x128xf32>,
    %302 = vector.extract_strided_slice %281 {offsets = [2, 128], sizes = [1, 128], strides = [1, 1]} : vector<4x256xf32> to vector<1x128xf32>
    %c0_208 = arith.constant 0 : index
    %c6 = arith.constant 6 : index
    %c16_209 = arith.constant 16 : index
    %303 = vector.load %arg17[%c0_208, %c6, %c16_209] : memref<2x10x160xf32, #tpu.memory_space<vmem>>, vector<1x1x128xf32>
    %304 = vector.shape_cast %303 : vector<1x1x128xf32> to vector<1x128xf32>
    %305 = vector.shape_cast %302 : vector<1x128xf32> to vector<1x1x128xf32>
    tpu.vector_store %arg17[%c0_208, %c6, %c16_209], %305 {strides = array<i32>} : memref<2x10x160xf32, #tpu.memory_space<vmem>>, vector<1x1x128xf32>,
    %306 = vector.extract_strided_slice %281 {offsets = [3, 0], sizes = [1, 128], strides = [1, 1]} : vector<4x256xf32> to vector<1x128xf32>
    %c0_210 = arith.constant 0 : index
    %c7 = arith.constant 7 : index
    %c16_211 = arith.constant 16 : index
    %307 = vector.load %arg17[%c0_210, %c7, %c16_211] : memref<2x10x160xf32, #tpu.memory_space<vmem>>, vector<1x1x128xf32>
    %308 = vector.shape_cast %307 : vector<1x1x128xf32> to vector<1x128xf32>
    %309 = vector.shape_cast %306 : vector<1x128xf32> to vector<1x1x128xf32>
    tpu.vector_store %arg17[%c0_210, %c7, %c16_211], %309 {strides = array<i32>} : memref<2x10x160xf32, #tpu.memory_space<vmem>>, vector<1x1x128xf32>,
    %310 = vector.extract_strided_slice %281 {offsets = [3, 128], sizes = [1, 128], strides = [1, 1]} : vector<4x256xf32> to vector<1x128xf32>
    %c0_212 = arith.constant 0 : index
    %c8 = arith.constant 8 : index
    %c16_213 = arith.constant 16 : index
    %311 = vector.load %arg17[%c0_212, %c8, %c16_213] : memref<2x10x160xf32, #tpu.memory_space<vmem>>, vector<1x1x128xf32>
    %312 = vector.shape_cast %311 : vector<1x1x128xf32> to vector<1x128xf32>
    %313 = vector.shape_cast %310 : vector<1x128xf32> to vector<1x1x128xf32>
    tpu.vector_store %arg17[%c0_212, %c8, %c16_213], %313 {strides = array<i32>} : memref<2x10x160xf32, #tpu.memory_space<vmem>>, vector<1x1x128xf32>,
    %c1_214 = arith.constant 1 : index
    %c0_215 = arith.constant 0 : index
    %c0_216 = arith.constant 0 : index
    %314 = vector.load %arg16[%c1_214, %c0_215, %c0_216] : memref<2x6x192xf32, #tpu.memory_space<vmem>>, vector<1x4x192xf32>
    %315 = vector.shape_cast %314 : vector<1x4x192xf32> to vector<4x192xf32>
    %c0_217 = arith.constant 0 : index
    %c0_218 = arith.constant 0 : index
    %c0_219 = arith.constant 0 : index
    %316 = vector.load %arg8[%c0_217, %c0_218, %c0_219] : memref<3x192x256xf32, #tpu.memory_space<vmem>>, vector<1x192x256xf32>
    %317 = vector.shape_cast %316 : vector<1x192x256xf32> to vector<192x256xf32>
    %cst_220 = arith.constant dense<0.000000e+00> : vector<4x256xf32>
    %318 = tpu.matmul %315, %317, %cst_220 {dimension_numbers = #tpu.dot_dimension_numbers<[1], [0], [0], [1], [0, 0, 1, 1], [], []>} : vector<4x192xf32>, vector<192x256xf32>, vector<4x256xf32> -> vector<4x256xf32>
    %c1_221 = arith.constant 1 : index
    %c1_222 = arith.constant 1 : index
    %c0_223 = arith.constant 0 : index
    %319 = vector.load %arg16[%c1_221, %c1_222, %c0_223] : memref<2x6x192xf32, #tpu.memory_space<vmem>>, vector<1x4x192xf32>
    %320 = vector.shape_cast %319 : vector<1x4x192xf32> to vector<4x192xf32>
    %c1_224 = arith.constant 1 : index
    %c0_225 = arith.constant 0 : index
    %c0_226 = arith.constant 0 : index
    %321 = vector.load %arg8[%c1_224, %c0_225, %c0_226] : memref<3x192x256xf32, #tpu.memory_space<vmem>>, vector<1x192x256xf32>
    %322 = vector.shape_cast %321 : vector<1x192x256xf32> to vector<192x256xf32>
    %cst_227 = arith.constant dense<0.000000e+00> : vector<4x256xf32>
    %323 = tpu.matmul %320, %322, %cst_227 {dimension_numbers = #tpu.dot_dimension_numbers<[1], [0], [0], [1], [0, 0, 1, 1], [], []>} : vector<4x192xf32>, vector<192x256xf32>, vector<4x256xf32> -> vector<4x256xf32>
    %324 = arith.addf %318, %323 : vector<4x256xf32>
    %c1_228 = arith.constant 1 : index
    %c2_229 = arith.constant 2 : index
    %c0_230 = arith.constant 0 : index
    %325 = vector.load %arg16[%c1_228, %c2_229, %c0_230] : memref<2x6x192xf32, #tpu.memory_space<vmem>>, vector<1x4x192xf32>
    %326 = vector.shape_cast %325 : vector<1x4x192xf32> to vector<4x192xf32>
    %c2_231 = arith.constant 2 : index
    %c0_232 = arith.constant 0 : index
    %c0_233 = arith.constant 0 : index
    %327 = vector.load %arg8[%c2_231, %c0_232, %c0_233] : memref<3x192x256xf32, #tpu.memory_space<vmem>>, vector<1x192x256xf32>
    %328 = vector.shape_cast %327 : vector<1x192x256xf32> to vector<192x256xf32>
    %cst_234 = arith.constant dense<0.000000e+00> : vector<4x256xf32>
    %329 = tpu.matmul %326, %328, %cst_234 {dimension_numbers = #tpu.dot_dimension_numbers<[1], [0], [0], [1], [0, 0, 1, 1], [], []>} : vector<4x192xf32>, vector<192x256xf32>, vector<4x256xf32> -> vector<4x256xf32>
    %330 = arith.addf %324, %329 : vector<4x256xf32>
    %c0_235 = arith.constant 0 : index
    %c0_236 = arith.constant 0 : index
    %331 = vector.load %arg9[%c0_235, %c0_236] : memref<1x256xf32, #tpu.memory_space<vmem>>, vector<1x256xf32>
    %332 = vector.broadcast %331 : vector<1x256xf32> to vector<4x256xf32>
    %333 = arith.addf %330, %332 : vector<4x256xf32>
    %cst_237 = arith.constant 0.000000e+00 : f32
    %334 = vector.broadcast %cst_237 : f32 to vector<4x256xf32>
    %335 = arith.maximumf %333, %334 : vector<4x256xf32>
    %336 = vector.broadcast %12 : f32 to vector<4x256xf32>
    %337 = arith.mulf %336, %335 : vector<4x256xf32>
    %338 = math.tanh %333 : vector<4x256xf32>
    %339 = vector.broadcast %13 : f32 to vector<4x256xf32>
    %340 = arith.mulf %339, %338 : vector<4x256xf32>
    %341 = arith.addf %337, %340 : vector<4x256xf32>
    %cst_238 = arith.constant 0.000000e+00 : f32
    %342 = vector.broadcast %cst_238 : f32 to vector<4x256xf32>
    %343 = arith.cmpf ogt, %333, %342 : vector<4x256xf32>
    %cst_239 = arith.constant 2.000000e-01 : f32
    %344 = vector.broadcast %cst_239 : f32 to vector<4x256xf32>
    %345 = arith.mulf %344, %333 : vector<4x256xf32>
    %346 = arith.select %343, %333, %345 : vector<4x256xi1>, vector<4x256xf32>
    %347 = vector.broadcast %14 : f32 to vector<4x256xf32>
    %348 = arith.mulf %347, %346 : vector<4x256xf32>
    %349 = arith.addf %341, %348 : vector<4x256xf32>
    %cst_240 = arith.constant 0.000000e+00 : f32
    %350 = vector.broadcast %cst_240 : f32 to vector<4x256xf32>
    %351 = arith.cmpf ogt, %333, %350 : vector<4x256xf32>
    %cst_241 = arith.constant 0.000000e+00 : f32
    %352 = vector.broadcast %cst_241 : f32 to vector<4x256xf32>
    %353 = arith.minimumf %333, %352 : vector<4x256xf32>
    %354 = math.exp %353 : vector<4x256xf32>
    %cst_242 = arith.constant 1.000000e+00 : f32
    %355 = vector.broadcast %cst_242 : f32 to vector<4x256xf32>
    %356 = arith.subf %354, %355 : vector<4x256xf32>
    %357 = arith.select %351, %333, %356 : vector<4x256xi1>, vector<4x256xf32>
    %358 = vector.broadcast %15 : f32 to vector<4x256xf32>
    %359 = arith.mulf %358, %357 : vector<4x256xf32>
    %360 = arith.addf %349, %359 : vector<4x256xf32>
    %361 = vector.extract_strided_slice %360 {offsets = [0, 0], sizes = [1, 128], strides = [1, 1]} : vector<4x256xf32> to vector<1x128xf32>
    %c1_243 = arith.constant 1 : index
    %c1_244 = arith.constant 1 : index
    %c16_245 = arith.constant 16 : index
    %362 = vector.load %arg17[%c1_243, %c1_244, %c16_245] : memref<2x10x160xf32, #tpu.memory_space<vmem>>, vector<1x1x128xf32>
    %363 = vector.shape_cast %362 : vector<1x1x128xf32> to vector<1x128xf32>
    %364 = vector.shape_cast %361 : vector<1x128xf32> to vector<1x1x128xf32>
    tpu.vector_store %arg17[%c1_243, %c1_244, %c16_245], %364 {strides = array<i32>} : memref<2x10x160xf32, #tpu.memory_space<vmem>>, vector<1x1x128xf32>,
    %365 = vector.extract_strided_slice %360 {offsets = [0, 128], sizes = [1, 128], strides = [1, 1]} : vector<4x256xf32> to vector<1x128xf32>
    %c1_246 = arith.constant 1 : index
    %c2_247 = arith.constant 2 : index
    %c16_248 = arith.constant 16 : index
    %366 = vector.load %arg17[%c1_246, %c2_247, %c16_248] : memref<2x10x160xf32, #tpu.memory_space<vmem>>, vector<1x1x128xf32>
    %367 = vector.shape_cast %366 : vector<1x1x128xf32> to vector<1x128xf32>
    %368 = vector.shape_cast %365 : vector<1x128xf32> to vector<1x1x128xf32>
    tpu.vector_store %arg17[%c1_246, %c2_247, %c16_248], %368 {strides = array<i32>} : memref<2x10x160xf32, #tpu.memory_space<vmem>>, vector<1x1x128xf32>,
    %369 = vector.extract_strided_slice %360 {offsets = [1, 0], sizes = [1, 128], strides = [1, 1]} : vector<4x256xf32> to vector<1x128xf32>
    %c1_249 = arith.constant 1 : index
    %c3_250 = arith.constant 3 : index
    %c16_251 = arith.constant 16 : index
    %370 = vector.load %arg17[%c1_249, %c3_250, %c16_251] : memref<2x10x160xf32, #tpu.memory_space<vmem>>, vector<1x1x128xf32>
    %371 = vector.shape_cast %370 : vector<1x1x128xf32> to vector<1x128xf32>
    %372 = vector.shape_cast %369 : vector<1x128xf32> to vector<1x1x128xf32>
    tpu.vector_store %arg17[%c1_249, %c3_250, %c16_251], %372 {strides = array<i32>} : memref<2x10x160xf32, #tpu.memory_space<vmem>>, vector<1x1x128xf32>,
    %373 = vector.extract_strided_slice %360 {offsets = [1, 128], sizes = [1, 128], strides = [1, 1]} : vector<4x256xf32> to vector<1x128xf32>
    %c1_252 = arith.constant 1 : index
    %c4_253 = arith.constant 4 : index
    %c16_254 = arith.constant 16 : index
    %374 = vector.load %arg17[%c1_252, %c4_253, %c16_254] : memref<2x10x160xf32, #tpu.memory_space<vmem>>, vector<1x1x128xf32>
    %375 = vector.shape_cast %374 : vector<1x1x128xf32> to vector<1x128xf32>
    %376 = vector.shape_cast %373 : vector<1x128xf32> to vector<1x1x128xf32>
    tpu.vector_store %arg17[%c1_252, %c4_253, %c16_254], %376 {strides = array<i32>} : memref<2x10x160xf32, #tpu.memory_space<vmem>>, vector<1x1x128xf32>,
    %377 = vector.extract_strided_slice %360 {offsets = [2, 0], sizes = [1, 128], strides = [1, 1]} : vector<4x256xf32> to vector<1x128xf32>
    %c1_255 = arith.constant 1 : index
    %c5_256 = arith.constant 5 : index
    %c16_257 = arith.constant 16 : index
    %378 = vector.load %arg17[%c1_255, %c5_256, %c16_257] : memref<2x10x160xf32, #tpu.memory_space<vmem>>, vector<1x1x128xf32>
    %379 = vector.shape_cast %378 : vector<1x1x128xf32> to vector<1x128xf32>
    %380 = vector.shape_cast %377 : vector<1x128xf32> to vector<1x1x128xf32>
    tpu.vector_store %arg17[%c1_255, %c5_256, %c16_257], %380 {strides = array<i32>} : memref<2x10x160xf32, #tpu.memory_space<vmem>>, vector<1x1x128xf32>,
    %381 = vector.extract_strided_slice %360 {offsets = [2, 128], sizes = [1, 128], strides = [1, 1]} : vector<4x256xf32> to vector<1x128xf32>
    %c1_258 = arith.constant 1 : index
    %c6_259 = arith.constant 6 : index
    %c16_260 = arith.constant 16 : index
    %382 = vector.load %arg17[%c1_258, %c6_259, %c16_260] : memref<2x10x160xf32, #tpu.memory_space<vmem>>, vector<1x1x128xf32>
    %383 = vector.shape_cast %382 : vector<1x1x128xf32> to vector<1x128xf32>
    %384 = vector.shape_cast %381 : vector<1x128xf32> to vector<1x1x128xf32>
    tpu.vector_store %arg17[%c1_258, %c6_259, %c16_260], %384 {strides = array<i32>} : memref<2x10x160xf32, #tpu.memory_space<vmem>>, vector<1x1x128xf32>,
    %385 = vector.extract_strided_slice %360 {offsets = [3, 0], sizes = [1, 128], strides = [1, 1]} : vector<4x256xf32> to vector<1x128xf32>
    %c1_261 = arith.constant 1 : index
    %c7_262 = arith.constant 7 : index
    %c16_263 = arith.constant 16 : index
    %386 = vector.load %arg17[%c1_261, %c7_262, %c16_263] : memref<2x10x160xf32, #tpu.memory_space<vmem>>, vector<1x1x128xf32>
    %387 = vector.shape_cast %386 : vector<1x1x128xf32> to vector<1x128xf32>
    %388 = vector.shape_cast %385 : vector<1x128xf32> to vector<1x1x128xf32>
    tpu.vector_store %arg17[%c1_261, %c7_262, %c16_263], %388 {strides = array<i32>} : memref<2x10x160xf32, #tpu.memory_space<vmem>>, vector<1x1x128xf32>,
    %389 = vector.extract_strided_slice %360 {offsets = [3, 128], sizes = [1, 128], strides = [1, 1]} : vector<4x256xf32> to vector<1x128xf32>
    %c1_264 = arith.constant 1 : index
    %c8_265 = arith.constant 8 : index
    %c16_266 = arith.constant 16 : index
    %390 = vector.load %arg17[%c1_264, %c8_265, %c16_266] : memref<2x10x160xf32, #tpu.memory_space<vmem>>, vector<1x1x128xf32>
    %391 = vector.shape_cast %390 : vector<1x1x128xf32> to vector<1x128xf32>
    %392 = vector.shape_cast %389 : vector<1x128xf32> to vector<1x1x128xf32>
    tpu.vector_store %arg17[%c1_264, %c8_265, %c16_266], %392 {strides = array<i32>} : memref<2x10x160xf32, #tpu.memory_space<vmem>>, vector<1x1x128xf32>,
    %c0_267 = arith.constant 0 : index
    %c0_268 = arith.constant 0 : index
    %c0_269 = arith.constant 0 : index
    %393 = vector.load %arg17[%c0_267, %c0_268, %c0_269] : memref<2x10x160xf32, #tpu.memory_space<vmem>>, vector<1x8x160xf32>
    %394 = vector.shape_cast %393 : vector<1x8x160xf32> to vector<8x160xf32>
    %c0_270 = arith.constant 0 : index
    %c0_271 = arith.constant 0 : index
    %c0_272 = arith.constant 0 : index
    %395 = vector.load %arg10[%c0_270, %c0_271, %c0_272] : memref<3x160x256xf32, #tpu.memory_space<vmem>>, vector<1x160x256xf32>
    %396 = vector.shape_cast %395 : vector<1x160x256xf32> to vector<160x256xf32>
    %cst_273 = arith.constant dense<0.000000e+00> : vector<8x256xf32>
    %397 = tpu.matmul %394, %396, %cst_273 {dimension_numbers = #tpu.dot_dimension_numbers<[1], [0], [0], [1], [0, 0, 1, 1], [], []>} : vector<8x160xf32>, vector<160x256xf32>, vector<8x256xf32> -> vector<8x256xf32>
    %c0_274 = arith.constant 0 : index
    %c1_275 = arith.constant 1 : index
    %c0_276 = arith.constant 0 : index
    %398 = vector.load %arg17[%c0_274, %c1_275, %c0_276] : memref<2x10x160xf32, #tpu.memory_space<vmem>>, vector<1x8x160xf32>
    %399 = vector.shape_cast %398 : vector<1x8x160xf32> to vector<8x160xf32>
    %c1_277 = arith.constant 1 : index
    %c0_278 = arith.constant 0 : index
    %c0_279 = arith.constant 0 : index
    %400 = vector.load %arg10[%c1_277, %c0_278, %c0_279] : memref<3x160x256xf32, #tpu.memory_space<vmem>>, vector<1x160x256xf32>
    %401 = vector.shape_cast %400 : vector<1x160x256xf32> to vector<160x256xf32>
    %cst_280 = arith.constant dense<0.000000e+00> : vector<8x256xf32>
    %402 = tpu.matmul %399, %401, %cst_280 {dimension_numbers = #tpu.dot_dimension_numbers<[1], [0], [0], [1], [0, 0, 1, 1], [], []>} : vector<8x160xf32>, vector<160x256xf32>, vector<8x256xf32> -> vector<8x256xf32>
    %403 = arith.addf %397, %402 : vector<8x256xf32>
    %c0_281 = arith.constant 0 : index
    %c2_282 = arith.constant 2 : index
    %c0_283 = arith.constant 0 : index
    %404 = vector.load %arg17[%c0_281, %c2_282, %c0_283] : memref<2x10x160xf32, #tpu.memory_space<vmem>>, vector<1x8x160xf32>
    %405 = vector.shape_cast %404 : vector<1x8x160xf32> to vector<8x160xf32>
    %c2_284 = arith.constant 2 : index
    %c0_285 = arith.constant 0 : index
    %c0_286 = arith.constant 0 : index
    %406 = vector.load %arg10[%c2_284, %c0_285, %c0_286] : memref<3x160x256xf32, #tpu.memory_space<vmem>>, vector<1x160x256xf32>
    %407 = vector.shape_cast %406 : vector<1x160x256xf32> to vector<160x256xf32>
    %cst_287 = arith.constant dense<0.000000e+00> : vector<8x256xf32>
    %408 = tpu.matmul %405, %407, %cst_287 {dimension_numbers = #tpu.dot_dimension_numbers<[1], [0], [0], [1], [0, 0, 1, 1], [], []>} : vector<8x160xf32>, vector<160x256xf32>, vector<8x256xf32> -> vector<8x256xf32>
    %409 = arith.addf %403, %408 : vector<8x256xf32>
    %c0_288 = arith.constant 0 : index
    %c0_289 = arith.constant 0 : index
    %410 = vector.load %arg11[%c0_288, %c0_289] : memref<1x256xf32, #tpu.memory_space<vmem>>, vector<1x256xf32>
    %411 = vector.broadcast %410 : vector<1x256xf32> to vector<8x256xf32>
    %412 = arith.addf %409, %411 : vector<8x256xf32>
    %cst_290 = arith.constant 0.000000e+00 : f32
    %413 = vector.broadcast %cst_290 : f32 to vector<8x256xf32>
    %414 = arith.maximumf %412, %413 : vector<8x256xf32>
    %415 = vector.broadcast %16 : f32 to vector<8x256xf32>
    %416 = arith.mulf %415, %414 : vector<8x256xf32>
    %417 = math.tanh %412 : vector<8x256xf32>
    %418 = vector.broadcast %17 : f32 to vector<8x256xf32>
    %419 = arith.mulf %418, %417 : vector<8x256xf32>
    %420 = arith.addf %416, %419 : vector<8x256xf32>
    %cst_291 = arith.constant 0.000000e+00 : f32
    %421 = vector.broadcast %cst_291 : f32 to vector<8x256xf32>
    %422 = arith.cmpf ogt, %412, %421 : vector<8x256xf32>
    %cst_292 = arith.constant 2.000000e-01 : f32
    %423 = vector.broadcast %cst_292 : f32 to vector<8x256xf32>
    %424 = arith.mulf %423, %412 : vector<8x256xf32>
    %425 = arith.select %422, %412, %424 : vector<8x256xi1>, vector<8x256xf32>
    %426 = vector.broadcast %18 : f32 to vector<8x256xf32>
    %427 = arith.mulf %426, %425 : vector<8x256xf32>
    %428 = arith.addf %420, %427 : vector<8x256xf32>
    %cst_293 = arith.constant 0.000000e+00 : f32
    %429 = vector.broadcast %cst_293 : f32 to vector<8x256xf32>
    %430 = arith.cmpf ogt, %412, %429 : vector<8x256xf32>
    %cst_294 = arith.constant 0.000000e+00 : f32
    %431 = vector.broadcast %cst_294 : f32 to vector<8x256xf32>
    %432 = arith.minimumf %412, %431 : vector<8x256xf32>
    %433 = math.exp %432 : vector<8x256xf32>
    %cst_295 = arith.constant 1.000000e+00 : f32
    %434 = vector.broadcast %cst_295 : f32 to vector<8x256xf32>
    %435 = arith.subf %433, %434 : vector<8x256xf32>
    %436 = arith.select %430, %412, %435 : vector<8x256xi1>, vector<8x256xf32>
    %437 = vector.broadcast %19 : f32 to vector<8x256xf32>
    %438 = arith.mulf %437, %436 : vector<8x256xf32>
    %439 = arith.addf %428, %438 : vector<8x256xf32>
    %440 = vector.extract_strided_slice %439 {offsets = [0, 0], sizes = [1, 128], strides = [1, 1]} : vector<8x256xf32> to vector<1x128xf32>
    %c0_296 = arith.constant 0 : index
    %c1_297 = arith.constant 1 : index
    %c8_298 = arith.constant 8 : index
    %441 = vector.load %arg18[%c0_296, %c1_297, %c8_298] : memref<2x18x144xf32, #tpu.memory_space<vmem>>, vector<1x1x128xf32>
    %442 = vector.shape_cast %441 : vector<1x1x128xf32> to vector<1x128xf32>
    %443 = vector.shape_cast %440 : vector<1x128xf32> to vector<1x1x128xf32>
    tpu.vector_store %arg18[%c0_296, %c1_297, %c8_298], %443 {strides = array<i32>} : memref<2x18x144xf32, #tpu.memory_space<vmem>>, vector<1x1x128xf32>,
    %444 = vector.extract_strided_slice %439 {offsets = [0, 128], sizes = [1, 128], strides = [1, 1]} : vector<8x256xf32> to vector<1x128xf32>
    %c0_299 = arith.constant 0 : index
    %c2_300 = arith.constant 2 : index
    %c8_301 = arith.constant 8 : index
    %445 = vector.load %arg18[%c0_299, %c2_300, %c8_301] : memref<2x18x144xf32, #tpu.memory_space<vmem>>, vector<1x1x128xf32>
    %446 = vector.shape_cast %445 : vector<1x1x128xf32> to vector<1x128xf32>
    %447 = vector.shape_cast %444 : vector<1x128xf32> to vector<1x1x128xf32>
    tpu.vector_store %arg18[%c0_299, %c2_300, %c8_301], %447 {strides = array<i32>} : memref<2x18x144xf32, #tpu.memory_space<vmem>>, vector<1x1x128xf32>,
    %448 = vector.extract_strided_slice %439 {offsets = [1, 0], sizes = [1, 128], strides = [1, 1]} : vector<8x256xf32> to vector<1x128xf32>
    %c0_302 = arith.constant 0 : index
    %c3_303 = arith.constant 3 : index
    %c8_304 = arith.constant 8 : index
    %449 = vector.load %arg18[%c0_302, %c3_303, %c8_304] : memref<2x18x144xf32, #tpu.memory_space<vmem>>, vector<1x1x128xf32>
    %450 = vector.shape_cast %449 : vector<1x1x128xf32> to vector<1x128xf32>
    %451 = vector.shape_cast %448 : vector<1x128xf32> to vector<1x1x128xf32>
    tpu.vector_store %arg18[%c0_302, %c3_303, %c8_304], %451 {strides = array<i32>} : memref<2x18x144xf32, #tpu.memory_space<vmem>>, vector<1x1x128xf32>,
    %452 = vector.extract_strided_slice %439 {offsets = [1, 128], sizes = [1, 128], strides = [1, 1]} : vector<8x256xf32> to vector<1x128xf32>
    %c0_305 = arith.constant 0 : index
    %c4_306 = arith.constant 4 : index
    %c8_307 = arith.constant 8 : index
    %453 = vector.load %arg18[%c0_305, %c4_306, %c8_307] : memref<2x18x144xf32, #tpu.memory_space<vmem>>, vector<1x1x128xf32>
    %454 = vector.shape_cast %453 : vector<1x1x128xf32> to vector<1x128xf32>
    %455 = vector.shape_cast %452 : vector<1x128xf32> to vector<1x1x128xf32>
    tpu.vector_store %arg18[%c0_305, %c4_306, %c8_307], %455 {strides = array<i32>} : memref<2x18x144xf32, #tpu.memory_space<vmem>>, vector<1x1x128xf32>,
    %456 = vector.extract_strided_slice %439 {offsets = [2, 0], sizes = [1, 128], strides = [1, 1]} : vector<8x256xf32> to vector<1x128xf32>
    %c0_308 = arith.constant 0 : index
    %c5_309 = arith.constant 5 : index
    %c8_310 = arith.constant 8 : index
    %457 = vector.load %arg18[%c0_308, %c5_309, %c8_310] : memref<2x18x144xf32, #tpu.memory_space<vmem>>, vector<1x1x128xf32>
    %458 = vector.shape_cast %457 : vector<1x1x128xf32> to vector<1x128xf32>
    %459 = vector.shape_cast %456 : vector<1x128xf32> to vector<1x1x128xf32>
    tpu.vector_store %arg18[%c0_308, %c5_309, %c8_310], %459 {strides = array<i32>} : memref<2x18x144xf32, #tpu.memory_space<vmem>>, vector<1x1x128xf32>,
    %460 = vector.extract_strided_slice %439 {offsets = [2, 128], sizes = [1, 128], strides = [1, 1]} : vector<8x256xf32> to vector<1x128xf32>
    %c0_311 = arith.constant 0 : index
    %c6_312 = arith.constant 6 : index
    %c8_313 = arith.constant 8 : index
    %461 = vector.load %arg18[%c0_311, %c6_312, %c8_313] : memref<2x18x144xf32, #tpu.memory_space<vmem>>, vector<1x1x128xf32>
    %462 = vector.shape_cast %461 : vector<1x1x128xf32> to vector<1x128xf32>
    %463 = vector.shape_cast %460 : vector<1x128xf32> to vector<1x1x128xf32>
    tpu.vector_store %arg18[%c0_311, %c6_312, %c8_313], %463 {strides = array<i32>} : memref<2x18x144xf32, #tpu.memory_space<vmem>>, vector<1x1x128xf32>,
    %464 = vector.extract_strided_slice %439 {offsets = [3, 0], sizes = [1, 128], strides = [1, 1]} : vector<8x256xf32> to vector<1x128xf32>
    %c0_314 = arith.constant 0 : index
    %c7_315 = arith.constant 7 : index
    %c8_316 = arith.constant 8 : index
    %465 = vector.load %arg18[%c0_314, %c7_315, %c8_316] : memref<2x18x144xf32, #tpu.memory_space<vmem>>, vector<1x1x128xf32>
    %466 = vector.shape_cast %465 : vector<1x1x128xf32> to vector<1x128xf32>
    %467 = vector.shape_cast %464 : vector<1x128xf32> to vector<1x1x128xf32>
    tpu.vector_store %arg18[%c0_314, %c7_315, %c8_316], %467 {strides = array<i32>} : memref<2x18x144xf32, #tpu.memory_space<vmem>>, vector<1x1x128xf32>,
    %468 = vector.extract_strided_slice %439 {offsets = [3, 128], sizes = [1, 128], strides = [1, 1]} : vector<8x256xf32> to vector<1x128xf32>
    %c0_317 = arith.constant 0 : index
    %c8_318 = arith.constant 8 : index
    %c8_319 = arith.constant 8 : index
    %469 = vector.load %arg18[%c0_317, %c8_318, %c8_319] : memref<2x18x144xf32, #tpu.memory_space<vmem>>, vector<1x1x128xf32>
    %470 = vector.shape_cast %469 : vector<1x1x128xf32> to vector<1x128xf32>
    %471 = vector.shape_cast %468 : vector<1x128xf32> to vector<1x1x128xf32>
    tpu.vector_store %arg18[%c0_317, %c8_318, %c8_319], %471 {strides = array<i32>} : memref<2x18x144xf32, #tpu.memory_space<vmem>>, vector<1x1x128xf32>,
    %472 = vector.extract_strided_slice %439 {offsets = [4, 0], sizes = [1, 128], strides = [1, 1]} : vector<8x256xf32> to vector<1x128xf32>
    %c0_320 = arith.constant 0 : index
    %c9 = arith.constant 9 : index
    %c8_321 = arith.constant 8 : index
    %473 = vector.load %arg18[%c0_320, %c9, %c8_321] : memref<2x18x144xf32, #tpu.memory_space<vmem>>, vector<1x1x128xf32>
    %474 = vector.shape_cast %473 : vector<1x1x128xf32> to vector<1x128xf32>
    %475 = vector.shape_cast %472 : vector<1x128xf32> to vector<1x1x128xf32>
    tpu.vector_store %arg18[%c0_320, %c9, %c8_321], %475 {strides = array<i32>} : memref<2x18x144xf32, #tpu.memory_space<vmem>>, vector<1x1x128xf32>,
    %476 = vector.extract_strided_slice %439 {offsets = [4, 128], sizes = [1, 128], strides = [1, 1]} : vector<8x256xf32> to vector<1x128xf32>
    %c0_322 = arith.constant 0 : index
    %c10 = arith.constant 10 : index
    %c8_323 = arith.constant 8 : index
    %477 = vector.load %arg18[%c0_322, %c10, %c8_323] : memref<2x18x144xf32, #tpu.memory_space<vmem>>, vector<1x1x128xf32>
    %478 = vector.shape_cast %477 : vector<1x1x128xf32> to vector<1x128xf32>
    %479 = vector.shape_cast %476 : vector<1x128xf32> to vector<1x1x128xf32>
    tpu.vector_store %arg18[%c0_322, %c10, %c8_323], %479 {strides = array<i32>} : memref<2x18x144xf32, #tpu.memory_space<vmem>>, vector<1x1x128xf32>,
    %480 = vector.extract_strided_slice %439 {offsets = [5, 0], sizes = [1, 128], strides = [1, 1]} : vector<8x256xf32> to vector<1x128xf32>
    %c0_324 = arith.constant 0 : index
    %c11 = arith.constant 11 : index
    %c8_325 = arith.constant 8 : index
    %481 = vector.load %arg18[%c0_324, %c11, %c8_325] : memref<2x18x144xf32, #tpu.memory_space<vmem>>, vector<1x1x128xf32>
    %482 = vector.shape_cast %481 : vector<1x1x128xf32> to vector<1x128xf32>
    %483 = vector.shape_cast %480 : vector<1x128xf32> to vector<1x1x128xf32>
    tpu.vector_store %arg18[%c0_324, %c11, %c8_325], %483 {strides = array<i32>} : memref<2x18x144xf32, #tpu.memory_space<vmem>>, vector<1x1x128xf32>,
    %484 = vector.extract_strided_slice %439 {offsets = [5, 128], sizes = [1, 128], strides = [1, 1]} : vector<8x256xf32> to vector<1x128xf32>
    %c0_326 = arith.constant 0 : index
    %c12 = arith.constant 12 : index
    %c8_327 = arith.constant 8 : index
    %485 = vector.load %arg18[%c0_326, %c12, %c8_327] : memref<2x18x144xf32, #tpu.memory_space<vmem>>, vector<1x1x128xf32>
    %486 = vector.shape_cast %485 : vector<1x1x128xf32> to vector<1x128xf32>
    %487 = vector.shape_cast %484 : vector<1x128xf32> to vector<1x1x128xf32>
    tpu.vector_store %arg18[%c0_326, %c12, %c8_327], %487 {strides = array<i32>} : memref<2x18x144xf32, #tpu.memory_space<vmem>>, vector<1x1x128xf32>,
    %488 = vector.extract_strided_slice %439 {offsets = [6, 0], sizes = [1, 128], strides = [1, 1]} : vector<8x256xf32> to vector<1x128xf32>
    %c0_328 = arith.constant 0 : index
    %c13 = arith.constant 13 : index
    %c8_329 = arith.constant 8 : index
    %489 = vector.load %arg18[%c0_328, %c13, %c8_329] : memref<2x18x144xf32, #tpu.memory_space<vmem>>, vector<1x1x128xf32>
    %490 = vector.shape_cast %489 : vector<1x1x128xf32> to vector<1x128xf32>
    %491 = vector.shape_cast %488 : vector<1x128xf32> to vector<1x1x128xf32>
    tpu.vector_store %arg18[%c0_328, %c13, %c8_329], %491 {strides = array<i32>} : memref<2x18x144xf32, #tpu.memory_space<vmem>>, vector<1x1x128xf32>,
    %492 = vector.extract_strided_slice %439 {offsets = [6, 128], sizes = [1, 128], strides = [1, 1]} : vector<8x256xf32> to vector<1x128xf32>
    %c0_330 = arith.constant 0 : index
    %c14 = arith.constant 14 : index
    %c8_331 = arith.constant 8 : index
    %493 = vector.load %arg18[%c0_330, %c14, %c8_331] : memref<2x18x144xf32, #tpu.memory_space<vmem>>, vector<1x1x128xf32>
    %494 = vector.shape_cast %493 : vector<1x1x128xf32> to vector<1x128xf32>
    %495 = vector.shape_cast %492 : vector<1x128xf32> to vector<1x1x128xf32>
    tpu.vector_store %arg18[%c0_330, %c14, %c8_331], %495 {strides = array<i32>} : memref<2x18x144xf32, #tpu.memory_space<vmem>>, vector<1x1x128xf32>,
    %496 = vector.extract_strided_slice %439 {offsets = [7, 0], sizes = [1, 128], strides = [1, 1]} : vector<8x256xf32> to vector<1x128xf32>
    %c0_332 = arith.constant 0 : index
    %c15 = arith.constant 15 : index
    %c8_333 = arith.constant 8 : index
    %497 = vector.load %arg18[%c0_332, %c15, %c8_333] : memref<2x18x144xf32, #tpu.memory_space<vmem>>, vector<1x1x128xf32>
    %498 = vector.shape_cast %497 : vector<1x1x128xf32> to vector<1x128xf32>
    %499 = vector.shape_cast %496 : vector<1x128xf32> to vector<1x1x128xf32>
    tpu.vector_store %arg18[%c0_332, %c15, %c8_333], %499 {strides = array<i32>} : memref<2x18x144xf32, #tpu.memory_space<vmem>>, vector<1x1x128xf32>,
    %500 = vector.extract_strided_slice %439 {offsets = [7, 128], sizes = [1, 128], strides = [1, 1]} : vector<8x256xf32> to vector<1x128xf32>
    %c0_334 = arith.constant 0 : index
    %c16_335 = arith.constant 16 : index
    %c8_336 = arith.constant 8 : index
    %501 = vector.load %arg18[%c0_334, %c16_335, %c8_336] : memref<2x18x144xf32, #tpu.memory_space<vmem>>, vector<1x1x128xf32>
    %502 = vector.shape_cast %501 : vector<1x1x128xf32> to vector<1x128xf32>
    %503 = vector.shape_cast %500 : vector<1x128xf32> to vector<1x1x128xf32>
    tpu.vector_store %arg18[%c0_334, %c16_335, %c8_336], %503 {strides = array<i32>} : memref<2x18x144xf32, #tpu.memory_space<vmem>>, vector<1x1x128xf32>,
    %c1_337 = arith.constant 1 : index
    %c0_338 = arith.constant 0 : index
    %c0_339 = arith.constant 0 : index
    %504 = vector.load %arg17[%c1_337, %c0_338, %c0_339] : memref<2x10x160xf32, #tpu.memory_space<vmem>>, vector<1x8x160xf32>
    %505 = vector.shape_cast %504 : vector<1x8x160xf32> to vector<8x160xf32>
    %c0_340 = arith.constant 0 : index
    %c0_341 = arith.constant 0 : index
    %c0_342 = arith.constant 0 : index
    %506 = vector.load %arg10[%c0_340, %c0_341, %c0_342] : memref<3x160x256xf32, #tpu.memory_space<vmem>>, vector<1x160x256xf32>
    %507 = vector.shape_cast %506 : vector<1x160x256xf32> to vector<160x256xf32>
    %cst_343 = arith.constant dense<0.000000e+00> : vector<8x256xf32>
    %508 = tpu.matmul %505, %507, %cst_343 {dimension_numbers = #tpu.dot_dimension_numbers<[1], [0], [0], [1], [0, 0, 1, 1], [], []>} : vector<8x160xf32>, vector<160x256xf32>, vector<8x256xf32> -> vector<8x256xf32>
    %c1_344 = arith.constant 1 : index
    %c1_345 = arith.constant 1 : index
    %c0_346 = arith.constant 0 : index
    %509 = vector.load %arg17[%c1_344, %c1_345, %c0_346] : memref<2x10x160xf32, #tpu.memory_space<vmem>>, vector<1x8x160xf32>
    %510 = vector.shape_cast %509 : vector<1x8x160xf32> to vector<8x160xf32>
    %c1_347 = arith.constant 1 : index
    %c0_348 = arith.constant 0 : index
    %c0_349 = arith.constant 0 : index
    %511 = vector.load %arg10[%c1_347, %c0_348, %c0_349] : memref<3x160x256xf32, #tpu.memory_space<vmem>>, vector<1x160x256xf32>
    %512 = vector.shape_cast %511 : vector<1x160x256xf32> to vector<160x256xf32>
    %cst_350 = arith.constant dense<0.000000e+00> : vector<8x256xf32>
    %513 = tpu.matmul %510, %512, %cst_350 {dimension_numbers = #tpu.dot_dimension_numbers<[1], [0], [0], [1], [0, 0, 1, 1], [], []>} : vector<8x160xf32>, vector<160x256xf32>, vector<8x256xf32> -> vector<8x256xf32>
    %514 = arith.addf %508, %513 : vector<8x256xf32>
    %c1_351 = arith.constant 1 : index
    %c2_352 = arith.constant 2 : index
    %c0_353 = arith.constant 0 : index
    %515 = vector.load %arg17[%c1_351, %c2_352, %c0_353] : memref<2x10x160xf32, #tpu.memory_space<vmem>>, vector<1x8x160xf32>
    %516 = vector.shape_cast %515 : vector<1x8x160xf32> to vector<8x160xf32>
    %c2_354 = arith.constant 2 : index
    %c0_355 = arith.constant 0 : index
    %c0_356 = arith.constant 0 : index
    %517 = vector.load %arg10[%c2_354, %c0_355, %c0_356] : memref<3x160x256xf32, #tpu.memory_space<vmem>>, vector<1x160x256xf32>
    %518 = vector.shape_cast %517 : vector<1x160x256xf32> to vector<160x256xf32>
    %cst_357 = arith.constant dense<0.000000e+00> : vector<8x256xf32>
    %519 = tpu.matmul %516, %518, %cst_357 {dimension_numbers = #tpu.dot_dimension_numbers<[1], [0], [0], [1], [0, 0, 1, 1], [], []>} : vector<8x160xf32>, vector<160x256xf32>, vector<8x256xf32> -> vector<8x256xf32>
    %520 = arith.addf %514, %519 : vector<8x256xf32>
    %c0_358 = arith.constant 0 : index
    %c0_359 = arith.constant 0 : index
    %521 = vector.load %arg11[%c0_358, %c0_359] : memref<1x256xf32, #tpu.memory_space<vmem>>, vector<1x256xf32>
    %522 = vector.broadcast %521 : vector<1x256xf32> to vector<8x256xf32>
    %523 = arith.addf %520, %522 : vector<8x256xf32>
    %cst_360 = arith.constant 0.000000e+00 : f32
    %524 = vector.broadcast %cst_360 : f32 to vector<8x256xf32>
    %525 = arith.maximumf %523, %524 : vector<8x256xf32>
    %526 = vector.broadcast %16 : f32 to vector<8x256xf32>
    %527 = arith.mulf %526, %525 : vector<8x256xf32>
    %528 = math.tanh %523 : vector<8x256xf32>
    %529 = vector.broadcast %17 : f32 to vector<8x256xf32>
    %530 = arith.mulf %529, %528 : vector<8x256xf32>
    %531 = arith.addf %527, %530 : vector<8x256xf32>
    %cst_361 = arith.constant 0.000000e+00 : f32
    %532 = vector.broadcast %cst_361 : f32 to vector<8x256xf32>
    %533 = arith.cmpf ogt, %523, %532 : vector<8x256xf32>
    %cst_362 = arith.constant 2.000000e-01 : f32
    %534 = vector.broadcast %cst_362 : f32 to vector<8x256xf32>
    %535 = arith.mulf %534, %523 : vector<8x256xf32>
    %536 = arith.select %533, %523, %535 : vector<8x256xi1>, vector<8x256xf32>
    %537 = vector.broadcast %18 : f32 to vector<8x256xf32>
    %538 = arith.mulf %537, %536 : vector<8x256xf32>
    %539 = arith.addf %531, %538 : vector<8x256xf32>
    %cst_363 = arith.constant 0.000000e+00 : f32
    %540 = vector.broadcast %cst_363 : f32 to vector<8x256xf32>
    %541 = arith.cmpf ogt, %523, %540 : vector<8x256xf32>
    %cst_364 = arith.constant 0.000000e+00 : f32
    %542 = vector.broadcast %cst_364 : f32 to vector<8x256xf32>
    %543 = arith.minimumf %523, %542 : vector<8x256xf32>
    %544 = math.exp %543 : vector<8x256xf32>
    %cst_365 = arith.constant 1.000000e+00 : f32
    %545 = vector.broadcast %cst_365 : f32 to vector<8x256xf32>
    %546 = arith.subf %544, %545 : vector<8x256xf32>
    %547 = arith.select %541, %523, %546 : vector<8x256xi1>, vector<8x256xf32>
    %548 = vector.broadcast %19 : f32 to vector<8x256xf32>
    %549 = arith.mulf %548, %547 : vector<8x256xf32>
    %550 = arith.addf %539, %549 : vector<8x256xf32>
    %551 = vector.extract_strided_slice %550 {offsets = [0, 0], sizes = [1, 128], strides = [1, 1]} : vector<8x256xf32> to vector<1x128xf32>
    %c1_366 = arith.constant 1 : index
    %c1_367 = arith.constant 1 : index
    %c8_368 = arith.constant 8 : index
    %552 = vector.load %arg18[%c1_366, %c1_367, %c8_368] : memref<2x18x144xf32, #tpu.memory_space<vmem>>, vector<1x1x128xf32>
    %553 = vector.shape_cast %552 : vector<1x1x128xf32> to vector<1x128xf32>
    %554 = vector.shape_cast %551 : vector<1x128xf32> to vector<1x1x128xf32>
    tpu.vector_store %arg18[%c1_366, %c1_367, %c8_368], %554 {strides = array<i32>} : memref<2x18x144xf32, #tpu.memory_space<vmem>>, vector<1x1x128xf32>,
    %555 = vector.extract_strided_slice %550 {offsets = [0, 128], sizes = [1, 128], strides = [1, 1]} : vector<8x256xf32> to vector<1x128xf32>
    %c1_369 = arith.constant 1 : index
    %c2_370 = arith.constant 2 : index
    %c8_371 = arith.constant 8 : index
    %556 = vector.load %arg18[%c1_369, %c2_370, %c8_371] : memref<2x18x144xf32, #tpu.memory_space<vmem>>, vector<1x1x128xf32>
    %557 = vector.shape_cast %556 : vector<1x1x128xf32> to vector<1x128xf32>
    %558 = vector.shape_cast %555 : vector<1x128xf32> to vector<1x1x128xf32>
    tpu.vector_store %arg18[%c1_369, %c2_370, %c8_371], %558 {strides = array<i32>} : memref<2x18x144xf32, #tpu.memory_space<vmem>>, vector<1x1x128xf32>,
    %559 = vector.extract_strided_slice %550 {offsets = [1, 0], sizes = [1, 128], strides = [1, 1]} : vector<8x256xf32> to vector<1x128xf32>
    %c1_372 = arith.constant 1 : index
    %c3_373 = arith.constant 3 : index
    %c8_374 = arith.constant 8 : index
    %560 = vector.load %arg18[%c1_372, %c3_373, %c8_374] : memref<2x18x144xf32, #tpu.memory_space<vmem>>, vector<1x1x128xf32>
    %561 = vector.shape_cast %560 : vector<1x1x128xf32> to vector<1x128xf32>
    %562 = vector.shape_cast %559 : vector<1x128xf32> to vector<1x1x128xf32>
    tpu.vector_store %arg18[%c1_372, %c3_373, %c8_374], %562 {strides = array<i32>} : memref<2x18x144xf32, #tpu.memory_space<vmem>>, vector<1x1x128xf32>,
    %563 = vector.extract_strided_slice %550 {offsets = [1, 128], sizes = [1, 128], strides = [1, 1]} : vector<8x256xf32> to vector<1x128xf32>
    %c1_375 = arith.constant 1 : index
    %c4_376 = arith.constant 4 : index
    %c8_377 = arith.constant 8 : index
    %564 = vector.load %arg18[%c1_375, %c4_376, %c8_377] : memref<2x18x144xf32, #tpu.memory_space<vmem>>, vector<1x1x128xf32>
    %565 = vector.shape_cast %564 : vector<1x1x128xf32> to vector<1x128xf32>
    %566 = vector.shape_cast %563 : vector<1x128xf32> to vector<1x1x128xf32>
    tpu.vector_store %arg18[%c1_375, %c4_376, %c8_377], %566 {strides = array<i32>} : memref<2x18x144xf32, #tpu.memory_space<vmem>>, vector<1x1x128xf32>,
    %567 = vector.extract_strided_slice %550 {offsets = [2, 0], sizes = [1, 128], strides = [1, 1]} : vector<8x256xf32> to vector<1x128xf32>
    %c1_378 = arith.constant 1 : index
    %c5_379 = arith.constant 5 : index
    %c8_380 = arith.constant 8 : index
    %568 = vector.load %arg18[%c1_378, %c5_379, %c8_380] : memref<2x18x144xf32, #tpu.memory_space<vmem>>, vector<1x1x128xf32>
    %569 = vector.shape_cast %568 : vector<1x1x128xf32> to vector<1x128xf32>
    %570 = vector.shape_cast %567 : vector<1x128xf32> to vector<1x1x128xf32>
    tpu.vector_store %arg18[%c1_378, %c5_379, %c8_380], %570 {strides = array<i32>} : memref<2x18x144xf32, #tpu.memory_space<vmem>>, vector<1x1x128xf32>,
    %571 = vector.extract_strided_slice %550 {offsets = [2, 128], sizes = [1, 128], strides = [1, 1]} : vector<8x256xf32> to vector<1x128xf32>
    %c1_381 = arith.constant 1 : index
    %c6_382 = arith.constant 6 : index
    %c8_383 = arith.constant 8 : index
    %572 = vector.load %arg18[%c1_381, %c6_382, %c8_383] : memref<2x18x144xf32, #tpu.memory_space<vmem>>, vector<1x1x128xf32>
    %573 = vector.shape_cast %572 : vector<1x1x128xf32> to vector<1x128xf32>
    %574 = vector.shape_cast %571 : vector<1x128xf32> to vector<1x1x128xf32>
    tpu.vector_store %arg18[%c1_381, %c6_382, %c8_383], %574 {strides = array<i32>} : memref<2x18x144xf32, #tpu.memory_space<vmem>>, vector<1x1x128xf32>,
    %575 = vector.extract_strided_slice %550 {offsets = [3, 0], sizes = [1, 128], strides = [1, 1]} : vector<8x256xf32> to vector<1x128xf32>
    %c1_384 = arith.constant 1 : index
    %c7_385 = arith.constant 7 : index
    %c8_386 = arith.constant 8 : index
    %576 = vector.load %arg18[%c1_384, %c7_385, %c8_386] : memref<2x18x144xf32, #tpu.memory_space<vmem>>, vector<1x1x128xf32>
    %577 = vector.shape_cast %576 : vector<1x1x128xf32> to vector<1x128xf32>
    %578 = vector.shape_cast %575 : vector<1x128xf32> to vector<1x1x128xf32>
    tpu.vector_store %arg18[%c1_384, %c7_385, %c8_386], %578 {strides = array<i32>} : memref<2x18x144xf32, #tpu.memory_space<vmem>>, vector<1x1x128xf32>,
    %579 = vector.extract_strided_slice %550 {offsets = [3, 128], sizes = [1, 128], strides = [1, 1]} : vector<8x256xf32> to vector<1x128xf32>
    %c1_387 = arith.constant 1 : index
    %c8_388 = arith.constant 8 : index
    %c8_389 = arith.constant 8 : index
    %580 = vector.load %arg18[%c1_387, %c8_388, %c8_389] : memref<2x18x144xf32, #tpu.memory_space<vmem>>, vector<1x1x128xf32>
    %581 = vector.shape_cast %580 : vector<1x1x128xf32> to vector<1x128xf32>
    %582 = vector.shape_cast %579 : vector<1x128xf32> to vector<1x1x128xf32>
    tpu.vector_store %arg18[%c1_387, %c8_388, %c8_389], %582 {strides = array<i32>} : memref<2x18x144xf32, #tpu.memory_space<vmem>>, vector<1x1x128xf32>,
    %583 = vector.extract_strided_slice %550 {offsets = [4, 0], sizes = [1, 128], strides = [1, 1]} : vector<8x256xf32> to vector<1x128xf32>
    %c1_390 = arith.constant 1 : index
    %c9_391 = arith.constant 9 : index
    %c8_392 = arith.constant 8 : index
    %584 = vector.load %arg18[%c1_390, %c9_391, %c8_392] : memref<2x18x144xf32, #tpu.memory_space<vmem>>, vector<1x1x128xf32>
    %585 = vector.shape_cast %584 : vector<1x1x128xf32> to vector<1x128xf32>
    %586 = vector.shape_cast %583 : vector<1x128xf32> to vector<1x1x128xf32>
    tpu.vector_store %arg18[%c1_390, %c9_391, %c8_392], %586 {strides = array<i32>} : memref<2x18x144xf32, #tpu.memory_space<vmem>>, vector<1x1x128xf32>,
    %587 = vector.extract_strided_slice %550 {offsets = [4, 128], sizes = [1, 128], strides = [1, 1]} : vector<8x256xf32> to vector<1x128xf32>
    %c1_393 = arith.constant 1 : index
    %c10_394 = arith.constant 10 : index
    %c8_395 = arith.constant 8 : index
    %588 = vector.load %arg18[%c1_393, %c10_394, %c8_395] : memref<2x18x144xf32, #tpu.memory_space<vmem>>, vector<1x1x128xf32>
    %589 = vector.shape_cast %588 : vector<1x1x128xf32> to vector<1x128xf32>
    %590 = vector.shape_cast %587 : vector<1x128xf32> to vector<1x1x128xf32>
    tpu.vector_store %arg18[%c1_393, %c10_394, %c8_395], %590 {strides = array<i32>} : memref<2x18x144xf32, #tpu.memory_space<vmem>>, vector<1x1x128xf32>,
    %591 = vector.extract_strided_slice %550 {offsets = [5, 0], sizes = [1, 128], strides = [1, 1]} : vector<8x256xf32> to vector<1x128xf32>
    %c1_396 = arith.constant 1 : index
    %c11_397 = arith.constant 11 : index
    %c8_398 = arith.constant 8 : index
    %592 = vector.load %arg18[%c1_396, %c11_397, %c8_398] : memref<2x18x144xf32, #tpu.memory_space<vmem>>, vector<1x1x128xf32>
    %593 = vector.shape_cast %592 : vector<1x1x128xf32> to vector<1x128xf32>
    %594 = vector.shape_cast %591 : vector<1x128xf32> to vector<1x1x128xf32>
    tpu.vector_store %arg18[%c1_396, %c11_397, %c8_398], %594 {strides = array<i32>} : memref<2x18x144xf32, #tpu.memory_space<vmem>>, vector<1x1x128xf32>,
    %595 = vector.extract_strided_slice %550 {offsets = [5, 128], sizes = [1, 128], strides = [1, 1]} : vector<8x256xf32> to vector<1x128xf32>
    %c1_399 = arith.constant 1 : index
    %c12_400 = arith.constant 12 : index
    %c8_401 = arith.constant 8 : index
    %596 = vector.load %arg18[%c1_399, %c12_400, %c8_401] : memref<2x18x144xf32, #tpu.memory_space<vmem>>, vector<1x1x128xf32>
    %597 = vector.shape_cast %596 : vector<1x1x128xf32> to vector<1x128xf32>
    %598 = vector.shape_cast %595 : vector<1x128xf32> to vector<1x1x128xf32>
    tpu.vector_store %arg18[%c1_399, %c12_400, %c8_401], %598 {strides = array<i32>} : memref<2x18x144xf32, #tpu.memory_space<vmem>>, vector<1x1x128xf32>,
    %599 = vector.extract_strided_slice %550 {offsets = [6, 0], sizes = [1, 128], strides = [1, 1]} : vector<8x256xf32> to vector<1x128xf32>
    %c1_402 = arith.constant 1 : index
    %c13_403 = arith.constant 13 : index
    %c8_404 = arith.constant 8 : index
    %600 = vector.load %arg18[%c1_402, %c13_403, %c8_404] : memref<2x18x144xf32, #tpu.memory_space<vmem>>, vector<1x1x128xf32>
    %601 = vector.shape_cast %600 : vector<1x1x128xf32> to vector<1x128xf32>
    %602 = vector.shape_cast %599 : vector<1x128xf32> to vector<1x1x128xf32>
    tpu.vector_store %arg18[%c1_402, %c13_403, %c8_404], %602 {strides = array<i32>} : memref<2x18x144xf32, #tpu.memory_space<vmem>>, vector<1x1x128xf32>,
    %603 = vector.extract_strided_slice %550 {offsets = [6, 128], sizes = [1, 128], strides = [1, 1]} : vector<8x256xf32> to vector<1x128xf32>
    %c1_405 = arith.constant 1 : index
    %c14_406 = arith.constant 14 : index
    %c8_407 = arith.constant 8 : index
    %604 = vector.load %arg18[%c1_405, %c14_406, %c8_407] : memref<2x18x144xf32, #tpu.memory_space<vmem>>, vector<1x1x128xf32>
    %605 = vector.shape_cast %604 : vector<1x1x128xf32> to vector<1x128xf32>
    %606 = vector.shape_cast %603 : vector<1x128xf32> to vector<1x1x128xf32>
    tpu.vector_store %arg18[%c1_405, %c14_406, %c8_407], %606 {strides = array<i32>} : memref<2x18x144xf32, #tpu.memory_space<vmem>>, vector<1x1x128xf32>,
    %607 = vector.extract_strided_slice %550 {offsets = [7, 0], sizes = [1, 128], strides = [1, 1]} : vector<8x256xf32> to vector<1x128xf32>
    %c1_408 = arith.constant 1 : index
    %c15_409 = arith.constant 15 : index
    %c8_410 = arith.constant 8 : index
    %608 = vector.load %arg18[%c1_408, %c15_409, %c8_410] : memref<2x18x144xf32, #tpu.memory_space<vmem>>, vector<1x1x128xf32>
    %609 = vector.shape_cast %608 : vector<1x1x128xf32> to vector<1x128xf32>
    %610 = vector.shape_cast %607 : vector<1x128xf32> to vector<1x1x128xf32>
    tpu.vector_store %arg18[%c1_408, %c15_409, %c8_410], %610 {strides = array<i32>} : memref<2x18x144xf32, #tpu.memory_space<vmem>>, vector<1x1x128xf32>,
    %611 = vector.extract_strided_slice %550 {offsets = [7, 128], sizes = [1, 128], strides = [1, 1]} : vector<8x256xf32> to vector<1x128xf32>
    %c1_411 = arith.constant 1 : index
    %c16_412 = arith.constant 16 : index
    %c8_413 = arith.constant 8 : index
    %612 = vector.load %arg18[%c1_411, %c16_412, %c8_413] : memref<2x18x144xf32, #tpu.memory_space<vmem>>, vector<1x1x128xf32>
    %613 = vector.shape_cast %612 : vector<1x1x128xf32> to vector<1x128xf32>
    %614 = vector.shape_cast %611 : vector<1x128xf32> to vector<1x1x128xf32>
    tpu.vector_store %arg18[%c1_411, %c16_412, %c8_413], %614 {strides = array<i32>} : memref<2x18x144xf32, #tpu.memory_space<vmem>>, vector<1x1x128xf32>,
    %c0_414 = arith.constant 0 : index
    %c0_415 = arith.constant 0 : index
    %c0_416 = arith.constant 0 : index
    %615 = vector.load %arg18[%c0_414, %c0_415, %c0_416] : memref<2x18x144xf32, #tpu.memory_space<vmem>>, vector<1x16x144xf32>
    %616 = vector.shape_cast %615 : vector<1x16x144xf32> to vector<16x144xf32>
    %c0_417 = arith.constant 0 : index
    %c0_418 = arith.constant 0 : index
    %c0_419 = arith.constant 0 : index
    %617 = vector.load %arg12[%c0_417, %c0_418, %c0_419] : memref<3x144x32xf32, #tpu.memory_space<vmem>>, vector<1x144x32xf32>
    %618 = vector.shape_cast %617 : vector<1x144x32xf32> to vector<144x32xf32>
    %cst_420 = arith.constant dense<0.000000e+00> : vector<16x32xf32>
    %619 = tpu.matmul %616, %618, %cst_420 {dimension_numbers = #tpu.dot_dimension_numbers<[1], [0], [0], [1], [0, 0, 1, 1], [], []>} : vector<16x144xf32>, vector<144x32xf32>, vector<16x32xf32> -> vector<16x32xf32>
    %c0_421 = arith.constant 0 : index
    %c1_422 = arith.constant 1 : index
    %c0_423 = arith.constant 0 : index
    %620 = vector.load %arg18[%c0_421, %c1_422, %c0_423] : memref<2x18x144xf32, #tpu.memory_space<vmem>>, vector<1x16x144xf32>
    %621 = vector.shape_cast %620 : vector<1x16x144xf32> to vector<16x144xf32>
    %c1_424 = arith.constant 1 : index
    %c0_425 = arith.constant 0 : index
    %c0_426 = arith.constant 0 : index
    %622 = vector.load %arg12[%c1_424, %c0_425, %c0_426] : memref<3x144x32xf32, #tpu.memory_space<vmem>>, vector<1x144x32xf32>
    %623 = vector.shape_cast %622 : vector<1x144x32xf32> to vector<144x32xf32>
    %cst_427 = arith.constant dense<0.000000e+00> : vector<16x32xf32>
    %624 = tpu.matmul %621, %623, %cst_427 {dimension_numbers = #tpu.dot_dimension_numbers<[1], [0], [0], [1], [0, 0, 1, 1], [], []>} : vector<16x144xf32>, vector<144x32xf32>, vector<16x32xf32> -> vector<16x32xf32>
    %625 = arith.addf %619, %624 : vector<16x32xf32>
    %c0_428 = arith.constant 0 : index
    %c2_429 = arith.constant 2 : index
    %c0_430 = arith.constant 0 : index
    %626 = vector.load %arg18[%c0_428, %c2_429, %c0_430] : memref<2x18x144xf32, #tpu.memory_space<vmem>>, vector<1x16x144xf32>
    %627 = vector.shape_cast %626 : vector<1x16x144xf32> to vector<16x144xf32>
    %c2_431 = arith.constant 2 : index
    %c0_432 = arith.constant 0 : index
    %c0_433 = arith.constant 0 : index
    %628 = vector.load %arg12[%c2_431, %c0_432, %c0_433] : memref<3x144x32xf32, #tpu.memory_space<vmem>>, vector<1x144x32xf32>
    %629 = vector.shape_cast %628 : vector<1x144x32xf32> to vector<144x32xf32>
    %cst_434 = arith.constant dense<0.000000e+00> : vector<16x32xf32>
    %630 = tpu.matmul %627, %629, %cst_434 {dimension_numbers = #tpu.dot_dimension_numbers<[1], [0], [0], [1], [0, 0, 1, 1], [], []>} : vector<16x144xf32>, vector<144x32xf32>, vector<16x32xf32> -> vector<16x32xf32>
    %631 = arith.addf %625, %630 : vector<16x32xf32>
    %c0_435 = arith.constant 0 : index
    %c0_436 = arith.constant 0 : index
    %632 = vector.load %arg13[%c0_435, %c0_436] : memref<1x32xf32, #tpu.memory_space<vmem>>, vector<1x32xf32>
    %633 = vector.broadcast %632 : vector<1x32xf32> to vector<16x32xf32>
    %634 = arith.addf %631, %633 : vector<16x32xf32>
    %635 = vector.extract_strided_slice %634 {offsets = [0, 16], sizes = [16, 16], strides = [1, 1]} : vector<16x32xf32> to vector<16x16xf32>
    %636 = arith.negf %635 : vector<16x16xf32>
    %637 = math.exp %636 : vector<16x16xf32>
    %cst_437 = arith.constant 1.000000e+00 : f32
    %638 = vector.broadcast %cst_437 : f32 to vector<16x16xf32>
    %639 = arith.addf %638, %637 : vector<16x16xf32>
    %640 = arith.divf %638, %639 : vector<16x16xf32>
    %641 = vector.extract_strided_slice %634 {offsets = [0, 0], sizes = [16, 16], strides = [1, 1]} : vector<16x32xf32> to vector<16x16xf32>
    %642 = math.tanh %641 : vector<16x16xf32>
    %643 = arith.mulf %642, %640 : vector<16x16xf32>
    %c0_438 = arith.constant 0 : index
    %c0_439 = arith.constant 0 : index
    %c0_440 = arith.constant 0 : index
    %c0_441 = arith.constant 0 : index
    %644 = vector.load %arg14[%c0_438, %c0_439, %c0_440, %c0_441] : memref<2x1x16x16xf32, #tpu.memory_space<vmem>>, vector<1x1x16x16xf32>
    %645 = vector.shape_cast %644 : vector<1x1x16x16xf32> to vector<16x16xf32>
    %646 = vector.shape_cast %643 : vector<16x16xf32> to vector<1x1x16x16xf32>
    tpu.vector_store %arg14[%c0_438, %c0_439, %c0_440, %c0_441], %646 {strides = array<i32>} : memref<2x1x16x16xf32, #tpu.memory_space<vmem>>, vector<1x1x16x16xf32>,
    %c1_442 = arith.constant 1 : index
    %c0_443 = arith.constant 0 : index
    %c0_444 = arith.constant 0 : index
    %647 = vector.load %arg18[%c1_442, %c0_443, %c0_444] : memref<2x18x144xf32, #tpu.memory_space<vmem>>, vector<1x16x144xf32>
    %648 = vector.shape_cast %647 : vector<1x16x144xf32> to vector<16x144xf32>
    %c0_445 = arith.constant 0 : index
    %c0_446 = arith.constant 0 : index
    %c0_447 = arith.constant 0 : index
    %649 = vector.load %arg12[%c0_445, %c0_446, %c0_447] : memref<3x144x32xf32, #tpu.memory_space<vmem>>, vector<1x144x32xf32>
    %650 = vector.shape_cast %649 : vector<1x144x32xf32> to vector<144x32xf32>
    %cst_448 = arith.constant dense<0.000000e+00> : vector<16x32xf32>
    %651 = tpu.matmul %648, %650, %cst_448 {dimension_numbers = #tpu.dot_dimension_numbers<[1], [0], [0], [1], [0, 0, 1, 1], [], []>} : vector<16x144xf32>, vector<144x32xf32>, vector<16x32xf32> -> vector<16x32xf32>
    %c1_449 = arith.constant 1 : index
    %c1_450 = arith.constant 1 : index
    %c0_451 = arith.constant 0 : index
    %652 = vector.load %arg18[%c1_449, %c1_450, %c0_451] : memref<2x18x144xf32, #tpu.memory_space<vmem>>, vector<1x16x144xf32>
    %653 = vector.shape_cast %652 : vector<1x16x144xf32> to vector<16x144xf32>
    %c1_452 = arith.constant 1 : index
    %c0_453 = arith.constant 0 : index
    %c0_454 = arith.constant 0 : index
    %654 = vector.load %arg12[%c1_452, %c0_453, %c0_454] : memref<3x144x32xf32, #tpu.memory_space<vmem>>, vector<1x144x32xf32>
    %655 = vector.shape_cast %654 : vector<1x144x32xf32> to vector<144x32xf32>
    %cst_455 = arith.constant dense<0.000000e+00> : vector<16x32xf32>
    %656 = tpu.matmul %653, %655, %cst_455 {dimension_numbers = #tpu.dot_dimension_numbers<[1], [0], [0], [1], [0, 0, 1, 1], [], []>} : vector<16x144xf32>, vector<144x32xf32>, vector<16x32xf32> -> vector<16x32xf32>
    %657 = arith.addf %651, %656 : vector<16x32xf32>
    %c1_456 = arith.constant 1 : index
    %c2_457 = arith.constant 2 : index
    %c0_458 = arith.constant 0 : index
    %658 = vector.load %arg18[%c1_456, %c2_457, %c0_458] : memref<2x18x144xf32, #tpu.memory_space<vmem>>, vector<1x16x144xf32>
    %659 = vector.shape_cast %658 : vector<1x16x144xf32> to vector<16x144xf32>
    %c2_459 = arith.constant 2 : index
    %c0_460 = arith.constant 0 : index
    %c0_461 = arith.constant 0 : index
    %660 = vector.load %arg12[%c2_459, %c0_460, %c0_461] : memref<3x144x32xf32, #tpu.memory_space<vmem>>, vector<1x144x32xf32>
    %661 = vector.shape_cast %660 : vector<1x144x32xf32> to vector<144x32xf32>
    %cst_462 = arith.constant dense<0.000000e+00> : vector<16x32xf32>
    %662 = tpu.matmul %659, %661, %cst_462 {dimension_numbers = #tpu.dot_dimension_numbers<[1], [0], [0], [1], [0, 0, 1, 1], [], []>} : vector<16x144xf32>, vector<144x32xf32>, vector<16x32xf32> -> vector<16x32xf32>
    %663 = arith.addf %657, %662 : vector<16x32xf32>
    %c0_463 = arith.constant 0 : index
    %c0_464 = arith.constant 0 : index
    %664 = vector.load %arg13[%c0_463, %c0_464] : memref<1x32xf32, #tpu.memory_space<vmem>>, vector<1x32xf32>
    %665 = vector.broadcast %664 : vector<1x32xf32> to vector<16x32xf32>
    %666 = arith.addf %663, %665 : vector<16x32xf32>
    %667 = vector.extract_strided_slice %666 {offsets = [0, 16], sizes = [16, 16], strides = [1, 1]} : vector<16x32xf32> to vector<16x16xf32>
    %668 = arith.negf %667 : vector<16x16xf32>
    %669 = math.exp %668 : vector<16x16xf32>
    %cst_465 = arith.constant 1.000000e+00 : f32
    %670 = vector.broadcast %cst_465 : f32 to vector<16x16xf32>
    %671 = arith.addf %670, %669 : vector<16x16xf32>
    %672 = arith.divf %670, %671 : vector<16x16xf32>
    %673 = vector.extract_strided_slice %666 {offsets = [0, 0], sizes = [16, 16], strides = [1, 1]} : vector<16x32xf32> to vector<16x16xf32>
    %674 = math.tanh %673 : vector<16x16xf32>
    %675 = arith.mulf %674, %672 : vector<16x16xf32>
    %c1_466 = arith.constant 1 : index
    %c0_467 = arith.constant 0 : index
    %c0_468 = arith.constant 0 : index
    %c0_469 = arith.constant 0 : index
    %676 = vector.load %arg14[%c1_466, %c0_467, %c0_468, %c0_469] : memref<2x1x16x16xf32, #tpu.memory_space<vmem>>, vector<1x1x16x16xf32>
    %677 = vector.shape_cast %676 : vector<1x1x16x16xf32> to vector<16x16xf32>
    %678 = vector.shape_cast %675 : vector<16x16xf32> to vector<1x1x16x16xf32>
    tpu.vector_store %arg14[%c1_466, %c0_467, %c0_468, %c0_469], %678 {strides = array<i32>} : memref<2x1x16x16xf32, #tpu.memory_space<vmem>>, vector<1x1x16x16xf32>,
    return
  }
}

</mosaic_0001>

<llo_original>
// kernel: nas_noise_decoder.1
$region0: #{nas_noise_decoder.1}
  #allocation0 [shape = 'u32[]', space=smem, size = 0x4, offset = 0x4, fixed_abs, tag = 'smem constant byte address 0x4 - core index']
  #allocation1 [shape = 'u32[144,128]{1,0:T(1,128)}', space=vmem, size = 0x12000, scoped, tag = 'internal scratch']
  #allocation2 [shape = 'f32[2,4,256]{2,1,0:T(4,128)}', space=vmem, size = 0x2000, scoped, tag = 'scratch operand']
  #allocation3 [shape = 'f32[2,6,192]{2,1,0:T(8,128)}', space=vmem, size = 0x4000, scoped, tag = 'scratch operand']
  #allocation4 [shape = 'f32[2,10,160]{2,1,0:T(8,128)}', space=vmem, size = 0x8000, scoped, tag = 'scratch operand']
  #allocation5 [shape = 'f32[2,18,144]{2,1,0:T(8,128)}', space=vmem, size = 0xc000, scoped, tag = 'scratch operand']
  %s0 = inlined_call_operand.vmem [shape: f32[5,4], index: 0, kind: input, shape index: {}]
  %s1 = inlined_call_operand.vmem [shape: f32[2,10], index: 1, kind: input, shape index: {}]
  %s2 = inlined_call_operand.vmem [shape: f32[10,128], index: 2, kind: input, shape index: {}]
  %s3 = inlined_call_operand.vmem [shape: f32[1,128], index: 3, kind: input, shape index: {}]
  %s4 = inlined_call_operand.vmem [shape: f32[128,256], index: 4, kind: input, shape index: {}]
  %s5 = inlined_call_operand.vmem [shape: f32[1,256], index: 5, kind: input, shape index: {}]
  %s6 = inlined_call_operand.hbm [shape: f32[3,256,256], index: 6, kind: input, shape index: {}]
  %s7 = inlined_call_operand.vmem [shape: f32[1,256], index: 7, kind: input, shape index: {}]
  %s8 = inlined_call_operand.hbm [shape: f32[3,192,256], index: 8, kind: input, shape index: {}]
  %s9 = inlined_call_operand.vmem [shape: f32[1,256], index: 9, kind: input, shape index: {}]
  %s10 = inlined_call_operand.hbm [shape: f32[3,160,256], index: 10, kind: input, shape index: {}]
  %s11 = inlined_call_operand.vmem [shape: f32[1,256], index: 11, kind: input, shape index: {}]
  %s12 = inlined_call_operand.vmem [shape: f32[3,144,32], index: 12, kind: input, shape index: {}]
  %s13 = inlined_call_operand.vmem [shape: f32[1,32], index: 13, kind: input, shape index: {}]
  %s14 = inlined_call_operand.hbm [shape: f32[2,1,16,16], index: 14, kind: output, shape index: {}]
  %s15 = sld [smem:[#allocation0]]
  $region82: #{nas_noise_decoder.1} parent=0
    _
  %s17 = ssub.s32 1, %s15
  %s18 = scalar_select 0, %s17, %s15
  $region1: #{nas_noise_decoder.1} parent=0
    #allocation6 [shape = 'u8[4096]{0}', space=smem, size = 0x1000, scoped, tag = 'input window, operand 0, single buffered']
    #allocation7 [shape = 's32[1]{0}', space=sflag, size = 0x4, scoped, tag = 'scoped memory for nas_noise_decoder.1']
    #allocation8 [shape = 's32[1]{0}', space=sflag, size = 0x4, scoped, tag = 'scoped memory for nas_noise_decoder.1']
    #allocation9 [shape = 's32[1]{0}', space=sflag, size = 0x4, scoped, tag = 'scoped memory for nas_noise_decoder.1']
    #allocation10 [shape = 'u8[786432]{0}', space=vmem, size = 0xc0000, scoped, tag = 'input window, operand 6, single buffered']
    #allocation11 [shape = 'u8[589824]{0}', space=vmem, size = 0x90000, scoped, tag = 'input window, operand 8, single buffered']
    #allocation12 [shape = 's32[1]{0}', space=sflag, size = 0x4, scoped, tag = 'scoped memory for nas_noise_decoder.1']
    #allocation13 [shape = 'u8[491520]{0}', space=vmem, size = 0x78000, scoped, tag = 'input window, operand 10, single buffered']
    #allocation14 [shape = 'u8[16384]{0}', space=vmem, size = 0x4000, scoped, tag = 'output window, operand 0, single buffered']
    %19 = vsyncpa [#allocation9], 0
    %20 = vsyncpa [#allocation7], 0
    %21 = vsyncpa [#allocation12], 0
    %22 = vsyncpa [#allocation8], 0
    // Predicated region
    $region2: #{nas_noise_decoder.1} parent=1 // pred_check
      _
    $region3: #{nas_noise_decoder.1} parent=1 // pred_check_branch
      %24 = sbr.rel (0) target = $region5
    $region4: #{nas_noise_decoder.1} parent=1 // pred_region
      %s26 = ssub.s32 128, 128
      %27 = vsyncadd [#allocation9], %s26
      %s29 = sshll.u32 %s0, 4
      %s30 = int_to_ptr.vmem [resolvable:$true] %s29
      %32 = dma.vmem_to_smem %s30, 128, [#allocation6], [#allocation9]
    $region5: #{nas_noise_decoder.1} parent=1 // pred_fallthru
      _
    // Predicated region
    $region6: #{nas_noise_decoder.1} parent=1 // pred_check
      _
    $region7: #{nas_noise_decoder.1} parent=1 // pred_check_branch
      %34 = sbr.rel (0) target = $region9
    $region8: #{nas_noise_decoder.1} parent=1 // pred_region
      _
    $region9: #{nas_noise_decoder.1} parent=1 // pred_fallthru
      _
    // Predicated region
    $region10: #{nas_noise_decoder.1} parent=1 // pred_check
      _
    $region11: #{nas_noise_decoder.1} parent=1 // pred_check_branch
      %36 = sbr.rel (0) target = $region13
    $region12: #{nas_noise_decoder.1} parent=1 // pred_region
      _
    $region13: #{nas_noise_decoder.1} parent=1 // pred_fallthru
      _
    // Predicated region
    $region14: #{nas_noise_decoder.1} parent=1 // pred_check
      _
    $region15: #{nas_noise_decoder.1} parent=1 // pred_check_branch
      %38 = sbr.rel (0) target = $region17
    $region16: #{nas_noise_decoder.1} parent=1 // pred_region
      _
    $region17: #{nas_noise_decoder.1} parent=1 // pred_fallthru
      _
    // Predicated region
    $region18: #{nas_noise_decoder.1} parent=1 // pred_check
      _
    $region19: #{nas_noise_decoder.1} parent=1 // pred_check_branch
      %40 = sbr.rel (0) target = $region21
    $region20: #{nas_noise_decoder.1} parent=1 // pred_region
      _
    $region21: #{nas_noise_decoder.1} parent=1 // pred_fallthru
      _
    // Predicated region
    $region22: #{nas_noise_decoder.1} parent=1 // pred_check
      _
    $region23: #{nas_noise_decoder.1} parent=1 // pred_check_branch
      %42 = sbr.rel (0) target = $region25
    $region24: #{nas_noise_decoder.1} parent=1 // pred_region
      _
    $region25: #{nas_noise_decoder.1} parent=1 // pred_fallthru
      _
    // Predicated region
    $region26: #{nas_noise_decoder.1} parent=1 // pred_check
      _
    $region27: #{nas_noise_decoder.1} parent=1 // pred_check_branch
      %44 = sbr.rel (0) target = $region29
    $region28: #{nas_noise_decoder.1} parent=1 // pred_region
      %s46 = ssub.s32 24576, 24576
      %47 = vsyncadd [#allocation7], %s46
      %s48 = sshll.u32 [#allocation10], 4
      %s49 = int_to_ptr.vmem [resolvable:$true] %s48
      %54 = dma.hbm_to_vmem [thread:$0]  %s6, 24576, %s49, [#allocation7], 256, 256, 16
    $region29: #{nas_noise_decoder.1} parent=1 // pred_fallthru
      _
    // Predicated region
    $region30: #{nas_noise_decoder.1} parent=1 // pred_check
      _
    $region31: #{nas_noise_decoder.1} parent=1 // pred_check_branch
      %56 = sbr.rel (0) target = $region33
    $region32: #{nas_noise_decoder.1} parent=1 // pred_region
      _
    $region33: #{nas_noise_decoder.1} parent=1 // pred_fallthru
      _
    // Predicated region
    $region34: #{nas_noise_decoder.1} parent=1 // pred_check
      _
    $region35: #{nas_noise_decoder.1} parent=1 // pred_check_branch
      %58 = sbr.rel (0) target = $region37
    $region36: #{nas_noise_decoder.1} parent=1 // pred_region
      %s60 = ssub.s32 18432, 18432
      %61 = vsyncadd [#allocation12], %s60
      %s62 = sshll.u32 [#allocation11], 4
      %s63 = int_to_ptr.vmem [resolvable:$true] %s62
      %68 = dma.hbm_to_vmem [thread:$0]  %s8, 18432, %s63, [#allocation12], 256, 256, 16
    $region37: #{nas_noise_decoder.1} parent=1 // pred_fallthru
      _
    // Predicated region
    $region38: #{nas_noise_decoder.1} parent=1 // pred_check
      _
    $region39: #{nas_noise_decoder.1} parent=1 // pred_check_branch
      %70 = sbr.rel (0) target = $region41
    $region40: #{nas_noise_decoder.1} parent=1 // pred_region
      _
    $region41: #{nas_noise_decoder.1} parent=1 // pred_fallthru
      _
    // Predicated region
    $region42: #{nas_noise_decoder.1} parent=1 // pred_check
      _
    $region43: #{nas_noise_decoder.1} parent=1 // pred_check_branch
      %72 = sbr.rel (0) target = $region45
    $region44: #{nas_noise_decoder.1} parent=1 // pred_region
      %s74 = ssub.s32 15360, 15360
      %75 = vsyncadd [#allocation12], %s74
      %s76 = sshll.u32 [#allocation13], 4
      %s77 = int_to_ptr.vmem [resolvable:$true] %s76
      %82 = dma.hbm_to_vmem [thread:$0]  %s10, 15360, %s77, [#allocation12], 256, 256, 16
    $region45: #{nas_noise_decoder.1} parent=1 // pred_fallthru
      _
    // Predicated region
    $region46: #{nas_noise_decoder.1} parent=1 // pred_check
      _
    $region47: #{nas_noise_decoder.1} parent=1 // pred_check_branch
      %84 = sbr.rel (0) target = $region49
    $region48: #{nas_noise_decoder.1} parent=1 // pred_region
      _
    $region49: #{nas_noise_decoder.1} parent=1 // pred_fallthru
      _
    // Predicated region
    $region50: #{nas_noise_decoder.1} parent=1 // pred_check
      _
    $region51: #{nas_noise_decoder.1} parent=1 // pred_check_branch
      %86 = sbr.rel (0) target = $region53
    $region52: #{nas_noise_decoder.1} parent=1 // pred_region
      _
    $region53: #{nas_noise_decoder.1} parent=1 // pred_fallthru
      _
    // Predicated region
    $region54: #{nas_noise_decoder.1} parent=1 // pred_check
      _
    $region55: #{nas_noise_decoder.1} parent=1 // pred_check_branch
      %88 = sbr.rel (0) target = $region57
    $region56: #{nas_noise_decoder.1} parent=1 // pred_region
      _
    $region57: #{nas_noise_decoder.1} parent=1 // pred_fallthru
      _
    // Predicated region
    $region58: #{nas_noise_decoder.1} parent=1 // pred_check
      _
    $region59: #{nas_noise_decoder.1} parent=1 // pred_check_branch
      %90 = sbr.rel (0) target = $region61
    $region60: #{nas_noise_decoder.1} parent=1 // pred_region
      %91 = dma.done [#allocation9], 128
    $region61: #{nas_noise_decoder.1} parent=1 // pred_fallthru
      _
    // Predicated region
    $region62: #{nas_noise_decoder.1} parent=1 // pred_check
      _
    $region63: #{nas_noise_decoder.1} parent=1 // pred_check_branch
      %93 = sbr.rel (0) target = $region65
    $region64: #{nas_noise_decoder.1} parent=1 // pred_region
      %94 = dma.done [#allocation7], 24576
    $region65: #{nas_noise_decoder.1} parent=1 // pred_fallthru
      _
    // Predicated region
    $region66: #{nas_noise_decoder.1} parent=1 // pred_check
      _
    $region67: #{nas_noise_decoder.1} parent=1 // pred_check_branch
      %96 = sbr.rel (0) target = $region69
    $region68: #{nas_noise_decoder.1} parent=1 // pred_region
      %97 = dma.done [#allocation12], 18432
    $region69: #{nas_noise_decoder.1} parent=1 // pred_fallthru
      _
    // Predicated region
    $region70: #{nas_noise_decoder.1} parent=1 // pred_check
      _
    $region71: #{nas_noise_decoder.1} parent=1 // pred_check_branch
      %99 = sbr.rel (0) target = $region73
    $region72: #{nas_noise_decoder.1} parent=1 // pred_region
      %100 = dma.done [#allocation12], 15360
    $region73: #{nas_noise_decoder.1} parent=1 // pred_fallthru
      _
    %101 = sfence
    %s102 = sld [smem:[#allocation6]]
    %s103 = sld [smem:[#allocation6 + $0x1]]
    %s104 = sld [smem:[#allocation6 + $0x2]]
    %s105 = sld [smem:[#allocation6 + $0x3]]
    %s106 = sld [smem:[#allocation6 + $0x80]]
    %s107 = sld [smem:[#allocation6 + $0x81]]
    %s108 = sld [smem:[#allocation6 + $0x82]]
    %s109 = sld [smem:[#allocation6 + $0x83]]
    %s110 = sld [smem:[#allocation6 + $0x100]]
    %s111 = sld [smem:[#allocation6 + $0x101]]
    %s112 = sld [smem:[#allocation6 + $0x102]]
    %s113 = sld [smem:[#allocation6 + $0x103]]
    %s114 = sld [smem:[#allocation6 + $0x180]]
    %s115 = sld [smem:[#allocation6 + $0x181]]
    %s116 = sld [smem:[#allocation6 + $0x182]]
    %s117 = sld [smem:[#allocation6 + $0x183]]
    %s118 = sld [smem:[#allocation6 + $0x200]]
    %s119 = sld [smem:[#allocation6 + $0x201]]
    %s120 = sld [smem:[#allocation6 + $0x202]]
    %s121 = sld [smem:[#allocation6 + $0x203]]
    %v122 = vld [vmem:[%s1] sm:$0x3]
    %v123 = vld [vmem:[%s2] sm:$0xff]
    %v124 = vld [vmem:[%s2 + $0x8] sm:$0x3]
    %v125 = vld [vmem:[%s3] sm:$0x1]
    %v127 = vlaneseq
    %v128 = vshrl.u32 %v127, 7
    %v129 = vsub.s32 0, %v128
    %v130 = vrot.slane %v125, %v129
    %vm132 = vcmask 80896
    %v134 = vsel %vm132, %v122, 0
    %vm136 = vcmask 1041408
    %v138 = vsel %vm136, %v124, 0
    %140 = vmatprep.subr.mxu0 0.0
    %141 = vmatpush1.msra.mxu0 %v123
    %142 = vmatprep.subr.mxu0 0.0
    %143 = vmatpush1.msra.mxu0 %v138
    %144 = vmatprep.subr.mxu0 0.0
    %145 = vmatpush1.msra.mxu0 0.0
    %146 = vmatprep.subr.mxu0 0.0
    %147 = vmatpush1.msra.mxu0 0.0
    %148 = vmatprep.subr.mxu0 0.0
    %149 = vmatpush1.msra.mxu0 0.0
    %150 = vmatprep.subr.mxu0 0.0
    %151 = vmatpush1.msra.mxu0 0.0
    %152 = vmatprep.subr.mxu0 0.0
    %153 = vmatpush1.msra.mxu0 0.0
    %154 = vmatprep.subr.mxu0 0.0
    %155 = vmatpush1.msra.mxu0 0.0
    %156 = vmatprep.subr.mxu0 0.0
    %157 = vmatpush1.msra.mxu0 0.0
    %158 = vmatprep.subr.mxu0 0.0
    %159 = vmatpush1.msra.mxu0 0.0
    %160 = vmatprep.subr.mxu0 0.0
    %161 = vmatpush1.msra.mxu0 0.0
    %162 = vmatprep.subr.mxu0 0.0
    %163 = vmatpush1.msra.mxu0 0.0
    %164 = vmatprep.subr.mxu0 0.0
    %165 = vmatpush1.msra.mxu0 0.0
    %166 = vmatprep.subr.mxu0 0.0
    %167 = vmatpush1.msra.mxu0 0.0
    %168 = vmatprep.subr.mxu0 0.0
    %169 = vmatpush1.msra.mxu0 0.0
    %170 = vmatprep.subr.mxu0 0.0
    %171 = vmatpush1.msra.mxu0 0.0
    %172 = vmatprep.subr.mxu0 0.0
    %173 = vmatpush1.msra.mxu0 0.0
    %174 = vmatprep.subr.mxu0 0.0
    %175 = vmatpush1.msra.mxu0 0.0
    %176 = vmatprep.subr.mxu0 0.0
    %177 = vmatpush1.msra.mxu0 0.0
    %178 = vmatprep.subr.mxu0 0.0
    %179 = vmatpush1.msra.mxu0 0.0
    %180 = vmatprep.subr.mxu0 0.0
    %181 = vmatpush1.msra.mxu0 0.0
    %182 = vmatprep.subr.mxu0 0.0
    %183 = vmatpush1.msra.mxu0 0.0
    %184 = vmatprep.subr.mxu0 0.0
    %185 = vmatpush1.msra.mxu0 0.0
    %186 = vmatprep.subr.mxu0 0.0
    %187 = vmatpush1.msra.mxu0 0.0
    %188 = vmatprep.subr.mxu0 0.0
    %189 = vmatpush1.msra.mxu0 0.0
    %190 = vmatprep.subr.mxu0 0.0
    %191 = vmatpush1.msra.mxu0 0.0
    %192 = vmatprep.subr.mxu0 0.0
    %193 = vmatpush1.msra.mxu0 0.0
    %194 = vmatprep.subr.mxu0 0.0
    %195 = vmatpush1.msra.mxu0 0.0
    %196 = vmatprep.subr.mxu0 0.0
    %197 = vmatpush1.msra.mxu0 0.0
    %198 = vmatprep.subr.mxu0 0.0
    %199 = vmatpush1.msra.mxu0 0.0
    %200 = vmatprep.subr.mxu0 0.0
    %201 = vmatpush1.msra.mxu0 0.0
    %202 = vmatprep.subr.mxu0 0.0
    %203 = vmatpush1.msra.mxu0 0.0
    %204 = vmatprep.mubr.f32.mxu0 0.0
    %205 = vmatmul.mubr.f32.gmra.mrb[0].mxu0 %v134
    %v206 = vpop.f32.mrb[0].mxu0
    %v207 = vadd.f32 %v130, %v206
    %v208 = vpop.f32.mrb[0].mxu0
    %209 = vdwg.mxu0
    %v210 = vmax.f32 %v207, 0.0
    %v211 = vstv %s102
    %v212 = vmul.f32 %v211, %v210
    %v213 = vtanh.pop %v207
    %v214 = vstv %s103
    %v215 = vmul.f32 %v214, %v213
    %v216 = vadd.f32 %v212, %v215
    %vm217 = vcmp.gt.f32.partialorder %v207, 0.0
    %v218 = vmul.f32 %v207, 0.2
    %v219 = vsel %vm217, %v207, %v218
    %v220 = vstv %s104
    %v221 = vmul.f32 %v220, %v219
    %v222 = vadd.f32 %v216, %v221
    %v223 = vmin.f32 %v207, 0.0
    %v224 = vmul.f32 %v223, 1.442695
    %v225 = vpow.pop %v224
    %v226 = vsub.f32 %v225, 1.0
    %v227 = vsel %vm217, %v207, %v226
    %v228 = vstv %s105
    %v229 = vmul.f32 %v228, %v227
    %v230 = vadd.f32 %v222, %v229
    %v231 = vld [vmem:[%s4] sm:$0xff]
    %v232 = vld [vmem:[%s4 + $0x8] sm:$0xff]
    %v233 = vld [vmem:[%s4 + $0x10] sm:$0xff]
    %v234 = vld [vmem:[%s4 + $0x18] sm:$0xff]
    %v235 = vld [vmem:[%s4 + $0x20] sm:$0xff]
    %v236 = vld [vmem:[%s4 + $0x28] sm:$0xff]
    %v237 = vld [vmem:[%s4 + $0x30] sm:$0xff]
    %v238 = vld [vmem:[%s4 + $0x38] sm:$0xff]
    %v239 = vld [vmem:[%s4 + $0x40] sm:$0xff]
    %v240 = vld [vmem:[%s4 + $0x48] sm:$0xff]
    %v241 = vld [vmem:[%s4 + $0x50] sm:$0xff]
    %v242 = vld [vmem:[%s4 + $0x58] sm:$0xff]
    %v243 = vld [vmem:[%s4 + $0x60] sm:$0xff]
    %v244 = vld [vmem:[%s4 + $0x68] sm:$0xff]
    %v245 = vld [vmem:[%s4 + $0x70] sm:$0xff]
    %v246 = vld [vmem:[%s4 + $0x78] sm:$0xff]
    %v247 = vld [vmem:[%s4 + $0x80] sm:$0xff]
    %v248 = vld [vmem:[%s4 + $0x88] sm:$0xff]
    %v249 = vld [vmem:[%s4 + $0x90] sm:$0xff]
    %v250 = vld [vmem:[%s4 + $0x98] sm:$0xff]
    %v251 = vld [vmem:[%s4 + $0xa0] sm:$0xff]
    %v252 = vld [vmem:[%s4 + $0xa8] sm:$0xff]
    %v253 = vld [vmem:[%s4 + $0xb0] sm:$0xff]
    %v254 = vld [vmem:[%s4 + $0xb8] sm:$0xff]
    %v255 = vld [vmem:[%s4 + $0xc0] sm:$0xff]
    %v256 = vld [vmem:[%s4 + $0xc8] sm:$0xff]
    %v257 = vld [vmem:[%s4 + $0xd0] sm:$0xff]
    %v258 = vld [vmem:[%s4 + $0xd8] sm:$0xff]
    %v259 = vld [vmem:[%s4 + $0xe0] sm:$0xff]
    %v260 = vld [vmem:[%s4 + $0xe8] sm:$0xff]
    %v261 = vld [vmem:[%s4 + $0xf0] sm:$0xff]
    %v262 = vld [vmem:[%s4 + $0xf8] sm:$0xff]
    %v263 = vld [vmem:[%s5] sm:$0x3]
    %v265 = vlaneseq
    %v266 = vshrl.u32 %v265, 7
    %v267 = vsub.s32 0, %v266
    %v268 = vrot.slane %v263, %v267
    %v269 = vlaneseq
    %v270 = vshrl.u32 %v269, 7
    %v271 = vsub.s32 1, %v270
    %v272 = vrot.slane %v263, %v271
    %275 = vmatprep.subr.mxu0 %v232
    %276 = vmatpush1.msra.mxu0 %v231
    %277 = vmatprep.subr.mxu0 %v234
    %278 = vmatpush1.msra.mxu0 %v233
    %279 = vmatprep.subr.mxu0 %v236
    %280 = vmatpush1.msra.mxu0 %v235
    %281 = vmatprep.subr.mxu0 %v238
    %282 = vmatpush1.msra.mxu0 %v237
    %283 = vmatprep.subr.mxu0 %v240
    %284 = vmatpush1.msra.mxu0 %v239
    %285 = vmatprep.subr.mxu0 %v242
    %286 = vmatpush1.msra.mxu0 %v241
    %287 = vmatprep.subr.mxu0 %v244
    %288 = vmatpush1.msra.mxu0 %v243
    %289 = vmatprep.subr.mxu0 %v246
    %290 = vmatpush1.msra.mxu0 %v245
    %291 = vmatprep.subr.mxu0 %v248
    %292 = vmatpush1.msra.mxu0 %v247
    %293 = vmatprep.subr.mxu0 %v250
    %294 = vmatpush1.msra.mxu0 %v249
    %295 = vmatprep.subr.mxu0 %v252
    %296 = vmatpush1.msra.mxu0 %v251
    %297 = vmatprep.subr.mxu0 %v254
    %298 = vmatpush1.msra.mxu0 %v253
    %299 = vmatprep.subr.mxu0 %v256
    %300 = vmatpush1.msra.mxu0 %v255
    %301 = vmatprep.subr.mxu0 %v258
    %302 = vmatpush1.msra.mxu0 %v257
    %303 = vmatprep.subr.mxu0 %v260
    %304 = vmatpush1.msra.mxu0 %v259
    %305 = vmatprep.subr.mxu0 %v262
    %306 = vmatpush1.msra.mxu0 %v261
    %307 = vmatprep.subr.mxu0 0.0
    %308 = vmatpush1.msra.mxu0 0.0
    %309 = vmatprep.subr.mxu0 0.0
    %310 = vmatpush1.msra.mxu0 0.0
    %311 = vmatprep.subr.mxu0 0.0
    %312 = vmatpush1.msra.mxu0 0.0
    %313 = vmatprep.subr.mxu0 0.0
    %314 = vmatpush1.msra.mxu0 0.0
    %315 = vmatprep.subr.mxu0 0.0
    %316 = vmatpush1.msra.mxu0 0.0
    %317 = vmatprep.subr.mxu0 0.0
    %318 = vmatpush1.msra.mxu0 0.0
    %319 = vmatprep.subr.mxu0 0.0
    %320 = vmatpush1.msra.mxu0 0.0
    %321 = vmatprep.subr.mxu0 0.0
    %322 = vmatpush1.msra.mxu0 0.0
    %323 = vmatprep.subr.mxu0 0.0
    %324 = vmatpush1.msra.mxu0 0.0
    %325 = vmatprep.subr.mxu0 0.0
    %326 = vmatpush1.msra.mxu0 0.0
    %327 = vmatprep.subr.mxu0 0.0
    %328 = vmatpush1.msra.mxu0 0.0
    %329 = vmatprep.subr.mxu0 0.0
    %330 = vmatpush1.msra.mxu0 0.0
    %331 = vmatprep.subr.mxu0 0.0
    %332 = vmatpush1.msra.mxu0 0.0
    %333 = vmatprep.subr.mxu0 0.0
    %334 = vmatpush1.msra.mxu0 0.0
    %335 = vmatprep.subr.mxu0 0.0
    %336 = vmatpush1.msra.mxu0 0.0
    %337 = vmatprep.subr.mxu0 0.0
    %338 = vmatpush1.msra.mxu0 0.0
    %339 = vmatprep.mubr.f32.mxu0 0.0
    %340 = vmatmul.mubr.f32.gmra.mrb[0].mxu0 %v230
    %v341 = vpop.f32.mrb[0].mxu0
    %v342 = vadd.f32 %v268, %v341
    %v343 = vpop.f32.mrb[0].mxu0
    %v344 = vadd.f32 %v272, %v343
    %345 = vdwg.mxu0
    %v346 = vmax.f32 %v342, 0.0
    %v347 = vmax.f32 %v344, 0.0
    %v348 = vstv %s106
    %v349 = vmul.f32 %v348, %v346
    %v350 = vmul.f32 %v348, %v347
    %v351 = vtanh.pop %v342
    %v352 = vtanh.pop %v344
    %v353 = vstv %s107
    %v354 = vmul.f32 %v353, %v351
    %v355 = vmul.f32 %v353, %v352
    %v356 = vadd.f32 %v349, %v354
    %v357 = vadd.f32 %v350, %v355
    %vm358 = vcmp.gt.f32.partialorder %v342, 0.0
    %vm359 = vcmp.gt.f32.partialorder %v344, 0.0
    %v360 = vmul.f32 %v342, 0.2
    %v361 = vmul.f32 %v344, 0.2
    %v362 = vsel %vm358, %v342, %v360
    %v363 = vsel %vm359, %v344, %v361
    %v364 = vstv %s108
    %v365 = vmul.f32 %v364, %v362
    %v366 = vmul.f32 %v364, %v363
    %v367 = vadd.f32 %v356, %v365
    %v368 = vadd.f32 %v357, %v366
    %v369 = vmin.f32 %v342, 0.0
    %v370 = vmin.f32 %v344, 0.0
    %v371 = vmul.f32 %v369, 1.442695
    %v372 = vpow.pop %v371
    %v373 = vmul.f32 %v370, 1.442695
    %v374 = vpow.pop %v373
    %v375 = vsub.f32 %v372, 1.0
    %v376 = vsub.f32 %v374, 1.0
    %v377 = vsel %vm358, %v342, %v375
    %v378 = vsel %vm359, %v344, %v376
    %v379 = vstv %s109
    %v380 = vmul.f32 %v379, %v377
    %v381 = vmul.f32 %v379, %v378
    %v382 = vadd.f32 %v367, %v380
    %v383 = vadd.f32 %v368, %v381
    %384 = vst [vmem:[#allocation2] sm:$0xff] 0.0
    %385 = vst [vmem:[#allocation2 + $0x8] sm:$0xff] 0.0
    %386 = vst [vmem:[#allocation3] sm:$0x3f] 0.0
    %vm387 = vcmask 521216
    %388 = vst.msk [vmem:[#allocation3 + $0x8] sm:$0x3f] %vm387, 0.0
    %389 = vst [vmem:[#allocation3 + $0x10] sm:$0x3f] 0.0
    %390 = vst.msk [vmem:[#allocation3 + $0x18] sm:$0x3f] %vm387, 0.0
    %391 = vst [vmem:[#allocation4] sm:$0xff] 0.0
    %vm392 = vcmask 261120
    %393 = vst.msk [vmem:[#allocation4 + $0x8] sm:$0xff] %vm392, 0.0
    %394 = vst [vmem:[#allocation4 + $0x10] sm:$0x3] 0.0
    %vm395 = vcmask 254976
    %396 = vst.msk [vmem:[#allocation4 + $0x18] sm:$0x3] %vm395, 0.0
    %397 = vst [vmem:[#allocation4 + $0x20] sm:$0xff] 0.0
    %398 = vst.msk [vmem:[#allocation4 + $0x28] sm:$0xff] %vm392, 0.0
    %399 = vst [vmem:[#allocation4 + $0x30] sm:$0x3] 0.0
    %400 = vst.msk [vmem:[#allocation4 + $0x38] sm:$0x3] %vm395, 0.0
    %401 = vst [vmem:[#allocation5] sm:$0xff] 0.0
    %vm402 = vcmask 130048
    %403 = vst.msk [vmem:[#allocation5 + $0x8] sm:$0xff] %vm402, 0.0
    %404 = vst [vmem:[#allocation5 + $0x10] sm:$0xff] 0.0
    %405 = vst.msk [vmem:[#allocation5 + $0x18] sm:$0xff] %vm402, 0.0
    %406 = vst [vmem:[#allocation5 + $0x20] sm:$0x3] 0.0
    %vm407 = vcmask 123904
    %408 = vst.msk [vmem:[#allocation5 + $0x28] sm:$0x3] %vm407, 0.0
    %409 = vst [vmem:[#allocation5 + $0x30] sm:$0xff] 0.0
    %410 = vst.msk [vmem:[#allocation5 + $0x38] sm:$0xff] %vm402, 0.0
    %411 = vst [vmem:[#allocation5 + $0x40] sm:$0xff] 0.0
    %412 = vst.msk [vmem:[#allocation5 + $0x48] sm:$0xff] %vm402, 0.0
    %413 = vst [vmem:[#allocation5 + $0x50] sm:$0x3] 0.0
    %414 = vst.msk [vmem:[#allocation5 + $0x58] sm:$0x3] %vm407, 0.0
    %416 = vrot.lane.b32.xlu0 %v382, 64
    %v417 = vpop.permute.xlu0 %416
    %v418 = vrot.slane %v417, 4
    %vm419 = vcmask 523264
    %v420 = vsel %vm419, %v418, %v417
    %vm422 = vcmask 1040896
    %vm423 = vcmask 520196
    %vm424 = vmor %vm423, %vm422
    %425 = vst.msk [vmem:[#allocation2 + $0x1] sm:$0x11] %vm424, %v420
    %427 = vrot.lane.b32.xlu0 %v383, 64
    %v428 = vpop.permute.xlu0 %427
    %v429 = vrot.slane %v428, 4
    %v430 = vsel %vm419, %v429, %v428
    %432 = vst.msk [vmem:[#allocation2 + $0x2] sm:$0x11] %vm424, %v430
    %v433 = vrot.slane %v382, 5
    %v434 = vrot.slane %v433, 4
    %435 = vrot.lane.b32.xlu0 %v434, 64
    %v436 = vpop.permute.xlu0 %435
    %v437 = vrot.slane %v436, 4
    %v438 = vsel %vm419, %v437, %v436
    %s440 = scalar_lea.vmem [#allocation2], 8
    %441 = vst.msk [vmem:[%s440 + $0x1] sm:$0x11] %vm424, %v438
    %v442 = vrot.slane %v383, 5
    %v443 = vrot.slane %v442, 4
    %444 = vrot.lane.b32.xlu0 %v443, 64
    %v445 = vpop.permute.xlu0 %444
    %v446 = vrot.slane %v445, 4
    %v447 = vsel %vm419, %v446, %v445
    %449 = vst.msk [vmem:[%s440 + $0x2] sm:$0x11] %vm424, %v447
    %v450 = vld [vmem:[#allocation2] sm:$0x33]
    %v451 = vld [vmem:[#allocation10] sm:$0xff]
    %v452 = vld [vmem:[#allocation10 + $0x8] sm:$0xff]
    %v453 = vld [vmem:[#allocation10 + $0x10] sm:$0xff]
    %v454 = vld [vmem:[#allocation10 + $0x18] sm:$0xff]
    %v455 = vld [vmem:[#allocation10 + $0x20] sm:$0xff]
    %v456 = vld [vmem:[#allocation10 + $0x28] sm:$0xff]
    %v457 = vld [vmem:[#allocation10 + $0x30] sm:$0xff]
    %v458 = vld [vmem:[#allocation10 + $0x38] sm:$0xff]
    %v459 = vld [vmem:[#allocation10 + $0x40] sm:$0xff]
    %v460 = vld [vmem:[#allocation10 + $0x48] sm:$0xff]
    %v461 = vld [vmem:[#allocation10 + $0x50] sm:$0xff]
    %v462 = vld [vmem:[#allocation10 + $0x58] sm:$0xff]
    %v463 = vld [vmem:[#allocation10 + $0x60] sm:$0xff]
    %v464 = vld [vmem:[#allocation10 + $0x68] sm:$0xff]
    %v465 = vld [vmem:[#allocation10 + $0x70] sm:$0xff]
    %v466 = vld [vmem:[#allocation10 + $0x78] sm:$0xff]
    %v467 = vld [vmem:[#allocation10 + $0x80] sm:$0xff]
    %v468 = vld [vmem:[#allocation10 + $0x88] sm:$0xff]
    %v469 = vld [vmem:[#allocation10 + $0x90] sm:$0xff]
    %v470 = vld [vmem:[#allocation10 + $0x98] sm:$0xff]
    %v471 = vld [vmem:[#allocation10 + $0xa0] sm:$0xff]
    %v472 = vld [vmem:[#allocation10 + $0xa8] sm:$0xff]
    %v473 = vld [vmem:[#allocation10 + $0xb0] sm:$0xff]
    %v474 = vld [vmem:[#allocation10 + $0xb8] sm:$0xff]
    %v475 = vld [vmem:[#allocation10 + $0xc0] sm:$0xff]
    %v476 = vld [vmem:[#allocation10 + $0xc8] sm:$0xff]
    %v477 = vld [vmem:[#allocation10 + $0xd0] sm:$0xff]
    %v478 = vld [vmem:[#allocation10 + $0xd8] sm:$0xff]
    %v479 = vld [vmem:[#allocation10 + $0xe0] sm:$0xff]
    %v480 = vld [vmem:[#allocation10 + $0xe8] sm:$0xff]
    %v481 = vld [vmem:[#allocation10 + $0xf0] sm:$0xff]
    %v482 = vld [vmem:[#allocation10 + $0xf8] sm:$0xff]
    %v483 = vld [vmem:[#allocation10 + $0x100] sm:$0xff]
    %v484 = vld [vmem:[#allocation10 + $0x108] sm:$0xff]
    %v485 = vld [vmem:[#allocation10 + $0x110] sm:$0xff]
    %v486 = vld [vmem:[#allocation10 + $0x118] sm:$0xff]
    %v487 = vld [vmem:[#allocation10 + $0x120] sm:$0xff]
    %v488 = vld [vmem:[#allocation10 + $0x128] sm:$0xff]
    %v489 = vld [vmem:[#allocation10 + $0x130] sm:$0xff]
    %v490 = vld [vmem:[#allocation10 + $0x138] sm:$0xff]
    %v491 = vld [vmem:[#allocation10 + $0x140] sm:$0xff]
    %v492 = vld [vmem:[#allocation10 + $0x148] sm:$0xff]
    %v493 = vld [vmem:[#allocation10 + $0x150] sm:$0xff]
    %v494 = vld [vmem:[#allocation10 + $0x158] sm:$0xff]
    %v495 = vld [vmem:[#allocation10 + $0x160] sm:$0xff]
    %v496 = vld [vmem:[#allocation10 + $0x168] sm:$0xff]
    %v497 = vld [vmem:[#allocation10 + $0x170] sm:$0xff]
    %v498 = vld [vmem:[#allocation10 + $0x178] sm:$0xff]
    %v499 = vld [vmem:[#allocation10 + $0x180] sm:$0xff]
    %v500 = vld [vmem:[#allocation10 + $0x188] sm:$0xff]
    %v501 = vld [vmem:[#allocation10 + $0x190] sm:$0xff]
    %v502 = vld [vmem:[#allocation10 + $0x198] sm:$0xff]
    %v503 = vld [vmem:[#allocation10 + $0x1a0] sm:$0xff]
    %v504 = vld [vmem:[#allocation10 + $0x1a8] sm:$0xff]
    %v505 = vld [vmem:[#allocation10 + $0x1b0] sm:$0xff]
    %v506 = vld [vmem:[#allocation10 + $0x1b8] sm:$0xff]
    %v507 = vld [vmem:[#allocation10 + $0x1c0] sm:$0xff]
    %v508 = vld [vmem:[#allocation10 + $0x1c8] sm:$0xff]
    %v509 = vld [vmem:[#allocation10 + $0x1d0] sm:$0xff]
    %v510 = vld [vmem:[#allocation10 + $0x1d8] sm:$0xff]
    %v511 = vld [vmem:[#allocation10 + $0x1e0] sm:$0xff]
    %v512 = vld [vmem:[#allocation10 + $0x1e8] sm:$0xff]
    %v513 = vld [vmem:[#allocation10 + $0x1f0] sm:$0xff]
    %v514 = vld [vmem:[#allocation10 + $0x1f8] sm:$0xff]
    %v515 = vld [vmem:[#allocation2] sm:$0x66]
    %s516 = scalar_lea.vmem [#allocation10], 512
    %v517 = vld [vmem:[%s516] sm:$0xff]
    %v518 = vld [vmem:[%s516 + $0x8] sm:$0xff]
    %v519 = vld [vmem:[%s516 + $0x10] sm:$0xff]
    %v520 = vld [vmem:[%s516 + $0x18] sm:$0xff]
    %v521 = vld [vmem:[%s516 + $0x20] sm:$0xff]
    %v522 = vld [vmem:[%s516 + $0x28] sm:$0xff]
    %v523 = vld [vmem:[%s516 + $0x30] sm:$0xff]
    %v524 = vld [vmem:[%s516 + $0x38] sm:$0xff]
    %v525 = vld [vmem:[%s516 + $0x40] sm:$0xff]
    %v526 = vld [vmem:[%s516 + $0x48] sm:$0xff]
    %v527 = vld [vmem:[%s516 + $0x50] sm:$0xff]
    %v528 = vld [vmem:[%s516 + $0x58] sm:$0xff]
    %v529 = vld [vmem:[%s516 + $0x60] sm:$0xff]
    %v530 = vld [vmem:[%s516 + $0x68] sm:$0xff]
    %v531 = vld [vmem:[%s516 + $0x70] sm:$0xff]
    %v532 = vld [vmem:[%s516 + $0x78] sm:$0xff]
    %v533 = vld [vmem:[%s516 + $0x80] sm:$0xff]
    %v534 = vld [vmem:[%s516 + $0x88] sm:$0xff]
    %v535 = vld [vmem:[%s516 + $0x90] sm:$0xff]
    %v536 = vld [vmem:[%s516 + $0x98] sm:$0xff]
    %v537 = vld [vmem:[%s516 + $0xa0] sm:$0xff]
    %v538 = vld [vmem:[%s516 + $0xa8] sm:$0xff]
    %v539 = vld [vmem:[%s516 + $0xb0] sm:$0xff]
    %v540 = vld [vmem:[%s516 + $0xb8] sm:$0xff]
    %v541 = vld [vmem:[%s516 + $0xc0] sm:$0xff]
    %v542 = vld [vmem:[%s516 + $0xc8] sm:$0xff]
    %v543 = vld [vmem:[%s516 + $0xd0] sm:$0xff]
    %v544 = vld [vmem:[%s516 + $0xd8] sm:$0xff]
    %v545 = vld [vmem:[%s516 + $0xe0] sm:$0xff]
    %v546 = vld [vmem:[%s516 + $0xe8] sm:$0xff]
    %v547 = vld [vmem:[%s516 + $0xf0] sm:$0xff]
    %v548 = vld [vmem:[%s516 + $0xf8] sm:$0xff]
    %v549 = vld [vmem:[%s516 + $0x100] sm:$0xff]
    %v550 = vld [vmem:[%s516 + $0x108] sm:$0xff]
    %v551 = vld [vmem:[%s516 + $0x110] sm:$0xff]
    %v552 = vld [vmem:[%s516 + $0x118] sm:$0xff]
    %v553 = vld [vmem:[%s516 + $0x120] sm:$0xff]
    %v554 = vld [vmem:[%s516 + $0x128] sm:$0xff]
    %v555 = vld [vmem:[%s516 + $0x130] sm:$0xff]
    %v556 = vld [vmem:[%s516 + $0x138] sm:$0xff]
    %v557 = vld [vmem:[%s516 + $0x140] sm:$0xff]
    %v558 = vld [vmem:[%s516 + $0x148] sm:$0xff]
    %v559 = vld [vmem:[%s516 + $0x150] sm:$0xff]
    %v560 = vld [vmem:[%s516 + $0x158] sm:$0xff]
    %v561 = vld [vmem:[%s516 + $0x160] sm:$0xff]
    %v562 = vld [vmem:[%s516 + $0x168] sm:$0xff]
    %v563 = vld [vmem:[%s516 + $0x170] sm:$0xff]
    %v564 = vld [vmem:[%s516 + $0x178] sm:$0xff]
    %v565 = vld [vmem:[%s516 + $0x180] sm:$0xff]
    %v566 = vld [vmem:[%s516 + $0x188] sm:$0xff]
    %v567 = vld [vmem:[%s516 + $0x190] sm:$0xff]
    %v568 = vld [vmem:[%s516 + $0x198] sm:$0xff]
    %v569 = vld [vmem:[%s516 + $0x1a0] sm:$0xff]
    %v570 = vld [vmem:[%s516 + $0x1a8] sm:$0xff]
    %v571 = vld [vmem:[%s516 + $0x1b0] sm:$0xff]
    %v572 = vld [vmem:[%s516 + $0x1b8] sm:$0xff]
    %v573 = vld [vmem:[%s516 + $0x1c0] sm:$0xff]
    %v574 = vld [vmem:[%s516 + $0x1c8] sm:$0xff]
    %v575 = vld [vmem:[%s516 + $0x1d0] sm:$0xff]
    %v576 = vld [vmem:[%s516 + $0x1d8] sm:$0xff]
    %v577 = vld [vmem:[%s516 + $0x1e0] sm:$0xff]
    %v578 = vld [vmem:[%s516 + $0x1e8] sm:$0xff]
    %v579 = vld [vmem:[%s516 + $0x1f0] sm:$0xff]
    %v580 = vld [vmem:[%s516 + $0x1f8] sm:$0xff]
    %v582 = vcombine.high %v515, %v515
    %v583 = vrot.slane %v515, 1
    %v584 = vrot.slane %v582, 1
    %587 = vmatprep.subr.mxu0 %v518
    %588 = vmatpush1.msra.mxu0 %v517
    %589 = vmatprep.subr.mxu0 %v520
    %590 = vmatpush1.msra.mxu0 %v519
    %591 = vmatprep.subr.mxu0 %v522
    %592 = vmatpush1.msra.mxu0 %v521
    %593 = vmatprep.subr.mxu0 %v524
    %594 = vmatpush1.msra.mxu0 %v523
    %595 = vmatprep.subr.mxu0 %v526
    %596 = vmatpush1.msra.mxu0 %v525
    %597 = vmatprep.subr.mxu0 %v528
    %598 = vmatpush1.msra.mxu0 %v527
    %599 = vmatprep.subr.mxu0 %v530
    %600 = vmatpush1.msra.mxu0 %v529
    %601 = vmatprep.subr.mxu0 %v532
    %602 = vmatpush1.msra.mxu0 %v531
    %603 = vmatprep.subr.mxu0 %v534
    %604 = vmatpush1.msra.mxu0 %v533
    %605 = vmatprep.subr.mxu0 %v536
    %606 = vmatpush1.msra.mxu0 %v535
    %607 = vmatprep.subr.mxu0 %v538
    %608 = vmatpush1.msra.mxu0 %v537
    %609 = vmatprep.subr.mxu0 %v540
    %610 = vmatpush1.msra.mxu0 %v539
    %611 = vmatprep.subr.mxu0 %v542
    %612 = vmatpush1.msra.mxu0 %v541
    %613 = vmatprep.subr.mxu0 %v544
    %614 = vmatpush1.msra.mxu0 %v543
    %615 = vmatprep.subr.mxu0 %v546
    %616 = vmatpush1.msra.mxu0 %v545
    %617 = vmatprep.subr.mxu0 %v548
    %618 = vmatpush1.msra.mxu0 %v547
    %619 = vmatprep.subr.mxu0 %v550
    %620 = vmatpush1.msra.mxu0 %v549
    %621 = vmatprep.subr.mxu0 %v552
    %622 = vmatpush1.msra.mxu0 %v551
    %623 = vmatprep.subr.mxu0 %v554
    %624 = vmatpush1.msra.mxu0 %v553
    %625 = vmatprep.subr.mxu0 %v556
    %626 = vmatpush1.msra.mxu0 %v555
    %627 = vmatprep.subr.mxu0 %v558
    %628 = vmatpush1.msra.mxu0 %v557
    %629 = vmatprep.subr.mxu0 %v560
    %630 = vmatpush1.msra.mxu0 %v559
    %631 = vmatprep.subr.mxu0 %v562
    %632 = vmatpush1.msra.mxu0 %v561
    %633 = vmatprep.subr.mxu0 %v564
    %634 = vmatpush1.msra.mxu0 %v563
    %635 = vmatprep.subr.mxu0 %v566
    %636 = vmatpush1.msra.mxu0 %v565
    %637 = vmatprep.subr.mxu0 %v568
    %638 = vmatpush1.msra.mxu0 %v567
    %639 = vmatprep.subr.mxu0 %v570
    %640 = vmatpush1.msra.mxu0 %v569
    %641 = vmatprep.subr.mxu0 %v572
    %642 = vmatpush1.msra.mxu0 %v571
    %643 = vmatprep.subr.mxu0 %v574
    %644 = vmatpush1.msra.mxu0 %v573
    %645 = vmatprep.subr.mxu0 %v576
    %646 = vmatpush1.msra.mxu0 %v575
    %647 = vmatprep.subr.mxu0 %v578
    %648 = vmatpush1.msra.mxu0 %v577
    %649 = vmatprep.subr.mxu0 %v580
    %650 = vmatpush1.msra.mxu0 %v579
    %651 = vmatprep.mubr.f32.mxu0 %v584
    %652 = vmatmul.mubr.f32.gmra.mrb[0].mxu0 %v583
    %v653 = vpop.f32.mrb[0].mxu0
    %v654 = vadd.f32 0.0, %v653
    %v655 = vpop.f32.mrb[0].mxu0
    %v656 = vadd.f32 0.0, %v655
    %657 = vdwg.mxu0
    %v659 = vcombine.high %v450, %v450
    %661 = vmatprep.subr.mxu0 %v452
    %662 = vmatpush1.msra.mxu0 %v451
    %663 = vmatprep.subr.mxu0 %v454
    %664 = vmatpush1.msra.mxu0 %v453
    %665 = vmatprep.subr.mxu0 %v456
    %666 = vmatpush1.msra.mxu0 %v455
    %667 = vmatprep.subr.mxu0 %v458
    %668 = vmatpush1.msra.mxu0 %v457
    %669 = vmatprep.subr.mxu0 %v460
    %670 = vmatpush1.msra.mxu0 %v459
    %671 = vmatprep.subr.mxu0 %v462
    %672 = vmatpush1.msra.mxu0 %v461
    %673 = vmatprep.subr.mxu0 %v464
    %674 = vmatpush1.msra.mxu0 %v463
    %675 = vmatprep.subr.mxu0 %v466
    %676 = vmatpush1.msra.mxu0 %v465
    %677 = vmatprep.subr.mxu0 %v468
    %678 = vmatpush1.msra.mxu0 %v467
    %679 = vmatprep.subr.mxu0 %v470
    %680 = vmatpush1.msra.mxu0 %v469
    %681 = vmatprep.subr.mxu0 %v472
    %682 = vmatpush1.msra.mxu0 %v471
    %683 = vmatprep.subr.mxu0 %v474
    %684 = vmatpush1.msra.mxu0 %v473
    %685 = vmatprep.subr.mxu0 %v476
    %686 = vmatpush1.msra.mxu0 %v475
    %687 = vmatprep.subr.mxu0 %v478
    %688 = vmatpush1.msra.mxu0 %v477
    %689 = vmatprep.subr.mxu0 %v480
    %690 = vmatpush1.msra.mxu0 %v479
    %691 = vmatprep.subr.mxu0 %v482
    %692 = vmatpush1.msra.mxu0 %v481
    %693 = vmatprep.subr.mxu0 %v484
    %694 = vmatpush1.msra.mxu0 %v483
    %695 = vmatprep.subr.mxu0 %v486
    %696 = vmatpush1.msra.mxu0 %v485
    %697 = vmatprep.subr.mxu0 %v488
    %698 = vmatpush1.msra.mxu0 %v487
    %699 = vmatprep.subr.mxu0 %v490
    %700 = vmatpush1.msra.mxu0 %v489
    %701 = vmatprep.subr.mxu0 %v492
    %702 = vmatpush1.msra.mxu0 %v491
    %703 = vmatprep.subr.mxu0 %v494
    %704 = vmatpush1.msra.mxu0 %v493
    %705 = vmatprep.subr.mxu0 %v496
    %706 = vmatpush1.msra.mxu0 %v495
    %707 = vmatprep.subr.mxu0 %v498
    %708 = vmatpush1.msra.mxu0 %v497
    %709 = vmatprep.subr.mxu0 %v500
    %710 = vmatpush1.msra.mxu0 %v499
    %711 = vmatprep.subr.mxu0 %v502
    %712 = vmatpush1.msra.mxu0 %v501
    %713 = vmatprep.subr.mxu0 %v504
    %714 = vmatpush1.msra.mxu0 %v503
    %715 = vmatprep.subr.mxu0 %v506
    %716 = vmatpush1.msra.mxu0 %v505
    %717 = vmatprep.subr.mxu0 %v508
    %718 = vmatpush1.msra.mxu0 %v507
    %719 = vmatprep.subr.mxu0 %v510
    %720 = vmatpush1.msra.mxu0 %v509
    %721 = vmatprep.subr.mxu0 %v512
    %722 = vmatpush1.msra.mxu0 %v511
    %723 = vmatprep.subr.mxu0 %v514
    %724 = vmatpush1.msra.mxu0 %v513
    %725 = vmatprep.mubr.f32.mxu0 %v659
    %726 = vmatmul.mubr.f32.gmra.mrb[0].mxu0 %v450
    %v727 = vpop.f32.mrb[0].mxu0
    %v728 = vadd.f32 %v654, %v727
    %v729 = vpop.f32.mrb[0].mxu0
    %v730 = vadd.f32 %v656, %v729
    %731 = vdwg.mxu0
    %v732 = vld [vmem:[#allocation2] sm:$0xcc]
    %s733 = scalar_lea.vmem [#allocation10], 1024
    %v734 = vld [vmem:[%s733] sm:$0xff]
    %v735 = vld [vmem:[%s733 + $0x8] sm:$0xff]
    %v736 = vld [vmem:[%s733 + $0x10] sm:$0xff]
    %v737 = vld [vmem:[%s733 + $0x18] sm:$0xff]
    %v738 = vld [vmem:[%s733 + $0x20] sm:$0xff]
    %v739 = vld [vmem:[%s733 + $0x28] sm:$0xff]
    %v740 = vld [vmem:[%s733 + $0x30] sm:$0xff]
    %v741 = vld [vmem:[%s733 + $0x38] sm:$0xff]
    %v742 = vld [vmem:[%s733 + $0x40] sm:$0xff]
    %v743 = vld [vmem:[%s733 + $0x48] sm:$0xff]
    %v744 = vld [vmem:[%s733 + $0x50] sm:$0xff]
    %v745 = vld [vmem:[%s733 + $0x58] sm:$0xff]
    %v746 = vld [vmem:[%s733 + $0x60] sm:$0xff]
    %v747 = vld [vmem:[%s733 + $0x68] sm:$0xff]
    %v748 = vld [vmem:[%s733 + $0x70] sm:$0xff]
    %v749 = vld [vmem:[%s733 + $0x78] sm:$0xff]
    %v750 = vld [vmem:[%s733 + $0x80] sm:$0xff]
    %v751 = vld [vmem:[%s733 + $0x88] sm:$0xff]
    %v752 = vld [vmem:[%s733 + $0x90] sm:$0xff]
    %v753 = vld [vmem:[%s733 + $0x98] sm:$0xff]
    %v754 = vld [vmem:[%s733 + $0xa0] sm:$0xff]
    %v755 = vld [vmem:[%s733 + $0xa8] sm:$0xff]
    %v756 = vld [vmem:[%s733 + $0xb0] sm:$0xff]
    %v757 = vld [vmem:[%s733 + $0xb8] sm:$0xff]
    %v758 = vld [vmem:[%s733 + $0xc0] sm:$0xff]
    %v759 = vld [vmem:[%s733 + $0xc8] sm:$0xff]
    %v760 = vld [vmem:[%s733 + $0xd0] sm:$0xff]
    %v761 = vld [vmem:[%s733 + $0xd8] sm:$0xff]
    %v762 = vld [vmem:[%s733 + $0xe0] sm:$0xff]
    %v763 = vld [vmem:[%s733 + $0xe8] sm:$0xff]
    %v764 = vld [vmem:[%s733 + $0xf0] sm:$0xff]
    %v765 = vld [vmem:[%s733 + $0xf8] sm:$0xff]
    %v766 = vld [vmem:[%s733 + $0x100] sm:$0xff]
    %v767 = vld [vmem:[%s733 + $0x108] sm:$0xff]
    %v768 = vld [vmem:[%s733 + $0x110] sm:$0xff]
    %v769 = vld [vmem:[%s733 + $0x118] sm:$0xff]
    %v770 = vld [vmem:[%s733 + $0x120] sm:$0xff]
    %v771 = vld [vmem:[%s733 + $0x128] sm:$0xff]
    %v772 = vld [vmem:[%s733 + $0x130] sm:$0xff]
    %v773 = vld [vmem:[%s733 + $0x138] sm:$0xff]
    %v774 = vld [vmem:[%s733 + $0x140] sm:$0xff]
    %v775 = vld [vmem:[%s733 + $0x148] sm:$0xff]
    %v776 = vld [vmem:[%s733 + $0x150] sm:$0xff]
    %v777 = vld [vmem:[%s733 + $0x158] sm:$0xff]
    %v778 = vld [vmem:[%s733 + $0x160] sm:$0xff]
    %v779 = vld [vmem:[%s733 + $0x168] sm:$0xff]
    %v780 = vld [vmem:[%s733 + $0x170] sm:$0xff]
    %v781 = vld [vmem:[%s733 + $0x178] sm:$0xff]
    %v782 = vld [vmem:[%s733 + $0x180] sm:$0xff]
    %v783 = vld [vmem:[%s733 + $0x188] sm:$0xff]
    %v784 = vld [vmem:[%s733 + $0x190] sm:$0xff]
    %v785 = vld [vmem:[%s733 + $0x198] sm:$0xff]
    %v786 = vld [vmem:[%s733 + $0x1a0] sm:$0xff]
    %v787 = vld [vmem:[%s733 + $0x1a8] sm:$0xff]
    %v788 = vld [vmem:[%s733 + $0x1b0] sm:$0xff]
    %v789 = vld [vmem:[%s733 + $0x1b8] sm:$0xff]
    %v790 = vld [vmem:[%s733 + $0x1c0] sm:$0xff]
    %v791 = vld [vmem:[%s733 + $0x1c8] sm:$0xff]
    %v792 = vld [vmem:[%s733 + $0x1d0] sm:$0xff]
    %v793 = vld [vmem:[%s733 + $0x1d8] sm:$0xff]
    %v794 = vld [vmem:[%s733 + $0x1e0] sm:$0xff]
    %v795 = vld [vmem:[%s733 + $0x1e8] sm:$0xff]
    %v796 = vld [vmem:[%s733 + $0x1f0] sm:$0xff]
    %v797 = vld [vmem:[%s733 + $0x1f8] sm:$0xff]
    %v799 = vcombine.high %v732, %v732
    %v800 = vrot.slane %v732, 2
    %v801 = vrot.slane %v799, 2
    %804 = vmatprep.subr.mxu0 %v735
    %805 = vmatpush1.msra.mxu0 %v734
    %806 = vmatprep.subr.mxu0 %v737
    %807 = vmatpush1.msra.mxu0 %v736
    %808 = vmatprep.subr.mxu0 %v739
    %809 = vmatpush1.msra.mxu0 %v738
    %810 = vmatprep.subr.mxu0 %v741
    %811 = vmatpush1.msra.mxu0 %v740
    %812 = vmatprep.subr.mxu0 %v743
    %813 = vmatpush1.msra.mxu0 %v742
    %814 = vmatprep.subr.mxu0 %v745
    %815 = vmatpush1.msra.mxu0 %v744
    %816 = vmatprep.subr.mxu0 %v747
    %817 = vmatpush1.msra.mxu0 %v746
    %818 = vmatprep.subr.mxu0 %v749
    %819 = vmatpush1.msra.mxu0 %v748
    %820 = vmatprep.subr.mxu0 %v751
    %821 = vmatpush1.msra.mxu0 %v750
    %822 = vmatprep.subr.mxu0 %v753
    %823 = vmatpush1.msra.mxu0 %v752
    %824 = vmatprep.subr.mxu0 %v755
    %825 = vmatpush1.msra.mxu0 %v754
    %826 = vmatprep.subr.mxu0 %v757
    %827 = vmatpush1.msra.mxu0 %v756
    %828 = vmatprep.subr.mxu0 %v759
    %829 = vmatpush1.msra.mxu0 %v758
    %830 = vmatprep.subr.mxu0 %v761
    %831 = vmatpush1.msra.mxu0 %v760
    %832 = vmatprep.subr.mxu0 %v763
    %833 = vmatpush1.msra.mxu0 %v762
    %834 = vmatprep.subr.mxu0 %v765
    %835 = vmatpush1.msra.mxu0 %v764
    %836 = vmatprep.subr.mxu0 %v767
    %837 = vmatpush1.msra.mxu0 %v766
    %838 = vmatprep.subr.mxu0 %v769
    %839 = vmatpush1.msra.mxu0 %v768
    %840 = vmatprep.subr.mxu0 %v771
    %841 = vmatpush1.msra.mxu0 %v770
    %842 = vmatprep.subr.mxu0 %v773
    %843 = vmatpush1.msra.mxu0 %v772
    %844 = vmatprep.subr.mxu0 %v775
    %845 = vmatpush1.msra.mxu0 %v774
    %846 = vmatprep.subr.mxu0 %v777
    %847 = vmatpush1.msra.mxu0 %v776
    %848 = vmatprep.subr.mxu0 %v779
    %849 = vmatpush1.msra.mxu0 %v778
    %850 = vmatprep.subr.mxu0 %v781
    %851 = vmatpush1.msra.mxu0 %v780
    %852 = vmatprep.subr.mxu0 %v783
    %853 = vmatpush1.msra.mxu0 %v782
    %854 = vmatprep.subr.mxu0 %v785
    %855 = vmatpush1.msra.mxu0 %v784
    %856 = vmatprep.subr.mxu0 %v787
    %857 = vmatpush1.msra.mxu0 %v786
    %858 = vmatprep.subr.mxu0 %v789
    %859 = vmatpush1.msra.mxu0 %v788
    %860 = vmatprep.subr.mxu0 %v791
    %861 = vmatpush1.msra.mxu0 %v790
    %862 = vmatprep.subr.mxu0 %v793
    %863 = vmatpush1.msra.mxu0 %v792
    %864 = vmatprep.subr.mxu0 %v795
    %865 = vmatpush1.msra.mxu0 %v794
    %866 = vmatprep.subr.mxu0 %v797
    %867 = vmatpush1.msra.mxu0 %v796
    %868 = vmatprep.mubr.f32.mxu0 %v801
    %869 = vmatmul.mubr.f32.gmra.mrb[0].mxu0 %v800
    %v870 = vpop.f32.mrb[0].mxu0
    %v871 = vadd.f32 0.0, %v870
    %v872 = vpop.f32.mrb[0].mxu0
    %v873 = vadd.f32 0.0, %v872
    %874 = vdwg.mxu0
    %v875 = vadd.f32 %v728, %v871
    %v876 = vadd.f32 %v730, %v873
    %v877 = vld [vmem:[%s7] sm:$0x3]
    %v879 = vlaneseq
    %v880 = vshrl.u32 %v879, 7
    %v881 = vsub.s32 0, %v880
    %v882 = vrot.slane %v877, %v881
    %v883 = vlaneseq
    %v884 = vshrl.u32 %v883, 7
    %v885 = vsub.s32 1, %v884
    %v886 = vrot.slane %v877, %v885
    %v889 = vadd.f32 %v875, %v882
    %v890 = vadd.f32 %v876, %v886
    %v891 = vmax.f32 %v889, 0.0
    %v892 = vmax.f32 %v890, 0.0
    %v893 = vstv %s110
    %v894 = vmul.f32 %v893, %v891
    %v895 = vmul.f32 %v893, %v892
    %v896 = vtanh.pop %v889
    %v897 = vtanh.pop %v890
    %v898 = vstv %s111
    %v899 = vmul.f32 %v898, %v896
    %v900 = vmul.f32 %v898, %v897
    %v901 = vadd.f32 %v894, %v899
    %v902 = vadd.f32 %v895, %v900
    %vm903 = vcmp.gt.f32.partialorder %v889, 0.0
    %vm904 = vcmp.gt.f32.partialorder %v890, 0.0
    %v905 = vmul.f32 %v889, 0.2
    %v906 = vmul.f32 %v890, 0.2
    %v907 = vsel %vm903, %v889, %v905
    %v908 = vsel %vm904, %v890, %v906
    %v909 = vstv %s112
    %v910 = vmul.f32 %v909, %v907
    %v911 = vmul.f32 %v909, %v908
    %v912 = vadd.f32 %v901, %v910
    %v913 = vadd.f32 %v902, %v911
    %v914 = vmin.f32 %v889, 0.0
    %v915 = vmin.f32 %v890, 0.0
    %v916 = vmul.f32 %v914, 1.442695
    %v917 = vpow.pop %v916
    %v918 = vmul.f32 %v915, 1.442695
    %v919 = vpow.pop %v918
    %v920 = vsub.f32 %v917, 1.0
    %v921 = vsub.f32 %v919, 1.0
    %v922 = vsel %vm903, %v889, %v920
    %v923 = vsel %vm904, %v890, %v921
    %v924 = vstv %s113
    %v925 = vmul.f32 %v924, %v922
    %v926 = vmul.f32 %v924, %v923
    %v927 = vadd.f32 %v912, %v925
    %v928 = vadd.f32 %v913, %v926
    %930 = vrot.lane.b32.xlu0 %v927, 32
    %v931 = vpop.permute.xlu0 %930
    %vm933 = vcmask 1040640
    %934 = vst.msk [vmem:[#allocation3 + $0x1] sm:$0x1] %vm933, %v931
    %vm935 = vcmask 253952
    %936 = vst.msk [vmem:[#allocation3 + $0x9] sm:$0x1] %vm935, %v931
    %938 = vrot.lane.b32.xlu0 %v928, 32
    %v939 = vpop.permute.xlu0 %938
    %941 = vst.msk [vmem:[#allocation3 + $0x2] sm:$0x1] %vm933, %v939
    %942 = vst.msk [vmem:[#allocation3 + $0xa] sm:$0x1] %vm935, %v939
    %v943 = vrot.slane %v927, 1
    %944 = vrot.lane.b32.xlu0 %v943, 32
    %v945 = vpop.permute.xlu0 %944
    %947 = vst.msk [vmem:[#allocation3 + $0x3] sm:$0x1] %vm933, %v945
    %948 = vst.msk [vmem:[#allocation3 + $0xb] sm:$0x1] %vm935, %v945
    %v949 = vrot.slane %v928, 1
    %950 = vrot.lane.b32.xlu0 %v949, 32
    %v951 = vpop.permute.xlu0 %950
    %953 = vst.msk [vmem:[#allocation3 + $0x4] sm:$0x1] %vm933, %v951
    %954 = vst.msk [vmem:[#allocation3 + $0xc] sm:$0x1] %vm935, %v951
    %v955 = vld [vmem:[%s440] sm:$0x33]
    %v956 = vld [vmem:[#allocation10] sm:$0xff]
    %v957 = vld [vmem:[#allocation10 + $0x8] sm:$0xff]
    %v958 = vld [vmem:[#allocation10 + $0x10] sm:$0xff]
    %v959 = vld [vmem:[#allocation10 + $0x18] sm:$0xff]
    %v960 = vld [vmem:[#allocation10 + $0x20] sm:$0xff]
    %v961 = vld [vmem:[#allocation10 + $0x28] sm:$0xff]
    %v962 = vld [vmem:[#allocation10 + $0x30] sm:$0xff]
    %v963 = vld [vmem:[#allocation10 + $0x38] sm:$0xff]
    %v964 = vld [vmem:[#allocation10 + $0x40] sm:$0xff]
    %v965 = vld [vmem:[#allocation10 + $0x48] sm:$0xff]
    %v966 = vld [vmem:[#allocation10 + $0x50] sm:$0xff]
    %v967 = vld [vmem:[#allocation10 + $0x58] sm:$0xff]
    %v968 = vld [vmem:[#allocation10 + $0x60] sm:$0xff]
    %v969 = vld [vmem:[#allocation10 + $0x68] sm:$0xff]
    %v970 = vld [vmem:[#allocation10 + $0x70] sm:$0xff]
    %v971 = vld [vmem:[#allocation10 + $0x78] sm:$0xff]
    %v972 = vld [vmem:[#allocation10 + $0x80] sm:$0xff]
    %v973 = vld [vmem:[#allocation10 + $0x88] sm:$0xff]
    %v974 = vld [vmem:[#allocation10 + $0x90] sm:$0xff]
    %v975 = vld [vmem:[#allocation10 + $0x98] sm:$0xff]
    %v976 = vld [vmem:[#allocation10 + $0xa0] sm:$0xff]
    %v977 = vld [vmem:[#allocation10 + $0xa8] sm:$0xff]
    %v978 = vld [vmem:[#allocation10 + $0xb0] sm:$0xff]
    %v979 = vld [vmem:[#allocation10 + $0xb8] sm:$0xff]
    %v980 = vld [vmem:[#allocation10 + $0xc0] sm:$0xff]
    %v981 = vld [vmem:[#allocation10 + $0xc8] sm:$0xff]
    %v982 = vld [vmem:[#allocation10 + $0xd0] sm:$0xff]
    %v983 = vld [vmem:[#allocation10 + $0xd8] sm:$0xff]
    %v984 = vld [vmem:[#allocation10 + $0xe0] sm:$0xff]
    %v985 = vld [vmem:[#allocation10 + $0xe8] sm:$0xff]
    %v986 = vld [vmem:[#allocation10 + $0xf0] sm:$0xff]
    %v987 = vld [vmem:[#allocation10 + $0xf8] sm:$0xff]
    %v988 = vld [vmem:[#allocation10 + $0x100] sm:$0xff]
    %v989 = vld [vmem:[#allocation10 + $0x108] sm:$0xff]
    %v990 = vld [vmem:[#allocation10 + $0x110] sm:$0xff]
    %v991 = vld [vmem:[#allocation10 + $0x118] sm:$0xff]
    %v992 = vld [vmem:[#allocation10 + $0x120] sm:$0xff]
    %v993 = vld [vmem:[#allocation10 + $0x128] sm:$0xff]
    %v994 = vld [vmem:[#allocation10 + $0x130] sm:$0xff]
    %v995 = vld [vmem:[#allocation10 + $0x138] sm:$0xff]
    %v996 = vld [vmem:[#allocation10 + $0x140] sm:$0xff]
    %v997 = vld [vmem:[#allocation10 + $0x148] sm:$0xff]
    %v998 = vld [vmem:[#allocation10 + $0x150] sm:$0xff]
    %v999 = vld [vmem:[#allocation10 + $0x158] sm:$0xff]
    %v1000 = vld [vmem:[#allocation10 + $0x160] sm:$0xff]
    %v1001 = vld [vmem:[#allocation10 + $0x168] sm:$0xff]
    %v1002 = vld [vmem:[#allocation10 + $0x170] sm:$0xff]
    %v1003 = vld [vmem:[#allocation10 + $0x178] sm:$0xff]
    %v1004 = vld [vmem:[#allocation10 + $0x180] sm:$0xff]
    %v1005 = vld [vmem:[#allocation10 + $0x188] sm:$0xff]
    %v1006 = vld [vmem:[#allocation10 + $0x190] sm:$0xff]
    %v1007 = vld [vmem:[#allocation10 + $0x198] sm:$0xff]
    %v1008 = vld [vmem:[#allocation10 + $0x1a0] sm:$0xff]
    %v1009 = vld [vmem:[#allocation10 + $0x1a8] sm:$0xff]
    %v1010 = vld [vmem:[#allocation10 + $0x1b0] sm:$0xff]
    %v1011 = vld [vmem:[#allocation10 + $0x1b8] sm:$0xff]
    %v1012 = vld [vmem:[#allocation10 + $0x1c0] sm:$0xff]
    %v1013 = vld [vmem:[#allocation10 + $0x1c8] sm:$0xff]
    %v1014 = vld [vmem:[#allocation10 + $0x1d0] sm:$0xff]
    %v1015 = vld [vmem:[#allocation10 + $0x1d8] sm:$0xff]
    %v1016 = vld [vmem:[#allocation10 + $0x1e0] sm:$0xff]
    %v1017 = vld [vmem:[#allocation10 + $0x1e8] sm:$0xff]
    %v1018 = vld [vmem:[#allocation10 + $0x1f0] sm:$0xff]
    %v1019 = vld [vmem:[#allocation10 + $0x1f8] sm:$0xff]
    %v1020 = vld [vmem:[%s440] sm:$0x66]
    %v1021 = vld [vmem:[%s516] sm:$0xff]
    %v1022 = vld [vmem:[%s516 + $0x8] sm:$0xff]
    %v1023 = vld [vmem:[%s516 + $0x10] sm:$0xff]
    %v1024 = vld [vmem:[%s516 + $0x18] sm:$0xff]
    %v1025 = vld [vmem:[%s516 + $0x20] sm:$0xff]
    %v1026 = vld [vmem:[%s516 + $0x28] sm:$0xff]
    %v1027 = vld [vmem:[%s516 + $0x30] sm:$0xff]
    %v1028 = vld [vmem:[%s516 + $0x38] sm:$0xff]
    %v1029 = vld [vmem:[%s516 + $0x40] sm:$0xff]
    %v1030 = vld [vmem:[%s516 + $0x48] sm:$0xff]
    %v1031 = vld [vmem:[%s516 + $0x50] sm:$0xff]
    %v1032 = vld [vmem:[%s516 + $0x58] sm:$0xff]
    %v1033 = vld [vmem:[%s516 + $0x60] sm:$0xff]
    %v1034 = vld [vmem:[%s516 + $0x68] sm:$0xff]
    %v1035 = vld [vmem:[%s516 + $0x70] sm:$0xff]
    %v1036 = vld [vmem:[%s516 + $0x78] sm:$0xff]
    %v1037 = vld [vmem:[%s516 + $0x80] sm:$0xff]
    %v1038 = vld [vmem:[%s516 + $0x88] sm:$0xff]
    %v1039 = vld [vmem:[%s516 + $0x90] sm:$0xff]
    %v1040 = vld [vmem:[%s516 + $0x98] sm:$0xff]
    %v1041 = vld [vmem:[%s516 + $0xa0] sm:$0xff]
    %v1042 = vld [vmem:[%s516 + $0xa8] sm:$0xff]
    %v1043 = vld [vmem:[%s516 + $0xb0] sm:$0xff]
    %v1044 = vld [vmem:[%s516 + $0xb8] sm:$0xff]
    %v1045 = vld [vmem:[%s516 + $0xc0] sm:$0xff]
    %v1046 = vld [vmem:[%s516 + $0xc8] sm:$0xff]
    %v1047 = vld [vmem:[%s516 + $0xd0] sm:$0xff]
    %v1048 = vld [vmem:[%s516 + $0xd8] sm:$0xff]
    %v1049 = vld [vmem:[%s516 + $0xe0] sm:$0xff]
    %v1050 = vld [vmem:[%s516 + $0xe8] sm:$0xff]
    %v1051 = vld [vmem:[%s516 + $0xf0] sm:$0xff]
    %v1052 = vld [vmem:[%s516 + $0xf8] sm:$0xff]
    %v1053 = vld [vmem:[%s516 + $0x100] sm:$0xff]
    %v1054 = vld [vmem:[%s516 + $0x108] sm:$0xff]
    %v1055 = vld [vmem:[%s516 + $0x110] sm:$0xff]
    %v1056 = vld [vmem:[%s516 + $0x118] sm:$0xff]
    %v1057 = vld [vmem:[%s516 + $0x120] sm:$0xff]
    %v1058 = vld [vmem:[%s516 + $0x128] sm:$0xff]
    %v1059 = vld [vmem:[%s516 + $0x130] sm:$0xff]
    %v1060 = vld [vmem:[%s516 + $0x138] sm:$0xff]
    %v1061 = vld [vmem:[%s516 + $0x140] sm:$0xff]
    %v1062 = vld [vmem:[%s516 + $0x148] sm:$0xff]
    %v1063 = vld [vmem:[%s516 + $0x150] sm:$0xff]
    %v1064 = vld [vmem:[%s516 + $0x158] sm:$0xff]
    %v1065 = vld [vmem:[%s516 + $0x160] sm:$0xff]
    %v1066 = vld [vmem:[%s516 + $0x168] sm:$0xff]
    %v1067 = vld [vmem:[%s516 + $0x170] sm:$0xff]
    %v1068 = vld [vmem:[%s516 + $0x178] sm:$0xff]
    %v1069 = vld [vmem:[%s516 + $0x180] sm:$0xff]
    %v1070 = vld [vmem:[%s516 + $0x188] sm:$0xff]
    %v1071 = vld [vmem:[%s516 + $0x190] sm:$0xff]
    %v1072 = vld [vmem:[%s516 + $0x198] sm:$0xff]
    %v1073 = vld [vmem:[%s516 + $0x1a0] sm:$0xff]
    %v1074 = vld [vmem:[%s516 + $0x1a8] sm:$0xff]
    %v1075 = vld [vmem:[%s516 + $0x1b0] sm:$0xff]
    %v1076 = vld [vmem:[%s516 + $0x1b8] sm:$0xff]
    %v1077 = vld [vmem:[%s516 + $0x1c0] sm:$0xff]
    %v1078 = vld [vmem:[%s516 + $0x1c8] sm:$0xff]
    %v1079 = vld [vmem:[%s516 + $0x1d0] sm:$0xff]
    %v1080 = vld [vmem:[%s516 + $0x1d8] sm:$0xff]
    %v1081 = vld [vmem:[%s516 + $0x1e0] sm:$0xff]
    %v1082 = vld [vmem:[%s516 + $0x1e8] sm:$0xff]
    %v1083 = vld [vmem:[%s516 + $0x1f0] sm:$0xff]
    %v1084 = vld [vmem:[%s516 + $0x1f8] sm:$0xff]
    %v1086 = vcombine.high %v1020, %v1020
    %v1087 = vrot.slane %v1020, 1
    %v1088 = vrot.slane %v1086, 1
    %1091 = vmatprep.subr.mxu0 %v1022
    %1092 = vmatpush1.msra.mxu0 %v1021
    %1093 = vmatprep.subr.mxu0 %v1024
    %1094 = vmatpush1.msra.mxu0 %v1023
    %1095 = vmatprep.subr.mxu0 %v1026
    %1096 = vmatpush1.msra.mxu0 %v1025
    %1097 = vmatprep.subr.mxu0 %v1028
    %1098 = vmatpush1.msra.mxu0 %v1027
    %1099 = vmatprep.subr.mxu0 %v1030
    %1100 = vmatpush1.msra.mxu0 %v1029
    %1101 = vmatprep.subr.mxu0 %v1032
    %1102 = vmatpush1.msra.mxu0 %v1031
    %1103 = vmatprep.subr.mxu0 %v1034
    %1104 = vmatpush1.msra.mxu0 %v1033
    %1105 = vmatprep.subr.mxu0 %v1036
    %1106 = vmatpush1.msra.mxu0 %v1035
    %1107 = vmatprep.subr.mxu0 %v1038
    %1108 = vmatpush1.msra.mxu0 %v1037
    %1109 = vmatprep.subr.mxu0 %v1040
    %1110 = vmatpush1.msra.mxu0 %v1039
    %1111 = vmatprep.subr.mxu0 %v1042
    %1112 = vmatpush1.msra.mxu0 %v1041
    %1113 = vmatprep.subr.mxu0 %v1044
    %1114 = vmatpush1.msra.mxu0 %v1043
    %1115 = vmatprep.subr.mxu0 %v1046
    %1116 = vmatpush1.msra.mxu0 %v1045
    %1117 = vmatprep.subr.mxu0 %v1048
    %1118 = vmatpush1.msra.mxu0 %v1047
    %1119 = vmatprep.subr.mxu0 %v1050
    %1120 = vmatpush1.msra.mxu0 %v1049
    %1121 = vmatprep.subr.mxu0 %v1052
    %1122 = vmatpush1.msra.mxu0 %v1051
    %1123 = vmatprep.subr.mxu0 %v1054
    %1124 = vmatpush1.msra.mxu0 %v1053
    %1125 = vmatprep.subr.mxu0 %v1056
    %1126 = vmatpush1.msra.mxu0 %v1055
    %1127 = vmatprep.subr.mxu0 %v1058
    %1128 = vmatpush1.msra.mxu0 %v1057
    %1129 = vmatprep.subr.mxu0 %v1060
    %1130 = vmatpush1.msra.mxu0 %v1059
    %1131 = vmatprep.subr.mxu0 %v1062
    %1132 = vmatpush1.msra.mxu0 %v1061
    %1133 = vmatprep.subr.mxu0 %v1064
    %1134 = vmatpush1.msra.mxu0 %v1063
    %1135 = vmatprep.subr.mxu0 %v1066
    %1136 = vmatpush1.msra.mxu0 %v1065
    %1137 = vmatprep.subr.mxu0 %v1068
    %1138 = vmatpush1.msra.mxu0 %v1067
    %1139 = vmatprep.subr.mxu0 %v1070
    %1140 = vmatpush1.msra.mxu0 %v1069
    %1141 = vmatprep.subr.mxu0 %v1072
    %1142 = vmatpush1.msra.mxu0 %v1071
    %1143 = vmatprep.subr.mxu0 %v1074
    %1144 = vmatpush1.msra.mxu0 %v1073
    %1145 = vmatprep.subr.mxu0 %v1076
    %1146 = vmatpush1.msra.mxu0 %v1075
    %1147 = vmatprep.subr.mxu0 %v1078
    %1148 = vmatpush1.msra.mxu0 %v1077
    %1149 = vmatprep.subr.mxu0 %v1080
    %1150 = vmatpush1.msra.mxu0 %v1079
    %1151 = vmatprep.subr.mxu0 %v1082
    %1152 = vmatpush1.msra.mxu0 %v1081
    %1153 = vmatprep.subr.mxu0 %v1084
    %1154 = vmatpush1.msra.mxu0 %v1083
    %1155 = vmatprep.mubr.f32.mxu0 %v1088
    %1156 = vmatmul.mubr.f32.gmra.mrb[0].mxu0 %v1087
    %v1157 = vpop.f32.mrb[0].mxu0
    %v1158 = vadd.f32 0.0, %v1157
    %v1159 = vpop.f32.mrb[0].mxu0
    %v1160 = vadd.f32 0.0, %v1159
    %1161 = vdwg.mxu0
    %v1163 = vcombine.high %v955, %v955
    %1165 = vmatprep.subr.mxu0 %v957
    %1166 = vmatpush1.msra.mxu0 %v956
    %1167 = vmatprep.subr.mxu0 %v959
    %1168 = vmatpush1.msra.mxu0 %v958
    %1169 = vmatprep.subr.mxu0 %v961
    %1170 = vmatpush1.msra.mxu0 %v960
    %1171 = vmatprep.subr.mxu0 %v963
    %1172 = vmatpush1.msra.mxu0 %v962
    %1173 = vmatprep.subr.mxu0 %v965
    %1174 = vmatpush1.msra.mxu0 %v964
    %1175 = vmatprep.subr.mxu0 %v967
    %1176 = vmatpush1.msra.mxu0 %v966
    %1177 = vmatprep.subr.mxu0 %v969
    %1178 = vmatpush1.msra.mxu0 %v968
    %1179 = vmatprep.subr.mxu0 %v971
    %1180 = vmatpush1.msra.mxu0 %v970
    %1181 = vmatprep.subr.mxu0 %v973
    %1182 = vmatpush1.msra.mxu0 %v972
    %1183 = vmatprep.subr.mxu0 %v975
    %1184 = vmatpush1.msra.mxu0 %v974
    %1185 = vmatprep.subr.mxu0 %v977
    %1186 = vmatpush1.msra.mxu0 %v976
    %1187 = vmatprep.subr.mxu0 %v979
    %1188 = vmatpush1.msra.mxu0 %v978
    %1189 = vmatprep.subr.mxu0 %v981
    %1190 = vmatpush1.msra.mxu0 %v980
    %1191 = vmatprep.subr.mxu0 %v983
    %1192 = vmatpush1.msra.mxu0 %v982
    %1193 = vmatprep.subr.mxu0 %v985
    %1194 = vmatpush1.msra.mxu0 %v984
    %1195 = vmatprep.subr.mxu0 %v987
    %1196 = vmatpush1.msra.mxu0 %v986
    %1197 = vmatprep.subr.mxu0 %v989
    %1198 = vmatpush1.msra.mxu0 %v988
    %1199 = vmatprep.subr.mxu0 %v991
    %1200 = vmatpush1.msra.mxu0 %v990
    %1201 = vmatprep.subr.mxu0 %v993
    %1202 = vmatpush1.msra.mxu0 %v992
    %1203 = vmatprep.subr.mxu0 %v995
    %1204 = vmatpush1.msra.mxu0 %v994
    %1205 = vmatprep.subr.mxu0 %v997
    %1206 = vmatpush1.msra.mxu0 %v996
    %1207 = vmatprep.subr.mxu0 %v999
    %1208 = vmatpush1.msra.mxu0 %v998
    %1209 = vmatprep.subr.mxu0 %v1001
    %1210 = vmatpush1.msra.mxu0 %v1000
    %1211 = vmatprep.subr.mxu0 %v1003
    %1212 = vmatpush1.msra.mxu0 %v1002
    %1213 = vmatprep.subr.mxu0 %v1005
    %1214 = vmatpush1.msra.mxu0 %v1004
    %1215 = vmatprep.subr.mxu0 %v1007
    %1216 = vmatpush1.msra.mxu0 %v1006
    %1217 = vmatprep.subr.mxu0 %v1009
    %1218 = vmatpush1.msra.mxu0 %v1008
    %1219 = vmatprep.subr.mxu0 %v1011
    %1220 = vmatpush1.msra.mxu0 %v1010
    %1221 = vmatprep.subr.mxu0 %v1013
    %1222 = vmatpush1.msra.mxu0 %v1012
    %1223 = vmatprep.subr.mxu0 %v1015
    %1224 = vmatpush1.msra.mxu0 %v1014
    %1225 = vmatprep.subr.mxu0 %v1017
    %1226 = vmatpush1.msra.mxu0 %v1016
    %1227 = vmatprep.subr.mxu0 %v1019
    %1228 = vmatpush1.msra.mxu0 %v1018
    %1229 = vmatprep.mubr.f32.mxu0 %v1163
    %1230 = vmatmul.mubr.f32.gmra.mrb[0].mxu0 %v955
    %v1231 = vpop.f32.mrb[0].mxu0
    %v1232 = vadd.f32 %v1158, %v1231
    %v1233 = vpop.f32.mrb[0].mxu0
    %v1234 = vadd.f32 %v1160, %v1233
    %1235 = vdwg.mxu0
    %v1236 = vld [vmem:[%s440] sm:$0xcc]
    %v1237 = vld [vmem:[%s733] sm:$0xff]
    %v1238 = vld [vmem:[%s733 + $0x8] sm:$0xff]
    %v1239 = vld [vmem:[%s733 + $0x10] sm:$0xff]
    %v1240 = vld [vmem:[%s733 + $0x18] sm:$0xff]
    %v1241 = vld [vmem:[%s733 + $0x20] sm:$0xff]
    %v1242 = vld [vmem:[%s733 + $0x28] sm:$0xff]
    %v1243 = vld [vmem:[%s733 + $0x30] sm:$0xff]
    %v1244 = vld [vmem:[%s733 + $0x38] sm:$0xff]
    %v1245 = vld [vmem:[%s733 + $0x40] sm:$0xff]
    %v1246 = vld [vmem:[%s733 + $0x48] sm:$0xff]
    %v1247 = vld [vmem:[%s733 + $0x50] sm:$0xff]
    %v1248 = vld [vmem:[%s733 + $0x58] sm:$0xff]
    %v1249 = vld [vmem:[%s733 + $0x60] sm:$0xff]
    %v1250 = vld [vmem:[%s733 + $0x68] sm:$0xff]
    %v1251 = vld [vmem:[%s733 + $0x70] sm:$0xff]
    %v1252 = vld [vmem:[%s733 + $0x78] sm:$0xff]
    %v1253 = vld [vmem:[%s733 + $0x80] sm:$0xff]
    %v1254 = vld [vmem:[%s733 + $0x88] sm:$0xff]
    %v1255 = vld [vmem:[%s733 + $0x90] sm:$0xff]
    %v1256 = vld [vmem:[%s733 + $0x98] sm:$0xff]
    %v1257 = vld [vmem:[%s733 + $0xa0] sm:$0xff]
    %v1258 = vld [vmem:[%s733 + $0xa8] sm:$0xff]
    %v1259 = vld [vmem:[%s733 + $0xb0] sm:$0xff]
    %v1260 = vld [vmem:[%s733 + $0xb8] sm:$0xff]
    %v1261 = vld [vmem:[%s733 + $0xc0] sm:$0xff]
    %v1262 = vld [vmem:[%s733 + $0xc8] sm:$0xff]
    %v1263 = vld [vmem:[%s733 + $0xd0] sm:$0xff]
    %v1264 = vld [vmem:[%s733 + $0xd8] sm:$0xff]
    %v1265 = vld [vmem:[%s733 + $0xe0] sm:$0xff]
    %v1266 = vld [vmem:[%s733 + $0xe8] sm:$0xff]
    %v1267 = vld [vmem:[%s733 + $0xf0] sm:$0xff]
    %v1268 = vld [vmem:[%s733 + $0xf8] sm:$0xff]
    %v1269 = vld [vmem:[%s733 + $0x100] sm:$0xff]
    %v1270 = vld [vmem:[%s733 + $0x108] sm:$0xff]
    %v1271 = vld [vmem:[%s733 + $0x110] sm:$0xff]
    %v1272 = vld [vmem:[%s733 + $0x118] sm:$0xff]
    %v1273 = vld [vmem:[%s733 + $0x120] sm:$0xff]
    %v1274 = vld [vmem:[%s733 + $0x128] sm:$0xff]
    %v1275 = vld [vmem:[%s733 + $0x130] sm:$0xff]
    %v1276 = vld [vmem:[%s733 + $0x138] sm:$0xff]
    %v1277 = vld [vmem:[%s733 + $0x140] sm:$0xff]
    %v1278 = vld [vmem:[%s733 + $0x148] sm:$0xff]
    %v1279 = vld [vmem:[%s733 + $0x150] sm:$0xff]
    %v1280 = vld [vmem:[%s733 + $0x158] sm:$0xff]
    %v1281 = vld [vmem:[%s733 + $0x160] sm:$0xff]
    %v1282 = vld [vmem:[%s733 + $0x168] sm:$0xff]
    %v1283 = vld [vmem:[%s733 + $0x170] sm:$0xff]
    %v1284 = vld [vmem:[%s733 + $0x178] sm:$0xff]
    %v1285 = vld [vmem:[%s733 + $0x180] sm:$0xff]
    %v1286 = vld [vmem:[%s733 + $0x188] sm:$0xff]
    %v1287 = vld [vmem:[%s733 + $0x190] sm:$0xff]
    %v1288 = vld [vmem:[%s733 + $0x198] sm:$0xff]
    %v1289 = vld [vmem:[%s733 + $0x1a0] sm:$0xff]
    %v1290 = vld [vmem:[%s733 + $0x1a8] sm:$0xff]
    %v1291 = vld [vmem:[%s733 + $0x1b0] sm:$0xff]
    %v1292 = vld [vmem:[%s733 + $0x1b8] sm:$0xff]
    %v1293 = vld [vmem:[%s733 + $0x1c0] sm:$0xff]
    %v1294 = vld [vmem:[%s733 + $0x1c8] sm:$0xff]
    %v1295 = vld [vmem:[%s733 + $0x1d0] sm:$0xff]
    %v1296 = vld [vmem:[%s733 + $0x1d8] sm:$0xff]
    %v1297 = vld [vmem:[%s733 + $0x1e0] sm:$0xff]
    %v1298 = vld [vmem:[%s733 + $0x1e8] sm:$0xff]
    %v1299 = vld [vmem:[%s733 + $0x1f0] sm:$0xff]
    %v1300 = vld [vmem:[%s733 + $0x1f8] sm:$0xff]
    %v1302 = vcombine.high %v1236, %v1236
    %v1303 = vrot.slane %v1236, 2
    %v1304 = vrot.slane %v1302, 2
    %1307 = vmatprep.subr.mxu0 %v1238
    %1308 = vmatpush1.msra.mxu0 %v1237
    %1309 = vmatprep.subr.mxu0 %v1240
    %1310 = vmatpush1.msra.mxu0 %v1239
    %1311 = vmatprep.subr.mxu0 %v1242
    %1312 = vmatpush1.msra.mxu0 %v1241
    %1313 = vmatprep.subr.mxu0 %v1244
    %1314 = vmatpush1.msra.mxu0 %v1243
    %1315 = vmatprep.subr.mxu0 %v1246
    %1316 = vmatpush1.msra.mxu0 %v1245
    %1317 = vmatprep.subr.mxu0 %v1248
    %1318 = vmatpush1.msra.mxu0 %v1247
    %1319 = vmatprep.subr.mxu0 %v1250
    %1320 = vmatpush1.msra.mxu0 %v1249
    %1321 = vmatprep.subr.mxu0 %v1252
    %1322 = vmatpush1.msra.mxu0 %v1251
    %1323 = vmatprep.subr.mxu0 %v1254
    %1324 = vmatpush1.msra.mxu0 %v1253
    %1325 = vmatprep.subr.mxu0 %v1256
    %1326 = vmatpush1.msra.mxu0 %v1255
    %1327 = vmatprep.subr.mxu0 %v1258
    %1328 = vmatpush1.msra.mxu0 %v1257
    %1329 = vmatprep.subr.mxu0 %v1260
    %1330 = vmatpush1.msra.mxu0 %v1259
    %1331 = vmatprep.subr.mxu0 %v1262
    %1332 = vmatpush1.msra.mxu0 %v1261
    %1333 = vmatprep.subr.mxu0 %v1264
    %1334 = vmatpush1.msra.mxu0 %v1263
    %1335 = vmatprep.subr.mxu0 %v1266
    %1336 = vmatpush1.msra.mxu0 %v1265
    %1337 = vmatprep.subr.mxu0 %v1268
    %1338 = vmatpush1.msra.mxu0 %v1267
    %1339 = vmatprep.subr.mxu0 %v1270
    %1340 = vmatpush1.msra.mxu0 %v1269
    %1341 = vmatprep.subr.mxu0 %v1272
    %1342 = vmatpush1.msra.mxu0 %v1271
    %1343 = vmatprep.subr.mxu0 %v1274
    %1344 = vmatpush1.msra.mxu0 %v1273
    %1345 = vmatprep.subr.mxu0 %v1276
    %1346 = vmatpush1.msra.mxu0 %v1275
    %1347 = vmatprep.subr.mxu0 %v1278
    %1348 = vmatpush1.msra.mxu0 %v1277
    %1349 = vmatprep.subr.mxu0 %v1280
    %1350 = vmatpush1.msra.mxu0 %v1279
    %1351 = vmatprep.subr.mxu0 %v1282
    %1352 = vmatpush1.msra.mxu0 %v1281
    %1353 = vmatprep.subr.mxu0 %v1284
    %1354 = vmatpush1.msra.mxu0 %v1283
    %1355 = vmatprep.subr.mxu0 %v1286
    %1356 = vmatpush1.msra.mxu0 %v1285
    %1357 = vmatprep.subr.mxu0 %v1288
    %1358 = vmatpush1.msra.mxu0 %v1287
    %1359 = vmatprep.subr.mxu0 %v1290
    %1360 = vmatpush1.msra.mxu0 %v1289
    %1361 = vmatprep.subr.mxu0 %v1292
    %1362 = vmatpush1.msra.mxu0 %v1291
    %1363 = vmatprep.subr.mxu0 %v1294
    %1364 = vmatpush1.msra.mxu0 %v1293
    %1365 = vmatprep.subr.mxu0 %v1296
    %1366 = vmatpush1.msra.mxu0 %v1295
    %1367 = vmatprep.subr.mxu0 %v1298
    %1368 = vmatpush1.msra.mxu0 %v1297
    %1369 = vmatprep.subr.mxu0 %v1300
    %1370 = vmatpush1.msra.mxu0 %v1299
    %1371 = vmatprep.mubr.f32.mxu0 %v1304
    %1372 = vmatmul.mubr.f32.gmra.mrb[0].mxu0 %v1303
    %v1373 = vpop.f32.mrb[0].mxu0
    %v1374 = vadd.f32 0.0, %v1373
    %v1375 = vpop.f32.mrb[0].mxu0
    %v1376 = vadd.f32 0.0, %v1375
    %1377 = vdwg.mxu0
    %v1378 = vadd.f32 %v1232, %v1374
    %v1379 = vadd.f32 %v1234, %v1376
    %v1380 = vld [vmem:[%s7] sm:$0x3]
    %v1382 = vlaneseq
    %v1383 = vshrl.u32 %v1382, 7
    %v1384 = vsub.s32 0, %v1383
    %v1385 = vrot.slane %v1380, %v1384
    %v1386 = vlaneseq
    %v1387 = vshrl.u32 %v1386, 7
    %v1388 = vsub.s32 1, %v1387
    %v1389 = vrot.slane %v1380, %v1388
    %v1392 = vadd.f32 %v1378, %v1385
    %v1393 = vadd.f32 %v1379, %v1389
    %v1394 = vmax.f32 %v1392, 0.0
    %v1395 = vmax.f32 %v1393, 0.0
    %v1396 = vmul.f32 %v893, %v1394
    %v1397 = vmul.f32 %v893, %v1395
    %v1398 = vtanh.pop %v1392
    %v1399 = vtanh.pop %v1393
    %v1400 = vmul.f32 %v898, %v1398
    %v1401 = vmul.f32 %v898, %v1399
    %v1402 = vadd.f32 %v1396, %v1400
    %v1403 = vadd.f32 %v1397, %v1401
    %vm1404 = vcmp.gt.f32.partialorder %v1392, 0.0
    %vm1405 = vcmp.gt.f32.partialorder %v1393, 0.0
    %v1406 = vmul.f32 %v1392, 0.2
    %v1407 = vmul.f32 %v1393, 0.2
    %v1408 = vsel %vm1404, %v1392, %v1406
    %v1409 = vsel %vm1405, %v1393, %v1407
    %v1410 = vmul.f32 %v909, %v1408
    %v1411 = vmul.f32 %v909, %v1409
    %v1412 = vadd.f32 %v1402, %v1410
    %v1413 = vadd.f32 %v1403, %v1411
    %v1414 = vmin.f32 %v1392, 0.0
    %v1415 = vmin.f32 %v1393, 0.0
    %v1416 = vmul.f32 %v1414, 1.442695
    %v1417 = vpow.pop %v1416
    %v1418 = vmul.f32 %v1415, 1.442695
    %v1419 = vpow.pop %v1418
    %v1420 = vsub.f32 %v1417, 1.0
    %v1421 = vsub.f32 %v1419, 1.0
    %v1422 = vsel %vm1404, %v1392, %v1420
    %v1423 = vsel %vm1405, %v1393, %v1421
    %v1424 = vmul.f32 %v924, %v1422
    %v1425 = vmul.f32 %v924, %v1423
    %v1426 = vadd.f32 %v1412, %v1424
    %v1427 = vadd.f32 %v1413, %v1425
    %1429 = vrot.lane.b32.xlu0 %v1426, 32
    %v1430 = vpop.permute.xlu0 %1429
    %s1432 = scalar_lea.vmem [#allocation3], 16
    %1433 = vst.msk [vmem:[%s1432 + $0x1] sm:$0x1] %vm933, %v1430
    %1434 = vst.msk [vmem:[%s1432 + $0x9] sm:$0x1] %vm935, %v1430
    %1436 = vrot.lane.b32.xlu0 %v1427, 32
    %v1437 = vpop.permute.xlu0 %1436
    %1439 = vst.msk [vmem:[%s1432 + $0x2] sm:$0x1] %vm933, %v1437
    %1440 = vst.msk [vmem:[%s1432 + $0xa] sm:$0x1] %vm935, %v1437
    %v1441 = vrot.slane %v1426, 1
    %1442 = vrot.lane.b32.xlu0 %v1441, 32
    %v1443 = vpop.permute.xlu0 %1442
    %1445 = vst.msk [vmem:[%s1432 + $0x3] sm:$0x1] %vm933, %v1443
    %1446 = vst.msk [vmem:[%s1432 + $0xb] sm:$0x1] %vm935, %v1443
    %v1447 = vrot.slane %v1427, 1
    %1448 = vrot.lane.b32.xlu0 %v1447, 32
    %v1449 = vpop.permute.xlu0 %1448
    %1451 = vst.msk [vmem:[%s1432 + $0x4] sm:$0x1] %vm933, %v1449
    %1452 = vst.msk [vmem:[%s1432 + $0xc] sm:$0x1] %vm935, %v1449
    %v1453 = vld [vmem:[#allocation3] sm:$0xf]
    %v1454 = vld [vmem:[#allocation3 + $0x8] sm:$0xf]
    %v1455 = vld [vmem:[#allocation11] sm:$0xff]
    %v1456 = vld [vmem:[#allocation11 + $0x8] sm:$0xff]
    %v1457 = vld [vmem:[#allocation11 + $0x10] sm:$0xff]
    %v1458 = vld [vmem:[#allocation11 + $0x18] sm:$0xff]
    %v1459 = vld [vmem:[#allocation11 + $0x20] sm:$0xff]
    %v1460 = vld [vmem:[#allocation11 + $0x28] sm:$0xff]
    %v1461 = vld [vmem:[#allocation11 + $0x30] sm:$0xff]
    %v1462 = vld [vmem:[#allocation11 + $0x38] sm:$0xff]
    %v1463 = vld [vmem:[#allocation11 + $0x40] sm:$0xff]
    %v1464 = vld [vmem:[#allocation11 + $0x48] sm:$0xff]
    %v1465 = vld [vmem:[#allocation11 + $0x50] sm:$0xff]
    %v1466 = vld [vmem:[#allocation11 + $0x58] sm:$0xff]
    %v1467 = vld [vmem:[#allocation11 + $0x60] sm:$0xff]
    %v1468 = vld [vmem:[#allocation11 + $0x68] sm:$0xff]
    %v1469 = vld [vmem:[#allocation11 + $0x70] sm:$0xff]
    %v1470 = vld [vmem:[#allocation11 + $0x78] sm:$0xff]
    %v1471 = vld [vmem:[#allocation11 + $0x80] sm:$0xff]
    %v1472 = vld [vmem:[#allocation11 + $0x88] sm:$0xff]
    %v1473 = vld [vmem:[#allocation11 + $0x90] sm:$0xff]
    %v1474 = vld [vmem:[#allocation11 + $0x98] sm:$0xff]
    %v1475 = vld [vmem:[#allocation11 + $0xa0] sm:$0xff]
    %v1476 = vld [vmem:[#allocation11 + $0xa8] sm:$0xff]
    %v1477 = vld [vmem:[#allocation11 + $0xb0] sm:$0xff]
    %v1478 = vld [vmem:[#allocation11 + $0xb8] sm:$0xff]
    %v1479 = vld [vmem:[#allocation11 + $0xc0] sm:$0xff]
    %v1480 = vld [vmem:[#allocation11 + $0xc8] sm:$0xff]
    %v1481 = vld [vmem:[#allocation11 + $0xd0] sm:$0xff]
    %v1482 = vld [vmem:[#allocation11 + $0xd8] sm:$0xff]
    %v1483 = vld [vmem:[#allocation11 + $0xe0] sm:$0xff]
    %v1484 = vld [vmem:[#allocation11 + $0xe8] sm:$0xff]
    %v1485 = vld [vmem:[#allocation11 + $0xf0] sm:$0xff]
    %v1486 = vld [vmem:[#allocation11 + $0xf8] sm:$0xff]
    %v1487 = vld [vmem:[#allocation11 + $0x100] sm:$0xff]
    %v1488 = vld [vmem:[#allocation11 + $0x108] sm:$0xff]
    %v1489 = vld [vmem:[#allocation11 + $0x110] sm:$0xff]
    %v1490 = vld [vmem:[#allocation11 + $0x118] sm:$0xff]
    %v1491 = vld [vmem:[#allocation11 + $0x120] sm:$0xff]
    %v1492 = vld [vmem:[#allocation11 + $0x128] sm:$0xff]
    %v1493 = vld [vmem:[#allocation11 + $0x130] sm:$0xff]
    %v1494 = vld [vmem:[#allocation11 + $0x138] sm:$0xff]
    %v1495 = vld [vmem:[#allocation11 + $0x140] sm:$0xff]
    %v1496 = vld [vmem:[#allocation11 + $0x148] sm:$0xff]
    %v1497 = vld [vmem:[#allocation11 + $0x150] sm:$0xff]
    %v1498 = vld [vmem:[#allocation11 + $0x158] sm:$0xff]
    %v1499 = vld [vmem:[#allocation11 + $0x160] sm:$0xff]
    %v1500 = vld [vmem:[#allocation11 + $0x168] sm:$0xff]
    %v1501 = vld [vmem:[#allocation11 + $0x170] sm:$0xff]
    %v1502 = vld [vmem:[#allocation11 + $0x178] sm:$0xff]
    %v1503 = vld [vmem:[#allocation3] sm:$0x1e]
    %v1504 = vld [vmem:[#allocation3 + $0x8] sm:$0x1e]
    %s1505 = scalar_lea.vmem [#allocation11], 384
    %v1506 = vld [vmem:[%s1505] sm:$0xff]
    %v1507 = vld [vmem:[%s1505 + $0x8] sm:$0xff]
    %v1508 = vld [vmem:[%s1505 + $0x10] sm:$0xff]
    %v1509 = vld [vmem:[%s1505 + $0x18] sm:$0xff]
    %v1510 = vld [vmem:[%s1505 + $0x20] sm:$0xff]
    %v1511 = vld [vmem:[%s1505 + $0x28] sm:$0xff]
    %v1512 = vld [vmem:[%s1505 + $0x30] sm:$0xff]
    %v1513 = vld [vmem:[%s1505 + $0x38] sm:$0xff]
    %v1514 = vld [vmem:[%s1505 + $0x40] sm:$0xff]
    %v1515 = vld [vmem:[%s1505 + $0x48] sm:$0xff]
    %v1516 = vld [vmem:[%s1505 + $0x50] sm:$0xff]
    %v1517 = vld [vmem:[%s1505 + $0x58] sm:$0xff]
    %v1518 = vld [vmem:[%s1505 + $0x60] sm:$0xff]
    %v1519 = vld [vmem:[%s1505 + $0x68] sm:$0xff]
    %v1520 = vld [vmem:[%s1505 + $0x70] sm:$0xff]
    %v1521 = vld [vmem:[%s1505 + $0x78] sm:$0xff]
    %v1522 = vld [vmem:[%s1505 + $0x80] sm:$0xff]
    %v1523 = vld [vmem:[%s1505 + $0x88] sm:$0xff]
    %v1524 = vld [vmem:[%s1505 + $0x90] sm:$0xff]
    %v1525 = vld [vmem:[%s1505 + $0x98] sm:$0xff]
    %v1526 = vld [vmem:[%s1505 + $0xa0] sm:$0xff]
    %v1527 = vld [vmem:[%s1505 + $0xa8] sm:$0xff]
    %v1528 = vld [vmem:[%s1505 + $0xb0] sm:$0xff]
    %v1529 = vld [vmem:[%s1505 + $0xb8] sm:$0xff]
    %v1530 = vld [vmem:[%s1505 + $0xc0] sm:$0xff]
    %v1531 = vld [vmem:[%s1505 + $0xc8] sm:$0xff]
    %v1532 = vld [vmem:[%s1505 + $0xd0] sm:$0xff]
    %v1533 = vld [vmem:[%s1505 + $0xd8] sm:$0xff]
    %v1534 = vld [vmem:[%s1505 + $0xe0] sm:$0xff]
    %v1535 = vld [vmem:[%s1505 + $0xe8] sm:$0xff]
    %v1536 = vld [vmem:[%s1505 + $0xf0] sm:$0xff]
    %v1537 = vld [vmem:[%s1505 + $0xf8] sm:$0xff]
    %v1538 = vld [vmem:[%s1505 + $0x100] sm:$0xff]
    %v1539 = vld [vmem:[%s1505 + $0x108] sm:$0xff]
    %v1540 = vld [vmem:[%s1505 + $0x110] sm:$0xff]
    %v1541 = vld [vmem:[%s1505 + $0x118] sm:$0xff]
    %v1542 = vld [vmem:[%s1505 + $0x120] sm:$0xff]
    %v1543 = vld [vmem:[%s1505 + $0x128] sm:$0xff]
    %v1544 = vld [vmem:[%s1505 + $0x130] sm:$0xff]
    %v1545 = vld [vmem:[%s1505 + $0x138] sm:$0xff]
    %v1546 = vld [vmem:[%s1505 + $0x140] sm:$0xff]
    %v1547 = vld [vmem:[%s1505 + $0x148] sm:$0xff]
    %v1548 = vld [vmem:[%s1505 + $0x150] sm:$0xff]
    %v1549 = vld [vmem:[%s1505 + $0x158] sm:$0xff]
    %v1550 = vld [vmem:[%s1505 + $0x160] sm:$0xff]
    %v1551 = vld [vmem:[%s1505 + $0x168] sm:$0xff]
    %v1552 = vld [vmem:[%s1505 + $0x170] sm:$0xff]
    %v1553 = vld [vmem:[%s1505 + $0x178] sm:$0xff]
    %v1556 = vrot.slane %v1503, 1
    %v1557 = vrot.slane %v1504, 1
    %v1559 = vsel %vm419, %v1557, 0
    %1561 = vmatprep.subr.mxu0 %v1507
    %1562 = vmatpush1.msra.mxu0 %v1506
    %1563 = vmatprep.subr.mxu0 %v1509
    %1564 = vmatpush1.msra.mxu0 %v1508
    %1565 = vmatprep.subr.mxu0 %v1511
    %1566 = vmatpush1.msra.mxu0 %v1510
    %1567 = vmatprep.subr.mxu0 %v1513
    %1568 = vmatpush1.msra.mxu0 %v1512
    %1569 = vmatprep.subr.mxu0 %v1515
    %1570 = vmatpush1.msra.mxu0 %v1514
    %1571 = vmatprep.subr.mxu0 %v1517
    %1572 = vmatpush1.msra.mxu0 %v1516
    %1573 = vmatprep.subr.mxu0 %v1519
    %1574 = vmatpush1.msra.mxu0 %v1518
    %1575 = vmatprep.subr.mxu0 %v1521
    %1576 = vmatpush1.msra.mxu0 %v1520
    %1577 = vmatprep.subr.mxu0 %v1523
    %1578 = vmatpush1.msra.mxu0 %v1522
    %1579 = vmatprep.subr.mxu0 %v1525
    %1580 = vmatpush1.msra.mxu0 %v1524
    %1581 = vmatprep.subr.mxu0 %v1527
    %1582 = vmatpush1.msra.mxu0 %v1526
    %1583 = vmatprep.subr.mxu0 %v1529
    %1584 = vmatpush1.msra.mxu0 %v1528
    %1585 = vmatprep.subr.mxu0 %v1531
    %1586 = vmatpush1.msra.mxu0 %v1530
    %1587 = vmatprep.subr.mxu0 %v1533
    %1588 = vmatpush1.msra.mxu0 %v1532
    %1589 = vmatprep.subr.mxu0 %v1535
    %1590 = vmatpush1.msra.mxu0 %v1534
    %1591 = vmatprep.subr.mxu0 %v1537
    %1592 = vmatpush1.msra.mxu0 %v1536
    %1593 = vmatprep.subr.mxu0 %v1539
    %1594 = vmatpush1.msra.mxu0 %v1538
    %1595 = vmatprep.subr.mxu0 %v1541
    %1596 = vmatpush1.msra.mxu0 %v1540
    %1597 = vmatprep.subr.mxu0 %v1543
    %1598 = vmatpush1.msra.mxu0 %v1542
    %1599 = vmatprep.subr.mxu0 %v1545
    %1600 = vmatpush1.msra.mxu0 %v1544
    %1601 = vmatprep.subr.mxu0 %v1547
    %1602 = vmatpush1.msra.mxu0 %v1546
    %1603 = vmatprep.subr.mxu0 %v1549
    %1604 = vmatpush1.msra.mxu0 %v1548
    %1605 = vmatprep.subr.mxu0 %v1551
    %1606 = vmatpush1.msra.mxu0 %v1550
    %1607 = vmatprep.subr.mxu0 %v1553
    %1608 = vmatpush1.msra.mxu0 %v1552
    %1609 = vmatprep.subr.mxu0 0.0
    %1610 = vmatpush1.msra.mxu0 0.0
    %1611 = vmatprep.subr.mxu0 0.0
    %1612 = vmatpush1.msra.mxu0 0.0
    %1613 = vmatprep.subr.mxu0 0.0
    %1614 = vmatpush1.msra.mxu0 0.0
    %1615 = vmatprep.subr.mxu0 0.0
    %1616 = vmatpush1.msra.mxu0 0.0
    %1617 = vmatprep.subr.mxu0 0.0
    %1618 = vmatpush1.msra.mxu0 0.0
    %1619 = vmatprep.subr.mxu0 0.0
    %1620 = vmatpush1.msra.mxu0 0.0
    %1621 = vmatprep.subr.mxu0 0.0
    %1622 = vmatpush1.msra.mxu0 0.0
    %1623 = vmatprep.subr.mxu0 0.0
    %1624 = vmatpush1.msra.mxu0 0.0
    %1625 = vmatprep.mubr.f32.mxu0 %v1559
    %1626 = vmatmul.mubr.f32.gmra.mrb[0].mxu0 %v1556
    %v1627 = vpop.f32.mrb[0].mxu0
    %v1628 = vadd.f32 0.0, %v1627
    %v1629 = vpop.f32.mrb[0].mxu0
    %v1630 = vadd.f32 0.0, %v1629
    %1631 = vdwg.mxu0
    %v1633 = vsel %vm419, %v1454, 0
    %1635 = vmatprep.subr.mxu0 %v1456
    %1636 = vmatpush1.msra.mxu0 %v1455
    %1637 = vmatprep.subr.mxu0 %v1458
    %1638 = vmatpush1.msra.mxu0 %v1457
    %1639 = vmatprep.subr.mxu0 %v1460
    %1640 = vmatpush1.msra.mxu0 %v1459
    %1641 = vmatprep.subr.mxu0 %v1462
    %1642 = vmatpush1.msra.mxu0 %v1461
    %1643 = vmatprep.subr.mxu0 %v1464
    %1644 = vmatpush1.msra.mxu0 %v1463
    %1645 = vmatprep.subr.mxu0 %v1466
    %1646 = vmatpush1.msra.mxu0 %v1465
    %1647 = vmatprep.subr.mxu0 %v1468
    %1648 = vmatpush1.msra.mxu0 %v1467
    %1649 = vmatprep.subr.mxu0 %v1470
    %1650 = vmatpush1.msra.mxu0 %v1469
    %1651 = vmatprep.subr.mxu0 %v1472
    %1652 = vmatpush1.msra.mxu0 %v1471
    %1653 = vmatprep.subr.mxu0 %v1474
    %1654 = vmatpush1.msra.mxu0 %v1473
    %1655 = vmatprep.subr.mxu0 %v1476
    %1656 = vmatpush1.msra.mxu0 %v1475
    %1657 = vmatprep.subr.mxu0 %v1478
    %1658 = vmatpush1.msra.mxu0 %v1477
    %1659 = vmatprep.subr.mxu0 %v1480
    %1660 = vmatpush1.msra.mxu0 %v1479
    %1661 = vmatprep.subr.mxu0 %v1482
    %1662 = vmatpush1.msra.mxu0 %v1481
    %1663 = vmatprep.subr.mxu0 %v1484
    %1664 = vmatpush1.msra.mxu0 %v1483
    %1665 = vmatprep.subr.mxu0 %v1486
    %1666 = vmatpush1.msra.mxu0 %v1485
    %1667 = vmatprep.subr.mxu0 %v1488
    %1668 = vmatpush1.msra.mxu0 %v1487
    %1669 = vmatprep.subr.mxu0 %v1490
    %1670 = vmatpush1.msra.mxu0 %v1489
    %1671 = vmatprep.subr.mxu0 %v1492
    %1672 = vmatpush1.msra.mxu0 %v1491
    %1673 = vmatprep.subr.mxu0 %v1494
    %1674 = vmatpush1.msra.mxu0 %v1493
    %1675 = vmatprep.subr.mxu0 %v1496
    %1676 = vmatpush1.msra.mxu0 %v1495
    %1677 = vmatprep.subr.mxu0 %v1498
    %1678 = vmatpush1.msra.mxu0 %v1497
    %1679 = vmatprep.subr.mxu0 %v1500
    %1680 = vmatpush1.msra.mxu0 %v1499
    %1681 = vmatprep.subr.mxu0 %v1502
    %1682 = vmatpush1.msra.mxu0 %v1501
    %1683 = vmatprep.subr.mxu0 0.0
    %1684 = vmatpush1.msra.mxu0 0.0
    %1685 = vmatprep.subr.mxu0 0.0
    %1686 = vmatpush1.msra.mxu0 0.0
    %1687 = vmatprep.subr.mxu0 0.0
    %1688 = vmatpush1.msra.mxu0 0.0
    %1689 = vmatprep.subr.mxu0 0.0
    %1690 = vmatpush1.msra.mxu0 0.0
    %1691 = vmatprep.subr.mxu0 0.0
    %1692 = vmatpush1.msra.mxu0 0.0
    %1693 = vmatprep.subr.mxu0 0.0
    %1694 = vmatpush1.msra.mxu0 0.0
    %1695 = vmatprep.subr.mxu0 0.0
    %1696 = vmatpush1.msra.mxu0 0.0
    %1697 = vmatprep.subr.mxu0 0.0
    %1698 = vmatpush1.msra.mxu0 0.0
    %1699 = vmatprep.mubr.f32.mxu0 %v1633
    %1700 = vmatmul.mubr.f32.gmra.mrb[0].mxu0 %v1453
    %v1701 = vpop.f32.mrb[0].mxu0
    %v1702 = vadd.f32 %v1628, %v1701
    %v1703 = vpop.f32.mrb[0].mxu0
    %v1704 = vadd.f32 %v1630, %v1703
    %1705 = vdwg.mxu0
    %v1706 = vld [vmem:[#allocation3] sm:$0x3c]
    %v1707 = vld [vmem:[#allocation3 + $0x8] sm:$0x3c]
    %s1708 = scalar_lea.vmem [#allocation11], 768
    %v1709 = vld [vmem:[%s1708] sm:$0xff]
    %v1710 = vld [vmem:[%s1708 + $0x8] sm:$0xff]
    %v1711 = vld [vmem:[%s1708 + $0x10] sm:$0xff]
    %v1712 = vld [vmem:[%s1708 + $0x18] sm:$0xff]
    %v1713 = vld [vmem:[%s1708 + $0x20] sm:$0xff]
    %v1714 = vld [vmem:[%s1708 + $0x28] sm:$0xff]
    %v1715 = vld [vmem:[%s1708 + $0x30] sm:$0xff]
    %v1716 = vld [vmem:[%s1708 + $0x38] sm:$0xff]
    %v1717 = vld [vmem:[%s1708 + $0x40] sm:$0xff]
    %v1718 = vld [vmem:[%s1708 + $0x48] sm:$0xff]
    %v1719 = vld [vmem:[%s1708 + $0x50] sm:$0xff]
    %v1720 = vld [vmem:[%s1708 + $0x58] sm:$0xff]
    %v1721 = vld [vmem:[%s1708 + $0x60] sm:$0xff]
    %v1722 = vld [vmem:[%s1708 + $0x68] sm:$0xff]
    %v1723 = vld [vmem:[%s1708 + $0x70] sm:$0xff]
    %v1724 = vld [vmem:[%s1708 + $0x78] sm:$0xff]
    %v1725 = vld [vmem:[%s1708 + $0x80] sm:$0xff]
    %v1726 = vld [vmem:[%s1708 + $0x88] sm:$0xff]
    %v1727 = vld [vmem:[%s1708 + $0x90] sm:$0xff]
    %v1728 = vld [vmem:[%s1708 + $0x98] sm:$0xff]
    %v1729 = vld [vmem:[%s1708 + $0xa0] sm:$0xff]
    %v1730 = vld [vmem:[%s1708 + $0xa8] sm:$0xff]
    %v1731 = vld [vmem:[%s1708 + $0xb0] sm:$0xff]
    %v1732 = vld [vmem:[%s1708 + $0xb8] sm:$0xff]
    %v1733 = vld [vmem:[%s1708 + $0xc0] sm:$0xff]
    %v1734 = vld [vmem:[%s1708 + $0xc8] sm:$0xff]
    %v1735 = vld [vmem:[%s1708 + $0xd0] sm:$0xff]
    %v1736 = vld [vmem:[%s1708 + $0xd8] sm:$0xff]
    %v1737 = vld [vmem:[%s1708 + $0xe0] sm:$0xff]
    %v1738 = vld [vmem:[%s1708 + $0xe8] sm:$0xff]
    %v1739 = vld [vmem:[%s1708 + $0xf0] sm:$0xff]
    %v1740 = vld [vmem:[%s1708 + $0xf8] sm:$0xff]
    %v1741 = vld [vmem:[%s1708 + $0x100] sm:$0xff]
    %v1742 = vld [vmem:[%s1708 + $0x108] sm:$0xff]
    %v1743 = vld [vmem:[%s1708 + $0x110] sm:$0xff]
    %v1744 = vld [vmem:[%s1708 + $0x118] sm:$0xff]
    %v1745 = vld [vmem:[%s1708 + $0x120] sm:$0xff]
    %v1746 = vld [vmem:[%s1708 + $0x128] sm:$0xff]
    %v1747 = vld [vmem:[%s1708 + $0x130] sm:$0xff]
    %v1748 = vld [vmem:[%s1708 + $0x138] sm:$0xff]
    %v1749 = vld [vmem:[%s1708 + $0x140] sm:$0xff]
    %v1750 = vld [vmem:[%s1708 + $0x148] sm:$0xff]
    %v1751 = vld [vmem:[%s1708 + $0x150] sm:$0xff]
    %v1752 = vld [vmem:[%s1708 + $0x158] sm:$0xff]
    %v1753 = vld [vmem:[%s1708 + $0x160] sm:$0xff]
    %v1754 = vld [vmem:[%s1708 + $0x168] sm:$0xff]
    %v1755 = vld [vmem:[%s1708 + $0x170] sm:$0xff]
    %v1756 = vld [vmem:[%s1708 + $0x178] sm:$0xff]
    %v1759 = vrot.slane %v1706, 2
    %v1760 = vrot.slane %v1707, 2
    %v1762 = vsel %vm419, %v1760, 0
    %1764 = vmatprep.subr.mxu0 %v1710
    %1765 = vmatpush1.msra.mxu0 %v1709
    %1766 = vmatprep.subr.mxu0 %v1712
    %1767 = vmatpush1.msra.mxu0 %v1711
    %1768 = vmatprep.subr.mxu0 %v1714
    %1769 = vmatpush1.msra.mxu0 %v1713
    %1770 = vmatprep.subr.mxu0 %v1716
    %1771 = vmatpush1.msra.mxu0 %v1715
    %1772 = vmatprep.subr.mxu0 %v1718
    %1773 = vmatpush1.msra.mxu0 %v1717
    %1774 = vmatprep.subr.mxu0 %v1720
    %1775 = vmatpush1.msra.mxu0 %v1719
    %1776 = vmatprep.subr.mxu0 %v1722
    %1777 = vmatpush1.msra.mxu0 %v1721
    %1778 = vmatprep.subr.mxu0 %v1724
    %1779 = vmatpush1.msra.mxu0 %v1723
    %1780 = vmatprep.subr.mxu0 %v1726
    %1781 = vmatpush1.msra.mxu0 %v1725
    %1782 = vmatprep.subr.mxu0 %v1728
    %1783 = vmatpush1.msra.mxu0 %v1727
    %1784 = vmatprep.subr.mxu0 %v1730
    %1785 = vmatpush1.msra.mxu0 %v1729
    %1786 = vmatprep.subr.mxu0 %v1732
    %1787 = vmatpush1.msra.mxu0 %v1731
    %1788 = vmatprep.subr.mxu0 %v1734
    %1789 = vmatpush1.msra.mxu0 %v1733
    %1790 = vmatprep.subr.mxu0 %v1736
    %1791 = vmatpush1.msra.mxu0 %v1735
    %1792 = vmatprep.subr.mxu0 %v1738
    %1793 = vmatpush1.msra.mxu0 %v1737
    %1794 = vmatprep.subr.mxu0 %v1740
    %1795 = vmatpush1.msra.mxu0 %v1739
    %1796 = vmatprep.subr.mxu0 %v1742
    %1797 = vmatpush1.msra.mxu0 %v1741
    %1798 = vmatprep.subr.mxu0 %v1744
    %1799 = vmatpush1.msra.mxu0 %v1743
    %1800 = vmatprep.subr.mxu0 %v1746
    %1801 = vmatpush1.msra.mxu0 %v1745
    %1802 = vmatprep.subr.mxu0 %v1748
    %1803 = vmatpush1.msra.mxu0 %v1747
    %1804 = vmatprep.subr.mxu0 %v1750
    %1805 = vmatpush1.msra.mxu0 %v1749
    %1806 = vmatprep.subr.mxu0 %v1752
    %1807 = vmatpush1.msra.mxu0 %v1751
    %1808 = vmatprep.subr.mxu0 %v1754
    %1809 = vmatpush1.msra.mxu0 %v1753
    %1810 = vmatprep.subr.mxu0 %v1756
    %1811 = vmatpush1.msra.mxu0 %v1755
    %1812 = vmatprep.subr.mxu0 0.0
    %1813 = vmatpush1.msra.mxu0 0.0
    %1814 = vmatprep.subr.mxu0 0.0
    %1815 = vmatpush1.msra.mxu0 0.0
    %1816 = vmatprep.subr.mxu0 0.0
    %1817 = vmatpush1.msra.mxu0 0.0
    %1818 = vmatprep.subr.mxu0 0.0
    %1819 = vmatpush1.msra.mxu0 0.0
    %1820 = vmatprep.subr.mxu0 0.0
    %1821 = vmatpush1.msra.mxu0 0.0
    %1822 = vmatprep.subr.mxu0 0.0
    %1823 = vmatpush1.msra.mxu0 0.0
    %1824 = vmatprep.subr.mxu0 0.0
    %1825 = vmatpush1.msra.mxu0 0.0
    %1826 = vmatprep.subr.mxu0 0.0
    %1827 = vmatpush1.msra.mxu0 0.0
    %1828 = vmatprep.mubr.f32.mxu0 %v1762
    %1829 = vmatmul.mubr.f32.gmra.mrb[0].mxu0 %v1759
    %v1830 = vpop.f32.mrb[0].mxu0
    %v1831 = vadd.f32 0.0, %v1830
    %v1832 = vpop.f32.mrb[0].mxu0
    %v1833 = vadd.f32 0.0, %v1832
    %1834 = vdwg.mxu0
    %v1835 = vadd.f32 %v1702, %v1831
    %v1836 = vadd.f32 %v1704, %v1833
    %v1837 = vld [vmem:[%s9] sm:$0x3]
    %v1839 = vlaneseq
    %v1840 = vshrl.u32 %v1839, 7
    %v1841 = vsub.s32 0, %v1840
    %v1842 = vrot.slane %v1837, %v1841
    %v1843 = vlaneseq
    %v1844 = vshrl.u32 %v1843, 7
    %v1845 = vsub.s32 1, %v1844
    %v1846 = vrot.slane %v1837, %v1845
    %v1849 = vadd.f32 %v1835, %v1842
    %v1850 = vadd.f32 %v1836, %v1846
    %v1851 = vmax.f32 %v1849, 0.0
    %v1852 = vmax.f32 %v1850, 0.0
    %v1853 = vstv %s114
    %v1854 = vmul.f32 %v1853, %v1851
    %v1855 = vmul.f32 %v1853, %v1852
    %v1856 = vtanh.pop %v1849
    %v1857 = vtanh.pop %v1850
    %v1858 = vstv %s115
    %v1859 = vmul.f32 %v1858, %v1856
    %v1860 = vmul.f32 %v1858, %v1857
    %v1861 = vadd.f32 %v1854, %v1859
    %v1862 = vadd.f32 %v1855, %v1860
    %vm1863 = vcmp.gt.f32.partialorder %v1849, 0.0
    %vm1864 = vcmp.gt.f32.partialorder %v1850, 0.0
    %v1865 = vmul.f32 %v1849, 0.2
    %v1866 = vmul.f32 %v1850, 0.2
    %v1867 = vsel %vm1863, %v1849, %v1865
    %v1868 = vsel %vm1864, %v1850, %v1866
    %v1869 = vstv %s116
    %v1870 = vmul.f32 %v1869, %v1867
    %v1871 = vmul.f32 %v1869, %v1868
    %v1872 = vadd.f32 %v1861, %v1870
    %v1873 = vadd.f32 %v1862, %v1871
    %v1874 = vmin.f32 %v1849, 0.0
    %v1875 = vmin.f32 %v1850, 0.0
    %v1876 = vmul.f32 %v1874, 1.442695
    %v1877 = vpow.pop %v1876
    %v1878 = vmul.f32 %v1875, 1.442695
    %v1879 = vpow.pop %v1878
    %v1880 = vsub.f32 %v1877, 1.0
    %v1881 = vsub.f32 %v1879, 1.0
    %v1882 = vsel %vm1863, %v1849, %v1880
    %v1883 = vsel %vm1864, %v1850, %v1881
    %v1884 = vstv %s117
    %v1885 = vmul.f32 %v1884, %v1882
    %v1886 = vmul.f32 %v1884, %v1883
    %v1887 = vadd.f32 %v1872, %v1885
    %v1888 = vadd.f32 %v1873, %v1886
    %1890 = vrot.lane.b32.xlu0 %v1887, 16
    %v1891 = vpop.permute.xlu0 %1890
    %vm1893 = vcmask 1040512
    %1894 = vst.msk [vmem:[#allocation4 + $0x1] sm:$0x1] %vm1893, %v1891
    %vm1895 = vcmask 122880
    %1896 = vst.msk [vmem:[#allocation4 + $0x9] sm:$0x1] %vm1895, %v1891
    %1898 = vrot.lane.b32.xlu0 %v1888, 16
    %v1899 = vpop.permute.xlu0 %1898
    %1901 = vst.msk [vmem:[#allocation4 + $0x2] sm:$0x1] %vm1893, %v1899
    %1902 = vst.msk [vmem:[#allocation4 + $0xa] sm:$0x1] %vm1895, %v1899
    %v1903 = vrot.slane %v1887, 1
    %1904 = vrot.lane.b32.xlu0 %v1903, 16
    %v1905 = vpop.permute.xlu0 %1904
    %1907 = vst.msk [vmem:[#allocation4 + $0x3] sm:$0x1] %vm1893, %v1905
    %1908 = vst.msk [vmem:[#allocation4 + $0xb] sm:$0x1] %vm1895, %v1905
    %v1909 = vrot.slane %v1888, 1
    %1910 = vrot.lane.b32.xlu0 %v1909, 16
    %v1911 = vpop.permute.xlu0 %1910
    %1913 = vst.msk [vmem:[#allocation4 + $0x4] sm:$0x1] %vm1893, %v1911
    %1914 = vst.msk [vmem:[#allocation4 + $0xc] sm:$0x1] %vm1895, %v1911
    %v1915 = vrot.slane %v1887, 2
    %1916 = vrot.lane.b32.xlu0 %v1915, 16
    %v1917 = vpop.permute.xlu0 %1916
    %1919 = vst.msk [vmem:[#allocation4 + $0x5] sm:$0x1] %vm1893, %v1917
    %1920 = vst.msk [vmem:[#allocation4 + $0xd] sm:$0x1] %vm1895, %v1917
    %v1921 = vrot.slane %v1888, 2
    %1922 = vrot.lane.b32.xlu0 %v1921, 16
    %v1923 = vpop.permute.xlu0 %1922
    %1925 = vst.msk [vmem:[#allocation4 + $0x6] sm:$0x1] %vm1893, %v1923
    %1926 = vst.msk [vmem:[#allocation4 + $0xe] sm:$0x1] %vm1895, %v1923
    %v1927 = vrot.slane %v1887, 3
    %1928 = vrot.lane.b32.xlu0 %v1927, 16
    %v1929 = vpop.permute.xlu0 %1928
    %1931 = vst.msk [vmem:[#allocation4 + $0x7] sm:$0x1] %vm1893, %v1929
    %1932 = vst.msk [vmem:[#allocation4 + $0xf] sm:$0x1] %vm1895, %v1929
    %v1933 = vrot.slane %v1888, 3
    %1934 = vrot.lane.b32.xlu0 %v1933, 16
    %v1935 = vpop.permute.xlu0 %1934
    %1937 = vst.msk [vmem:[#allocation4 + $0x10] sm:$0x1] %vm1893, %v1935
    %1938 = vst.msk [vmem:[#allocation4 + $0x18] sm:$0x1] %vm1895, %v1935
    %v1939 = vld [vmem:[%s1432] sm:$0xf]
    %v1940 = vld [vmem:[%s1432 + $0x8] sm:$0xf]
    %v1941 = vld [vmem:[#allocation11] sm:$0xff]
    %v1942 = vld [vmem:[#allocation11 + $0x8] sm:$0xff]
    %v1943 = vld [vmem:[#allocation11 + $0x10] sm:$0xff]
    %v1944 = vld [vmem:[#allocation11 + $0x18] sm:$0xff]
    %v1945 = vld [vmem:[#allocation11 + $0x20] sm:$0xff]
    %v1946 = vld [vmem:[#allocation11 + $0x28] sm:$0xff]
    %v1947 = vld [vmem:[#allocation11 + $0x30] sm:$0xff]
    %v1948 = vld [vmem:[#allocation11 + $0x38] sm:$0xff]
    %v1949 = vld [vmem:[#allocation11 + $0x40] sm:$0xff]
    %v1950 = vld [vmem:[#allocation11 + $0x48] sm:$0xff]
    %v1951 = vld [vmem:[#allocation11 + $0x50] sm:$0xff]
    %v1952 = vld [vmem:[#allocation11 + $0x58] sm:$0xff]
    %v1953 = vld [vmem:[#allocation11 + $0x60] sm:$0xff]
    %v1954 = vld [vmem:[#allocation11 + $0x68] sm:$0xff]
    %v1955 = vld [vmem:[#allocation11 + $0x70] sm:$0xff]
    %v1956 = vld [vmem:[#allocation11 + $0x78] sm:$0xff]
    %v1957 = vld [vmem:[#allocation11 + $0x80] sm:$0xff]
    %v1958 = vld [vmem:[#allocation11 + $0x88] sm:$0xff]
    %v1959 = vld [vmem:[#allocation11 + $0x90] sm:$0xff]
    %v1960 = vld [vmem:[#allocation11 + $0x98] sm:$0xff]
    %v1961 = vld [vmem:[#allocation11 + $0xa0] sm:$0xff]
    %v1962 = vld [vmem:[#allocation11 + $0xa8] sm:$0xff]
    %v1963 = vld [vmem:[#allocation11 + $0xb0] sm:$0xff]
    %v1964 = vld [vmem:[#allocation11 + $0xb8] sm:$0xff]
    %v1965 = vld [vmem:[#allocation11 + $0xc0] sm:$0xff]
    %v1966 = vld [vmem:[#allocation11 + $0xc8] sm:$0xff]
    %v1967 = vld [vmem:[#allocation11 + $0xd0] sm:$0xff]
    %v1968 = vld [vmem:[#allocation11 + $0xd8] sm:$0xff]
    %v1969 = vld [vmem:[#allocation11 + $0xe0] sm:$0xff]
    %v1970 = vld [vmem:[#allocation11 + $0xe8] sm:$0xff]
    %v1971 = vld [vmem:[#allocation11 + $0xf0] sm:$0xff]
    %v1972 = vld [vmem:[#allocation11 + $0xf8] sm:$0xff]
    %v1973 = vld [vmem:[#allocation11 + $0x100] sm:$0xff]
    %v1974 = vld [vmem:[#allocation11 + $0x108] sm:$0xff]
    %v1975 = vld [vmem:[#allocation11 + $0x110] sm:$0xff]
    %v1976 = vld [vmem:[#allocation11 + $0x118] sm:$0xff]
    %v1977 = vld [vmem:[#allocation11 + $0x120] sm:$0xff]
    %v1978 = vld [vmem:[#allocation11 + $0x128] sm:$0xff]
    %v1979 = vld [vmem:[#allocation11 + $0x130] sm:$0xff]
    %v1980 = vld [vmem:[#allocation11 + $0x138] sm:$0xff]
    %v1981 = vld [vmem:[#allocation11 + $0x140] sm:$0xff]
    %v1982 = vld [vmem:[#allocation11 + $0x148] sm:$0xff]
    %v1983 = vld [vmem:[#allocation11 + $0x150] sm:$0xff]
    %v1984 = vld [vmem:[#allocation11 + $0x158] sm:$0xff]
    %v1985 = vld [vmem:[#allocation11 + $0x160] sm:$0xff]
    %v1986 = vld [vmem:[#allocation11 + $0x168] sm:$0xff]
    %v1987 = vld [vmem:[#allocation11 + $0x170] sm:$0xff]
    %v1988 = vld [vmem:[#allocation11 + $0x178] sm:$0xff]
    %v1989 = vld [vmem:[%s1432] sm:$0x1e]
    %v1990 = vld [vmem:[%s1432 + $0x8] sm:$0x1e]
    %v1991 = vld [vmem:[%s1505] sm:$0xff]
    %v1992 = vld [vmem:[%s1505 + $0x8] sm:$0xff]
    %v1993 = vld [vmem:[%s1505 + $0x10] sm:$0xff]
    %v1994 = vld [vmem:[%s1505 + $0x18] sm:$0xff]
    %v1995 = vld [vmem:[%s1505 + $0x20] sm:$0xff]
    %v1996 = vld [vmem:[%s1505 + $0x28] sm:$0xff]
    %v1997 = vld [vmem:[%s1505 + $0x30] sm:$0xff]
    %v1998 = vld [vmem:[%s1505 + $0x38] sm:$0xff]
    %v1999 = vld [vmem:[%s1505 + $0x40] sm:$0xff]
    %v2000 = vld [vmem:[%s1505 + $0x48] sm:$0xff]
    %v2001 = vld [vmem:[%s1505 + $0x50] sm:$0xff]
    %v2002 = vld [vmem:[%s1505 + $0x58] sm:$0xff]
    %v2003 = vld [vmem:[%s1505 + $0x60] sm:$0xff]
    %v2004 = vld [vmem:[%s1505 + $0x68] sm:$0xff]
    %v2005 = vld [vmem:[%s1505 + $0x70] sm:$0xff]
    %v2006 = vld [vmem:[%s1505 + $0x78] sm:$0xff]
    %v2007 = vld [vmem:[%s1505 + $0x80] sm:$0xff]
    %v2008 = vld [vmem:[%s1505 + $0x88] sm:$0xff]
    %v2009 = vld [vmem:[%s1505 + $0x90] sm:$0xff]
    %v2010 = vld [vmem:[%s1505 + $0x98] sm:$0xff]
    %v2011 = vld [vmem:[%s1505 + $0xa0] sm:$0xff]
    %v2012 = vld [vmem:[%s1505 + $0xa8] sm:$0xff]
    %v2013 = vld [vmem:[%s1505 + $0xb0] sm:$0xff]
    %v2014 = vld [vmem:[%s1505 + $0xb8] sm:$0xff]
    %v2015 = vld [vmem:[%s1505 + $0xc0] sm:$0xff]
    %v2016 = vld [vmem:[%s1505 + $0xc8] sm:$0xff]
    %v2017 = vld [vmem:[%s1505 + $0xd0] sm:$0xff]
    %v2018 = vld [vmem:[%s1505 + $0xd8] sm:$0xff]
    %v2019 = vld [vmem:[%s1505 + $0xe0] sm:$0xff]
    %v2020 = vld [vmem:[%s1505 + $0xe8] sm:$0xff]
    %v2021 = vld [vmem:[%s1505 + $0xf0] sm:$0xff]
    %v2022 = vld [vmem:[%s1505 + $0xf8] sm:$0xff]
    %v2023 = vld [vmem:[%s1505 + $0x100] sm:$0xff]
    %v2024 = vld [vmem:[%s1505 + $0x108] sm:$0xff]
    %v2025 = vld [vmem:[%s1505 + $0x110] sm:$0xff]
    %v2026 = vld [vmem:[%s1505 + $0x118] sm:$0xff]
    %v2027 = vld [vmem:[%s1505 + $0x120] sm:$0xff]
    %v2028 = vld [vmem:[%s1505 + $0x128] sm:$0xff]
    %v2029 = vld [vmem:[%s1505 + $0x130] sm:$0xff]
    %v2030 = vld [vmem:[%s1505 + $0x138] sm:$0xff]
    %v2031 = vld [vmem:[%s1505 + $0x140] sm:$0xff]
    %v2032 = vld [vmem:[%s1505 + $0x148] sm:$0xff]
    %v2033 = vld [vmem:[%s1505 + $0x150] sm:$0xff]
    %v2034 = vld [vmem:[%s1505 + $0x158] sm:$0xff]
    %v2035 = vld [vmem:[%s1505 + $0x160] sm:$0xff]
    %v2036 = vld [vmem:[%s1505 + $0x168] sm:$0xff]
    %v2037 = vld [vmem:[%s1505 + $0x170] sm:$0xff]
    %v2038 = vld [vmem:[%s1505 + $0x178] sm:$0xff]
    %v2041 = vrot.slane %v1989, 1
    %v2042 = vrot.slane %v1990, 1
    %v2044 = vsel %vm419, %v2042, 0
    %2046 = vmatprep.subr.mxu0 %v1992
    %2047 = vmatpush1.msra.mxu0 %v1991
    %2048 = vmatprep.subr.mxu0 %v1994
    %2049 = vmatpush1.msra.mxu0 %v1993
    %2050 = vmatprep.subr.mxu0 %v1996
    %2051 = vmatpush1.msra.mxu0 %v1995
    %2052 = vmatprep.subr.mxu0 %v1998
    %2053 = vmatpush1.msra.mxu0 %v1997
    %2054 = vmatprep.subr.mxu0 %v2000
    %2055 = vmatpush1.msra.mxu0 %v1999
    %2056 = vmatprep.subr.mxu0 %v2002
    %2057 = vmatpush1.msra.mxu0 %v2001
    %2058 = vmatprep.subr.mxu0 %v2004
    %2059 = vmatpush1.msra.mxu0 %v2003
    %2060 = vmatprep.subr.mxu0 %v2006
    %2061 = vmatpush1.msra.mxu0 %v2005
    %2062 = vmatprep.subr.mxu0 %v2008
    %2063 = vmatpush1.msra.mxu0 %v2007
    %2064 = vmatprep.subr.mxu0 %v2010
    %2065 = vmatpush1.msra.mxu0 %v2009
    %2066 = vmatprep.subr.mxu0 %v2012
    %2067 = vmatpush1.msra.mxu0 %v2011
    %2068 = vmatprep.subr.mxu0 %v2014
    %2069 = vmatpush1.msra.mxu0 %v2013
    %2070 = vmatprep.subr.mxu0 %v2016
    %2071 = vmatpush1.msra.mxu0 %v2015
    %2072 = vmatprep.subr.mxu0 %v2018
    %2073 = vmatpush1.msra.mxu0 %v2017
    %2074 = vmatprep.subr.mxu0 %v2020
    %2075 = vmatpush1.msra.mxu0 %v2019
    %2076 = vmatprep.subr.mxu0 %v2022
    %2077 = vmatpush1.msra.mxu0 %v2021
    %2078 = vmatprep.subr.mxu0 %v2024
    %2079 = vmatpush1.msra.mxu0 %v2023
    %2080 = vmatprep.subr.mxu0 %v2026
    %2081 = vmatpush1.msra.mxu0 %v2025
    %2082 = vmatprep.subr.mxu0 %v2028
    %2083 = vmatpush1.msra.mxu0 %v2027
    %2084 = vmatprep.subr.mxu0 %v2030
    %2085 = vmatpush1.msra.mxu0 %v2029
    %2086 = vmatprep.subr.mxu0 %v2032
    %2087 = vmatpush1.msra.mxu0 %v2031
    %2088 = vmatprep.subr.mxu0 %v2034
    %2089 = vmatpush1.msra.mxu0 %v2033
    %2090 = vmatprep.subr.mxu0 %v2036
    %2091 = vmatpush1.msra.mxu0 %v2035
    %2092 = vmatprep.subr.mxu0 %v2038
    %2093 = vmatpush1.msra.mxu0 %v2037
    %2094 = vmatprep.subr.mxu0 0.0
    %2095 = vmatpush1.msra.mxu0 0.0
    %2096 = vmatprep.subr.mxu0 0.0
    %2097 = vmatpush1.msra.mxu0 0.0
    %2098 = vmatprep.subr.mxu0 0.0
    %2099 = vmatpush1.msra.mxu0 0.0
    %2100 = vmatprep.subr.mxu0 0.0
    %2101 = vmatpush1.msra.mxu0 0.0
    %2102 = vmatprep.subr.mxu0 0.0
    %2103 = vmatpush1.msra.mxu0 0.0
    %2104 = vmatprep.subr.mxu0 0.0
    %2105 = vmatpush1.msra.mxu0 0.0
    %2106 = vmatprep.subr.mxu0 0.0
    %2107 = vmatpush1.msra.mxu0 0.0
    %2108 = vmatprep.subr.mxu0 0.0
    %2109 = vmatpush1.msra.mxu0 0.0
    %2110 = vmatprep.mubr.f32.mxu0 %v2044
    %2111 = vmatmul.mubr.f32.gmra.mrb[0].mxu0 %v2041
    %v2112 = vpop.f32.mrb[0].mxu0
    %v2113 = vadd.f32 0.0, %v2112
    %v2114 = vpop.f32.mrb[0].mxu0
    %v2115 = vadd.f32 0.0, %v2114
    %2116 = vdwg.mxu0
    %v2118 = vsel %vm419, %v1940, 0
    %2120 = vmatprep.subr.mxu0 %v1942
    %2121 = vmatpush1.msra.mxu0 %v1941
    %2122 = vmatprep.subr.mxu0 %v1944
    %2123 = vmatpush1.msra.mxu0 %v1943
    %2124 = vmatprep.subr.mxu0 %v1946
    %2125 = vmatpush1.msra.mxu0 %v1945
    %2126 = vmatprep.subr.mxu0 %v1948
    %2127 = vmatpush1.msra.mxu0 %v1947
    %2128 = vmatprep.subr.mxu0 %v1950
    %2129 = vmatpush1.msra.mxu0 %v1949
    %2130 = vmatprep.subr.mxu0 %v1952
    %2131 = vmatpush1.msra.mxu0 %v1951
    %2132 = vmatprep.subr.mxu0 %v1954
    %2133 = vmatpush1.msra.mxu0 %v1953
    %2134 = vmatprep.subr.mxu0 %v1956
    %2135 = vmatpush1.msra.mxu0 %v1955
    %2136 = vmatprep.subr.mxu0 %v1958
    %2137 = vmatpush1.msra.mxu0 %v1957
    %2138 = vmatprep.subr.mxu0 %v1960
    %2139 = vmatpush1.msra.mxu0 %v1959
    %2140 = vmatprep.subr.mxu0 %v1962
    %2141 = vmatpush1.msra.mxu0 %v1961
    %2142 = vmatprep.subr.mxu0 %v1964
    %2143 = vmatpush1.msra.mxu0 %v1963
    %2144 = vmatprep.subr.mxu0 %v1966
    %2145 = vmatpush1.msra.mxu0 %v1965
    %2146 = vmatprep.subr.mxu0 %v1968
    %2147 = vmatpush1.msra.mxu0 %v1967
    %2148 = vmatprep.subr.mxu0 %v1970
    %2149 = vmatpush1.msra.mxu0 %v1969
    %2150 = vmatprep.subr.mxu0 %v1972
    %2151 = vmatpush1.msra.mxu0 %v1971
    %2152 = vmatprep.subr.mxu0 %v1974
    %2153 = vmatpush1.msra.mxu0 %v1973
    %2154 = vmatprep.subr.mxu0 %v1976
    %2155 = vmatpush1.msra.mxu0 %v1975
    %2156 = vmatprep.subr.mxu0 %v1978
    %2157 = vmatpush1.msra.mxu0 %v1977
    %2158 = vmatprep.subr.mxu0 %v1980
    %2159 = vmatpush1.msra.mxu0 %v1979
    %2160 = vmatprep.subr.mxu0 %v1982
    %2161 = vmatpush1.msra.mxu0 %v1981
    %2162 = vmatprep.subr.mxu0 %v1984
    %2163 = vmatpush1.msra.mxu0 %v1983
    %2164 = vmatprep.subr.mxu0 %v1986
    %2165 = vmatpush1.msra.mxu0 %v1985
    %2166 = vmatprep.subr.mxu0 %v1988
    %2167 = vmatpush1.msra.mxu0 %v1987
    %2168 = vmatprep.subr.mxu0 0.0
    %2169 = vmatpush1.msra.mxu0 0.0
    %2170 = vmatprep.subr.mxu0 0.0
    %2171 = vmatpush1.msra.mxu0 0.0
    %2172 = vmatprep.subr.mxu0 0.0
    %2173 = vmatpush1.msra.mxu0 0.0
    %2174 = vmatprep.subr.mxu0 0.0
    %2175 = vmatpush1.msra.mxu0 0.0
    %2176 = vmatprep.subr.mxu0 0.0
    %2177 = vmatpush1.msra.mxu0 0.0
    %2178 = vmatprep.subr.mxu0 0.0
    %2179 = vmatpush1.msra.mxu0 0.0
    %2180 = vmatprep.subr.mxu0 0.0
    %2181 = vmatpush1.msra.mxu0 0.0
    %2182 = vmatprep.subr.mxu0 0.0
    %2183 = vmatpush1.msra.mxu0 0.0
    %2184 = vmatprep.mubr.f32.mxu0 %v2118
    %2185 = vmatmul.mubr.f32.gmra.mrb[0].mxu0 %v1939
    %v2186 = vpop.f32.mrb[0].mxu0
    %v2187 = vadd.f32 %v2113, %v2186
    %v2188 = vpop.f32.mrb[0].mxu0
    %v2189 = vadd.f32 %v2115, %v2188
    %2190 = vdwg.mxu0
    %v2191 = vld [vmem:[%s1432] sm:$0x3c]
    %v2192 = vld [vmem:[%s1432 + $0x8] sm:$0x3c]
    %v2193 = vld [vmem:[%s1708] sm:$0xff]
    %v2194 = vld [vmem:[%s1708 + $0x8] sm:$0xff]
    %v2195 = vld [vmem:[%s1708 + $0x10] sm:$0xff]
    %v2196 = vld [vmem:[%s1708 + $0x18] sm:$0xff]
    %v2197 = vld [vmem:[%s1708 + $0x20] sm:$0xff]
    %v2198 = vld [vmem:[%s1708 + $0x28] sm:$0xff]
    %v2199 = vld [vmem:[%s1708 + $0x30] sm:$0xff]
    %v2200 = vld [vmem:[%s1708 + $0x38] sm:$0xff]
    %v2201 = vld [vmem:[%s1708 + $0x40] sm:$0xff]
    %v2202 = vld [vmem:[%s1708 + $0x48] sm:$0xff]
    %v2203 = vld [vmem:[%s1708 + $0x50] sm:$0xff]
    %v2204 = vld [vmem:[%s1708 + $0x58] sm:$0xff]
    %v2205 = vld [vmem:[%s1708 + $0x60] sm:$0xff]
    %v2206 = vld [vmem:[%s1708 + $0x68] sm:$0xff]
    %v2207 = vld [vmem:[%s1708 + $0x70] sm:$0xff]
    %v2208 = vld [vmem:[%s1708 + $0x78] sm:$0xff]
    %v2209 = vld [vmem:[%s1708 + $0x80] sm:$0xff]
    %v2210 = vld [vmem:[%s1708 + $0x88] sm:$0xff]
    %v2211 = vld [vmem:[%s1708 + $0x90] sm:$0xff]
    %v2212 = vld [vmem:[%s1708 + $0x98] sm:$0xff]
    %v2213 = vld [vmem:[%s1708 + $0xa0] sm:$0xff]
    %v2214 = vld [vmem:[%s1708 + $0xa8] sm:$0xff]
    %v2215 = vld [vmem:[%s1708 + $0xb0] sm:$0xff]
    %v2216 = vld [vmem:[%s1708 + $0xb8] sm:$0xff]
    %v2217 = vld [vmem:[%s1708 + $0xc0] sm:$0xff]
    %v2218 = vld [vmem:[%s1708 + $0xc8] sm:$0xff]
    %v2219 = vld [vmem:[%s1708 + $0xd0] sm:$0xff]
    %v2220 = vld [vmem:[%s1708 + $0xd8] sm:$0xff]
    %v2221 = vld [vmem:[%s1708 + $0xe0] sm:$0xff]
    %v2222 = vld [vmem:[%s1708 + $0xe8] sm:$0xff]
    %v2223 = vld [vmem:[%s1708 + $0xf0] sm:$0xff]
    %v2224 = vld [vmem:[%s1708 + $0xf8] sm:$0xff]
    %v2225 = vld [vmem:[%s1708 + $0x100] sm:$0xff]
    %v2226 = vld [vmem:[%s1708 + $0x108] sm:$0xff]
    %v2227 = vld [vmem:[%s1708 + $0x110] sm:$0xff]
    %v2228 = vld [vmem:[%s1708 + $0x118] sm:$0xff]
    %v2229 = vld [vmem:[%s1708 + $0x120] sm:$0xff]
    %v2230 = vld [vmem:[%s1708 + $0x128] sm:$0xff]
    %v2231 = vld [vmem:[%s1708 + $0x130] sm:$0xff]
    %v2232 = vld [vmem:[%s1708 + $0x138] sm:$0xff]
    %v2233 = vld [vmem:[%s1708 + $0x140] sm:$0xff]
    %v2234 = vld [vmem:[%s1708 + $0x148] sm:$0xff]
    %v2235 = vld [vmem:[%s1708 + $0x150] sm:$0xff]
    %v2236 = vld [vmem:[%s1708 + $0x158] sm:$0xff]
    %v2237 = vld [vmem:[%s1708 + $0x160] sm:$0xff]
    %v2238 = vld [vmem:[%s1708 + $0x168] sm:$0xff]
    %v2239 = vld [vmem:[%s1708 + $0x170] sm:$0xff]
    %v2240 = vld [vmem:[%s1708 + $0x178] sm:$0xff]
    %v2243 = vrot.slane %v2191, 2
    %v2244 = vrot.slane %v2192, 2
    %v2246 = vsel %vm419, %v2244, 0
    %2248 = vmatprep.subr.mxu0 %v2194
    %2249 = vmatpush1.msra.mxu0 %v2193
    %2250 = vmatprep.subr.mxu0 %v2196
    %2251 = vmatpush1.msra.mxu0 %v2195
    %2252 = vmatprep.subr.mxu0 %v2198
    %2253 = vmatpush1.msra.mxu0 %v2197
    %2254 = vmatprep.subr.mxu0 %v2200
    %2255 = vmatpush1.msra.mxu0 %v2199
    %2256 = vmatprep.subr.mxu0 %v2202
    %2257 = vmatpush1.msra.mxu0 %v2201
    %2258 = vmatprep.subr.mxu0 %v2204
    %2259 = vmatpush1.msra.mxu0 %v2203
    %2260 = vmatprep.subr.mxu0 %v2206
    %2261 = vmatpush1.msra.mxu0 %v2205
    %2262 = vmatprep.subr.mxu0 %v2208
    %2263 = vmatpush1.msra.mxu0 %v2207
    %2264 = vmatprep.subr.mxu0 %v2210
    %2265 = vmatpush1.msra.mxu0 %v2209
    %2266 = vmatprep.subr.mxu0 %v2212
    %2267 = vmatpush1.msra.mxu0 %v2211
    %2268 = vmatprep.subr.mxu0 %v2214
    %2269 = vmatpush1.msra.mxu0 %v2213
    %2270 = vmatprep.subr.mxu0 %v2216
    %2271 = vmatpush1.msra.mxu0 %v2215
    %2272 = vmatprep.subr.mxu0 %v2218
    %2273 = vmatpush1.msra.mxu0 %v2217
    %2274 = vmatprep.subr.mxu0 %v2220
    %2275 = vmatpush1.msra.mxu0 %v2219
    %2276 = vmatprep.subr.mxu0 %v2222
    %2277 = vmatpush1.msra.mxu0 %v2221
    %2278 = vmatprep.subr.mxu0 %v2224
    %2279 = vmatpush1.msra.mxu0 %v2223
    %2280 = vmatprep.subr.mxu0 %v2226
    %2281 = vmatpush1.msra.mxu0 %v2225
    %2282 = vmatprep.subr.mxu0 %v2228
    %2283 = vmatpush1.msra.mxu0 %v2227
    %2284 = vmatprep.subr.mxu0 %v2230
    %2285 = vmatpush1.msra.mxu0 %v2229
    %2286 = vmatprep.subr.mxu0 %v2232
    %2287 = vmatpush1.msra.mxu0 %v2231
    %2288 = vmatprep.subr.mxu0 %v2234
    %2289 = vmatpush1.msra.mxu0 %v2233
    %2290 = vmatprep.subr.mxu0 %v2236
    %2291 = vmatpush1.msra.mxu0 %v2235
    %2292 = vmatprep.subr.mxu0 %v2238
    %2293 = vmatpush1.msra.mxu0 %v2237
    %2294 = vmatprep.subr.mxu0 %v2240
    %2295 = vmatpush1.msra.mxu0 %v2239
    %2296 = vmatprep.subr.mxu0 0.0
    %2297 = vmatpush1.msra.mxu0 0.0
    %2298 = vmatprep.subr.mxu0 0.0
    %2299 = vmatpush1.msra.mxu0 0.0
    %2300 = vmatprep.subr.mxu0 0.0
    %2301 = vmatpush1.msra.mxu0 0.0
    %2302 = vmatprep.subr.mxu0 0.0
    %2303 = vmatpush1.msra.mxu0 0.0
    %2304 = vmatprep.subr.mxu0 0.0
    %2305 = vmatpush1.msra.mxu0 0.0
    %2306 = vmatprep.subr.mxu0 0.0
    %2307 = vmatpush1.msra.mxu0 0.0
    %2308 = vmatprep.subr.mxu0 0.0
    %2309 = vmatpush1.msra.mxu0 0.0
    %2310 = vmatprep.subr.mxu0 0.0
    %2311 = vmatpush1.msra.mxu0 0.0
    %2312 = vmatprep.mubr.f32.mxu0 %v2246
    %2313 = vmatmul.mubr.f32.gmra.mrb[0].mxu0 %v2243
    %v2314 = vpop.f32.mrb[0].mxu0
    %v2315 = vadd.f32 0.0, %v2314
    %v2316 = vpop.f32.mrb[0].mxu0
    %v2317 = vadd.f32 0.0, %v2316
    %2318 = vdwg.mxu0
    %v2319 = vadd.f32 %v2187, %v2315
    %v2320 = vadd.f32 %v2189, %v2317
    %v2321 = vld [vmem:[%s9] sm:$0x3]
    %v2323 = vlaneseq
    %v2324 = vshrl.u32 %v2323, 7
    %v2325 = vsub.s32 0, %v2324
    %v2326 = vrot.slane %v2321, %v2325
    %v2327 = vlaneseq
    %v2328 = vshrl.u32 %v2327, 7
    %v2329 = vsub.s32 1, %v2328
    %v2330 = vrot.slane %v2321, %v2329
    %v2333 = vadd.f32 %v2319, %v2326
    %v2334 = vadd.f32 %v2320, %v2330
    %v2335 = vmax.f32 %v2333, 0.0
    %v2336 = vmax.f32 %v2334, 0.0
    %v2337 = vmul.f32 %v1853, %v2335
    %v2338 = vmul.f32 %v1853, %v2336
    %v2339 = vtanh.pop %v2333
    %v2340 = vtanh.pop %v2334
    %v2341 = vmul.f32 %v1858, %v2339
    %v2342 = vmul.f32 %v1858, %v2340
    %v2343 = vadd.f32 %v2337, %v2341
    %v2344 = vadd.f32 %v2338, %v2342
    %vm2345 = vcmp.gt.f32.partialorder %v2333, 0.0
    %vm2346 = vcmp.gt.f32.partialorder %v2334, 0.0
    %v2347 = vmul.f32 %v2333, 0.2
    %v2348 = vmul.f32 %v2334, 0.2
    %v2349 = vsel %vm2345, %v2333, %v2347
    %v2350 = vsel %vm2346, %v2334, %v2348
    %v2351 = vmul.f32 %v1869, %v2349
    %v2352 = vmul.f32 %v1869, %v2350
    %v2353 = vadd.f32 %v2343, %v2351
    %v2354 = vadd.f32 %v2344, %v2352
    %v2355 = vmin.f32 %v2333, 0.0
    %v2356 = vmin.f32 %v2334, 0.0
    %v2357 = vmul.f32 %v2355, 1.442695
    %v2358 = vpow.pop %v2357
    %v2359 = vmul.f32 %v2356, 1.442695
    %v2360 = vpow.pop %v2359
    %v2361 = vsub.f32 %v2358, 1.0
    %v2362 = vsub.f32 %v2360, 1.0
    %v2363 = vsel %vm2345, %v2333, %v2361
    %v2364 = vsel %vm2346, %v2334, %v2362
    %v2365 = vmul.f32 %v1884, %v2363
    %v2366 = vmul.f32 %v1884, %v2364
    %v2367 = vadd.f32 %v2353, %v2365
    %v2368 = vadd.f32 %v2354, %v2366
    %2370 = vrot.lane.b32.xlu0 %v2367, 16
    %v2371 = vpop.permute.xlu0 %2370
    %s2373 = scalar_lea.vmem [#allocation4], 32
    %2374 = vst.msk [vmem:[%s2373 + $0x1] sm:$0x1] %vm1893, %v2371
    %2375 = vst.msk [vmem:[%s2373 + $0x9] sm:$0x1] %vm1895, %v2371
    %2377 = vrot.lane.b32.xlu0 %v2368, 16
    %v2378 = vpop.permute.xlu0 %2377
    %2380 = vst.msk [vmem:[%s2373 + $0x2] sm:$0x1] %vm1893, %v2378
    %2381 = vst.msk [vmem:[%s2373 + $0xa] sm:$0x1] %vm1895, %v2378
    %v2382 = vrot.slane %v2367, 1
    %2383 = vrot.lane.b32.xlu0 %v2382, 16
    %v2384 = vpop.permute.xlu0 %2383
    %2386 = vst.msk [vmem:[%s2373 + $0x3] sm:$0x1] %vm1893, %v2384
    %2387 = vst.msk [vmem:[%s2373 + $0xb] sm:$0x1] %vm1895, %v2384
    %v2388 = vrot.slane %v2368, 1
    %2389 = vrot.lane.b32.xlu0 %v2388, 16
    %v2390 = vpop.permute.xlu0 %2389
    %2392 = vst.msk [vmem:[%s2373 + $0x4] sm:$0x1] %vm1893, %v2390
    %2393 = vst.msk [vmem:[%s2373 + $0xc] sm:$0x1] %vm1895, %v2390
    %v2394 = vrot.slane %v2367, 2
    %2395 = vrot.lane.b32.xlu0 %v2394, 16
    %v2396 = vpop.permute.xlu0 %2395
    %2398 = vst.msk [vmem:[%s2373 + $0x5] sm:$0x1] %vm1893, %v2396
    %2399 = vst.msk [vmem:[%s2373 + $0xd] sm:$0x1] %vm1895, %v2396
    %v2400 = vrot.slane %v2368, 2
    %2401 = vrot.lane.b32.xlu0 %v2400, 16
    %v2402 = vpop.permute.xlu0 %2401
    %2404 = vst.msk [vmem:[%s2373 + $0x6] sm:$0x1] %vm1893, %v2402
    %2405 = vst.msk [vmem:[%s2373 + $0xe] sm:$0x1] %vm1895, %v2402
    %v2406 = vrot.slane %v2367, 3
    %2407 = vrot.lane.b32.xlu0 %v2406, 16
    %v2408 = vpop.permute.xlu0 %2407
    %2410 = vst.msk [vmem:[%s2373 + $0x7] sm:$0x1] %vm1893, %v2408
    %2411 = vst.msk [vmem:[%s2373 + $0xf] sm:$0x1] %vm1895, %v2408
    %v2412 = vrot.slane %v2368, 3
    %2413 = vrot.lane.b32.xlu0 %v2412, 16
    %v2414 = vpop.permute.xlu0 %2413
    %2416 = vst.msk [vmem:[%s2373 + $0x10] sm:$0x1] %vm1893, %v2414
    %2417 = vst.msk [vmem:[%s2373 + $0x18] sm:$0x1] %vm1895, %v2414
    %v2418 = vld [vmem:[#allocation4] sm:$0xff]
    %v2419 = vld [vmem:[#allocation4 + $0x8] sm:$0xff]
    %v2420 = vld [vmem:[#allocation13] sm:$0xff]
    %v2421 = vld [vmem:[#allocation13 + $0x8] sm:$0xff]
    %v2422 = vld [vmem:[#allocation13 + $0x10] sm:$0xff]
    %v2423 = vld [vmem:[#allocation13 + $0x18] sm:$0xff]
    %v2424 = vld [vmem:[#allocation13 + $0x20] sm:$0xff]
    %v2425 = vld [vmem:[#allocation13 + $0x28] sm:$0xff]
    %v2426 = vld [vmem:[#allocation13 + $0x30] sm:$0xff]
    %v2427 = vld [vmem:[#allocation13 + $0x38] sm:$0xff]
    %v2428 = vld [vmem:[#allocation13 + $0x40] sm:$0xff]
    %v2429 = vld [vmem:[#allocation13 + $0x48] sm:$0xff]
    %v2430 = vld [vmem:[#allocation13 + $0x50] sm:$0xff]
    %v2431 = vld [vmem:[#allocation13 + $0x58] sm:$0xff]
    %v2432 = vld [vmem:[#allocation13 + $0x60] sm:$0xff]
    %v2433 = vld [vmem:[#allocation13 + $0x68] sm:$0xff]
    %v2434 = vld [vmem:[#allocation13 + $0x70] sm:$0xff]
    %v2435 = vld [vmem:[#allocation13 + $0x78] sm:$0xff]
    %v2436 = vld [vmem:[#allocation13 + $0x80] sm:$0xff]
    %v2437 = vld [vmem:[#allocation13 + $0x88] sm:$0xff]
    %v2438 = vld [vmem:[#allocation13 + $0x90] sm:$0xff]
    %v2439 = vld [vmem:[#allocation13 + $0x98] sm:$0xff]
    %v2440 = vld [vmem:[#allocation13 + $0xa0] sm:$0xff]
    %v2441 = vld [vmem:[#allocation13 + $0xa8] sm:$0xff]
    %v2442 = vld [vmem:[#allocation13 + $0xb0] sm:$0xff]
    %v2443 = vld [vmem:[#allocation13 + $0xb8] sm:$0xff]
    %v2444 = vld [vmem:[#allocation13 + $0xc0] sm:$0xff]
    %v2445 = vld [vmem:[#allocation13 + $0xc8] sm:$0xff]
    %v2446 = vld [vmem:[#allocation13 + $0xd0] sm:$0xff]
    %v2447 = vld [vmem:[#allocation13 + $0xd8] sm:$0xff]
    %v2448 = vld [vmem:[#allocation13 + $0xe0] sm:$0xff]
    %v2449 = vld [vmem:[#allocation13 + $0xe8] sm:$0xff]
    %v2450 = vld [vmem:[#allocation13 + $0xf0] sm:$0xff]
    %v2451 = vld [vmem:[#allocation13 + $0xf8] sm:$0xff]
    %v2452 = vld [vmem:[#allocation13 + $0x100] sm:$0xff]
    %v2453 = vld [vmem:[#allocation13 + $0x108] sm:$0xff]
    %v2454 = vld [vmem:[#allocation13 + $0x110] sm:$0xff]
    %v2455 = vld [vmem:[#allocation13 + $0x118] sm:$0xff]
    %v2456 = vld [vmem:[#allocation13 + $0x120] sm:$0xff]
    %v2457 = vld [vmem:[#allocation13 + $0x128] sm:$0xff]
    %v2458 = vld [vmem:[#allocation13 + $0x130] sm:$0xff]
    %v2459 = vld [vmem:[#allocation13 + $0x138] sm:$0xff]
    %v2460 = vld [vmem:[#allocation4] sm:$0xfe]
    %v2461 = vld [vmem:[#allocation4 + $0x8] sm:$0xfe]
    %v2462 = vld [vmem:[#allocation4 + $0x10] sm:$0x1]
    %v2463 = vld [vmem:[#allocation4 + $0x18] sm:$0x1]
    %s2464 = scalar_lea.vmem [#allocation13], 320
    %v2465 = vld [vmem:[%s2464] sm:$0xff]
    %v2466 = vld [vmem:[%s2464 + $0x8] sm:$0xff]
    %v2467 = vld [vmem:[%s2464 + $0x10] sm:$0xff]
    %v2468 = vld [vmem:[%s2464 + $0x18] sm:$0xff]
    %v2469 = vld [vmem:[%s2464 + $0x20] sm:$0xff]
    %v2470 = vld [vmem:[%s2464 + $0x28] sm:$0xff]
    %v2471 = vld [vmem:[%s2464 + $0x30] sm:$0xff]
    %v2472 = vld [vmem:[%s2464 + $0x38] sm:$0xff]
    %v2473 = vld [vmem:[%s2464 + $0x40] sm:$0xff]
    %v2474 = vld [vmem:[%s2464 + $0x48] sm:$0xff]
    %v2475 = vld [vmem:[%s2464 + $0x50] sm:$0xff]
    %v2476 = vld [vmem:[%s2464 + $0x58] sm:$0xff]
    %v2477 = vld [vmem:[%s2464 + $0x60] sm:$0xff]
    %v2478 = vld [vmem:[%s2464 + $0x68] sm:$0xff]
    %v2479 = vld [vmem:[%s2464 + $0x70] sm:$0xff]
    %v2480 = vld [vmem:[%s2464 + $0x78] sm:$0xff]
    %v2481 = vld [vmem:[%s2464 + $0x80] sm:$0xff]
    %v2482 = vld [vmem:[%s2464 + $0x88] sm:$0xff]
    %v2483 = vld [vmem:[%s2464 + $0x90] sm:$0xff]
    %v2484 = vld [vmem:[%s2464 + $0x98] sm:$0xff]
    %v2485 = vld [vmem:[%s2464 + $0xa0] sm:$0xff]
    %v2486 = vld [vmem:[%s2464 + $0xa8] sm:$0xff]
    %v2487 = vld [vmem:[%s2464 + $0xb0] sm:$0xff]
    %v2488 = vld [vmem:[%s2464 + $0xb8] sm:$0xff]
    %v2489 = vld [vmem:[%s2464 + $0xc0] sm:$0xff]
    %v2490 = vld [vmem:[%s2464 + $0xc8] sm:$0xff]
    %v2491 = vld [vmem:[%s2464 + $0xd0] sm:$0xff]
    %v2492 = vld [vmem:[%s2464 + $0xd8] sm:$0xff]
    %v2493 = vld [vmem:[%s2464 + $0xe0] sm:$0xff]
    %v2494 = vld [vmem:[%s2464 + $0xe8] sm:$0xff]
    %v2495 = vld [vmem:[%s2464 + $0xf0] sm:$0xff]
    %v2496 = vld [vmem:[%s2464 + $0xf8] sm:$0xff]
    %v2497 = vld [vmem:[%s2464 + $0x100] sm:$0xff]
    %v2498 = vld [vmem:[%s2464 + $0x108] sm:$0xff]
    %v2499 = vld [vmem:[%s2464 + $0x110] sm:$0xff]
    %v2500 = vld [vmem:[%s2464 + $0x118] sm:$0xff]
    %v2501 = vld [vmem:[%s2464 + $0x120] sm:$0xff]
    %v2502 = vld [vmem:[%s2464 + $0x128] sm:$0xff]
    %v2503 = vld [vmem:[%s2464 + $0x130] sm:$0xff]
    %v2504 = vld [vmem:[%s2464 + $0x138] sm:$0xff]
    %vm2509 = vcmask 1046528
    %v2510 = vrot.slane %v2460, 1
    %v2511 = vrot.slane %v2462, 1
    %v2512 = vsel %vm2509, %v2510, %v2511
    %v2513 = vrot.slane %v2461, 1
    %v2514 = vrot.slane %v2463, 1
    %v2515 = vsel %vm2509, %v2513, %v2514
    %v2517 = vsel %vm392, %v2515, 0
    %2519 = vmatprep.subr.mxu0 %v2466
    %2520 = vmatpush1.msra.mxu0 %v2465
    %2521 = vmatprep.subr.mxu0 %v2468
    %2522 = vmatpush1.msra.mxu0 %v2467
    %2523 = vmatprep.subr.mxu0 %v2470
    %2524 = vmatpush1.msra.mxu0 %v2469
    %2525 = vmatprep.subr.mxu0 %v2472
    %2526 = vmatpush1.msra.mxu0 %v2471
    %2527 = vmatprep.subr.mxu0 %v2474
    %2528 = vmatpush1.msra.mxu0 %v2473
    %2529 = vmatprep.subr.mxu0 %v2476
    %2530 = vmatpush1.msra.mxu0 %v2475
    %2531 = vmatprep.subr.mxu0 %v2478
    %2532 = vmatpush1.msra.mxu0 %v2477
    %2533 = vmatprep.subr.mxu0 %v2480
    %2534 = vmatpush1.msra.mxu0 %v2479
    %2535 = vmatprep.subr.mxu0 %v2482
    %2536 = vmatpush1.msra.mxu0 %v2481
    %2537 = vmatprep.subr.mxu0 %v2484
    %2538 = vmatpush1.msra.mxu0 %v2483
    %2539 = vmatprep.subr.mxu0 %v2486
    %2540 = vmatpush1.msra.mxu0 %v2485
    %2541 = vmatprep.subr.mxu0 %v2488
    %2542 = vmatpush1.msra.mxu0 %v2487
    %2543 = vmatprep.subr.mxu0 %v2490
    %2544 = vmatpush1.msra.mxu0 %v2489
    %2545 = vmatprep.subr.mxu0 %v2492
    %2546 = vmatpush1.msra.mxu0 %v2491
    %2547 = vmatprep.subr.mxu0 %v2494
    %2548 = vmatpush1.msra.mxu0 %v2493
    %2549 = vmatprep.subr.mxu0 %v2496
    %2550 = vmatpush1.msra.mxu0 %v2495
    %2551 = vmatprep.subr.mxu0 %v2498
    %2552 = vmatpush1.msra.mxu0 %v2497
    %2553 = vmatprep.subr.mxu0 %v2500
    %2554 = vmatpush1.msra.mxu0 %v2499
    %2555 = vmatprep.subr.mxu0 %v2502
    %2556 = vmatpush1.msra.mxu0 %v2501
    %2557 = vmatprep.subr.mxu0 %v2504
    %2558 = vmatpush1.msra.mxu0 %v2503
    %2559 = vmatprep.subr.mxu0 0.0
    %2560 = vmatpush1.msra.mxu0 0.0
    %2561 = vmatprep.subr.mxu0 0.0
    %2562 = vmatpush1.msra.mxu0 0.0
    %2563 = vmatprep.subr.mxu0 0.0
    %2564 = vmatpush1.msra.mxu0 0.0
    %2565 = vmatprep.subr.mxu0 0.0
    %2566 = vmatpush1.msra.mxu0 0.0
    %2567 = vmatprep.subr.mxu0 0.0
    %2568 = vmatpush1.msra.mxu0 0.0
    %2569 = vmatprep.subr.mxu0 0.0
    %2570 = vmatpush1.msra.mxu0 0.0
    %2571 = vmatprep.subr.mxu0 0.0
    %2572 = vmatpush1.msra.mxu0 0.0
    %2573 = vmatprep.subr.mxu0 0.0
    %2574 = vmatpush1.msra.mxu0 0.0
    %2575 = vmatprep.subr.mxu0 0.0
    %2576 = vmatpush1.msra.mxu0 0.0
    %2577 = vmatprep.subr.mxu0 0.0
    %2578 = vmatpush1.msra.mxu0 0.0
    %2579 = vmatprep.subr.mxu0 0.0
    %2580 = vmatpush1.msra.mxu0 0.0
    %2581 = vmatprep.subr.mxu0 0.0
    %2582 = vmatpush1.msra.mxu0 0.0
    %2583 = vmatprep.mubr.f32.mxu0 %v2517
    %2584 = vmatmul.mubr.f32.gmra.mrb[0].mxu0 %v2512
    %v2585 = vpop.f32.mrb[0].mxu0
    %v2586 = vadd.f32 0.0, %v2585
    %v2587 = vpop.f32.mrb[0].mxu0
    %v2588 = vadd.f32 0.0, %v2587
    %2589 = vdwg.mxu0
    %v2591 = vsel %vm392, %v2419, 0
    %2593 = vmatprep.subr.mxu0 %v2421
    %2594 = vmatpush1.msra.mxu0 %v2420
    %2595 = vmatprep.subr.mxu0 %v2423
    %2596 = vmatpush1.msra.mxu0 %v2422
    %2597 = vmatprep.subr.mxu0 %v2425
    %2598 = vmatpush1.msra.mxu0 %v2424
    %2599 = vmatprep.subr.mxu0 %v2427
    %2600 = vmatpush1.msra.mxu0 %v2426
    %2601 = vmatprep.subr.mxu0 %v2429
    %2602 = vmatpush1.msra.mxu0 %v2428
    %2603 = vmatprep.subr.mxu0 %v2431
    %2604 = vmatpush1.msra.mxu0 %v2430
    %2605 = vmatprep.subr.mxu0 %v2433
    %2606 = vmatpush1.msra.mxu0 %v2432
    %2607 = vmatprep.subr.mxu0 %v2435
    %2608 = vmatpush1.msra.mxu0 %v2434
    %2609 = vmatprep.subr.mxu0 %v2437
    %2610 = vmatpush1.msra.mxu0 %v2436
    %2611 = vmatprep.subr.mxu0 %v2439
    %2612 = vmatpush1.msra.mxu0 %v2438
    %2613 = vmatprep.subr.mxu0 %v2441
    %2614 = vmatpush1.msra.mxu0 %v2440
    %2615 = vmatprep.subr.mxu0 %v2443
    %2616 = vmatpush1.msra.mxu0 %v2442
    %2617 = vmatprep.subr.mxu0 %v2445
    %2618 = vmatpush1.msra.mxu0 %v2444
    %2619 = vmatprep.subr.mxu0 %v2447
    %2620 = vmatpush1.msra.mxu0 %v2446
    %2621 = vmatprep.subr.mxu0 %v2449
    %2622 = vmatpush1.msra.mxu0 %v2448
    %2623 = vmatprep.subr.mxu0 %v2451
    %2624 = vmatpush1.msra.mxu0 %v2450
    %2625 = vmatprep.subr.mxu0 %v2453
    %2626 = vmatpush1.msra.mxu0 %v2452
    %2627 = vmatprep.subr.mxu0 %v2455
    %2628 = vmatpush1.msra.mxu0 %v2454
    %2629 = vmatprep.subr.mxu0 %v2457
    %2630 = vmatpush1.msra.mxu0 %v2456
    %2631 = vmatprep.subr.mxu0 %v2459
    %2632 = vmatpush1.msra.mxu0 %v2458
    %2633 = vmatprep.subr.mxu0 0.0
    %2634 = vmatpush1.msra.mxu0 0.0
    %2635 = vmatprep.subr.mxu0 0.0
    %2636 = vmatpush1.msra.mxu0 0.0
    %2637 = vmatprep.subr.mxu0 0.0
    %2638 = vmatpush1.msra.mxu0 0.0
    %2639 = vmatprep.subr.mxu0 0.0
    %2640 = vmatpush1.msra.mxu0 0.0
    %2641 = vmatprep.subr.mxu0 0.0
    %2642 = vmatpush1.msra.mxu0 0.0
    %2643 = vmatprep.subr.mxu0 0.0
    %2644 = vmatpush1.msra.mxu0 0.0
    %2645 = vmatprep.subr.mxu0 0.0
    %2646 = vmatpush1.msra.mxu0 0.0
    %2647 = vmatprep.subr.mxu0 0.0
    %2648 = vmatpush1.msra.mxu0 0.0
    %2649 = vmatprep.subr.mxu0 0.0
    %2650 = vmatpush1.msra.mxu0 0.0
    %2651 = vmatprep.subr.mxu0 0.0
    %2652 = vmatpush1.msra.mxu0 0.0
    %2653 = vmatprep.subr.mxu0 0.0
    %2654 = vmatpush1.msra.mxu0 0.0
    %2655 = vmatprep.subr.mxu0 0.0
    %2656 = vmatpush1.msra.mxu0 0.0
    %2657 = vmatprep.mubr.f32.mxu0 %v2591
    %2658 = vmatmul.mubr.f32.gmra.mrb[0].mxu0 %v2418
    %v2659 = vpop.f32.mrb[0].mxu0
    %v2660 = vadd.f32 %v2586, %v2659
    %v2661 = vpop.f32.mrb[0].mxu0
    %v2662 = vadd.f32 %v2588, %v2661
    %2663 = vdwg.mxu0
    %v2664 = vld [vmem:[#allocation4] sm:$0xfc]
    %v2665 = vld [vmem:[#allocation4 + $0x8] sm:$0xfc]
    %v2666 = vld [vmem:[#allocation4 + $0x10] sm:$0x3]
    %v2667 = vld [vmem:[#allocation4 + $0x18] sm:$0x3]
    %s2668 = scalar_lea.vmem [#allocation13], 640
    %v2669 = vld [vmem:[%s2668] sm:$0xff]
    %v2670 = vld [vmem:[%s2668 + $0x8] sm:$0xff]
    %v2671 = vld [vmem:[%s2668 + $0x10] sm:$0xff]
    %v2672 = vld [vmem:[%s2668 + $0x18] sm:$0xff]
    %v2673 = vld [vmem:[%s2668 + $0x20] sm:$0xff]
    %v2674 = vld [vmem:[%s2668 + $0x28] sm:$0xff]
    %v2675 = vld [vmem:[%s2668 + $0x30] sm:$0xff]
    %v2676 = vld [vmem:[%s2668 + $0x38] sm:$0xff]
    %v2677 = vld [vmem:[%s2668 + $0x40] sm:$0xff]
    %v2678 = vld [vmem:[%s2668 + $0x48] sm:$0xff]
    %v2679 = vld [vmem:[%s2668 + $0x50] sm:$0xff]
    %v2680 = vld [vmem:[%s2668 + $0x58] sm:$0xff]
    %v2681 = vld [vmem:[%s2668 + $0x60] sm:$0xff]
    %v2682 = vld [vmem:[%s2668 + $0x68] sm:$0xff]
    %v2683 = vld [vmem:[%s2668 + $0x70] sm:$0xff]
    %v2684 = vld [vmem:[%s2668 + $0x78] sm:$0xff]
    %v2685 = vld [vmem:[%s2668 + $0x80] sm:$0xff]
    %v2686 = vld [vmem:[%s2668 + $0x88] sm:$0xff]
    %v2687 = vld [vmem:[%s2668 + $0x90] sm:$0xff]
    %v2688 = vld [vmem:[%s2668 + $0x98] sm:$0xff]
    %v2689 = vld [vmem:[%s2668 + $0xa0] sm:$0xff]
    %v2690 = vld [vmem:[%s2668 + $0xa8] sm:$0xff]
    %v2691 = vld [vmem:[%s2668 + $0xb0] sm:$0xff]
    %v2692 = vld [vmem:[%s2668 + $0xb8] sm:$0xff]
    %v2693 = vld [vmem:[%s2668 + $0xc0] sm:$0xff]
    %v2694 = vld [vmem:[%s2668 + $0xc8] sm:$0xff]
    %v2695 = vld [vmem:[%s2668 + $0xd0] sm:$0xff]
    %v2696 = vld [vmem:[%s2668 + $0xd8] sm:$0xff]
    %v2697 = vld [vmem:[%s2668 + $0xe0] sm:$0xff]
    %v2698 = vld [vmem:[%s2668 + $0xe8] sm:$0xff]
    %v2699 = vld [vmem:[%s2668 + $0xf0] sm:$0xff]
    %v2700 = vld [vmem:[%s2668 + $0xf8] sm:$0xff]
    %v2701 = vld [vmem:[%s2668 + $0x100] sm:$0xff]
    %v2702 = vld [vmem:[%s2668 + $0x108] sm:$0xff]
    %v2703 = vld [vmem:[%s2668 + $0x110] sm:$0xff]
    %v2704 = vld [vmem:[%s2668 + $0x118] sm:$0xff]
    %v2705 = vld [vmem:[%s2668 + $0x120] sm:$0xff]
    %v2706 = vld [vmem:[%s2668 + $0x128] sm:$0xff]
    %v2707 = vld [vmem:[%s2668 + $0x130] sm:$0xff]
    %v2708 = vld [vmem:[%s2668 + $0x138] sm:$0xff]
    %vm2713 = vcmask 1045504
    %v2714 = vrot.slane %v2664, 2
    %v2715 = vrot.slane %v2666, 2
    %v2716 = vsel %vm2713, %v2714, %v2715
    %v2717 = vrot.slane %v2665, 2
    %v2718 = vrot.slane %v2667, 2
    %v2719 = vsel %vm2713, %v2717, %v2718
    %v2721 = vsel %vm392, %v2719, 0
    %2723 = vmatprep.subr.mxu0 %v2670
    %2724 = vmatpush1.msra.mxu0 %v2669
    %2725 = vmatprep.subr.mxu0 %v2672
    %2726 = vmatpush1.msra.mxu0 %v2671
    %2727 = vmatprep.subr.mxu0 %v2674
    %2728 = vmatpush1.msra.mxu0 %v2673
    %2729 = vmatprep.subr.mxu0 %v2676
    %2730 = vmatpush1.msra.mxu0 %v2675
    %2731 = vmatprep.subr.mxu0 %v2678
    %2732 = vmatpush1.msra.mxu0 %v2677
    %2733 = vmatprep.subr.mxu0 %v2680
    %2734 = vmatpush1.msra.mxu0 %v2679
    %2735 = vmatprep.subr.mxu0 %v2682
    %2736 = vmatpush1.msra.mxu0 %v2681
    %2737 = vmatprep.subr.mxu0 %v2684
    %2738 = vmatpush1.msra.mxu0 %v2683
    %2739 = vmatprep.subr.mxu0 %v2686
    %2740 = vmatpush1.msra.mxu0 %v2685
    %2741 = vmatprep.subr.mxu0 %v2688
    %2742 = vmatpush1.msra.mxu0 %v2687
    %2743 = vmatprep.subr.mxu0 %v2690
    %2744 = vmatpush1.msra.mxu0 %v2689
    %2745 = vmatprep.subr.mxu0 %v2692
    %2746 = vmatpush1.msra.mxu0 %v2691
    %2747 = vmatprep.subr.mxu0 %v2694
    %2748 = vmatpush1.msra.mxu0 %v2693
    %2749 = vmatprep.subr.mxu0 %v2696
    %2750 = vmatpush1.msra.mxu0 %v2695
    %2751 = vmatprep.subr.mxu0 %v2698
    %2752 = vmatpush1.msra.mxu0 %v2697
    %2753 = vmatprep.subr.mxu0 %v2700
    %2754 = vmatpush1.msra.mxu0 %v2699
    %2755 = vmatprep.subr.mxu0 %v2702
    %2756 = vmatpush1.msra.mxu0 %v2701
    %2757 = vmatprep.subr.mxu0 %v2704
    %2758 = vmatpush1.msra.mxu0 %v2703
    %2759 = vmatprep.subr.mxu0 %v2706
    %2760 = vmatpush1.msra.mxu0 %v2705
    %2761 = vmatprep.subr.mxu0 %v2708
    %2762 = vmatpush1.msra.mxu0 %v2707
    %2763 = vmatprep.subr.mxu0 0.0
    %2764 = vmatpush1.msra.mxu0 0.0
    %2765 = vmatprep.subr.mxu0 0.0
    %2766 = vmatpush1.msra.mxu0 0.0
    %2767 = vmatprep.subr.mxu0 0.0
    %2768 = vmatpush1.msra.mxu0 0.0
    %2769 = vmatprep.subr.mxu0 0.0
    %2770 = vmatpush1.msra.mxu0 0.0
    %2771 = vmatprep.subr.mxu0 0.0
    %2772 = vmatpush1.msra.mxu0 0.0
    %2773 = vmatprep.subr.mxu0 0.0
    %2774 = vmatpush1.msra.mxu0 0.0
    %2775 = vmatprep.subr.mxu0 0.0
    %2776 = vmatpush1.msra.mxu0 0.0
    %2777 = vmatprep.subr.mxu0 0.0
    %2778 = vmatpush1.msra.mxu0 0.0
    %2779 = vmatprep.subr.mxu0 0.0
    %2780 = vmatpush1.msra.mxu0 0.0
    %2781 = vmatprep.subr.mxu0 0.0
    %2782 = vmatpush1.msra.mxu0 0.0
    %2783 = vmatprep.subr.mxu0 0.0
    %2784 = vmatpush1.msra.mxu0 0.0
    %2785 = vmatprep.subr.mxu0 0.0
    %2786 = vmatpush1.msra.mxu0 0.0
    %2787 = vmatprep.mubr.f32.mxu0 %v2721
    %2788 = vmatmul.mubr.f32.gmra.mrb[0].mxu0 %v2716
    %v2789 = vpop.f32.mrb[0].mxu0
    %v2790 = vadd.f32 0.0, %v2789
    %v2791 = vpop.f32.mrb[0].mxu0
    %v2792 = vadd.f32 0.0, %v2791
    %2793 = vdwg.mxu0
    %v2794 = vadd.f32 %v2660, %v2790
    %v2795 = vadd.f32 %v2662, %v2792
    %v2796 = vld [vmem:[%s11] sm:$0x3]
    %v2798 = vlaneseq
    %v2799 = vshrl.u32 %v2798, 7
    %v2800 = vsub.s32 0, %v2799
    %v2801 = vrot.slane %v2796, %v2800
    %v2802 = vlaneseq
    %v2803 = vshrl.u32 %v2802, 7
    %v2804 = vsub.s32 1, %v2803
    %v2805 = vrot.slane %v2796, %v2804
    %v2808 = vadd.f32 %v2794, %v2801
    %v2809 = vadd.f32 %v2795, %v2805
    %v2810 = vmax.f32 %v2808, 0.0
    %v2811 = vmax.f32 %v2809, 0.0
    %v2812 = vstv %s118
    %v2813 = vmul.f32 %v2812, %v2810
    %v2814 = vmul.f32 %v2812, %v2811
    %v2815 = vtanh.pop %v2808
    %v2816 = vtanh.pop %v2809
    %v2817 = vstv %s119
    %v2818 = vmul.f32 %v2817, %v2815
    %v2819 = vmul.f32 %v2817, %v2816
    %v2820 = vadd.f32 %v2813, %v2818
    %v2821 = vadd.f32 %v2814, %v2819
    %vm2822 = vcmp.gt.f32.partialorder %v2808, 0.0
    %vm2823 = vcmp.gt.f32.partialorder %v2809, 0.0
    %v2824 = vmul.f32 %v2808, 0.2
    %v2825 = vmul.f32 %v2809, 0.2
    %v2826 = vsel %vm2822, %v2808, %v2824
    %v2827 = vsel %vm2823, %v2809, %v2825
    %v2828 = vstv %s120
    %v2829 = vmul.f32 %v2828, %v2826
    %v2830 = vmul.f32 %v2828, %v2827
    %v2831 = vadd.f32 %v2820, %v2829
    %v2832 = vadd.f32 %v2821, %v2830
    %v2833 = vmin.f32 %v2808, 0.0
    %v2834 = vmin.f32 %v2809, 0.0
    %v2835 = vmul.f32 %v2833, 1.442695
    %v2836 = vpow.pop %v2835
    %v2837 = vmul.f32 %v2834, 1.442695
    %v2838 = vpow.pop %v2837
    %v2839 = vsub.f32 %v2836, 1.0
    %v2840 = vsub.f32 %v2838, 1.0
    %v2841 = vsel %vm2822, %v2808, %v2839
    %v2842 = vsel %vm2823, %v2809, %v2840
    %v2843 = vstv %s121
    %v2844 = vmul.f32 %v2843, %v2841
    %v2845 = vmul.f32 %v2843, %v2842
    %v2846 = vadd.f32 %v2831, %v2844
    %v2847 = vadd.f32 %v2832, %v2845
    %2849 = vrot.lane.b32.xlu0 %v2846, 8
    %v2850 = vpop.permute.xlu0 %2849
    %vm2852 = vcmask 1040448
    %2853 = vst.msk [vmem:[#allocation5 + $0x1] sm:$0x1] %vm2852, %v2850
    %vm2854 = vcmask 57344
    %2855 = vst.msk [vmem:[#allocation5 + $0x9] sm:$0x1] %vm2854, %v2850
    %2857 = vrot.lane.b32.xlu0 %v2847, 8
    %v2858 = vpop.permute.xlu0 %2857
    %2860 = vst.msk [vmem:[#allocation5 + $0x2] sm:$0x1] %vm2852, %v2858
    %2861 = vst.msk [vmem:[#allocation5 + $0xa] sm:$0x1] %vm2854, %v2858
    %v2862 = vrot.slane %v2846, 1
    %2863 = vrot.lane.b32.xlu0 %v2862, 8
    %v2864 = vpop.permute.xlu0 %2863
    %2866 = vst.msk [vmem:[#allocation5 + $0x3] sm:$0x1] %vm2852, %v2864
    %2867 = vst.msk [vmem:[#allocation5 + $0xb] sm:$0x1] %vm2854, %v2864
    %v2868 = vrot.slane %v2847, 1
    %2869 = vrot.lane.b32.xlu0 %v2868, 8
    %v2870 = vpop.permute.xlu0 %2869
    %2872 = vst.msk [vmem:[#allocation5 + $0x4] sm:$0x1] %vm2852, %v2870
    %2873 = vst.msk [vmem:[#allocation5 + $0xc] sm:$0x1] %vm2854, %v2870
    %v2874 = vrot.slane %v2846, 2
    %2875 = vrot.lane.b32.xlu0 %v2874, 8
    %v2876 = vpop.permute.xlu0 %2875
    %2878 = vst.msk [vmem:[#allocation5 + $0x5] sm:$0x1] %vm2852, %v2876
    %2879 = vst.msk [vmem:[#allocation5 + $0xd] sm:$0x1] %vm2854, %v2876
    %v2880 = vrot.slane %v2847, 2
    %2881 = vrot.lane.b32.xlu0 %v2880, 8
    %v2882 = vpop.permute.xlu0 %2881
    %2884 = vst.msk [vmem:[#allocation5 + $0x6] sm:$0x1] %vm2852, %v2882
    %2885 = vst.msk [vmem:[#allocation5 + $0xe] sm:$0x1] %vm2854, %v2882
    %v2886 = vrot.slane %v2846, 3
    %2887 = vrot.lane.b32.xlu0 %v2886, 8
    %v2888 = vpop.permute.xlu0 %2887
    %2890 = vst.msk [vmem:[#allocation5 + $0x7] sm:$0x1] %vm2852, %v2888
    %2891 = vst.msk [vmem:[#allocation5 + $0xf] sm:$0x1] %vm2854, %v2888
    %v2892 = vrot.slane %v2847, 3
    %2893 = vrot.lane.b32.xlu0 %v2892, 8
    %v2894 = vpop.permute.xlu0 %2893
    %2896 = vst.msk [vmem:[#allocation5 + $0x10] sm:$0x1] %vm2852, %v2894
    %2897 = vst.msk [vmem:[#allocation5 + $0x18] sm:$0x1] %vm2854, %v2894
    %v2898 = vrot.slane %v2846, 4
    %2899 = vrot.lane.b32.xlu0 %v2898, 8
    %v2900 = vpop.permute.xlu0 %2899
    %2902 = vst.msk [vmem:[#allocation5 + $0x11] sm:$0x1] %vm2852, %v2900
    %2903 = vst.msk [vmem:[#allocation5 + $0x19] sm:$0x1] %vm2854, %v2900
    %v2904 = vrot.slane %v2847, 4
    %2905 = vrot.lane.b32.xlu0 %v2904, 8
    %v2906 = vpop.permute.xlu0 %2905
    %2908 = vst.msk [vmem:[#allocation5 + $0x12] sm:$0x1] %vm2852, %v2906
    %2909 = vst.msk [vmem:[#allocation5 + $0x1a] sm:$0x1] %vm2854, %v2906
    %v2910 = vrot.slane %v2846, 5
    %2911 = vrot.lane.b32.xlu0 %v2910, 8
    %v2912 = vpop.permute.xlu0 %2911
    %2914 = vst.msk [vmem:[#allocation5 + $0x13] sm:$0x1] %vm2852, %v2912
    %2915 = vst.msk [vmem:[#allocation5 + $0x1b] sm:$0x1] %vm2854, %v2912
    %v2916 = vrot.slane %v2847, 5
    %2917 = vrot.lane.b32.xlu0 %v2916, 8
    %v2918 = vpop.permute.xlu0 %2917
    %2920 = vst.msk [vmem:[#allocation5 + $0x14] sm:$0x1] %vm2852, %v2918
    %2921 = vst.msk [vmem:[#allocation5 + $0x1c] sm:$0x1] %vm2854, %v2918
    %v2922 = vrot.slane %v2846, 6
    %2923 = vrot.lane.b32.xlu0 %v2922, 8
    %v2924 = vpop.permute.xlu0 %2923
    %2926 = vst.msk [vmem:[#allocation5 + $0x15] sm:$0x1] %vm2852, %v2924
    %2927 = vst.msk [vmem:[#allocation5 + $0x1d] sm:$0x1] %vm2854, %v2924
    %v2928 = vrot.slane %v2847, 6
    %2929 = vrot.lane.b32.xlu0 %v2928, 8
    %v2930 = vpop.permute.xlu0 %2929
    %2932 = vst.msk [vmem:[#allocation5 + $0x16] sm:$0x1] %vm2852, %v2930
    %2933 = vst.msk [vmem:[#allocation5 + $0x1e] sm:$0x1] %vm2854, %v2930
    %v2934 = vrot.slane %v2846, 7
    %2935 = vrot.lane.b32.xlu0 %v2934, 8
    %v2936 = vpop.permute.xlu0 %2935
    %2938 = vst.msk [vmem:[#allocation5 + $0x17] sm:$0x1] %vm2852, %v2936
    %2939 = vst.msk [vmem:[#allocation5 + $0x1f] sm:$0x1] %vm2854, %v2936
    %v2940 = vrot.slane %v2847, 7
    %2941 = vrot.lane.b32.xlu0 %v2940, 8
    %v2942 = vpop.permute.xlu0 %2941
    %2944 = vst.msk [vmem:[#allocation5 + $0x20] sm:$0x1] %vm2852, %v2942
    %2945 = vst.msk [vmem:[#allocation5 + $0x28] sm:$0x1] %vm2854, %v2942
    %v2946 = vld [vmem:[%s2373] sm:$0xff]
    %v2947 = vld [vmem:[%s2373 + $0x8] sm:$0xff]
    %v2948 = vld [vmem:[#allocation13] sm:$0xff]
    %v2949 = vld [vmem:[#allocation13 + $0x8] sm:$0xff]
    %v2950 = vld [vmem:[#allocation13 + $0x10] sm:$0xff]
    %v2951 = vld [vmem:[#allocation13 + $0x18] sm:$0xff]
    %v2952 = vld [vmem:[#allocation13 + $0x20] sm:$0xff]
    %v2953 = vld [vmem:[#allocation13 + $0x28] sm:$0xff]
    %v2954 = vld [vmem:[#allocation13 + $0x30] sm:$0xff]
    %v2955 = vld [vmem:[#allocation13 + $0x38] sm:$0xff]
    %v2956 = vld [vmem:[#allocation13 + $0x40] sm:$0xff]
    %v2957 = vld [vmem:[#allocation13 + $0x48] sm:$0xff]
    %v2958 = vld [vmem:[#allocation13 + $0x50] sm:$0xff]
    %v2959 = vld [vmem:[#allocation13 + $0x58] sm:$0xff]
    %v2960 = vld [vmem:[#allocation13 + $0x60] sm:$0xff]
    %v2961 = vld [vmem:[#allocation13 + $0x68] sm:$0xff]
    %v2962 = vld [vmem:[#allocation13 + $0x70] sm:$0xff]
    %v2963 = vld [vmem:[#allocation13 + $0x78] sm:$0xff]
    %v2964 = vld [vmem:[#allocation13 + $0x80] sm:$0xff]
    %v2965 = vld [vmem:[#allocation13 + $0x88] sm:$0xff]
    %v2966 = vld [vmem:[#allocation13 + $0x90] sm:$0xff]
    %v2967 = vld [vmem:[#allocation13 + $0x98] sm:$0xff]
    %v2968 = vld [vmem:[#allocation13 + $0xa0] sm:$0xff]
    %v2969 = vld [vmem:[#allocation13 + $0xa8] sm:$0xff]
    %v2970 = vld [vmem:[#allocation13 + $0xb0] sm:$0xff]
    %v2971 = vld [vmem:[#allocation13 + $0xb8] sm:$0xff]
    %v2972 = vld [vmem:[#allocation13 + $0xc0] sm:$0xff]
    %v2973 = vld [vmem:[#allocation13 + $0xc8] sm:$0xff]
    %v2974 = vld [vmem:[#allocation13 + $0xd0] sm:$0xff]
    %v2975 = vld [vmem:[#allocation13 + $0xd8] sm:$0xff]
    %v2976 = vld [vmem:[#allocation13 + $0xe0] sm:$0xff]
    %v2977 = vld [vmem:[#allocation13 + $0xe8] sm:$0xff]
    %v2978 = vld [vmem:[#allocation13 + $0xf0] sm:$0xff]
    %v2979 = vld [vmem:[#allocation13 + $0xf8] sm:$0xff]
    %v2980 = vld [vmem:[#allocation13 + $0x100] sm:$0xff]
    %v2981 = vld [vmem:[#allocation13 + $0x108] sm:$0xff]
    %v2982 = vld [vmem:[#allocation13 + $0x110] sm:$0xff]
    %v2983 = vld [vmem:[#allocation13 + $0x118] sm:$0xff]
    %v2984 = vld [vmem:[#allocation13 + $0x120] sm:$0xff]
    %v2985 = vld [vmem:[#allocation13 + $0x128] sm:$0xff]
    %v2986 = vld [vmem:[#allocation13 + $0x130] sm:$0xff]
    %v2987 = vld [vmem:[#allocation13 + $0x138] sm:$0xff]
    %v2988 = vld [vmem:[%s2373] sm:$0xfe]
    %v2989 = vld [vmem:[%s2373 + $0x8] sm:$0xfe]
    %v2990 = vld [vmem:[%s2373 + $0x10] sm:$0x1]
    %v2991 = vld [vmem:[%s2373 + $0x18] sm:$0x1]
    %v2992 = vld [vmem:[%s2464] sm:$0xff]
    %v2993 = vld [vmem:[%s2464 + $0x8] sm:$0xff]
    %v2994 = vld [vmem:[%s2464 + $0x10] sm:$0xff]
    %v2995 = vld [vmem:[%s2464 + $0x18] sm:$0xff]
    %v2996 = vld [vmem:[%s2464 + $0x20] sm:$0xff]
    %v2997 = vld [vmem:[%s2464 + $0x28] sm:$0xff]
    %v2998 = vld [vmem:[%s2464 + $0x30] sm:$0xff]
    %v2999 = vld [vmem:[%s2464 + $0x38] sm:$0xff]
    %v3000 = vld [vmem:[%s2464 + $0x40] sm:$0xff]
    %v3001 = vld [vmem:[%s2464 + $0x48] sm:$0xff]
    %v3002 = vld [vmem:[%s2464 + $0x50] sm:$0xff]
    %v3003 = vld [vmem:[%s2464 + $0x58] sm:$0xff]
    %v3004 = vld [vmem:[%s2464 + $0x60] sm:$0xff]
    %v3005 = vld [vmem:[%s2464 + $0x68] sm:$0xff]
    %v3006 = vld [vmem:[%s2464 + $0x70] sm:$0xff]
    %v3007 = vld [vmem:[%s2464 + $0x78] sm:$0xff]
    %v3008 = vld [vmem:[%s2464 + $0x80] sm:$0xff]
    %v3009 = vld [vmem:[%s2464 + $0x88] sm:$0xff]
    %v3010 = vld [vmem:[%s2464 + $0x90] sm:$0xff]
    %v3011 = vld [vmem:[%s2464 + $0x98] sm:$0xff]
    %v3012 = vld [vmem:[%s2464 + $0xa0] sm:$0xff]
    %v3013 = vld [vmem:[%s2464 + $0xa8] sm:$0xff]
    %v3014 = vld [vmem:[%s2464 + $0xb0] sm:$0xff]
    %v3015 = vld [vmem:[%s2464 + $0xb8] sm:$0xff]
    %v3016 = vld [vmem:[%s2464 + $0xc0] sm:$0xff]
    %v3017 = vld [vmem:[%s2464 + $0xc8] sm:$0xff]
    %v3018 = vld [vmem:[%s2464 + $0xd0] sm:$0xff]
    %v3019 = vld [vmem:[%s2464 + $0xd8] sm:$0xff]
    %v3020 = vld [vmem:[%s2464 + $0xe0] sm:$0xff]
    %v3021 = vld [vmem:[%s2464 + $0xe8] sm:$0xff]
    %v3022 = vld [vmem:[%s2464 + $0xf0] sm:$0xff]
    %v3023 = vld [vmem:[%s2464 + $0xf8] sm:$0xff]
    %v3024 = vld [vmem:[%s2464 + $0x100] sm:$0xff]
    %v3025 = vld [vmem:[%s2464 + $0x108] sm:$0xff]
    %v3026 = vld [vmem:[%s2464 + $0x110] sm:$0xff]
    %v3027 = vld [vmem:[%s2464 + $0x118] sm:$0xff]
    %v3028 = vld [vmem:[%s2464 + $0x120] sm:$0xff]
    %v3029 = vld [vmem:[%s2464 + $0x128] sm:$0xff]
    %v3030 = vld [vmem:[%s2464 + $0x130] sm:$0xff]
    %v3031 = vld [vmem:[%s2464 + $0x138] sm:$0xff]
    %v3036 = vrot.slane %v2988, 1
    %v3037 = vrot.slane %v2990, 1
    %v3038 = vsel %vm2509, %v3036, %v3037
    %v3039 = vrot.slane %v2989, 1
    %v3040 = vrot.slane %v2991, 1
    %v3041 = vsel %vm2509, %v3039, %v3040
    %v3043 = vsel %vm392, %v3041, 0
    %3045 = vmatprep.subr.mxu0 %v2993
    %3046 = vmatpush1.msra.mxu0 %v2992
    %3047 = vmatprep.subr.mxu0 %v2995
    %3048 = vmatpush1.msra.mxu0 %v2994
    %3049 = vmatprep.subr.mxu0 %v2997
    %3050 = vmatpush1.msra.mxu0 %v2996
    %3051 = vmatprep.subr.mxu0 %v2999
    %3052 = vmatpush1.msra.mxu0 %v2998
    %3053 = vmatprep.subr.mxu0 %v3001
    %3054 = vmatpush1.msra.mxu0 %v3000
    %3055 = vmatprep.subr.mxu0 %v3003
    %3056 = vmatpush1.msra.mxu0 %v3002
    %3057 = vmatprep.subr.mxu0 %v3005
    %3058 = vmatpush1.msra.mxu0 %v3004
    %3059 = vmatprep.subr.mxu0 %v3007
    %3060 = vmatpush1.msra.mxu0 %v3006
    %3061 = vmatprep.subr.mxu0 %v3009
    %3062 = vmatpush1.msra.mxu0 %v3008
    %3063 = vmatprep.subr.mxu0 %v3011
    %3064 = vmatpush1.msra.mxu0 %v3010
    %3065 = vmatprep.subr.mxu0 %v3013
    %3066 = vmatpush1.msra.mxu0 %v3012
    %3067 = vmatprep.subr.mxu0 %v3015
    %3068 = vmatpush1.msra.mxu0 %v3014
    %3069 = vmatprep.subr.mxu0 %v3017
    %3070 = vmatpush1.msra.mxu0 %v3016
    %3071 = vmatprep.subr.mxu0 %v3019
    %3072 = vmatpush1.msra.mxu0 %v3018
    %3073 = vmatprep.subr.mxu0 %v3021
    %3074 = vmatpush1.msra.mxu0 %v3020
    %3075 = vmatprep.subr.mxu0 %v3023
    %3076 = vmatpush1.msra.mxu0 %v3022
    %3077 = vmatprep.subr.mxu0 %v3025
    %3078 = vmatpush1.msra.mxu0 %v3024
    %3079 = vmatprep.subr.mxu0 %v3027
    %3080 = vmatpush1.msra.mxu0 %v3026
    %3081 = vmatprep.subr.mxu0 %v3029
    %3082 = vmatpush1.msra.mxu0 %v3028
    %3083 = vmatprep.subr.mxu0 %v3031
    %3084 = vmatpush1.msra.mxu0 %v3030
    %3085 = vmatprep.subr.mxu0 0.0
    %3086 = vmatpush1.msra.mxu0 0.0
    %3087 = vmatprep.subr.mxu0 0.0
    %3088 = vmatpush1.msra.mxu0 0.0
    %3089 = vmatprep.subr.mxu0 0.0
    %3090 = vmatpush1.msra.mxu0 0.0
    %3091 = vmatprep.subr.mxu0 0.0
    %3092 = vmatpush1.msra.mxu0 0.0
    %3093 = vmatprep.subr.mxu0 0.0
    %3094 = vmatpush1.msra.mxu0 0.0
    %3095 = vmatprep.subr.mxu0 0.0
    %3096 = vmatpush1.msra.mxu0 0.0
    %3097 = vmatprep.subr.mxu0 0.0
    %3098 = vmatpush1.msra.mxu0 0.0
    %3099 = vmatprep.subr.mxu0 0.0
    %3100 = vmatpush1.msra.mxu0 0.0
    %3101 = vmatprep.subr.mxu0 0.0
    %3102 = vmatpush1.msra.mxu0 0.0
    %3103 = vmatprep.subr.mxu0 0.0
    %3104 = vmatpush1.msra.mxu0 0.0
    %3105 = vmatprep.subr.mxu0 0.0
    %3106 = vmatpush1.msra.mxu0 0.0
    %3107 = vmatprep.subr.mxu0 0.0
    %3108 = vmatpush1.msra.mxu0 0.0
    %3109 = vmatprep.mubr.f32.mxu0 %v3043
    %3110 = vmatmul.mubr.f32.gmra.mrb[0].mxu0 %v3038
    %v3111 = vpop.f32.mrb[0].mxu0
    %v3112 = vadd.f32 0.0, %v3111
    %v3113 = vpop.f32.mrb[0].mxu0
    %v3114 = vadd.f32 0.0, %v3113
    %3115 = vdwg.mxu0
    %v3117 = vsel %vm392, %v2947, 0
    %3119 = vmatprep.subr.mxu0 %v2949
    %3120 = vmatpush1.msra.mxu0 %v2948
    %3121 = vmatprep.subr.mxu0 %v2951
    %3122 = vmatpush1.msra.mxu0 %v2950
    %3123 = vmatprep.subr.mxu0 %v2953
    %3124 = vmatpush1.msra.mxu0 %v2952
    %3125 = vmatprep.subr.mxu0 %v2955
    %3126 = vmatpush1.msra.mxu0 %v2954
    %3127 = vmatprep.subr.mxu0 %v2957
    %3128 = vmatpush1.msra.mxu0 %v2956
    %3129 = vmatprep.subr.mxu0 %v2959
    %3130 = vmatpush1.msra.mxu0 %v2958
    %3131 = vmatprep.subr.mxu0 %v2961
    %3132 = vmatpush1.msra.mxu0 %v2960
    %3133 = vmatprep.subr.mxu0 %v2963
    %3134 = vmatpush1.msra.mxu0 %v2962
    %3135 = vmatprep.subr.mxu0 %v2965
    %3136 = vmatpush1.msra.mxu0 %v2964
    %3137 = vmatprep.subr.mxu0 %v2967
    %3138 = vmatpush1.msra.mxu0 %v2966
    %3139 = vmatprep.subr.mxu0 %v2969
    %3140 = vmatpush1.msra.mxu0 %v2968
    %3141 = vmatprep.subr.mxu0 %v2971
    %3142 = vmatpush1.msra.mxu0 %v2970
    %3143 = vmatprep.subr.mxu0 %v2973
    %3144 = vmatpush1.msra.mxu0 %v2972
    %3145 = vmatprep.subr.mxu0 %v2975
    %3146 = vmatpush1.msra.mxu0 %v2974
    %3147 = vmatprep.subr.mxu0 %v2977
    %3148 = vmatpush1.msra.mxu0 %v2976
    %3149 = vmatprep.subr.mxu0 %v2979
    %3150 = vmatpush1.msra.mxu0 %v2978
    %3151 = vmatprep.subr.mxu0 %v2981
    %3152 = vmatpush1.msra.mxu0 %v2980
    %3153 = vmatprep.subr.mxu0 %v2983
    %3154 = vmatpush1.msra.mxu0 %v2982
    %3155 = vmatprep.subr.mxu0 %v2985
    %3156 = vmatpush1.msra.mxu0 %v2984
    %3157 = vmatprep.subr.mxu0 %v2987
    %3158 = vmatpush1.msra.mxu0 %v2986
    %3159 = vmatprep.subr.mxu0 0.0
    %3160 = vmatpush1.msra.mxu0 0.0
    %3161 = vmatprep.subr.mxu0 0.0
    %3162 = vmatpush1.msra.mxu0 0.0
    %3163 = vmatprep.subr.mxu0 0.0
    %3164 = vmatpush1.msra.mxu0 0.0
    %3165 = vmatprep.subr.mxu0 0.0
    %3166 = vmatpush1.msra.mxu0 0.0
    %3167 = vmatprep.subr.mxu0 0.0
    %3168 = vmatpush1.msra.mxu0 0.0
    %3169 = vmatprep.subr.mxu0 0.0
    %3170 = vmatpush1.msra.mxu0 0.0
    %3171 = vmatprep.subr.mxu0 0.0
    %3172 = vmatpush1.msra.mxu0 0.0
    %3173 = vmatprep.subr.mxu0 0.0
    %3174 = vmatpush1.msra.mxu0 0.0
    %3175 = vmatprep.subr.mxu0 0.0
    %3176 = vmatpush1.msra.mxu0 0.0
    %3177 = vmatprep.subr.mxu0 0.0
    %3178 = vmatpush1.msra.mxu0 0.0
    %3179 = vmatprep.subr.mxu0 0.0
    %3180 = vmatpush1.msra.mxu0 0.0
    %3181 = vmatprep.subr.mxu0 0.0
    %3182 = vmatpush1.msra.mxu0 0.0
    %3183 = vmatprep.mubr.f32.mxu0 %v3117
    %3184 = vmatmul.mubr.f32.gmra.mrb[0].mxu0 %v2946
    %v3185 = vpop.f32.mrb[0].mxu0
    %v3186 = vadd.f32 %v3112, %v3185
    %v3187 = vpop.f32.mrb[0].mxu0
    %v3188 = vadd.f32 %v3114, %v3187
    %3189 = vdwg.mxu0
    %v3190 = vld [vmem:[%s2373] sm:$0xfc]
    %v3191 = vld [vmem:[%s2373 + $0x8] sm:$0xfc]
    %v3192 = vld [vmem:[%s2373 + $0x10] sm:$0x3]
    %v3193 = vld [vmem:[%s2373 + $0x18] sm:$0x3]
    %v3194 = vld [vmem:[%s2668] sm:$0xff]
    %v3195 = vld [vmem:[%s2668 + $0x8] sm:$0xff]
    %v3196 = vld [vmem:[%s2668 + $0x10] sm:$0xff]
    %v3197 = vld [vmem:[%s2668 + $0x18] sm:$0xff]
    %v3198 = vld [vmem:[%s2668 + $0x20] sm:$0xff]
    %v3199 = vld [vmem:[%s2668 + $0x28] sm:$0xff]
    %v3200 = vld [vmem:[%s2668 + $0x30] sm:$0xff]
    %v3201 = vld [vmem:[%s2668 + $0x38] sm:$0xff]
    %v3202 = vld [vmem:[%s2668 + $0x40] sm:$0xff]
    %v3203 = vld [vmem:[%s2668 + $0x48] sm:$0xff]
    %v3204 = vld [vmem:[%s2668 + $0x50] sm:$0xff]
    %v3205 = vld [vmem:[%s2668 + $0x58] sm:$0xff]
    %v3206 = vld [vmem:[%s2668 + $0x60] sm:$0xff]
    %v3207 = vld [vmem:[%s2668 + $0x68] sm:$0xff]
    %v3208 = vld [vmem:[%s2668 + $0x70] sm:$0xff]
    %v3209 = vld [vmem:[%s2668 + $0x78] sm:$0xff]
    %v3210 = vld [vmem:[%s2668 + $0x80] sm:$0xff]
    %v3211 = vld [vmem:[%s2668 + $0x88] sm:$0xff]
    %v3212 = vld [vmem:[%s2668 + $0x90] sm:$0xff]
    %v3213 = vld [vmem:[%s2668 + $0x98] sm:$0xff]
    %v3214 = vld [vmem:[%s2668 + $0xa0] sm:$0xff]
    %v3215 = vld [vmem:[%s2668 + $0xa8] sm:$0xff]
    %v3216 = vld [vmem:[%s2668 + $0xb0] sm:$0xff]
    %v3217 = vld [vmem:[%s2668 + $0xb8] sm:$0xff]
    %v3218 = vld [vmem:[%s2668 + $0xc0] sm:$0xff]
    %v3219 = vld [vmem:[%s2668 + $0xc8] sm:$0xff]
    %v3220 = vld [vmem:[%s2668 + $0xd0] sm:$0xff]
    %v3221 = vld [vmem:[%s2668 + $0xd8] sm:$0xff]
    %v3222 = vld [vmem:[%s2668 + $0xe0] sm:$0xff]
    %v3223 = vld [vmem:[%s2668 + $0xe8] sm:$0xff]
    %v3224 = vld [vmem:[%s2668 + $0xf0] sm:$0xff]
    %v3225 = vld [vmem:[%s2668 + $0xf8] sm:$0xff]
    %v3226 = vld [vmem:[%s2668 + $0x100] sm:$0xff]
    %v3227 = vld [vmem:[%s2668 + $0x108] sm:$0xff]
    %v3228 = vld [vmem:[%s2668 + $0x110] sm:$0xff]
    %v3229 = vld [vmem:[%s2668 + $0x118] sm:$0xff]
    %v3230 = vld [vmem:[%s2668 + $0x120] sm:$0xff]
    %v3231 = vld [vmem:[%s2668 + $0x128] sm:$0xff]
    %v3232 = vld [vmem:[%s2668 + $0x130] sm:$0xff]
    %v3233 = vld [vmem:[%s2668 + $0x138] sm:$0xff]
    %v3238 = vrot.slane %v3190, 2
    %v3239 = vrot.slane %v3192, 2
    %v3240 = vsel %vm2713, %v3238, %v3239
    %v3241 = vrot.slane %v3191, 2
    %v3242 = vrot.slane %v3193, 2
    %v3243 = vsel %vm2713, %v3241, %v3242
    %v3245 = vsel %vm392, %v3243, 0
    %3247 = vmatprep.subr.mxu0 %v3195
    %3248 = vmatpush1.msra.mxu0 %v3194
    %3249 = vmatprep.subr.mxu0 %v3197
    %3250 = vmatpush1.msra.mxu0 %v3196
    %3251 = vmatprep.subr.mxu0 %v3199
    %3252 = vmatpush1.msra.mxu0 %v3198
    %3253 = vmatprep.subr.mxu0 %v3201
    %3254 = vmatpush1.msra.mxu0 %v3200
    %3255 = vmatprep.subr.mxu0 %v3203
    %3256 = vmatpush1.msra.mxu0 %v3202
    %3257 = vmatprep.subr.mxu0 %v3205
    %3258 = vmatpush1.msra.mxu0 %v3204
    %3259 = vmatprep.subr.mxu0 %v3207
    %3260 = vmatpush1.msra.mxu0 %v3206
    %3261 = vmatprep.subr.mxu0 %v3209
    %3262 = vmatpush1.msra.mxu0 %v3208
    %3263 = vmatprep.subr.mxu0 %v3211
    %3264 = vmatpush1.msra.mxu0 %v3210
    %3265 = vmatprep.subr.mxu0 %v3213
    %3266 = vmatpush1.msra.mxu0 %v3212
    %3267 = vmatprep.subr.mxu0 %v3215
    %3268 = vmatpush1.msra.mxu0 %v3214
    %3269 = vmatprep.subr.mxu0 %v3217
    %3270 = vmatpush1.msra.mxu0 %v3216
    %3271 = vmatprep.subr.mxu0 %v3219
    %3272 = vmatpush1.msra.mxu0 %v3218
    %3273 = vmatprep.subr.mxu0 %v3221
    %3274 = vmatpush1.msra.mxu0 %v3220
    %3275 = vmatprep.subr.mxu0 %v3223
    %3276 = vmatpush1.msra.mxu0 %v3222
    %3277 = vmatprep.subr.mxu0 %v3225
    %3278 = vmatpush1.msra.mxu0 %v3224
    %3279 = vmatprep.subr.mxu0 %v3227
    %3280 = vmatpush1.msra.mxu0 %v3226
    %3281 = vmatprep.subr.mxu0 %v3229
    %3282 = vmatpush1.msra.mxu0 %v3228
    %3283 = vmatprep.subr.mxu0 %v3231
    %3284 = vmatpush1.msra.mxu0 %v3230
    %3285 = vmatprep.subr.mxu0 %v3233
    %3286 = vmatpush1.msra.mxu0 %v3232
    %3287 = vmatprep.subr.mxu0 0.0
    %3288 = vmatpush1.msra.mxu0 0.0
    %3289 = vmatprep.subr.mxu0 0.0
    %3290 = vmatpush1.msra.mxu0 0.0
    %3291 = vmatprep.subr.mxu0 0.0
    %3292 = vmatpush1.msra.mxu0 0.0
    %3293 = vmatprep.subr.mxu0 0.0
    %3294 = vmatpush1.msra.mxu0 0.0
    %3295 = vmatprep.subr.mxu0 0.0
    %3296 = vmatpush1.msra.mxu0 0.0
    %3297 = vmatprep.subr.mxu0 0.0
    %3298 = vmatpush1.msra.mxu0 0.0
    %3299 = vmatprep.subr.mxu0 0.0
    %3300 = vmatpush1.msra.mxu0 0.0
    %3301 = vmatprep.subr.mxu0 0.0
    %3302 = vmatpush1.msra.mxu0 0.0
    %3303 = vmatprep.subr.mxu0 0.0
    %3304 = vmatpush1.msra.mxu0 0.0
    %3305 = vmatprep.subr.mxu0 0.0
    %3306 = vmatpush1.msra.mxu0 0.0
    %3307 = vmatprep.subr.mxu0 0.0
    %3308 = vmatpush1.msra.mxu0 0.0
    %3309 = vmatprep.subr.mxu0 0.0
    %3310 = vmatpush1.msra.mxu0 0.0
    %3311 = vmatprep.mubr.f32.mxu0 %v3245
    %3312 = vmatmul.mubr.f32.gmra.mrb[0].mxu0 %v3240
    %v3313 = vpop.f32.mrb[0].mxu0
    %v3314 = vadd.f32 0.0, %v3313
    %v3315 = vpop.f32.mrb[0].mxu0
    %v3316 = vadd.f32 0.0, %v3315
    %3317 = vdwg.mxu0
    %v3318 = vadd.f32 %v3186, %v3314
    %v3319 = vadd.f32 %v3188, %v3316
    %v3320 = vld [vmem:[%s11] sm:$0x3]
    %v3322 = vlaneseq
    %v3323 = vshrl.u32 %v3322, 7
    %v3324 = vsub.s32 0, %v3323
    %v3325 = vrot.slane %v3320, %v3324
    %v3326 = vlaneseq
    %v3327 = vshrl.u32 %v3326, 7
    %v3328 = vsub.s32 1, %v3327
    %v3329 = vrot.slane %v3320, %v3328
    %v3332 = vadd.f32 %v3318, %v3325
    %v3333 = vadd.f32 %v3319, %v3329
    %v3334 = vmax.f32 %v3332, 0.0
    %v3335 = vmax.f32 %v3333, 0.0
    %v3336 = vmul.f32 %v2812, %v3334
    %v3337 = vmul.f32 %v2812, %v3335
    %v3338 = vtanh.pop %v3332
    %v3339 = vtanh.pop %v3333
    %v3340 = vmul.f32 %v2817, %v3338
    %v3341 = vmul.f32 %v2817, %v3339
    %v3342 = vadd.f32 %v3336, %v3340
    %v3343 = vadd.f32 %v3337, %v3341
    %vm3344 = vcmp.gt.f32.partialorder %v3332, 0.0
    %vm3345 = vcmp.gt.f32.partialorder %v3333, 0.0
    %v3346 = vmul.f32 %v3332, 0.2
    %v3347 = vmul.f32 %v3333, 0.2
    %v3348 = vsel %vm3344, %v3332, %v3346
    %v3349 = vsel %vm3345, %v3333, %v3347
    %v3350 = vmul.f32 %v2828, %v3348
    %v3351 = vmul.f32 %v2828, %v3349
    %v3352 = vadd.f32 %v3342, %v3350
    %v3353 = vadd.f32 %v3343, %v3351
    %v3354 = vmin.f32 %v3332, 0.0
    %v3355 = vmin.f32 %v3333, 0.0
    %v3356 = vmul.f32 %v3354, 1.442695
    %v3357 = vpow.pop %v3356
    %v3358 = vmul.f32 %v3355, 1.442695
    %v3359 = vpow.pop %v3358
    %v3360 = vsub.f32 %v3357, 1.0
    %v3361 = vsub.f32 %v3359, 1.0
    %v3362 = vsel %vm3344, %v3332, %v3360
    %v3363 = vsel %vm3345, %v3333, %v3361
    %v3364 = vmul.f32 %v2843, %v3362
    %v3365 = vmul.f32 %v2843, %v3363
    %v3366 = vadd.f32 %v3352, %v3364
    %v3367 = vadd.f32 %v3353, %v3365
    %3369 = vrot.lane.b32.xlu0 %v3366, 8
    %v3370 = vpop.permute.xlu0 %3369
    %s3372 = scalar_lea.vmem [#allocation5], 48
    %3373 = vst.msk [vmem:[%s3372 + $0x1] sm:$0x1] %vm2852, %v3370
    %3374 = vst.msk [vmem:[%s3372 + $0x9] sm:$0x1] %vm2854, %v3370
    %3376 = vrot.lane.b32.xlu0 %v3367, 8
    %v3377 = vpop.permute.xlu0 %3376
    %3379 = vst.msk [vmem:[%s3372 + $0x2] sm:$0x1] %vm2852, %v3377
    %3380 = vst.msk [vmem:[%s3372 + $0xa] sm:$0x1] %vm2854, %v3377
    %v3381 = vrot.slane %v3366, 1
    %3382 = vrot.lane.b32.xlu0 %v3381, 8
    %v3383 = vpop.permute.xlu0 %3382
    %3385 = vst.msk [vmem:[%s3372 + $0x3] sm:$0x1] %vm2852, %v3383
    %3386 = vst.msk [vmem:[%s3372 + $0xb] sm:$0x1] %vm2854, %v3383
    %v3387 = vrot.slane %v3367, 1
    %3388 = vrot.lane.b32.xlu0 %v3387, 8
    %v3389 = vpop.permute.xlu0 %3388
    %3391 = vst.msk [vmem:[%s3372 + $0x4] sm:$0x1] %vm2852, %v3389
    %3392 = vst.msk [vmem:[%s3372 + $0xc] sm:$0x1] %vm2854, %v3389
    %v3393 = vrot.slane %v3366, 2
    %3394 = vrot.lane.b32.xlu0 %v3393, 8
    %v3395 = vpop.permute.xlu0 %3394
    %3397 = vst.msk [vmem:[%s3372 + $0x5] sm:$0x1] %vm2852, %v3395
    %3398 = vst.msk [vmem:[%s3372 + $0xd] sm:$0x1] %vm2854, %v3395
    %v3399 = vrot.slane %v3367, 2
    %3400 = vrot.lane.b32.xlu0 %v3399, 8
    %v3401 = vpop.permute.xlu0 %3400
    %3403 = vst.msk [vmem:[%s3372 + $0x6] sm:$0x1] %vm2852, %v3401
    %3404 = vst.msk [vmem:[%s3372 + $0xe] sm:$0x1] %vm2854, %v3401
    %v3405 = vrot.slane %v3366, 3
    %3406 = vrot.lane.b32.xlu0 %v3405, 8
    %v3407 = vpop.permute.xlu0 %3406
    %3409 = vst.msk [vmem:[%s3372 + $0x7] sm:$0x1] %vm2852, %v3407
    %3410 = vst.msk [vmem:[%s3372 + $0xf] sm:$0x1] %vm2854, %v3407
    %v3411 = vrot.slane %v3367, 3
    %3412 = vrot.lane.b32.xlu0 %v3411, 8
    %v3413 = vpop.permute.xlu0 %3412
    %3415 = vst.msk [vmem:[%s3372 + $0x10] sm:$0x1] %vm2852, %v3413
    %3416 = vst.msk [vmem:[%s3372 + $0x18] sm:$0x1] %vm2854, %v3413
    %v3417 = vrot.slane %v3366, 4
    %3418 = vrot.lane.b32.xlu0 %v3417, 8
    %v3419 = vpop.permute.xlu0 %3418
    %3421 = vst.msk [vmem:[%s3372 + $0x11] sm:$0x1] %vm2852, %v3419
    %3422 = vst.msk [vmem:[%s3372 + $0x19] sm:$0x1] %vm2854, %v3419
    %v3423 = vrot.slane %v3367, 4
    %3424 = vrot.lane.b32.xlu0 %v3423, 8
    %v3425 = vpop.permute.xlu0 %3424
    %3427 = vst.msk [vmem:[%s3372 + $0x12] sm:$0x1] %vm2852, %v3425
    %3428 = vst.msk [vmem:[%s3372 + $0x1a] sm:$0x1] %vm2854, %v3425
    %v3429 = vrot.slane %v3366, 5
    %3430 = vrot.lane.b32.xlu0 %v3429, 8
    %v3431 = vpop.permute.xlu0 %3430
    %3433 = vst.msk [vmem:[%s3372 + $0x13] sm:$0x1] %vm2852, %v3431
    %3434 = vst.msk [vmem:[%s3372 + $0x1b] sm:$0x1] %vm2854, %v3431
    %v3435 = vrot.slane %v3367, 5
    %3436 = vrot.lane.b32.xlu0 %v3435, 8
    %v3437 = vpop.permute.xlu0 %3436
    %3439 = vst.msk [vmem:[%s3372 + $0x14] sm:$0x1] %vm2852, %v3437
    %3440 = vst.msk [vmem:[%s3372 + $0x1c] sm:$0x1] %vm2854, %v3437
    %v3441 = vrot.slane %v3366, 6
    %3442 = vrot.lane.b32.xlu0 %v3441, 8
    %v3443 = vpop.permute.xlu0 %3442
    %3445 = vst.msk [vmem:[%s3372 + $0x15] sm:$0x1] %vm2852, %v3443
    %3446 = vst.msk [vmem:[%s3372 + $0x1d] sm:$0x1] %vm2854, %v3443
    %v3447 = vrot.slane %v3367, 6
    %3448 = vrot.lane.b32.xlu0 %v3447, 8
    %v3449 = vpop.permute.xlu0 %3448
    %3451 = vst.msk [vmem:[%s3372 + $0x16] sm:$0x1] %vm2852, %v3449
    %3452 = vst.msk [vmem:[%s3372 + $0x1e] sm:$0x1] %vm2854, %v3449
    %v3453 = vrot.slane %v3366, 7
    %3454 = vrot.lane.b32.xlu0 %v3453, 8
    %v3455 = vpop.permute.xlu0 %3454
    %3457 = vst.msk [vmem:[%s3372 + $0x17] sm:$0x1] %vm2852, %v3455
    %3458 = vst.msk [vmem:[%s3372 + $0x1f] sm:$0x1] %vm2854, %v3455
    %v3459 = vrot.slane %v3367, 7
    %3460 = vrot.lane.b32.xlu0 %v3459, 8
    %v3461 = vpop.permute.xlu0 %3460
    %3463 = vst.msk [vmem:[%s3372 + $0x20] sm:$0x1] %vm2852, %v3461
    %3464 = vst.msk [vmem:[%s3372 + $0x28] sm:$0x1] %vm2854, %v3461
    %v3465 = vld [vmem:[#allocation5] sm:$0xff]
    %v3466 = vld [vmem:[#allocation5 + $0x8] sm:$0xff]
    %v3467 = vld [vmem:[#allocation5 + $0x10] sm:$0xff]
    %v3468 = vld [vmem:[#allocation5 + $0x18] sm:$0xff]
    %v3469 = vld [vmem:[%s12] sm:$0xff]
    %v3470 = vld [vmem:[%s12 + $0x8] sm:$0xff]
    %v3471 = vld [vmem:[%s12 + $0x10] sm:$0xff]
    %v3472 = vld [vmem:[%s12 + $0x18] sm:$0xff]
    %v3473 = vld [vmem:[%s12 + $0x20] sm:$0xff]
    %v3474 = vld [vmem:[%s12 + $0x28] sm:$0xff]
    %v3475 = vld [vmem:[%s12 + $0x30] sm:$0xff]
    %v3476 = vld [vmem:[%s12 + $0x38] sm:$0xff]
    %v3477 = vld [vmem:[%s12 + $0x40] sm:$0xff]
    %v3478 = vld [vmem:[%s12 + $0x48] sm:$0xff]
    %v3479 = vld [vmem:[%s12 + $0x50] sm:$0xff]
    %v3480 = vld [vmem:[%s12 + $0x58] sm:$0xff]
    %v3481 = vld [vmem:[%s12 + $0x60] sm:$0xff]
    %v3482 = vld [vmem:[%s12 + $0x68] sm:$0xff]
    %v3483 = vld [vmem:[%s12 + $0x70] sm:$0xff]
    %v3484 = vld [vmem:[%s12 + $0x78] sm:$0xff]
    %v3485 = vld [vmem:[%s12 + $0x80] sm:$0xff]
    %v3486 = vld [vmem:[%s12 + $0x88] sm:$0xff]
    %v3487 = vld [vmem:[#allocation5] sm:$0xfe]
    %v3488 = vld [vmem:[#allocation5 + $0x8] sm:$0xfe]
    %v3489 = vld [vmem:[#allocation5 + $0x20] sm:$0x1]
    %v3490 = vld [vmem:[#allocation5 + $0x28] sm:$0x1]
    %s3491 = scalar_lea.vmem %s12, 144
    %v3492 = vld [vmem:[%s3491] sm:$0xff]
    %v3493 = vld [vmem:[%s3491 + $0x8] sm:$0xff]
    %v3494 = vld [vmem:[%s3491 + $0x10] sm:$0xff]
    %v3495 = vld [vmem:[%s3491 + $0x18] sm:$0xff]
    %v3496 = vld [vmem:[%s3491 + $0x20] sm:$0xff]
    %v3497 = vld [vmem:[%s3491 + $0x28] sm:$0xff]
    %v3498 = vld [vmem:[%s3491 + $0x30] sm:$0xff]
    %v3499 = vld [vmem:[%s3491 + $0x38] sm:$0xff]
    %v3500 = vld [vmem:[%s3491 + $0x40] sm:$0xff]
    %v3501 = vld [vmem:[%s3491 + $0x48] sm:$0xff]
    %v3502 = vld [vmem:[%s3491 + $0x50] sm:$0xff]
    %v3503 = vld [vmem:[%s3491 + $0x58] sm:$0xff]
    %v3504 = vld [vmem:[%s3491 + $0x60] sm:$0xff]
    %v3505 = vld [vmem:[%s3491 + $0x68] sm:$0xff]
    %v3506 = vld [vmem:[%s3491 + $0x70] sm:$0xff]
    %v3507 = vld [vmem:[%s3491 + $0x78] sm:$0xff]
    %v3508 = vld [vmem:[%s3491 + $0x80] sm:$0xff]
    %v3509 = vld [vmem:[%s3491 + $0x88] sm:$0xff]
    %v3516 = vrot.slane %v3487, 1
    %v3517 = vrot.slane %v3467, 1
    %v3518 = vsel %vm2509, %v3516, %v3517
    %v3519 = vrot.slane %v3488, 1
    %v3520 = vrot.slane %v3468, 1
    %v3521 = vsel %vm2509, %v3519, %v3520
    %v3522 = vrot.slane %v3489, 1
    %v3523 = vsel %vm2509, %v3517, %v3522
    %v3524 = vrot.slane %v3490, 1
    %v3525 = vsel %vm2509, %v3520, %v3524
    %v3528 = vsel %vm402, %v3521, 0
    %v3530 = vsel %vm402, %v3525, 0
    %3532 = vmatprep.subr.mxu0 0.0
    %3533 = vmatpush1.msra.mxu0 %v3492
    %3534 = vmatprep.subr.mxu0 0.0
    %3535 = vmatpush1.msra.mxu0 %v3493
    %3536 = vmatprep.subr.mxu0 0.0
    %3537 = vmatpush1.msra.mxu0 %v3494
    %3538 = vmatprep.subr.mxu0 0.0
    %3539 = vmatpush1.msra.mxu0 %v3495
    %3540 = vmatprep.subr.mxu0 0.0
    %3541 = vmatpush1.msra.mxu0 %v3496
    %3542 = vmatprep.subr.mxu0 0.0
    %3543 = vmatpush1.msra.mxu0 %v3497
    %3544 = vmatprep.subr.mxu0 0.0
    %3545 = vmatpush1.msra.mxu0 %v3498
    %3546 = vmatprep.subr.mxu0 0.0
    %3547 = vmatpush1.msra.mxu0 %v3499
    %3548 = vmatprep.subr.mxu0 0.0
    %3549 = vmatpush1.msra.mxu0 %v3500
    %3550 = vmatprep.subr.mxu0 0.0
    %3551 = vmatpush1.msra.mxu0 %v3501
    %3552 = vmatprep.subr.mxu0 0.0
    %3553 = vmatpush1.msra.mxu0 %v3502
    %3554 = vmatprep.subr.mxu0 0.0
    %3555 = vmatpush1.msra.mxu0 %v3503
    %3556 = vmatprep.subr.mxu0 0.0
    %3557 = vmatpush1.msra.mxu0 %v3504
    %3558 = vmatprep.subr.mxu0 0.0
    %3559 = vmatpush1.msra.mxu0 %v3505
    %3560 = vmatprep.subr.mxu0 0.0
    %3561 = vmatpush1.msra.mxu0 %v3506
    %3562 = vmatprep.subr.mxu0 0.0
    %3563 = vmatpush1.msra.mxu0 %v3507
    %3564 = vmatprep.subr.mxu0 0.0
    %3565 = vmatpush1.msra.mxu0 %v3508
    %3566 = vmatprep.subr.mxu0 0.0
    %3567 = vmatpush1.msra.mxu0 %v3509
    %3568 = vmatprep.subr.mxu0 0.0
    %3569 = vmatpush1.msra.mxu0 0.0
    %3570 = vmatprep.subr.mxu0 0.0
    %3571 = vmatpush1.msra.mxu0 0.0
    %3572 = vmatprep.subr.mxu0 0.0
    %3573 = vmatpush1.msra.mxu0 0.0
    %3574 = vmatprep.subr.mxu0 0.0
    %3575 = vmatpush1.msra.mxu0 0.0
    %3576 = vmatprep.subr.mxu0 0.0
    %3577 = vmatpush1.msra.mxu0 0.0
    %3578 = vmatprep.subr.mxu0 0.0
    %3579 = vmatpush1.msra.mxu0 0.0
    %3580 = vmatprep.subr.mxu0 0.0
    %3581 = vmatpush1.msra.mxu0 0.0
    %3582 = vmatprep.subr.mxu0 0.0
    %3583 = vmatpush1.msra.mxu0 0.0
    %3584 = vmatprep.subr.mxu0 0.0
    %3585 = vmatpush1.msra.mxu0 0.0
    %3586 = vmatprep.subr.mxu0 0.0
    %3587 = vmatpush1.msra.mxu0 0.0
    %3588 = vmatprep.subr.mxu0 0.0
    %3589 = vmatpush1.msra.mxu0 0.0
    %3590 = vmatprep.subr.mxu0 0.0
    %3591 = vmatpush1.msra.mxu0 0.0
    %3592 = vmatprep.subr.mxu0 0.0
    %3593 = vmatpush1.msra.mxu0 0.0
    %3594 = vmatprep.subr.mxu0 0.0
    %3595 = vmatpush1.msra.mxu0 0.0
    %3596 = vmatprep.mubr.f32.mxu0 %v3528
    %3597 = vmatmul.mubr.f32.gmra.mrb[0].mxu0 %v3518
    %v3598 = vpop.f32.mrb[0].mxu0
    %v3599 = vadd.f32 0.0, %v3598
    %v3600 = vpop.f32.mrb[0].mxu0
    %3601 = vmatprep.mubr.f32.mxu0 %v3530
    %3602 = vmatmul.mubr.f32.gmra.mrb[0].mxu0 %v3523
    %v3603 = vpop.f32.mrb[0].mxu0
    %v3604 = vadd.f32 0.0, %v3603
    %v3605 = vpop.f32.mrb[0].mxu0
    %3606 = vdwg.mxu0
    %v3608 = vsel %vm402, %v3466, 0
    %v3610 = vsel %vm402, %v3468, 0
    %3612 = vmatprep.subr.mxu0 0.0
    %3613 = vmatpush1.msra.mxu0 %v3469
    %3614 = vmatprep.subr.mxu0 0.0
    %3615 = vmatpush1.msra.mxu0 %v3470
    %3616 = vmatprep.subr.mxu0 0.0
    %3617 = vmatpush1.msra.mxu0 %v3471
    %3618 = vmatprep.subr.mxu0 0.0
    %3619 = vmatpush1.msra.mxu0 %v3472
    %3620 = vmatprep.subr.mxu0 0.0
    %3621 = vmatpush1.msra.mxu0 %v3473
    %3622 = vmatprep.subr.mxu0 0.0
    %3623 = vmatpush1.msra.mxu0 %v3474
    %3624 = vmatprep.subr.mxu0 0.0
    %3625 = vmatpush1.msra.mxu0 %v3475
    %3626 = vmatprep.subr.mxu0 0.0
    %3627 = vmatpush1.msra.mxu0 %v3476
    %3628 = vmatprep.subr.mxu0 0.0
    %3629 = vmatpush1.msra.mxu0 %v3477
    %3630 = vmatprep.subr.mxu0 0.0
    %3631 = vmatpush1.msra.mxu0 %v3478
    %3632 = vmatprep.subr.mxu0 0.0
    %3633 = vmatpush1.msra.mxu0 %v3479
    %3634 = vmatprep.subr.mxu0 0.0
    %3635 = vmatpush1.msra.mxu0 %v3480
    %3636 = vmatprep.subr.mxu0 0.0
    %3637 = vmatpush1.msra.mxu0 %v3481
    %3638 = vmatprep.subr.mxu0 0.0
    %3639 = vmatpush1.msra.mxu0 %v3482
    %3640 = vmatprep.subr.mxu0 0.0
    %3641 = vmatpush1.msra.mxu0 %v3483
    %3642 = vmatprep.subr.mxu0 0.0
    %3643 = vmatpush1.msra.mxu0 %v3484
    %3644 = vmatprep.subr.mxu0 0.0
    %3645 = vmatpush1.msra.mxu0 %v3485
    %3646 = vmatprep.subr.mxu0 0.0
    %3647 = vmatpush1.msra.mxu0 %v3486
    %3648 = vmatprep.subr.mxu0 0.0
    %3649 = vmatpush1.msra.mxu0 0.0
    %3650 = vmatprep.subr.mxu0 0.0
    %3651 = vmatpush1.msra.mxu0 0.0
    %3652 = vmatprep.subr.mxu0 0.0
    %3653 = vmatpush1.msra.mxu0 0.0
    %3654 = vmatprep.subr.mxu0 0.0
    %3655 = vmatpush1.msra.mxu0 0.0
    %3656 = vmatprep.subr.mxu0 0.0
    %3657 = vmatpush1.msra.mxu0 0.0
    %3658 = vmatprep.subr.mxu0 0.0
    %3659 = vmatpush1.msra.mxu0 0.0
    %3660 = vmatprep.subr.mxu0 0.0
    %3661 = vmatpush1.msra.mxu0 0.0
    %3662 = vmatprep.subr.mxu0 0.0
    %3663 = vmatpush1.msra.mxu0 0.0
    %3664 = vmatprep.subr.mxu0 0.0
    %3665 = vmatpush1.msra.mxu0 0.0
    %3666 = vmatprep.subr.mxu0 0.0
    %3667 = vmatpush1.msra.mxu0 0.0
    %3668 = vmatprep.subr.mxu0 0.0
    %3669 = vmatpush1.msra.mxu0 0.0
    %3670 = vmatprep.subr.mxu0 0.0
    %3671 = vmatpush1.msra.mxu0 0.0
    %3672 = vmatprep.subr.mxu0 0.0
    %3673 = vmatpush1.msra.mxu0 0.0
    %3674 = vmatprep.subr.mxu0 0.0
    %3675 = vmatpush1.msra.mxu0 0.0
    %3676 = vmatprep.mubr.f32.mxu0 %v3608
    %3677 = vmatmul.mubr.f32.gmra.mrb[0].mxu0 %v3465
    %v3678 = vpop.f32.mrb[0].mxu0
    %v3679 = vadd.f32 %v3599, %v3678
    %v3680 = vpop.f32.mrb[0].mxu0
    %3681 = vmatprep.mubr.f32.mxu0 %v3610
    %3682 = vmatmul.mubr.f32.gmra.mrb[0].mxu0 %v3467
    %v3683 = vpop.f32.mrb[0].mxu0
    %v3684 = vadd.f32 %v3604, %v3683
    %v3685 = vpop.f32.mrb[0].mxu0
    %3686 = vdwg.mxu0
    %v3687 = vld [vmem:[#allocation5] sm:$0xfc]
    %v3688 = vld [vmem:[#allocation5 + $0x8] sm:$0xfc]
    %v3689 = vld [vmem:[#allocation5 + $0x20] sm:$0x3]
    %v3690 = vld [vmem:[#allocation5 + $0x28] sm:$0x3]
    %s3691 = scalar_lea.vmem %s12, 288
    %v3692 = vld [vmem:[%s3691] sm:$0xff]
    %v3693 = vld [vmem:[%s3691 + $0x8] sm:$0xff]
    %v3694 = vld [vmem:[%s3691 + $0x10] sm:$0xff]
    %v3695 = vld [vmem:[%s3691 + $0x18] sm:$0xff]
    %v3696 = vld [vmem:[%s3691 + $0x20] sm:$0xff]
    %v3697 = vld [vmem:[%s3691 + $0x28] sm:$0xff]
    %v3698 = vld [vmem:[%s3691 + $0x30] sm:$0xff]
    %v3699 = vld [vmem:[%s3691 + $0x38] sm:$0xff]
    %v3700 = vld [vmem:[%s3691 + $0x40] sm:$0xff]
    %v3701 = vld [vmem:[%s3691 + $0x48] sm:$0xff]
    %v3702 = vld [vmem:[%s3691 + $0x50] sm:$0xff]
    %v3703 = vld [vmem:[%s3691 + $0x58] sm:$0xff]
    %v3704 = vld [vmem:[%s3691 + $0x60] sm:$0xff]
    %v3705 = vld [vmem:[%s3691 + $0x68] sm:$0xff]
    %v3706 = vld [vmem:[%s3691 + $0x70] sm:$0xff]
    %v3707 = vld [vmem:[%s3691 + $0x78] sm:$0xff]
    %v3708 = vld [vmem:[%s3691 + $0x80] sm:$0xff]
    %v3709 = vld [vmem:[%s3691 + $0x88] sm:$0xff]
    %v3714 = vrot.slane %v3687, 2
    %v3715 = vrot.slane %v3467, 2
    %v3716 = vsel %vm2713, %v3714, %v3715
    %v3717 = vrot.slane %v3688, 2
    %v3718 = vrot.slane %v3468, 2
    %v3719 = vsel %vm2713, %v3717, %v3718
    %v3720 = vrot.slane %v3689, 2
    %v3721 = vsel %vm2713, %v3715, %v3720
    %v3722 = vrot.slane %v3690, 2
    %v3723 = vsel %vm2713, %v3718, %v3722
    %v3726 = vsel %vm402, %v3719, 0
    %v3728 = vsel %vm402, %v3723, 0
    %3730 = vmatprep.subr.mxu0 0.0
    %3731 = vmatpush1.msra.mxu0 %v3692
    %3732 = vmatprep.subr.mxu0 0.0
    %3733 = vmatpush1.msra.mxu0 %v3693
    %3734 = vmatprep.subr.mxu0 0.0
    %3735 = vmatpush1.msra.mxu0 %v3694
    %3736 = vmatprep.subr.mxu0 0.0
    %3737 = vmatpush1.msra.mxu0 %v3695
    %3738 = vmatprep.subr.mxu0 0.0
    %3739 = vmatpush1.msra.mxu0 %v3696
    %3740 = vmatprep.subr.mxu0 0.0
    %3741 = vmatpush1.msra.mxu0 %v3697
    %3742 = vmatprep.subr.mxu0 0.0
    %3743 = vmatpush1.msra.mxu0 %v3698
    %3744 = vmatprep.subr.mxu0 0.0
    %3745 = vmatpush1.msra.mxu0 %v3699
    %3746 = vmatprep.subr.mxu0 0.0
    %3747 = vmatpush1.msra.mxu0 %v3700
    %3748 = vmatprep.subr.mxu0 0.0
    %3749 = vmatpush1.msra.mxu0 %v3701
    %3750 = vmatprep.subr.mxu0 0.0
    %3751 = vmatpush1.msra.mxu0 %v3702
    %3752 = vmatprep.subr.mxu0 0.0
    %3753 = vmatpush1.msra.mxu0 %v3703
    %3754 = vmatprep.subr.mxu0 0.0
    %3755 = vmatpush1.msra.mxu0 %v3704
    %3756 = vmatprep.subr.mxu0 0.0
    %3757 = vmatpush1.msra.mxu0 %v3705
    %3758 = vmatprep.subr.mxu0 0.0
    %3759 = vmatpush1.msra.mxu0 %v3706
    %3760 = vmatprep.subr.mxu0 0.0
    %3761 = vmatpush1.msra.mxu0 %v3707
    %3762 = vmatprep.subr.mxu0 0.0
    %3763 = vmatpush1.msra.mxu0 %v3708
    %3764 = vmatprep.subr.mxu0 0.0
    %3765 = vmatpush1.msra.mxu0 %v3709
    %3766 = vmatprep.subr.mxu0 0.0
    %3767 = vmatpush1.msra.mxu0 0.0
    %3768 = vmatprep.subr.mxu0 0.0
    %3769 = vmatpush1.msra.mxu0 0.0
    %3770 = vmatprep.subr.mxu0 0.0
    %3771 = vmatpush1.msra.mxu0 0.0
    %3772 = vmatprep.subr.mxu0 0.0
    %3773 = vmatpush1.msra.mxu0 0.0
    %3774 = vmatprep.subr.mxu0 0.0
    %3775 = vmatpush1.msra.mxu0 0.0
    %3776 = vmatprep.subr.mxu0 0.0
    %3777 = vmatpush1.msra.mxu0 0.0
    %3778 = vmatprep.subr.mxu0 0.0
    %3779 = vmatpush1.msra.mxu0 0.0
    %3780 = vmatprep.subr.mxu0 0.0
    %3781 = vmatpush1.msra.mxu0 0.0
    %3782 = vmatprep.subr.mxu0 0.0
    %3783 = vmatpush1.msra.mxu0 0.0
    %3784 = vmatprep.subr.mxu0 0.0
    %3785 = vmatpush1.msra.mxu0 0.0
    %3786 = vmatprep.subr.mxu0 0.0
    %3787 = vmatpush1.msra.mxu0 0.0
    %3788 = vmatprep.subr.mxu0 0.0
    %3789 = vmatpush1.msra.mxu0 0.0
    %3790 = vmatprep.subr.mxu0 0.0
    %3791 = vmatpush1.msra.mxu0 0.0
    %3792 = vmatprep.subr.mxu0 0.0
    %3793 = vmatpush1.msra.mxu0 0.0
    %3794 = vmatprep.mubr.f32.mxu0 %v3726
    %3795 = vmatmul.mubr.f32.gmra.mrb[0].mxu0 %v3716
    %v3796 = vpop.f32.mrb[0].mxu0
    %v3797 = vadd.f32 0.0, %v3796
    %v3798 = vpop.f32.mrb[0].mxu0
    %3799 = vmatprep.mubr.f32.mxu0 %v3728
    %3800 = vmatmul.mubr.f32.gmra.mrb[0].mxu0 %v3721
    %v3801 = vpop.f32.mrb[0].mxu0
    %v3802 = vadd.f32 0.0, %v3801
    %v3803 = vpop.f32.mrb[0].mxu0
    %3804 = vdwg.mxu0
    %v3805 = vadd.f32 %v3679, %v3797
    %v3806 = vadd.f32 %v3684, %v3802
    %v3807 = vld [vmem:[%s13] sm:$0x1]
    %v3809 = vlaneseq
    %v3810 = vshrl.u32 %v3809, 7
    %v3811 = vsub.s32 0, %v3810
    %v3812 = vrot.slane %v3807, %v3811
    %v3814 = vadd.f32 %v3805, %v3812
    %v3815 = vadd.f32 %v3806, %v3812
    %v3816 = vxor.u32 %v3814, 2147483648
    %v3817 = vxor.u32 %v3815, 2147483648
    %v3818 = vmul.f32 %v3816, 1.442695
    %v3819 = vpow.pop %v3818
    %v3820 = vmul.f32 %v3817, 1.442695
    %v3821 = vpow.pop %v3820
    %v3822 = vadd.f32 %v3819, 1.0
    %v3823 = vadd.f32 %v3821, 1.0
    %v3824 = vrcp.pop %v3822
    %v3825 = vmul.f32 1.0, %v3824
    %v3826 = vrcp.pop %v3823
    %v3827 = vmul.f32 1.0, %v3826
    %v3828 = vtanh.pop %v3814
    %v3829 = vtanh.pop %v3815
    %3832 = vrot.lane.b32.xlu0 %v3825, 112
    %v3833 = vpop.permute.xlu0 %3832
    %3834 = vrot.lane.b32.xlu0 %v3827, 112
    %v3835 = vpop.permute.xlu0 %3834
    %v3838 = vmul.f32 %v3828, %v3833
    %v3839 = vmul.f32 %v3829, %v3835
    %3840 = vst.msk [vmem:[#allocation14] sm:$0xff] %vm402, %v3838
    %3841 = vst.msk [vmem:[#allocation14 + $0x8] sm:$0xff] %vm402, %v3839
    %v3842 = vld [vmem:[%s3372] sm:$0xff]
    %v3843 = vld [vmem:[%s3372 + $0x8] sm:$0xff]
    %v3844 = vld [vmem:[%s3372 + $0x10] sm:$0xff]
    %v3845 = vld [vmem:[%s3372 + $0x18] sm:$0xff]
    %v3846 = vld [vmem:[%s12] sm:$0xff]
    %v3847 = vld [vmem:[%s12 + $0x8] sm:$0xff]
    %v3848 = vld [vmem:[%s12 + $0x10] sm:$0xff]
    %v3849 = vld [vmem:[%s12 + $0x18] sm:$0xff]
    %v3850 = vld [vmem:[%s12 + $0x20] sm:$0xff]
    %v3851 = vld [vmem:[%s12 + $0x28] sm:$0xff]
    %v3852 = vld [vmem:[%s12 + $0x30] sm:$0xff]
    %v3853 = vld [vmem:[%s12 + $0x38] sm:$0xff]
    %v3854 = vld [vmem:[%s12 + $0x40] sm:$0xff]
    %v3855 = vld [vmem:[%s12 + $0x48] sm:$0xff]
    %v3856 = vld [vmem:[%s12 + $0x50] sm:$0xff]
    %v3857 = vld [vmem:[%s12 + $0x58] sm:$0xff]
    %v3858 = vld [vmem:[%s12 + $0x60] sm:$0xff]
    %v3859 = vld [vmem:[%s12 + $0x68] sm:$0xff]
    %v3860 = vld [vmem:[%s12 + $0x70] sm:$0xff]
    %v3861 = vld [vmem:[%s12 + $0x78] sm:$0xff]
    %v3862 = vld [vmem:[%s12 + $0x80] sm:$0xff]
    %v3863 = vld [vmem:[%s12 + $0x88] sm:$0xff]
    %v3864 = vld [vmem:[%s3372] sm:$0xfe]
    %v3865 = vld [vmem:[%s3372 + $0x8] sm:$0xfe]
    %v3866 = vld [vmem:[%s3372 + $0x20] sm:$0x1]
    %v3867 = vld [vmem:[%s3372 + $0x28] sm:$0x1]
    %v3868 = vld [vmem:[%s3491] sm:$0xff]
    %v3869 = vld [vmem:[%s3491 + $0x8] sm:$0xff]
    %v3870 = vld [vmem:[%s3491 + $0x10] sm:$0xff]
    %v3871 = vld [vmem:[%s3491 + $0x18] sm:$0xff]
    %v3872 = vld [vmem:[%s3491 + $0x20] sm:$0xff]
    %v3873 = vld [vmem:[%s3491 + $0x28] sm:$0xff]
    %v3874 = vld [vmem:[%s3491 + $0x30] sm:$0xff]
    %v3875 = vld [vmem:[%s3491 + $0x38] sm:$0xff]
    %v3876 = vld [vmem:[%s3491 + $0x40] sm:$0xff]
    %v3877 = vld [vmem:[%s3491 + $0x48] sm:$0xff]
    %v3878 = vld [vmem:[%s3491 + $0x50] sm:$0xff]
    %v3879 = vld [vmem:[%s3491 + $0x58] sm:$0xff]
    %v3880 = vld [vmem:[%s3491 + $0x60] sm:$0xff]
    %v3881 = vld [vmem:[%s3491 + $0x68] sm:$0xff]
    %v3882 = vld [vmem:[%s3491 + $0x70] sm:$0xff]
    %v3883 = vld [vmem:[%s3491 + $0x78] sm:$0xff]
    %v3884 = vld [vmem:[%s3491 + $0x80] sm:$0xff]
    %v3885 = vld [vmem:[%s3491 + $0x88] sm:$0xff]
    %v3892 = vrot.slane %v3864, 1
    %v3893 = vrot.slane %v3844, 1
    %v3894 = vsel %vm2509, %v3892, %v3893
    %v3895 = vrot.slane %v3865, 1
    %v3896 = vrot.slane %v3845, 1
    %v3897 = vsel %vm2509, %v3895, %v3896
    %v3898 = vrot.slane %v3866, 1
    %v3899 = vsel %vm2509, %v3893, %v3898
    %v3900 = vrot.slane %v3867, 1
    %v3901 = vsel %vm2509, %v3896, %v3900
    %v3904 = vsel %vm402, %v3897, 0
    %v3906 = vsel %vm402, %v3901, 0
    %3908 = vmatprep.subr.mxu0 0.0
    %3909 = vmatpush1.msra.mxu0 %v3868
    %3910 = vmatprep.subr.mxu0 0.0
    %3911 = vmatpush1.msra.mxu0 %v3869
    %3912 = vmatprep.subr.mxu0 0.0
    %3913 = vmatpush1.msra.mxu0 %v3870
    %3914 = vmatprep.subr.mxu0 0.0
    %3915 = vmatpush1.msra.mxu0 %v3871
    %3916 = vmatprep.subr.mxu0 0.0
    %3917 = vmatpush1.msra.mxu0 %v3872
    %3918 = vmatprep.subr.mxu0 0.0
    %3919 = vmatpush1.msra.mxu0 %v3873
    %3920 = vmatprep.subr.mxu0 0.0
    %3921 = vmatpush1.msra.mxu0 %v3874
    %3922 = vmatprep.subr.mxu0 0.0
    %3923 = vmatpush1.msra.mxu0 %v3875
    %3924 = vmatprep.subr.mxu0 0.0
    %3925 = vmatpush1.msra.mxu0 %v3876
    %3926 = vmatprep.subr.mxu0 0.0
    %3927 = vmatpush1.msra.mxu0 %v3877
    %3928 = vmatprep.subr.mxu0 0.0
    %3929 = vmatpush1.msra.mxu0 %v3878
    %3930 = vmatprep.subr.mxu0 0.0
    %3931 = vmatpush1.msra.mxu0 %v3879
    %3932 = vmatprep.subr.mxu0 0.0
    %3933 = vmatpush1.msra.mxu0 %v3880
    %3934 = vmatprep.subr.mxu0 0.0
    %3935 = vmatpush1.msra.mxu0 %v3881
    %3936 = vmatprep.subr.mxu0 0.0
    %3937 = vmatpush1.msra.mxu0 %v3882
    %3938 = vmatprep.subr.mxu0 0.0
    %3939 = vmatpush1.msra.mxu0 %v3883
    %3940 = vmatprep.subr.mxu0 0.0
    %3941 = vmatpush1.msra.mxu0 %v3884
    %3942 = vmatprep.subr.mxu0 0.0
    %3943 = vmatpush1.msra.mxu0 %v3885
    %3944 = vmatprep.subr.mxu0 0.0
    %3945 = vmatpush1.msra.mxu0 0.0
    %3946 = vmatprep.subr.mxu0 0.0
    %3947 = vmatpush1.msra.mxu0 0.0
    %3948 = vmatprep.subr.mxu0 0.0
    %3949 = vmatpush1.msra.mxu0 0.0
    %3950 = vmatprep.subr.mxu0 0.0
    %3951 = vmatpush1.msra.mxu0 0.0
    %3952 = vmatprep.subr.mxu0 0.0
    %3953 = vmatpush1.msra.mxu0 0.0
    %3954 = vmatprep.subr.mxu0 0.0
    %3955 = vmatpush1.msra.mxu0 0.0
    %3956 = vmatprep.subr.mxu0 0.0
    %3957 = vmatpush1.msra.mxu0 0.0
    %3958 = vmatprep.subr.mxu0 0.0
    %3959 = vmatpush1.msra.mxu0 0.0
    %3960 = vmatprep.subr.mxu0 0.0
    %3961 = vmatpush1.msra.mxu0 0.0
    %3962 = vmatprep.subr.mxu0 0.0
    %3963 = vmatpush1.msra.mxu0 0.0
    %3964 = vmatprep.subr.mxu0 0.0
    %3965 = vmatpush1.msra.mxu0 0.0
    %3966 = vmatprep.subr.mxu0 0.0
    %3967 = vmatpush1.msra.mxu0 0.0
    %3968 = vmatprep.subr.mxu0 0.0
    %3969 = vmatpush1.msra.mxu0 0.0
    %3970 = vmatprep.subr.mxu0 0.0
    %3971 = vmatpush1.msra.mxu0 0.0
    %3972 = vmatprep.mubr.f32.mxu0 %v3904
    %3973 = vmatmul.mubr.f32.gmra.mrb[0].mxu0 %v3894
    %v3974 = vpop.f32.mrb[0].mxu0
    %v3975 = vadd.f32 0.0, %v3974
    %v3976 = vpop.f32.mrb[0].mxu0
    %3977 = vmatprep.mubr.f32.mxu0 %v3906
    %3978 = vmatmul.mubr.f32.gmra.mrb[0].mxu0 %v3899
    %v3979 = vpop.f32.mrb[0].mxu0
    %v3980 = vadd.f32 0.0, %v3979
    %v3981 = vpop.f32.mrb[0].mxu0
    %3982 = vdwg.mxu0
    %v3984 = vsel %vm402, %v3843, 0
    %v3986 = vsel %vm402, %v3845, 0
    %3988 = vmatprep.subr.mxu0 0.0
    %3989 = vmatpush1.msra.mxu0 %v3846
    %3990 = vmatprep.subr.mxu0 0.0
    %3991 = vmatpush1.msra.mxu0 %v3847
    %3992 = vmatprep.subr.mxu0 0.0
    %3993 = vmatpush1.msra.mxu0 %v3848
    %3994 = vmatprep.subr.mxu0 0.0
    %3995 = vmatpush1.msra.mxu0 %v3849
    %3996 = vmatprep.subr.mxu0 0.0
    %3997 = vmatpush1.msra.mxu0 %v3850
    %3998 = vmatprep.subr.mxu0 0.0
    %3999 = vmatpush1.msra.mxu0 %v3851
    %4000 = vmatprep.subr.mxu0 0.0
    %4001 = vmatpush1.msra.mxu0 %v3852
    %4002 = vmatprep.subr.mxu0 0.0
    %4003 = vmatpush1.msra.mxu0 %v3853
    %4004 = vmatprep.subr.mxu0 0.0
    %4005 = vmatpush1.msra.mxu0 %v3854
    %4006 = vmatprep.subr.mxu0 0.0
    %4007 = vmatpush1.msra.mxu0 %v3855
    %4008 = vmatprep.subr.mxu0 0.0
    %4009 = vmatpush1.msra.mxu0 %v3856
    %4010 = vmatprep.subr.mxu0 0.0
    %4011 = vmatpush1.msra.mxu0 %v3857
    %4012 = vmatprep.subr.mxu0 0.0
    %4013 = vmatpush1.msra.mxu0 %v3858
    %4014 = vmatprep.subr.mxu0 0.0
    %4015 = vmatpush1.msra.mxu0 %v3859
    %4016 = vmatprep.subr.mxu0 0.0
    %4017 = vmatpush1.msra.mxu0 %v3860
    %4018 = vmatprep.subr.mxu0 0.0
    %4019 = vmatpush1.msra.mxu0 %v3861
    %4020 = vmatprep.subr.mxu0 0.0
    %4021 = vmatpush1.msra.mxu0 %v3862
    %4022 = vmatprep.subr.mxu0 0.0
    %4023 = vmatpush1.msra.mxu0 %v3863
    %4024 = vmatprep.subr.mxu0 0.0
    %4025 = vmatpush1.msra.mxu0 0.0
    %4026 = vmatprep.subr.mxu0 0.0
    %4027 = vmatpush1.msra.mxu0 0.0
    %4028 = vmatprep.subr.mxu0 0.0
    %4029 = vmatpush1.msra.mxu0 0.0
    %4030 = vmatprep.subr.mxu0 0.0
    %4031 = vmatpush1.msra.mxu0 0.0
    %4032 = vmatprep.subr.mxu0 0.0
    %4033 = vmatpush1.msra.mxu0 0.0
    %4034 = vmatprep.subr.mxu0 0.0
    %4035 = vmatpush1.msra.mxu0 0.0
    %4036 = vmatprep.subr.mxu0 0.0
    %4037 = vmatpush1.msra.mxu0 0.0
    %4038 = vmatprep.subr.mxu0 0.0
    %4039 = vmatpush1.msra.mxu0 0.0
    %4040 = vmatprep.subr.mxu0 0.0
    %4041 = vmatpush1.msra.mxu0 0.0
    %4042 = vmatprep.subr.mxu0 0.0
    %4043 = vmatpush1.msra.mxu0 0.0
    %4044 = vmatprep.subr.mxu0 0.0
    %4045 = vmatpush1.msra.mxu0 0.0
    %4046 = vmatprep.subr.mxu0 0.0
    %4047 = vmatpush1.msra.mxu0 0.0
    %4048 = vmatprep.subr.mxu0 0.0
    %4049 = vmatpush1.msra.mxu0 0.0
    %4050 = vmatprep.subr.mxu0 0.0
    %4051 = vmatpush1.msra.mxu0 0.0
    %4052 = vmatprep.mubr.f32.mxu0 %v3984
    %4053 = vmatmul.mubr.f32.gmra.mrb[0].mxu0 %v3842
    %v4054 = vpop.f32.mrb[0].mxu0
    %v4055 = vadd.f32 %v3975, %v4054
    %v4056 = vpop.f32.mrb[0].mxu0
    %4057 = vmatprep.mubr.f32.mxu0 %v3986
    %4058 = vmatmul.mubr.f32.gmra.mrb[0].mxu0 %v3844
    %v4059 = vpop.f32.mrb[0].mxu0
    %v4060 = vadd.f32 %v3980, %v4059
    %v4061 = vpop.f32.mrb[0].mxu0
    %4062 = vdwg.mxu0
    %v4063 = vld [vmem:[%s3372] sm:$0xfc]
    %v4064 = vld [vmem:[%s3372 + $0x8] sm:$0xfc]
    %v4065 = vld [vmem:[%s3372 + $0x20] sm:$0x3]
    %v4066 = vld [vmem:[%s3372 + $0x28] sm:$0x3]
    %v4067 = vld [vmem:[%s3691] sm:$0xff]
    %v4068 = vld [vmem:[%s3691 + $0x8] sm:$0xff]
    %v4069 = vld [vmem:[%s3691 + $0x10] sm:$0xff]
    %v4070 = vld [vmem:[%s3691 + $0x18] sm:$0xff]
    %v4071 = vld [vmem:[%s3691 + $0x20] sm:$0xff]
    %v4072 = vld [vmem:[%s3691 + $0x28] sm:$0xff]
    %v4073 = vld [vmem:[%s3691 + $0x30] sm:$0xff]
    %v4074 = vld [vmem:[%s3691 + $0x38] sm:$0xff]
    %v4075 = vld [vmem:[%s3691 + $0x40] sm:$0xff]
    %v4076 = vld [vmem:[%s3691 + $0x48] sm:$0xff]
    %v4077 = vld [vmem:[%s3691 + $0x50] sm:$0xff]
    %v4078 = vld [vmem:[%s3691 + $0x58] sm:$0xff]
    %v4079 = vld [vmem:[%s3691 + $0x60] sm:$0xff]
    %v4080 = vld [vmem:[%s3691 + $0x68] sm:$0xff]
    %v4081 = vld [vmem:[%s3691 + $0x70] sm:$0xff]
    %v4082 = vld [vmem:[%s3691 + $0x78] sm:$0xff]
    %v4083 = vld [vmem:[%s3691 + $0x80] sm:$0xff]
    %v4084 = vld [vmem:[%s3691 + $0x88] sm:$0xff]
    %v4089 = vrot.slane %v4063, 2
    %v4090 = vrot.slane %v3844, 2
    %v4091 = vsel %vm2713, %v4089, %v4090
    %v4092 = vrot.slane %v4064, 2
    %v4093 = vrot.slane %v3845, 2
    %v4094 = vsel %vm2713, %v4092, %v4093
    %v4095 = vrot.slane %v4065, 2
    %v4096 = vsel %vm2713, %v4090, %v4095
    %v4097 = vrot.slane %v4066, 2
    %v4098 = vsel %vm2713, %v4093, %v4097
    %v4101 = vsel %vm402, %v4094, 0
    %v4103 = vsel %vm402, %v4098, 0
    %4105 = vmatprep.subr.mxu0 0.0
    %4106 = vmatpush1.msra.mxu0 %v4067
    %4107 = vmatprep.subr.mxu0 0.0
    %4108 = vmatpush1.msra.mxu0 %v4068
    %4109 = vmatprep.subr.mxu0 0.0
    %4110 = vmatpush1.msra.mxu0 %v4069
    %4111 = vmatprep.subr.mxu0 0.0
    %4112 = vmatpush1.msra.mxu0 %v4070
    %4113 = vmatprep.subr.mxu0 0.0
    %4114 = vmatpush1.msra.mxu0 %v4071
    %4115 = vmatprep.subr.mxu0 0.0
    %4116 = vmatpush1.msra.mxu0 %v4072
    %4117 = vmatprep.subr.mxu0 0.0
    %4118 = vmatpush1.msra.mxu0 %v4073
    %4119 = vmatprep.subr.mxu0 0.0
    %4120 = vmatpush1.msra.mxu0 %v4074
    %4121 = vmatprep.subr.mxu0 0.0
    %4122 = vmatpush1.msra.mxu0 %v4075
    %4123 = vmatprep.subr.mxu0 0.0
    %4124 = vmatpush1.msra.mxu0 %v4076
    %4125 = vmatprep.subr.mxu0 0.0
    %4126 = vmatpush1.msra.mxu0 %v4077
    %4127 = vmatprep.subr.mxu0 0.0
    %4128 = vmatpush1.msra.mxu0 %v4078
    %4129 = vmatprep.subr.mxu0 0.0
    %4130 = vmatpush1.msra.mxu0 %v4079
    %4131 = vmatprep.subr.mxu0 0.0
    %4132 = vmatpush1.msra.mxu0 %v4080
    %4133 = vmatprep.subr.mxu0 0.0
    %4134 = vmatpush1.msra.mxu0 %v4081
    %4135 = vmatprep.subr.mxu0 0.0
    %4136 = vmatpush1.msra.mxu0 %v4082
    %4137 = vmatprep.subr.mxu0 0.0
    %4138 = vmatpush1.msra.mxu0 %v4083
    %4139 = vmatprep.subr.mxu0 0.0
    %4140 = vmatpush1.msra.mxu0 %v4084
    %4141 = vmatprep.subr.mxu0 0.0
    %4142 = vmatpush1.msra.mxu0 0.0
    %4143 = vmatprep.subr.mxu0 0.0
    %4144 = vmatpush1.msra.mxu0 0.0
    %4145 = vmatprep.subr.mxu0 0.0
    %4146 = vmatpush1.msra.mxu0 0.0
    %4147 = vmatprep.subr.mxu0 0.0
    %4148 = vmatpush1.msra.mxu0 0.0
    %4149 = vmatprep.subr.mxu0 0.0
    %4150 = vmatpush1.msra.mxu0 0.0
    %4151 = vmatprep.subr.mxu0 0.0
    %4152 = vmatpush1.msra.mxu0 0.0
    %4153 = vmatprep.subr.mxu0 0.0
    %4154 = vmatpush1.msra.mxu0 0.0
    %4155 = vmatprep.subr.mxu0 0.0
    %4156 = vmatpush1.msra.mxu0 0.0
    %4157 = vmatprep.subr.mxu0 0.0
    %4158 = vmatpush1.msra.mxu0 0.0
    %4159 = vmatprep.subr.mxu0 0.0
    %4160 = vmatpush1.msra.mxu0 0.0
    %4161 = vmatprep.subr.mxu0 0.0
    %4162 = vmatpush1.msra.mxu0 0.0
    %4163 = vmatprep.subr.mxu0 0.0
    %4164 = vmatpush1.msra.mxu0 0.0
    %4165 = vmatprep.subr.mxu0 0.0
    %4166 = vmatpush1.msra.mxu0 0.0
    %4167 = vmatprep.subr.mxu0 0.0
    %4168 = vmatpush1.msra.mxu0 0.0
    %4169 = vmatprep.mubr.f32.mxu0 %v4101
    %4170 = vmatmul.mubr.f32.gmra.mrb[0].mxu0 %v4091
    %v4171 = vpop.f32.mrb[0].mxu0
    %v4172 = vadd.f32 0.0, %v4171
    %v4173 = vpop.f32.mrb[0].mxu0
    %4174 = vmatprep.mubr.f32.mxu0 %v4103
    %4175 = vmatmul.mubr.f32.gmra.mrb[0].mxu0 %v4096
    %v4176 = vpop.f32.mrb[0].mxu0
    %v4177 = vadd.f32 0.0, %v4176
    %v4178 = vpop.f32.mrb[0].mxu0
    %4179 = vdwg.mxu0
    %v4180 = vadd.f32 %v4055, %v4172
    %v4181 = vadd.f32 %v4060, %v4177
    %v4182 = vld [vmem:[%s13] sm:$0x1]
    %v4184 = vlaneseq
    %v4185 = vshrl.u32 %v4184, 7
    %v4186 = vsub.s32 0, %v4185
    %v4187 = vrot.slane %v4182, %v4186
    %v4189 = vadd.f32 %v4180, %v4187
    %v4190 = vadd.f32 %v4181, %v4187
    %v4191 = vxor.u32 %v4189, 2147483648
    %v4192 = vxor.u32 %v4190, 2147483648
    %v4193 = vmul.f32 %v4191, 1.442695
    %v4194 = vpow.pop %v4193
    %v4195 = vmul.f32 %v4192, 1.442695
    %v4196 = vpow.pop %v4195
    %v4197 = vadd.f32 %v4194, 1.0
    %v4198 = vadd.f32 %v4196, 1.0
    %v4199 = vrcp.pop %v4197
    %v4200 = vmul.f32 1.0, %v4199
    %v4201 = vrcp.pop %v4198
    %v4202 = vmul.f32 1.0, %v4201
    %v4203 = vtanh.pop %v4189
    %v4204 = vtanh.pop %v4190
    %4207 = vrot.lane.b32.xlu0 %v4200, 112
    %v4208 = vpop.permute.xlu0 %4207
    %4209 = vrot.lane.b32.xlu0 %v4202, 112
    %v4210 = vpop.permute.xlu0 %4209
    %v4213 = vmul.f32 %v4203, %v4208
    %v4214 = vmul.f32 %v4204, %v4210
    %s4215 = scalar_lea.vmem [#allocation14], 16
    %4216 = vst.msk [vmem:[%s4215] sm:$0xff] %vm402, %v4213
    %4217 = vst.msk [vmem:[%s4215 + $0x8] sm:$0xff] %vm402, %v4214
    // Predicated region
    $region74: #{nas_noise_decoder.1} parent=1 // pred_check
      _
    $region75: #{nas_noise_decoder.1} parent=1 // pred_check_branch
      %4219 = sbr.rel (0) target = $region77
    $region76: #{nas_noise_decoder.1} parent=1 // pred_region
      %s4221 = ssub.s32 512, 512
      %4222 = vsyncadd [#allocation8], %s4221
      %s4223 = sshll.u32 [#allocation14], 4
      %s4224 = int_to_ptr.vmem [resolvable:$true] %s4223
      %4229 = dma.vmem_to_hbm [thread:$0]  %s4224, 512, %s14, [#allocation8], 128, 128, 8
    $region77: #{nas_noise_decoder.1} parent=1 // pred_fallthru
      _
    // Predicated region
    $region78: #{nas_noise_decoder.1} parent=1 // pred_check
      _
    $region79: #{nas_noise_decoder.1} parent=1 // pred_check_branch
      %4231 = sbr.rel (0) target = $region81
    $region80: #{nas_noise_decoder.1} parent=1 // pred_region
      %4232 = dma.done [#allocation8], 512
    $region81: #{nas_noise_decoder.1} parent=1 // pred_fallthru
      _
    %4233 = vsyncpa [#allocation7], 1
    %4234 = vsyncpa [#allocation12], 1
    %4235 = vsyncpa [#allocation8], 1
    %4236 = vsyncpa [#allocation9], 1

</llo_original>
